<compile_context>
chip_gen: v7x
topology: tpu7x:2x2x1
jax: 0.10.0
libtpu: 0.0.40
codegen_flags: <defaults>
</compile_context>

<pallas_src>
import jax
import jax.numpy as jnp
from jax.experimental import pallas as pl
from jax.experimental.pallas import tpu as pltpu

EPS = 1e-5
MAX_TM = 256                     # lane tile (multiple of 128); raise to 512-1024 for large images
VMEM_LIMIT = 32 * 1024 * 1024    # explicit scoped-VMEM budget (safe on v5e/v6e/v7x)


# ----------------------------------------------------------------------------
# Pallas kernels
# ----------------------------------------------------------------------------
def _matmul_stats_kernel(bT_ref, a_ref, out_ref, sum_ref, sq_ref):
    """out^T tile = B^T @ A^T tile (MXU, bf16 in / f32 acc).

    Also accumulates per-channel sum and sum-of-squares (BatchNorm batch stats)
    into resident (C, 1) output blocks across the M-grid axis.
    """
    acc = jnp.dot(bT_ref[...], a_ref[...], preferred_element_type=jnp.float32)
    out_ref[...] = acc

    @pl.when(pl.program_id(0) == 0)
    def _():
        sum_ref[...] = jnp.zeros_like(sum_ref)
        sq_ref[...] = jnp.zeros_like(sq_ref)

    # cross-lane reductions ride on the XLU slot next to the MXU work.
    sum_ref[...] += jnp.sum(acc, axis=1, keepdims=True)
    sq_ref[...] += jnp.sum(acc * acc, axis=1, keepdims=True)


def matmul_with_stats_t(bT, a_t, tm):
    """bT: (C, K) bf16, a_t: (K, Mp) bf16 -> (out (C, Mp) f32, colsum (C,1), colsumsq (C,1))."""
    C, K = bT.shape
    K2, Mp = a_t.shape
    assert K2 == K and Mp % tm == 0
    return pl.pallas_call(
        _matmul_stats_kernel,
        grid=(Mp // tm,),
        in_specs=[
            pl.BlockSpec((C, K), lambda i: (0, 0)),     # weights resident
            pl.BlockSpec((K, tm), lambda i: (0, i)),    # activation tile, pipelined
        ],
        out_specs=(
            pl.BlockSpec((C, tm), lambda i: (0, i)),
            pl.BlockSpec((C, 1), lambda i: (0, 0)),     # resident accumulator
            pl.BlockSpec((C, 1), lambda i: (0, 0)),     # resident accumulator
        ),
        out_shape=(
            jax.ShapeDtypeStruct((C, Mp), jnp.float32),
            jax.ShapeDtypeStruct((C, 1), jnp.float32),
            jax.ShapeDtypeStruct((C, 1), jnp.float32),
        ),
        compiler_params=pltpu.CompilerParams(
            dimension_semantics=("arbitrary",),          # stats reduction over M tiles
            vmem_limit_bytes=VMEM_LIMIT,
        ),
    )(bT, a_t)


def _make_affine_act_kernel(act, has_res, res_after_act):
    def kernel(*refs):
        if has_res:
            x_ref, s_ref, t_ref, r_ref, o_ref = refs
        else:
            x_ref, s_ref, t_ref, o_ref = refs
        y = x_ref[...] * s_ref[...] + t_ref[...]          # folded BatchNorm
        if has_res and not res_after_act:
            y = y + r_ref[...]                            # ResnetBlock: add before act
        if act == "relu":
            y = jnp.maximum(y, 0.0)
        elif act == "tanh":
            y = jnp.tanh(y)
        if has_res and res_after_act:
            y = y + r_ref[...]                            # skip connection: add after act
        o_ref[...] = y
    return kernel


def affine_act(x_cm, scale, shift, residual=None, act="none",
               res_after_act=False, tm=None):
    """y = act(x * scale + shift [+res]) [+res];  x: (C, Mp), scale/shift: (C,) or (C,1)."""
    C, Mp = x_cm.shape
    if tm is None:
        tm = Mp if Mp <= MAX_TM else MAX_TM
    assert Mp % tm == 0
    has_res = residual is not None
    kernel = _make_affine_act_kernel(act, has_res, res_after_act)
    ins = [
        x_cm.astype(jnp.float32),
        scale.reshape(C, 1).astype(jnp.float32),
        shift.reshape(C, 1).astype(jnp.float32),
    ]
    in_specs = [
        pl.BlockSpec((C, tm), lambda i: (0, i)),
        pl.BlockSpec((C, 1), lambda i: (0, 0)),
        pl.BlockSpec((C, 1), lambda i: (0, 0)),
    ]
    if has_res:
        ins.append(residual.astype(jnp.float32))
        in_specs.append(pl.BlockSpec((C, tm), lambda i: (0, i)))
    return pl.pallas_call(
        kernel,
        grid=(Mp // tm,),
        in_specs=in_specs,
        out_specs=pl.BlockSpec((C, tm), lambda i: (0, i)),
        out_shape=jax.ShapeDtypeStruct((C, Mp), jnp.float32),
        compiler_params=pltpu.CompilerParams(
            dimension_semantics=("parallel",),            # shard M tiles across cores
            vmem_limit_bytes=VMEM_LIMIT,
        ),
    )(*ins)


# ----------------------------------------------------------------------------
# JAX glue: padding, im2col (transposed), bilinear upsample, tiling plan
# ----------------------------------------------------------------------------
def reflect_pad(x, p):
    """x: (C, N, H, W)."""
    if p == 0:
        return x
    return jnp.pad(x, ((0, 0), (0, 0), (p, p), (p, p)), mode="reflect")


def im2col_t(x_pad, k, stride, Ho, Wo):
    """x_pad: (Cin, N, Hp, Wp) -> A^T (k*k*Cin, N*Ho*Wo), row order (kh, kw, cin)."""
    Cin, N = x_pad.shape[0], x_pad.shape[1]
    taps = []
    for kh in range(k):
        for kw in range(k):
            taps.append(x_pad[:, :, kh:kh + stride * Ho:stride,
                              kw:kw + stride * Wo:stride])
    a = jnp.stack(taps, axis=0)                    # (k*k, Cin, N, Ho, Wo)
    return a.reshape(k * k * Cin, N * Ho * Wo)


def upsample2x_bilinear(x):
    """F.interpolate(scale_factor=2, mode='bilinear', align_corners=False) on (C, N, H, W)."""
    # TODO(synk): upsample is fixed-weight shifted adds; kept in XLA glue (could use pltpu.roll).
    C, N, H, W = x.shape
    # height
    xm = jnp.concatenate([x[:, :, :1], x[:, :, :-1]], axis=2)
    xp = jnp.concatenate([x[:, :, 1:], x[:, :, -1:]], axis=2)
    even = 0.25 * xm + 0.75 * x
    odd = 0.75 * x + 0.25 * xp
    x = jnp.stack([even, odd], axis=3).reshape(C, N, 2 * H, W)
    # width
    xm = jnp.concatenate([x[:, :, :, :1], x[:, :, :, :-1]], axis=3)
    xp = jnp.concatenate([x[:, :, :, 1:], x[:, :, :, -1:]], axis=3)
    even = 0.25 * xm + 0.75 * x
    odd = 0.75 * x + 0.25 * xp
    x = jnp.stack([even, odd], axis=4).reshape(C, N, 2 * H, 2 * W)
    return x


def _plan_m(M, max_tm=MAX_TM):
    """Pick the lane tile TM and the padded M extent (padding columns are zero)."""
    if M <= max_tm:
        return M, M
    m_pad = ((M + max_tm - 1) // max_tm) * max_tm
    return max_tm, m_pad


# ----------------------------------------------------------------------------
# Composite block: reflect-pad conv (bias=False) + BatchNorm(train) + act (+ residual)
# ----------------------------------------------------------------------------
def conv_block(x, w, gamma=None, beta=None, *, stride=1, act="relu",
               residual=None, res_after_act=False):
    """x: (Cin, N, H, W).  w: (Cout, Cin, k, k) (PyTorch layout).

    residual (if given): (Cout, N, Ho, Wo); added before (res_after_act=False)
    or after (res_after_act=True) the activation.
    """
    Cout, Cin, k, _ = w.shape
    p = k // 2
    _, N, _, _ = x.shape
    xp = reflect_pad(x, p)
    Hp, Wp = xp.shape[2], xp.shape[3]
    Ho = (Hp - k) // stride + 1
    Wo = (Wp - k) // stride + 1
    M = N * Ho * Wo

    a_t = im2col_t(xp, k, stride, Ho, Wo)                                # (K, M) f32
    bT = jnp.transpose(w, (0, 2, 3, 1)).reshape(Cout, k * k * Cin)       # (Cout, K)

    tm, m_pad = _plan_m(M)
    if m_pad != M:
        a_t = jnp.pad(a_t, ((0, 0), (0, m_pad - M)))                     # zero cols -> zero stats

    out, colsum, colsumsq = matmul_with_stats_t(
        bT.astype(jnp.bfloat16), a_t.astype(jnp.bfloat16), tm)

    if gamma is not None:
        # BatchNorm training-mode batch stats (biased variance).  Note: E[x^2]-E[x]^2
        # in f32 can cancel for very large M / activations; acceptable at these scales.
        mean = colsum / M
        var = colsumsq / M - mean * mean
        scale = gamma.reshape(Cout, 1) / jnp.sqrt(var + EPS)
        shift = beta.reshape(Cout, 1) - mean * scale
    else:
        scale = jnp.ones((Cout, 1), jnp.float32)
        shift = jnp.zeros((Cout, 1), jnp.float32)

    res_cm = None
    if residual is not None:
        res_cm = residual.reshape(Cout, M)
        if m_pad != M:
            res_cm = jnp.pad(res_cm, ((0, 0), (0, m_pad - M)))

    y = affine_act(out, scale, shift, residual=res_cm, act=act,
                   res_after_act=res_after_act, tm=tm)
    if m_pad != M:
        y = y[:, :M]
    return y.reshape(Cout, N, Ho, Wo)


# ----------------------------------------------------------------------------
# ResUNetatt forward
# ----------------------------------------------------------------------------
def _unet_level(x, params, d, num_down):
    if d == num_down:
        # innermost FlatBlock: ResnetBlocks at ngf * 2**(levels-1) channels
        for rb in params["resblocks"]:
            h = conv_block(x, rb["w1"], rb["g1"], rb["b1"], act="relu")
            # out = relu(bn(conv2(h)) + x)  -> residual added before activation
            x = conv_block(h, rb["w2"], rb["g2"], rb["b2"], act="relu",
                           residual=x, res_after_act=False)
        return x
    dn = params["down"][d]
    y = conv_block(x, dn["w1"], dn["g1"], dn["b1"], stride=2, act="relu")
    y = conv_block(y, dn["w2"], dn["g2"], dn["b2"], stride=1, act="relu")
    y = _unet_level(y, params, d + 1, num_down)
    up = params["up"][d]
    y = upsample2x_bilinear(y)
    # SkipConnectionBlock: x + up(sub(down(x)));  skip add fused into the up-conv
    # epilogue (added AFTER the ReLU).  Outer flat blocks have 0 layers (identity).
    return conv_block(y, up["w"], up["g"], up["b"], stride=1, act="relu",
                      residual=x, res_after_act=True)


def res_unet_att_forward(params, x_nchw):
    num_down = len(params["down"])
    x = jnp.transpose(x_nchw, (1, 0, 2, 3))          # NCHW -> CNHW (channels-major)
    ic = params["in_conv"]
    x = conv_block(x, ic["w"], ic["gamma"], ic["beta"], act="relu")
    x = _unet_level(x, params, 0, num_down)
    outs = []
    for head in params["heads"]:
        y = conv_block(x, head["w"], None, None, act="tanh")   # no norm, bias=False, Tanh
        outs.append(jnp.transpose(y, (1, 0, 2, 3)))             # CNHW -> NCHW
    return tuple(outs)


# ----------------------------------------------------------------------------
# Deterministic parameter construction (shapes per ResUNetatt.__init__)
# ----------------------------------------------------------------------------
def init_params(key, in_nc=3, out_nc=(3,), ngf=8, flat_layers=(0, 0, 0, 3)):
    levels = len(flat_layers)
    assert all(l == 0 for l in flat_layers[:-1]), "outer flat blocks assumed empty"
    keys = iter(jax.random.split(key, 256))

    def nk():
        return next(keys)

    def conv_w(cout, cin, k):
        fan_in = cin * k * k
        return jax.random.normal(nk(), (cout, cin, k, k), jnp.float32) / jnp.sqrt(
            jnp.float32(fan_in))

    def bn(c):
        g = 1.0 + 0.1 * jax.random.normal(nk(), (c,), jnp.float32)
        b = 0.1 * jax.random.normal(nk(), (c,), jnp.float32)
        return g, b

    p = {}
    g, b = bn(ngf)
    p["in_conv"] = dict(w=conv_w(ngf, in_nc, 7), gamma=g, beta=b)

    downs, ups = [], []
    for d in range(levels - 1):
        cin = ngf * (2 ** d)
        cout = 2 * cin
        g1, b1 = bn(cout)
        g2, b2 = bn(cout)
        downs.append(dict(w1=conv_w(cout, cin, 3), g1=g1, b1=b1,
                          w2=conv_w(cout, cout, 3), g2=g2, b2=b2))
        gu, bu = bn(cin)
        ups.append(dict(w=conv_w(cin, cout, 3), g=gu, b=bu))
    p["down"] = downs
    p["up"] = ups

    cc = ngf * 2 ** (levels - 1)
    rbs = []
    for _ in range(flat_layers[-1]):
        g1, b1 = bn(cc)
        g2, b2 = bn(cc)
        rbs.append(dict(w1=conv_w(cc, cc, 3), g1=g1, b1=b1,
                        w2=conv_w(cc, cc, 3), g2=g2, b2=b2))
    p["resblocks"] = rbs

    p["heads"] = [dict(w=conv_w(c, ngf, 7)) for c in out_nc]
    return p


# ----------------------------------------------------------------------------
if __name__ == "__main__":
    key = jax.random.PRNGKey(0)
    kx, kp = jax.random.split(key)

    B, IN_NC, H, W = 2, 3, 16, 16
    NGF = 8
    OUT_NC = (3,)

    x = jax.random.normal(kx, (B, IN_NC, H, W), jnp.float32)
    params = init_params(kp, in_nc=IN_NC, out_nc=OUT_NC, ngf=NGF,
                         flat_layers=(0, 0, 0, 3))

    fwd = jax.jit(res_unet_att_forward)
    outs = jax.block_until_ready(fwd(params, x))

    assert isinstance(outs, tuple) and len(outs) == len(OUT_NC)
    assert outs[0].shape == (B, OUT_NC[0], H, W)
    assert bool(jnp.all(jnp.isfinite(outs[0])))
    assert bool(jnp.all(jnp.abs(outs[0]) <= 1.0 + 1e-6))  # tanh head

    print("KERNEL_OK")
</pallas_src>

<mosaic_0001>
module attributes {stable_mosaic.version = 11 : i64} {
  func.func @_matmul_stats_kernel(%arg0: i32, %arg1: memref<8x147xbf16, #tpu.memory_space<vmem>>, %arg2: memref<147x256xbf16, #tpu.memory_space<vmem>>, %arg3: memref<8x256xf32, #tpu.memory_space<vmem>>, %arg4: memref<8x1xf32, #tpu.memory_space<vmem>>, %arg5: memref<8x1xf32, #tpu.memory_space<vmem>>) attributes {dimension_semantics = [#tpu.dimension_semantics<arbitrary>], iteration_bounds = array<i64: 2>, scalar_prefetch = 0 : i64, scratch_operands = 0 : i64, tpu.core_type = #tpu.core_type<tc>, window_params = [{pipeline_mode = #tpu.pipeline_mode<synchronous>, transform_indices = @transform_0, window_bounds = array<i64: 8, 147>}, {transform_indices = @transform_1, window_bounds = array<i64: 147, 256>}, {transform_indices = @transform_2, window_bounds = array<i64: 8, 256>}, {pipeline_mode = #tpu.pipeline_mode<synchronous>, transform_indices = @transform_3, window_bounds = array<i64: 8, 1>}, {pipeline_mode = #tpu.pipeline_mode<synchronous>, transform_indices = @transform_4, window_bounds = array<i64: 8, 1>}]} {
    %c0 = arith.constant 0 : index
    %c0_0 = arith.constant 0 : index
    %0 = vector.load %arg1[%c0, %c0_0] : memref<8x147xbf16, #tpu.memory_space<vmem>>, vector<8x147xbf16>
    %c0_1 = arith.constant 0 : index
    %c0_2 = arith.constant 0 : index
    %1 = vector.load %arg2[%c0_1, %c0_2] : memref<147x256xbf16, #tpu.memory_space<vmem>>, vector<147x256xbf16>
    %cst = arith.constant dense<0.000000e+00> : vector<8x256xf32>
    %2 = tpu.matmul %0, %1, %cst {dimension_numbers = #tpu.dot_dimension_numbers<[1], [0], [0], [1], [0, 0, 1, 1], [], []>} : vector<8x147xbf16>, vector<147x256xbf16>, vector<8x256xf32> -> vector<8x256xf32>
    %c0_3 = arith.constant 0 : index
    %c0_4 = arith.constant 0 : index
    %3 = vector.load %arg3[%c0_3, %c0_4] : memref<8x256xf32, #tpu.memory_space<vmem>>, vector<8x256xf32>
    tpu.vector_store %arg3[%c0_3, %c0_4], %2 {strides = array<i32>} : memref<8x256xf32, #tpu.memory_space<vmem>>, vector<8x256xf32>,
    %c0_i32 = arith.constant 0 : i32
    %4 = arith.cmpi eq, %arg0, %c0_i32 : i32
    %5 = arith.extui %4 : i1 to i32
    %c0_i32_5 = arith.constant 0 : i32
    %6 = arith.cmpi ne, %5, %c0_i32_5 : i32
    scf.if %6 {
      %cst_16 = arith.constant 0.000000e+00 : f32
      %18 = vector.broadcast %cst_16 : f32 to vector<8x1xf32>
      %c0_17 = arith.constant 0 : index
      %c0_18 = arith.constant 0 : index
      %19 = vector.load %arg4[%c0_17, %c0_18] : memref<8x1xf32, #tpu.memory_space<vmem>>, vector<8x1xf32>
      tpu.vector_store %arg4[%c0_17, %c0_18], %18 {strides = array<i32>} : memref<8x1xf32, #tpu.memory_space<vmem>>, vector<8x1xf32>,
      %cst_19 = arith.constant 0.000000e+00 : f32
      %20 = vector.broadcast %cst_19 : f32 to vector<8x1xf32>
      %c0_20 = arith.constant 0 : index
      %c0_21 = arith.constant 0 : index
      %21 = vector.load %arg5[%c0_20, %c0_21] : memref<8x1xf32, #tpu.memory_space<vmem>>, vector<8x1xf32>
      tpu.vector_store %arg5[%c0_20, %c0_21], %20 {strides = array<i32>} : memref<8x1xf32, #tpu.memory_space<vmem>>, vector<8x1xf32>,
    } else {
    }
    %c0_6 = arith.constant 0 : index
    %c0_7 = arith.constant 0 : index
    %7 = vector.load %arg4[%c0_6, %c0_7] : memref<8x1xf32, #tpu.memory_space<vmem>>, vector<8x1xf32>
    %cst_8 = arith.constant dense<0.000000e+00> : vector<8xf32>
    %8 = vector.multi_reduction <add>, %2, %cst_8 [1] : vector<8x256xf32> to vector<8xf32>
    %9 = vector.shape_cast %8 : vector<8xf32> to vector<8x1xf32>
    %10 = arith.addf %7, %9 : vector<8x1xf32>
    %c0_9 = arith.constant 0 : index
    %c0_10 = arith.constant 0 : index
    %11 = vector.load %arg4[%c0_9, %c0_10] : memref<8x1xf32, #tpu.memory_space<vmem>>, vector<8x1xf32>
    tpu.vector_store %arg4[%c0_9, %c0_10], %10 {strides = array<i32>} : memref<8x1xf32, #tpu.memory_space<vmem>>, vector<8x1xf32>,
    %c0_11 = arith.constant 0 : index
    %c0_12 = arith.constant 0 : index
    %12 = vector.load %arg5[%c0_11, %c0_12] : memref<8x1xf32, #tpu.memory_space<vmem>>, vector<8x1xf32>
    %13 = arith.mulf %2, %2 : vector<8x256xf32>
    %cst_13 = arith.constant dense<0.000000e+00> : vector<8xf32>
    %14 = vector.multi_reduction <add>, %13, %cst_13 [1] : vector<8x256xf32> to vector<8xf32>
    %15 = vector.shape_cast %14 : vector<8xf32> to vector<8x1xf32>
    %16 = arith.addf %12, %15 : vector<8x1xf32>
    %c0_14 = arith.constant 0 : index
    %c0_15 = arith.constant 0 : index
    %17 = vector.load %arg5[%c0_14, %c0_15] : memref<8x1xf32, #tpu.memory_space<vmem>>, vector<8x1xf32>
    tpu.vector_store %arg5[%c0_14, %c0_15], %16 {strides = array<i32>} : memref<8x1xf32, #tpu.memory_space<vmem>>, vector<8x1xf32>,
    return
  }
  func.func @transform_0(%arg0: i32) -> (i32, i32) {
    %c0_i32 = arith.constant 0 : i32
    %c0_i32_0 = arith.constant 0 : i32
    %c0_i32_1 = arith.constant 0 : i32
    return %c0_i32, %c0_i32_0 : i32, i32
  }
  func.func @transform_1(%arg0: i32) -> (i32, i32) {
    %c0_i32 = arith.constant 0 : i32
    %c0_i32_0 = arith.constant 0 : i32
    return %c0_i32, %arg0 : i32, i32
  }
  func.func @transform_2(%arg0: i32) -> (i32, i32) {
    %c0_i32 = arith.constant 0 : i32
    %c0_i32_0 = arith.constant 0 : i32
    return %c0_i32, %arg0 : i32, i32
  }
  func.func @transform_3(%arg0: i32) -> (i32, i32) {
    %c0_i32 = arith.constant 0 : i32
    %c0_i32_0 = arith.constant 0 : i32
    %c0_i32_1 = arith.constant 0 : i32
    return %c0_i32, %c0_i32_0 : i32, i32
  }
  func.func @transform_4(%arg0: i32) -> (i32, i32) {
    %c0_i32 = arith.constant 0 : i32
    %c0_i32_0 = arith.constant 0 : i32
    %c0_i32_1 = arith.constant 0 : i32
    return %c0_i32, %c0_i32_0 : i32, i32
  }
}

module attributes {stable_mosaic.version = 11 : i64} {
  func.func @kernel(%arg0: i32, %arg1: memref<8x256xf32, #tpu.memory_space<vmem>>, %arg2: memref<8x1xf32, #tpu.memory_space<vmem>>, %arg3: memref<8x1xf32, #tpu.memory_space<vmem>>, %arg4: memref<8x256xf32, #tpu.memory_space<vmem>>) attributes {dimension_semantics = [#tpu.dimension_semantics<parallel>], iteration_bounds = array<i64: 2>, scalar_prefetch = 0 : i64, scratch_operands = 0 : i64, tpu.core_type = #tpu.core_type<tc>, window_params = [{transform_indices = @transform_0, window_bounds = array<i64: 8, 256>}, {pipeline_mode = #tpu.pipeline_mode<synchronous>, transform_indices = @transform_1, window_bounds = array<i64: 8, 1>}, {pipeline_mode = #tpu.pipeline_mode<synchronous>, transform_indices = @transform_2, window_bounds = array<i64: 8, 1>}, {transform_indices = @transform_3, window_bounds = array<i64: 8, 256>}]} {
    %c0 = arith.constant 0 : index
    %c0_0 = arith.constant 0 : index
    %0 = vector.load %arg1[%c0, %c0_0] : memref<8x256xf32, #tpu.memory_space<vmem>>, vector<8x256xf32>
    %c0_1 = arith.constant 0 : index
    %c0_2 = arith.constant 0 : index
    %1 = vector.load %arg2[%c0_1, %c0_2] : memref<8x1xf32, #tpu.memory_space<vmem>>, vector<8x1xf32>
    %2 = vector.broadcast %1 : vector<8x1xf32> to vector<8x256xf32>
    %3 = arith.mulf %0, %2 : vector<8x256xf32>
    %c0_3 = arith.constant 0 : index
    %c0_4 = arith.constant 0 : index
    %4 = vector.load %arg3[%c0_3, %c0_4] : memref<8x1xf32, #tpu.memory_space<vmem>>, vector<8x1xf32>
    %5 = vector.broadcast %4 : vector<8x1xf32> to vector<8x256xf32>
    %6 = arith.addf %3, %5 : vector<8x256xf32>
    %cst = arith.constant 0.000000e+00 : f32
    %7 = vector.broadcast %cst : f32 to vector<8x256xf32>
    %8 = arith.maximumf %6, %7 : vector<8x256xf32>
    %c0_5 = arith.constant 0 : index
    %c0_6 = arith.constant 0 : index
    %9 = vector.load %arg4[%c0_5, %c0_6] : memref<8x256xf32, #tpu.memory_space<vmem>>, vector<8x256xf32>
    tpu.vector_store %arg4[%c0_5, %c0_6], %8 {strides = array<i32>} : memref<8x256xf32, #tpu.memory_space<vmem>>, vector<8x256xf32>,
    return
  }
  func.func @transform_0(%arg0: i32) -> (i32, i32) {
    %c0_i32 = arith.constant 0 : i32
    %c0_i32_0 = arith.constant 0 : i32
    return %c0_i32, %arg0 : i32, i32
  }
  func.func @transform_1(%arg0: i32) -> (i32, i32) {
    %c0_i32 = arith.constant 0 : i32
    %c0_i32_0 = arith.constant 0 : i32
    %c0_i32_1 = arith.constant 0 : i32
    return %c0_i32, %c0_i32_0 : i32, i32
  }
  func.func @transform_2(%arg0: i32) -> (i32, i32) {
    %c0_i32 = arith.constant 0 : i32
    %c0_i32_0 = arith.constant 0 : i32
    %c0_i32_1 = arith.constant 0 : i32
    return %c0_i32, %c0_i32_0 : i32, i32
  }
  func.func @transform_3(%arg0: i32) -> (i32, i32) {
    %c0_i32 = arith.constant 0 : i32
    %c0_i32_0 = arith.constant 0 : i32
    return %c0_i32, %arg0 : i32, i32
  }
}

module attributes {stable_mosaic.version = 11 : i64} {
  func.func @_matmul_stats_kernel(%arg0: i32, %arg1: memref<16x72xbf16, #tpu.memory_space<vmem>>, %arg2: memref<72x128xbf16, #tpu.memory_space<vmem>>, %arg3: memref<16x128xf32, #tpu.memory_space<vmem>>, %arg4: memref<16x1xf32, #tpu.memory_space<vmem>>, %arg5: memref<16x1xf32, #tpu.memory_space<vmem>>) attributes {dimension_semantics = [#tpu.dimension_semantics<arbitrary>], iteration_bounds = array<i64: 1>, scalar_prefetch = 0 : i64, scratch_operands = 0 : i64, tpu.core_type = #tpu.core_type<tc>, window_params = [{pipeline_mode = #tpu.pipeline_mode<synchronous>, transform_indices = @transform_0, window_bounds = array<i64: 16, 72>}, {transform_indices = @transform_1, window_bounds = array<i64: 72, 128>}, {transform_indices = @transform_2, window_bounds = array<i64: 16, 128>}, {pipeline_mode = #tpu.pipeline_mode<synchronous>, transform_indices = @transform_3, window_bounds = array<i64: 16, 1>}, {pipeline_mode = #tpu.pipeline_mode<synchronous>, transform_indices = @transform_4, window_bounds = array<i64: 16, 1>}]} {
    %c0 = arith.constant 0 : index
    %c0_0 = arith.constant 0 : index
    %0 = vector.load %arg1[%c0, %c0_0] : memref<16x72xbf16, #tpu.memory_space<vmem>>, vector<16x72xbf16>
    %c0_1 = arith.constant 0 : index
    %c0_2 = arith.constant 0 : index
    %1 = vector.load %arg2[%c0_1, %c0_2] : memref<72x128xbf16, #tpu.memory_space<vmem>>, vector<72x128xbf16>
    %cst = arith.constant dense<0.000000e+00> : vector<16x128xf32>
    %2 = tpu.matmul %0, %1, %cst {dimension_numbers = #tpu.dot_dimension_numbers<[1], [0], [0], [1], [0, 0, 1, 1], [], []>} : vector<16x72xbf16>, vector<72x128xbf16>, vector<16x128xf32> -> vector<16x128xf32>
    %c0_3 = arith.constant 0 : index
    %c0_4 = arith.constant 0 : index
    %3 = vector.load %arg3[%c0_3, %c0_4] : memref<16x128xf32, #tpu.memory_space<vmem>>, vector<16x128xf32>
    tpu.vector_store %arg3[%c0_3, %c0_4], %2 {strides = array<i32>} : memref<16x128xf32, #tpu.memory_space<vmem>>, vector<16x128xf32>,
    %c0_i32 = arith.constant 0 : i32
    %4 = arith.cmpi eq, %arg0, %c0_i32 : i32
    %5 = arith.extui %4 : i1 to i32
    %c0_i32_5 = arith.constant 0 : i32
    %6 = arith.cmpi ne, %5, %c0_i32_5 : i32
    scf.if %6 {
      %cst_16 = arith.constant 0.000000e+00 : f32
      %18 = vector.broadcast %cst_16 : f32 to vector<16x1xf32>
      %c0_17 = arith.constant 0 : index
      %c0_18 = arith.constant 0 : index
      %19 = vector.load %arg4[%c0_17, %c0_18] : memref<16x1xf32, #tpu.memory_space<vmem>>, vector<16x1xf32>
      tpu.vector_store %arg4[%c0_17, %c0_18], %18 {strides = array<i32>} : memref<16x1xf32, #tpu.memory_space<vmem>>, vector<16x1xf32>,
      %cst_19 = arith.constant 0.000000e+00 : f32
      %20 = vector.broadcast %cst_19 : f32 to vector<16x1xf32>
      %c0_20 = arith.constant 0 : index
      %c0_21 = arith.constant 0 : index
      %21 = vector.load %arg5[%c0_20, %c0_21] : memref<16x1xf32, #tpu.memory_space<vmem>>, vector<16x1xf32>
      tpu.vector_store %arg5[%c0_20, %c0_21], %20 {strides = array<i32>} : memref<16x1xf32, #tpu.memory_space<vmem>>, vector<16x1xf32>,
    } else {
    }
    %c0_6 = arith.constant 0 : index
    %c0_7 = arith.constant 0 : index
    %7 = vector.load %arg4[%c0_6, %c0_7] : memref<16x1xf32, #tpu.memory_space<vmem>>, vector<16x1xf32>
    %cst_8 = arith.constant dense<0.000000e+00> : vector<16xf32>
    %8 = vector.multi_reduction <add>, %2, %cst_8 [1] : vector<16x128xf32> to vector<16xf32>
    %9 = vector.shape_cast %8 : vector<16xf32> to vector<16x1xf32>
    %10 = arith.addf %7, %9 : vector<16x1xf32>
    %c0_9 = arith.constant 0 : index
    %c0_10 = arith.constant 0 : index
    %11 = vector.load %arg4[%c0_9, %c0_10] : memref<16x1xf32, #tpu.memory_space<vmem>>, vector<16x1xf32>
    tpu.vector_store %arg4[%c0_9, %c0_10], %10 {strides = array<i32>} : memref<16x1xf32, #tpu.memory_space<vmem>>, vector<16x1xf32>,
    %c0_11 = arith.constant 0 : index
    %c0_12 = arith.constant 0 : index
    %12 = vector.load %arg5[%c0_11, %c0_12] : memref<16x1xf32, #tpu.memory_space<vmem>>, vector<16x1xf32>
    %13 = arith.mulf %2, %2 : vector<16x128xf32>
    %cst_13 = arith.constant dense<0.000000e+00> : vector<16xf32>
    %14 = vector.multi_reduction <add>, %13, %cst_13 [1] : vector<16x128xf32> to vector<16xf32>
    %15 = vector.shape_cast %14 : vector<16xf32> to vector<16x1xf32>
    %16 = arith.addf %12, %15 : vector<16x1xf32>
    %c0_14 = arith.constant 0 : index
    %c0_15 = arith.constant 0 : index
    %17 = vector.load %arg5[%c0_14, %c0_15] : memref<16x1xf32, #tpu.memory_space<vmem>>, vector<16x1xf32>
    tpu.vector_store %arg5[%c0_14, %c0_15], %16 {strides = array<i32>} : memref<16x1xf32, #tpu.memory_space<vmem>>, vector<16x1xf32>,
    return
  }
  func.func @transform_0(%arg0: i32) -> (i32, i32) {
    %c0_i32 = arith.constant 0 : i32
    %c0_i32_0 = arith.constant 0 : i32
    %c0_i32_1 = arith.constant 0 : i32
    return %c0_i32, %c0_i32_0 : i32, i32
  }
  func.func @transform_1(%arg0: i32) -> (i32, i32) {
    %c0_i32 = arith.constant 0 : i32
    %c0_i32_0 = arith.constant 0 : i32
    return %c0_i32, %arg0 : i32, i32
  }
  func.func @transform_2(%arg0: i32) -> (i32, i32) {
    %c0_i32 = arith.constant 0 : i32
    %c0_i32_0 = arith.constant 0 : i32
    return %c0_i32, %arg0 : i32, i32
  }
  func.func @transform_3(%arg0: i32) -> (i32, i32) {
    %c0_i32 = arith.constant 0 : i32
    %c0_i32_0 = arith.constant 0 : i32
    %c0_i32_1 = arith.constant 0 : i32
    return %c0_i32, %c0_i32_0 : i32, i32
  }
  func.func @transform_4(%arg0: i32) -> (i32, i32) {
    %c0_i32 = arith.constant 0 : i32
    %c0_i32_0 = arith.constant 0 : i32
    %c0_i32_1 = arith.constant 0 : i32
    return %c0_i32, %c0_i32_0 : i32, i32
  }
}

module attributes {stable_mosaic.version = 11 : i64} {
  func.func @kernel(%arg0: i32, %arg1: memref<16x128xf32, #tpu.memory_space<vmem>>, %arg2: memref<16x1xf32, #tpu.memory_space<vmem>>, %arg3: memref<16x1xf32, #tpu.memory_space<vmem>>, %arg4: memref<16x128xf32, #tpu.memory_space<vmem>>) attributes {dimension_semantics = [#tpu.dimension_semantics<parallel>], iteration_bounds = array<i64: 1>, scalar_prefetch = 0 : i64, scratch_operands = 0 : i64, tpu.core_type = #tpu.core_type<tc>, window_params = [{transform_indices = @transform_0, window_bounds = array<i64: 16, 128>}, {pipeline_mode = #tpu.pipeline_mode<synchronous>, transform_indices = @transform_1, window_bounds = array<i64: 16, 1>}, {pipeline_mode = #tpu.pipeline_mode<synchronous>, transform_indices = @transform_2, window_bounds = array<i64: 16, 1>}, {transform_indices = @transform_3, window_bounds = array<i64: 16, 128>}]} {
    %c0 = arith.constant 0 : index
    %c0_0 = arith.constant 0 : index
    %0 = vector.load %arg1[%c0, %c0_0] : memref<16x128xf32, #tpu.memory_space<vmem>>, vector<16x128xf32>
    %c0_1 = arith.constant 0 : index
    %c0_2 = arith.constant 0 : index
    %1 = vector.load %arg2[%c0_1, %c0_2] : memref<16x1xf32, #tpu.memory_space<vmem>>, vector<16x1xf32>
    %2 = vector.broadcast %1 : vector<16x1xf32> to vector<16x128xf32>
    %3 = arith.mulf %0, %2 : vector<16x128xf32>
    %c0_3 = arith.constant 0 : index
    %c0_4 = arith.constant 0 : index
    %4 = vector.load %arg3[%c0_3, %c0_4] : memref<16x1xf32, #tpu.memory_space<vmem>>, vector<16x1xf32>
    %5 = vector.broadcast %4 : vector<16x1xf32> to vector<16x128xf32>
    %6 = arith.addf %3, %5 : vector<16x128xf32>
    %cst = arith.constant 0.000000e+00 : f32
    %7 = vector.broadcast %cst : f32 to vector<16x128xf32>
    %8 = arith.maximumf %6, %7 : vector<16x128xf32>
    %c0_5 = arith.constant 0 : index
    %c0_6 = arith.constant 0 : index
    %9 = vector.load %arg4[%c0_5, %c0_6] : memref<16x128xf32, #tpu.memory_space<vmem>>, vector<16x128xf32>
    tpu.vector_store %arg4[%c0_5, %c0_6], %8 {strides = array<i32>} : memref<16x128xf32, #tpu.memory_space<vmem>>, vector<16x128xf32>,
    return
  }
  func.func @transform_0(%arg0: i32) -> (i32, i32) {
    %c0_i32 = arith.constant 0 : i32
    %c0_i32_0 = arith.constant 0 : i32
    return %c0_i32, %arg0 : i32, i32
  }
  func.func @transform_1(%arg0: i32) -> (i32, i32) {
    %c0_i32 = arith.constant 0 : i32
    %c0_i32_0 = arith.constant 0 : i32
    %c0_i32_1 = arith.constant 0 : i32
    return %c0_i32, %c0_i32_0 : i32, i32
  }
  func.func @transform_2(%arg0: i32) -> (i32, i32) {
    %c0_i32 = arith.constant 0 : i32
    %c0_i32_0 = arith.constant 0 : i32
    %c0_i32_1 = arith.constant 0 : i32
    return %c0_i32, %c0_i32_0 : i32, i32
  }
  func.func @transform_3(%arg0: i32) -> (i32, i32) {
    %c0_i32 = arith.constant 0 : i32
    %c0_i32_0 = arith.constant 0 : i32
    return %c0_i32, %arg0 : i32, i32
  }
}

module attributes {stable_mosaic.version = 11 : i64} {
  func.func @_matmul_stats_kernel(%arg0: i32, %arg1: memref<16x144xbf16, #tpu.memory_space<vmem>>, %arg2: memref<144x128xbf16, #tpu.memory_space<vmem>>, %arg3: memref<16x128xf32, #tpu.memory_space<vmem>>, %arg4: memref<16x1xf32, #tpu.memory_space<vmem>>, %arg5: memref<16x1xf32, #tpu.memory_space<vmem>>) attributes {dimension_semantics = [#tpu.dimension_semantics<arbitrary>], iteration_bounds = array<i64: 1>, scalar_prefetch = 0 : i64, scratch_operands = 0 : i64, tpu.core_type = #tpu.core_type<tc>, window_params = [{pipeline_mode = #tpu.pipeline_mode<synchronous>, transform_indices = @transform_0, window_bounds = array<i64: 16, 144>}, {transform_indices = @transform_1, window_bounds = array<i64: 144, 128>}, {transform_indices = @transform_2, window_bounds = array<i64: 16, 128>}, {pipeline_mode = #tpu.pipeline_mode<synchronous>, transform_indices = @transform_3, window_bounds = array<i64: 16, 1>}, {pipeline_mode = #tpu.pipeline_mode<synchronous>, transform_indices = @transform_4, window_bounds = array<i64: 16, 1>}]} {
    %c0 = arith.constant 0 : index
    %c0_0 = arith.constant 0 : index
    %0 = vector.load %arg1[%c0, %c0_0] : memref<16x144xbf16, #tpu.memory_space<vmem>>, vector<16x144xbf16>
    %c0_1 = arith.constant 0 : index
    %c0_2 = arith.constant 0 : index
    %1 = vector.load %arg2[%c0_1, %c0_2] : memref<144x128xbf16, #tpu.memory_space<vmem>>, vector<144x128xbf16>
    %cst = arith.constant dense<0.000000e+00> : vector<16x128xf32>
    %2 = tpu.matmul %0, %1, %cst {dimension_numbers = #tpu.dot_dimension_numbers<[1], [0], [0], [1], [0, 0, 1, 1], [], []>} : vector<16x144xbf16>, vector<144x128xbf16>, vector<16x128xf32> -> vector<16x128xf32>
    %c0_3 = arith.constant 0 : index
    %c0_4 = arith.constant 0 : index
    %3 = vector.load %arg3[%c0_3, %c0_4] : memref<16x128xf32, #tpu.memory_space<vmem>>, vector<16x128xf32>
    tpu.vector_store %arg3[%c0_3, %c0_4], %2 {strides = array<i32>} : memref<16x128xf32, #tpu.memory_space<vmem>>, vector<16x128xf32>,
    %c0_i32 = arith.constant 0 : i32
    %4 = arith.cmpi eq, %arg0, %c0_i32 : i32
    %5 = arith.extui %4 : i1 to i32
    %c0_i32_5 = arith.constant 0 : i32
    %6 = arith.cmpi ne, %5, %c0_i32_5 : i32
    scf.if %6 {
      %cst_16 = arith.constant 0.000000e+00 : f32
      %18 = vector.broadcast %cst_16 : f32 to vector<16x1xf32>
      %c0_17 = arith.constant 0 : index
      %c0_18 = arith.constant 0 : index
      %19 = vector.load %arg4[%c0_17, %c0_18] : memref<16x1xf32, #tpu.memory_space<vmem>>, vector<16x1xf32>
      tpu.vector_store %arg4[%c0_17, %c0_18], %18 {strides = array<i32>} : memref<16x1xf32, #tpu.memory_space<vmem>>, vector<16x1xf32>,
      %cst_19 = arith.constant 0.000000e+00 : f32
      %20 = vector.broadcast %cst_19 : f32 to vector<16x1xf32>
      %c0_20 = arith.constant 0 : index
      %c0_21 = arith.constant 0 : index
      %21 = vector.load %arg5[%c0_20, %c0_21] : memref<16x1xf32, #tpu.memory_space<vmem>>, vector<16x1xf32>
      tpu.vector_store %arg5[%c0_20, %c0_21], %20 {strides = array<i32>} : memref<16x1xf32, #tpu.memory_space<vmem>>, vector<16x1xf32>,
    } else {
    }
    %c0_6 = arith.constant 0 : index
    %c0_7 = arith.constant 0 : index
    %7 = vector.load %arg4[%c0_6, %c0_7] : memref<16x1xf32, #tpu.memory_space<vmem>>, vector<16x1xf32>
    %cst_8 = arith.constant dense<0.000000e+00> : vector<16xf32>
    %8 = vector.multi_reduction <add>, %2, %cst_8 [1] : vector<16x128xf32> to vector<16xf32>
    %9 = vector.shape_cast %8 : vector<16xf32> to vector<16x1xf32>
    %10 = arith.addf %7, %9 : vector<16x1xf32>
    %c0_9 = arith.constant 0 : index
    %c0_10 = arith.constant 0 : index
    %11 = vector.load %arg4[%c0_9, %c0_10] : memref<16x1xf32, #tpu.memory_space<vmem>>, vector<16x1xf32>
    tpu.vector_store %arg4[%c0_9, %c0_10], %10 {strides = array<i32>} : memref<16x1xf32, #tpu.memory_space<vmem>>, vector<16x1xf32>,
    %c0_11 = arith.constant 0 : index
    %c0_12 = arith.constant 0 : index
    %12 = vector.load %arg5[%c0_11, %c0_12] : memref<16x1xf32, #tpu.memory_space<vmem>>, vector<16x1xf32>
    %13 = arith.mulf %2, %2 : vector<16x128xf32>
    %cst_13 = arith.constant dense<0.000000e+00> : vector<16xf32>
    %14 = vector.multi_reduction <add>, %13, %cst_13 [1] : vector<16x128xf32> to vector<16xf32>
    %15 = vector.shape_cast %14 : vector<16xf32> to vector<16x1xf32>
    %16 = arith.addf %12, %15 : vector<16x1xf32>
    %c0_14 = arith.constant 0 : index
    %c0_15 = arith.constant 0 : index
    %17 = vector.load %arg5[%c0_14, %c0_15] : memref<16x1xf32, #tpu.memory_space<vmem>>, vector<16x1xf32>
    tpu.vector_store %arg5[%c0_14, %c0_15], %16 {strides = array<i32>} : memref<16x1xf32, #tpu.memory_space<vmem>>, vector<16x1xf32>,
    return
  }
  func.func @transform_0(%arg0: i32) -> (i32, i32) {
    %c0_i32 = arith.constant 0 : i32
    %c0_i32_0 = arith.constant 0 : i32
    %c0_i32_1 = arith.constant 0 : i32
    return %c0_i32, %c0_i32_0 : i32, i32
  }
  func.func @transform_1(%arg0: i32) -> (i32, i32) {
    %c0_i32 = arith.constant 0 : i32
    %c0_i32_0 = arith.constant 0 : i32
    return %c0_i32, %arg0 : i32, i32
  }
  func.func @transform_2(%arg0: i32) -> (i32, i32) {
    %c0_i32 = arith.constant 0 : i32
    %c0_i32_0 = arith.constant 0 : i32
    return %c0_i32, %arg0 : i32, i32
  }
  func.func @transform_3(%arg0: i32) -> (i32, i32) {
    %c0_i32 = arith.constant 0 : i32
    %c0_i32_0 = arith.constant 0 : i32
    %c0_i32_1 = arith.constant 0 : i32
    return %c0_i32, %c0_i32_0 : i32, i32
  }
  func.func @transform_4(%arg0: i32) -> (i32, i32) {
    %c0_i32 = arith.constant 0 : i32
    %c0_i32_0 = arith.constant 0 : i32
    %c0_i32_1 = arith.constant 0 : i32
    return %c0_i32, %c0_i32_0 : i32, i32
  }
}

module attributes {stable_mosaic.version = 11 : i64} {
  func.func @_matmul_stats_kernel(%arg0: i32, %arg1: memref<32x144xbf16, #tpu.memory_space<vmem>>, %arg2: memref<144x32xbf16, #tpu.memory_space<vmem>>, %arg3: memref<32x32xf32, #tpu.memory_space<vmem>>, %arg4: memref<32x1xf32, #tpu.memory_space<vmem>>, %arg5: memref<32x1xf32, #tpu.memory_space<vmem>>) attributes {dimension_semantics = [#tpu.dimension_semantics<arbitrary>], iteration_bounds = array<i64: 1>, scalar_prefetch = 0 : i64, scratch_operands = 0 : i64, tpu.core_type = #tpu.core_type<tc>, window_params = [{pipeline_mode = #tpu.pipeline_mode<synchronous>, transform_indices = @transform_0, window_bounds = array<i64: 32, 144>}, {transform_indices = @transform_1, window_bounds = array<i64: 144, 32>}, {transform_indices = @transform_2, window_bounds = array<i64: 32, 32>}, {pipeline_mode = #tpu.pipeline_mode<synchronous>, transform_indices = @transform_3, window_bounds = array<i64: 32, 1>}, {pipeline_mode = #tpu.pipeline_mode<synchronous>, transform_indices = @transform_4, window_bounds = array<i64: 32, 1>}]} {
    %c0 = arith.constant 0 : index
    %c0_0 = arith.constant 0 : index
    %0 = vector.load %arg1[%c0, %c0_0] : memref<32x144xbf16, #tpu.memory_space<vmem>>, vector<32x144xbf16>
    %c0_1 = arith.constant 0 : index
    %c0_2 = arith.constant 0 : index
    %1 = vector.load %arg2[%c0_1, %c0_2] : memref<144x32xbf16, #tpu.memory_space<vmem>>, vector<144x32xbf16>
    %cst = arith.constant dense<0.000000e+00> : vector<32x32xf32>
    %2 = tpu.matmul %0, %1, %cst {dimension_numbers = #tpu.dot_dimension_numbers<[1], [0], [0], [1], [0, 0, 1, 1], [], []>} : vector<32x144xbf16>, vector<144x32xbf16>, vector<32x32xf32> -> vector<32x32xf32>
    %c0_3 = arith.constant 0 : index
    %c0_4 = arith.constant 0 : index
    %3 = vector.load %arg3[%c0_3, %c0_4] : memref<32x32xf32, #tpu.memory_space<vmem>>, vector<32x32xf32>
    tpu.vector_store %arg3[%c0_3, %c0_4], %2 {strides = array<i32>} : memref<32x32xf32, #tpu.memory_space<vmem>>, vector<32x32xf32>,
    %c0_i32 = arith.constant 0 : i32
    %4 = arith.cmpi eq, %arg0, %c0_i32 : i32
    %5 = arith.extui %4 : i1 to i32
    %c0_i32_5 = arith.constant 0 : i32
    %6 = arith.cmpi ne, %5, %c0_i32_5 : i32
    scf.if %6 {
      %cst_16 = arith.constant 0.000000e+00 : f32
      %18 = vector.broadcast %cst_16 : f32 to vector<32x1xf32>
      %c0_17 = arith.constant 0 : index
      %c0_18 = arith.constant 0 : index
      %19 = vector.load %arg4[%c0_17, %c0_18] : memref<32x1xf32, #tpu.memory_space<vmem>>, vector<32x1xf32>
      tpu.vector_store %arg4[%c0_17, %c0_18], %18 {strides = array<i32>} : memref<32x1xf32, #tpu.memory_space<vmem>>, vector<32x1xf32>,
      %cst_19 = arith.constant 0.000000e+00 : f32
      %20 = vector.broadcast %cst_19 : f32 to vector<32x1xf32>
      %c0_20 = arith.constant 0 : index
      %c0_21 = arith.constant 0 : index
      %21 = vector.load %arg5[%c0_20, %c0_21] : memref<32x1xf32, #tpu.memory_space<vmem>>, vector<32x1xf32>
      tpu.vector_store %arg5[%c0_20, %c0_21], %20 {strides = array<i32>} : memref<32x1xf32, #tpu.memory_space<vmem>>, vector<32x1xf32>,
    } else {
    }
    %c0_6 = arith.constant 0 : index
    %c0_7 = arith.constant 0 : index
    %7 = vector.load %arg4[%c0_6, %c0_7] : memref<32x1xf32, #tpu.memory_space<vmem>>, vector<32x1xf32>
    %cst_8 = arith.constant dense<0.000000e+00> : vector<32xf32>
    %8 = vector.multi_reduction <add>, %2, %cst_8 [1] : vector<32x32xf32> to vector<32xf32>
    %9 = vector.shape_cast %8 : vector<32xf32> to vector<32x1xf32>
    %10 = arith.addf %7, %9 : vector<32x1xf32>
    %c0_9 = arith.constant 0 : index
    %c0_10 = arith.constant 0 : index
    %11 = vector.load %arg4[%c0_9, %c0_10] : memref<32x1xf32, #tpu.memory_space<vmem>>, vector<32x1xf32>
    tpu.vector_store %arg4[%c0_9, %c0_10], %10 {strides = array<i32>} : memref<32x1xf32, #tpu.memory_space<vmem>>, vector<32x1xf32>,
    %c0_11 = arith.constant 0 : index
    %c0_12 = arith.constant 0 : index
    %12 = vector.load %arg5[%c0_11, %c0_12] : memref<32x1xf32, #tpu.memory_space<vmem>>, vector<32x1xf32>
    %13 = arith.mulf %2, %2 : vector<32x32xf32>
    %cst_13 = arith.constant dense<0.000000e+00> : vector<32xf32>
    %14 = vector.multi_reduction <add>, %13, %cst_13 [1] : vector<32x32xf32> to vector<32xf32>
    %15 = vector.shape_cast %14 : vector<32xf32> to vector<32x1xf32>
    %16 = arith.addf %12, %15 : vector<32x1xf32>
    %c0_14 = arith.constant 0 : index
    %c0_15 = arith.constant 0 : index
    %17 = vector.load %arg5[%c0_14, %c0_15] : memref<32x1xf32, #tpu.memory_space<vmem>>, vector<32x1xf32>
    tpu.vector_store %arg5[%c0_14, %c0_15], %16 {strides = array<i32>} : memref<32x1xf32, #tpu.memory_space<vmem>>, vector<32x1xf32>,
    return
  }
  func.func @transform_0(%arg0: i32) -> (i32, i32) {
    %c0_i32 = arith.constant 0 : i32
    %c0_i32_0 = arith.constant 0 : i32
    %c0_i32_1 = arith.constant 0 : i32
    return %c0_i32, %c0_i32_0 : i32, i32
  }
  func.func @transform_1(%arg0: i32) -> (i32, i32) {
    %c0_i32 = arith.constant 0 : i32
    %c0_i32_0 = arith.constant 0 : i32
    return %c0_i32, %arg0 : i32, i32
  }
  func.func @transform_2(%arg0: i32) -> (i32, i32) {
    %c0_i32 = arith.constant 0 : i32
    %c0_i32_0 = arith.constant 0 : i32
    return %c0_i32, %arg0 : i32, i32
  }
  func.func @transform_3(%arg0: i32) -> (i32, i32) {
    %c0_i32 = arith.constant 0 : i32
    %c0_i32_0 = arith.constant 0 : i32
    %c0_i32_1 = arith.constant 0 : i32
    return %c0_i32, %c0_i32_0 : i32, i32
  }
  func.func @transform_4(%arg0: i32) -> (i32, i32) {
    %c0_i32 = arith.constant 0 : i32
    %c0_i32_0 = arith.constant 0 : i32
    %c0_i32_1 = arith.constant 0 : i32
    return %c0_i32, %c0_i32_0 : i32, i32
  }
}

module attributes {stable_mosaic.version = 11 : i64} {
  func.func @kernel(%arg0: i32, %arg1: memref<32x32xf32, #tpu.memory_space<vmem>>, %arg2: memref<32x1xf32, #tpu.memory_space<vmem>>, %arg3: memref<32x1xf32, #tpu.memory_space<vmem>>, %arg4: memref<32x32xf32, #tpu.memory_space<vmem>>) attributes {dimension_semantics = [#tpu.dimension_semantics<parallel>], iteration_bounds = array<i64: 1>, scalar_prefetch = 0 : i64, scratch_operands = 0 : i64, tpu.core_type = #tpu.core_type<tc>, window_params = [{transform_indices = @transform_0, window_bounds = array<i64: 32, 32>}, {pipeline_mode = #tpu.pipeline_mode<synchronous>, transform_indices = @transform_1, window_bounds = array<i64: 32, 1>}, {pipeline_mode = #tpu.pipeline_mode<synchronous>, transform_indices = @transform_2, window_bounds = array<i64: 32, 1>}, {transform_indices = @transform_3, window_bounds = array<i64: 32, 32>}]} {
    %c0 = arith.constant 0 : index
    %c0_0 = arith.constant 0 : index
    %0 = vector.load %arg1[%c0, %c0_0] : memref<32x32xf32, #tpu.memory_space<vmem>>, vector<32x32xf32>
    %c0_1 = arith.constant 0 : index
    %c0_2 = arith.constant 0 : index
    %1 = vector.load %arg2[%c0_1, %c0_2] : memref<32x1xf32, #tpu.memory_space<vmem>>, vector<32x1xf32>
    %2 = vector.broadcast %1 : vector<32x1xf32> to vector<32x32xf32>
    %3 = arith.mulf %0, %2 : vector<32x32xf32>
    %c0_3 = arith.constant 0 : index
    %c0_4 = arith.constant 0 : index
    %4 = vector.load %arg3[%c0_3, %c0_4] : memref<32x1xf32, #tpu.memory_space<vmem>>, vector<32x1xf32>
    %5 = vector.broadcast %4 : vector<32x1xf32> to vector<32x32xf32>
    %6 = arith.addf %3, %5 : vector<32x32xf32>
    %cst = arith.constant 0.000000e+00 : f32
    %7 = vector.broadcast %cst : f32 to vector<32x32xf32>
    %8 = arith.maximumf %6, %7 : vector<32x32xf32>
    %c0_5 = arith.constant 0 : index
    %c0_6 = arith.constant 0 : index
    %9 = vector.load %arg4[%c0_5, %c0_6] : memref<32x32xf32, #tpu.memory_space<vmem>>, vector<32x32xf32>
    tpu.vector_store %arg4[%c0_5, %c0_6], %8 {strides = array<i32>} : memref<32x32xf32, #tpu.memory_space<vmem>>, vector<32x32xf32>,
    return
  }
  func.func @transform_0(%arg0: i32) -> (i32, i32) {
    %c0_i32 = arith.constant 0 : i32
    %c0_i32_0 = arith.constant 0 : i32
    return %c0_i32, %arg0 : i32, i32
  }
  func.func @transform_1(%arg0: i32) -> (i32, i32) {
    %c0_i32 = arith.constant 0 : i32
    %c0_i32_0 = arith.constant 0 : i32
    %c0_i32_1 = arith.constant 0 : i32
    return %c0_i32, %c0_i32_0 : i32, i32
  }
  func.func @transform_2(%arg0: i32) -> (i32, i32) {
    %c0_i32 = arith.constant 0 : i32
    %c0_i32_0 = arith.constant 0 : i32
    %c0_i32_1 = arith.constant 0 : i32
    return %c0_i32, %c0_i32_0 : i32, i32
  }
  func.func @transform_3(%arg0: i32) -> (i32, i32) {
    %c0_i32 = arith.constant 0 : i32
    %c0_i32_0 = arith.constant 0 : i32
    return %c0_i32, %arg0 : i32, i32
  }
}

module attributes {stable_mosaic.version = 11 : i64} {
  func.func @_matmul_stats_kernel(%arg0: i32, %arg1: memref<32x288xbf16, #tpu.memory_space<vmem>>, %arg2: memref<288x32xbf16, #tpu.memory_space<vmem>>, %arg3: memref<32x32xf32, #tpu.memory_space<vmem>>, %arg4: memref<32x1xf32, #tpu.memory_space<vmem>>, %arg5: memref<32x1xf32, #tpu.memory_space<vmem>>) attributes {dimension_semantics = [#tpu.dimension_semantics<arbitrary>], iteration_bounds = array<i64: 1>, scalar_prefetch = 0 : i64, scratch_operands = 0 : i64, tpu.core_type = #tpu.core_type<tc>, window_params = [{pipeline_mode = #tpu.pipeline_mode<synchronous>, transform_indices = @transform_0, window_bounds = array<i64: 32, 288>}, {transform_indices = @transform_1, window_bounds = array<i64: 288, 32>}, {transform_indices = @transform_2, window_bounds = array<i64: 32, 32>}, {pipeline_mode = #tpu.pipeline_mode<synchronous>, transform_indices = @transform_3, window_bounds = array<i64: 32, 1>}, {pipeline_mode = #tpu.pipeline_mode<synchronous>, transform_indices = @transform_4, window_bounds = array<i64: 32, 1>}]} {
    %c0 = arith.constant 0 : index
    %c0_0 = arith.constant 0 : index
    %0 = vector.load %arg1[%c0, %c0_0] : memref<32x288xbf16, #tpu.memory_space<vmem>>, vector<32x288xbf16>
    %c0_1 = arith.constant 0 : index
    %c0_2 = arith.constant 0 : index
    %1 = vector.load %arg2[%c0_1, %c0_2] : memref<288x32xbf16, #tpu.memory_space<vmem>>, vector<288x32xbf16>
    %cst = arith.constant dense<0.000000e+00> : vector<32x32xf32>
    %2 = tpu.matmul %0, %1, %cst {dimension_numbers = #tpu.dot_dimension_numbers<[1], [0], [0], [1], [0, 0, 1, 1], [], []>} : vector<32x288xbf16>, vector<288x32xbf16>, vector<32x32xf32> -> vector<32x32xf32>
    %c0_3 = arith.constant 0 : index
    %c0_4 = arith.constant 0 : index
    %3 = vector.load %arg3[%c0_3, %c0_4] : memref<32x32xf32, #tpu.memory_space<vmem>>, vector<32x32xf32>
    tpu.vector_store %arg3[%c0_3, %c0_4], %2 {strides = array<i32>} : memref<32x32xf32, #tpu.memory_space<vmem>>, vector<32x32xf32>,
    %c0_i32 = arith.constant 0 : i32
    %4 = arith.cmpi eq, %arg0, %c0_i32 : i32
    %5 = arith.extui %4 : i1 to i32
    %c0_i32_5 = arith.constant 0 : i32
    %6 = arith.cmpi ne, %5, %c0_i32_5 : i32
    scf.if %6 {
      %cst_16 = arith.constant 0.000000e+00 : f32
      %18 = vector.broadcast %cst_16 : f32 to vector<32x1xf32>
      %c0_17 = arith.constant 0 : index
      %c0_18 = arith.constant 0 : index
      %19 = vector.load %arg4[%c0_17, %c0_18] : memref<32x1xf32, #tpu.memory_space<vmem>>, vector<32x1xf32>
      tpu.vector_store %arg4[%c0_17, %c0_18], %18 {strides = array<i32>} : memref<32x1xf32, #tpu.memory_space<vmem>>, vector<32x1xf32>,
      %cst_19 = arith.constant 0.000000e+00 : f32
      %20 = vector.broadcast %cst_19 : f32 to vector<32x1xf32>
      %c0_20 = arith.constant 0 : index
      %c0_21 = arith.constant 0 : index
      %21 = vector.load %arg5[%c0_20, %c0_21] : memref<32x1xf32, #tpu.memory_space<vmem>>, vector<32x1xf32>
      tpu.vector_store %arg5[%c0_20, %c0_21], %20 {strides = array<i32>} : memref<32x1xf32, #tpu.memory_space<vmem>>, vector<32x1xf32>,
    } else {
    }
    %c0_6 = arith.constant 0 : index
    %c0_7 = arith.constant 0 : index
    %7 = vector.load %arg4[%c0_6, %c0_7] : memref<32x1xf32, #tpu.memory_space<vmem>>, vector<32x1xf32>
    %cst_8 = arith.constant dense<0.000000e+00> : vector<32xf32>
    %8 = vector.multi_reduction <add>, %2, %cst_8 [1] : vector<32x32xf32> to vector<32xf32>
    %9 = vector.shape_cast %8 : vector<32xf32> to vector<32x1xf32>
    %10 = arith.addf %7, %9 : vector<32x1xf32>
    %c0_9 = arith.constant 0 : index
    %c0_10 = arith.constant 0 : index
    %11 = vector.load %arg4[%c0_9, %c0_10] : memref<32x1xf32, #tpu.memory_space<vmem>>, vector<32x1xf32>
    tpu.vector_store %arg4[%c0_9, %c0_10], %10 {strides = array<i32>} : memref<32x1xf32, #tpu.memory_space<vmem>>, vector<32x1xf32>,
    %c0_11 = arith.constant 0 : index
    %c0_12 = arith.constant 0 : index
    %12 = vector.load %arg5[%c0_11, %c0_12] : memref<32x1xf32, #tpu.memory_space<vmem>>, vector<32x1xf32>
    %13 = arith.mulf %2, %2 : vector<32x32xf32>
    %cst_13 = arith.constant dense<0.000000e+00> : vector<32xf32>
    %14 = vector.multi_reduction <add>, %13, %cst_13 [1] : vector<32x32xf32> to vector<32xf32>
    %15 = vector.shape_cast %14 : vector<32xf32> to vector<32x1xf32>
    %16 = arith.addf %12, %15 : vector<32x1xf32>
    %c0_14 = arith.constant 0 : index
    %c0_15 = arith.constant 0 : index
    %17 = vector.load %arg5[%c0_14, %c0_15] : memref<32x1xf32, #tpu.memory_space<vmem>>, vector<32x1xf32>
    tpu.vector_store %arg5[%c0_14, %c0_15], %16 {strides = array<i32>} : memref<32x1xf32, #tpu.memory_space<vmem>>, vector<32x1xf32>,
    return
  }
  func.func @transform_0(%arg0: i32) -> (i32, i32) {
    %c0_i32 = arith.constant 0 : i32
    %c0_i32_0 = arith.constant 0 : i32
    %c0_i32_1 = arith.constant 0 : i32
    return %c0_i32, %c0_i32_0 : i32, i32
  }
  func.func @transform_1(%arg0: i32) -> (i32, i32) {
    %c0_i32 = arith.constant 0 : i32
    %c0_i32_0 = arith.constant 0 : i32
    return %c0_i32, %arg0 : i32, i32
  }
  func.func @transform_2(%arg0: i32) -> (i32, i32) {
    %c0_i32 = arith.constant 0 : i32
    %c0_i32_0 = arith.constant 0 : i32
    return %c0_i32, %arg0 : i32, i32
  }
  func.func @transform_3(%arg0: i32) -> (i32, i32) {
    %c0_i32 = arith.constant 0 : i32
    %c0_i32_0 = arith.constant 0 : i32
    %c0_i32_1 = arith.constant 0 : i32
    return %c0_i32, %c0_i32_0 : i32, i32
  }
  func.func @transform_4(%arg0: i32) -> (i32, i32) {
    %c0_i32 = arith.constant 0 : i32
    %c0_i32_0 = arith.constant 0 : i32
    %c0_i32_1 = arith.constant 0 : i32
    return %c0_i32, %c0_i32_0 : i32, i32
  }
}

module attributes {stable_mosaic.version = 11 : i64} {
  func.func @_matmul_stats_kernel(%arg0: i32, %arg1: memref<64x288xbf16, #tpu.memory_space<vmem>>, %arg2: memref<288x8xbf16, #tpu.memory_space<vmem>>, %arg3: memref<64x8xf32, #tpu.memory_space<vmem>>, %arg4: memref<64x1xf32, #tpu.memory_space<vmem>>, %arg5: memref<64x1xf32, #tpu.memory_space<vmem>>) attributes {dimension_semantics = [#tpu.dimension_semantics<arbitrary>], iteration_bounds = array<i64: 1>, scalar_prefetch = 0 : i64, scratch_operands = 0 : i64, tpu.core_type = #tpu.core_type<tc>, window_params = [{pipeline_mode = #tpu.pipeline_mode<synchronous>, transform_indices = @transform_0, window_bounds = array<i64: 64, 288>}, {transform_indices = @transform_1, window_bounds = array<i64: 288, 8>}, {transform_indices = @transform_2, window_bounds = array<i64: 64, 8>}, {pipeline_mode = #tpu.pipeline_mode<synchronous>, transform_indices = @transform_3, window_bounds = array<i64: 64, 1>}, {pipeline_mode = #tpu.pipeline_mode<synchronous>, transform_indices = @transform_4, window_bounds = array<i64: 64, 1>}]} {
    %c0 = arith.constant 0 : index
    %c0_0 = arith.constant 0 : index
    %0 = vector.load %arg1[%c0, %c0_0] : memref<64x288xbf16, #tpu.memory_space<vmem>>, vector<64x288xbf16>
    %c0_1 = arith.constant 0 : index
    %c0_2 = arith.constant 0 : index
    %1 = vector.load %arg2[%c0_1, %c0_2] : memref<288x8xbf16, #tpu.memory_space<vmem>>, vector<288x8xbf16>
    %cst = arith.constant dense<0.000000e+00> : vector<64x8xf32>
    %2 = tpu.matmul %0, %1, %cst {dimension_numbers = #tpu.dot_dimension_numbers<[1], [0], [0], [1], [0, 0, 1, 1], [], []>} : vector<64x288xbf16>, vector<288x8xbf16>, vector<64x8xf32> -> vector<64x8xf32>
    %c0_3 = arith.constant 0 : index
    %c0_4 = arith.constant 0 : index
    %3 = vector.load %arg3[%c0_3, %c0_4] : memref<64x8xf32, #tpu.memory_space<vmem>>, vector<64x8xf32>
    tpu.vector_store %arg3[%c0_3, %c0_4], %2 {strides = array<i32>} : memref<64x8xf32, #tpu.memory_space<vmem>>, vector<64x8xf32>,
    %c0_i32 = arith.constant 0 : i32
    %4 = arith.cmpi eq, %arg0, %c0_i32 : i32
    %5 = arith.extui %4 : i1 to i32
    %c0_i32_5 = arith.constant 0 : i32
    %6 = arith.cmpi ne, %5, %c0_i32_5 : i32
    scf.if %6 {
      %cst_16 = arith.constant 0.000000e+00 : f32
      %18 = vector.broadcast %cst_16 : f32 to vector<64x1xf32>
      %c0_17 = arith.constant 0 : index
      %c0_18 = arith.constant 0 : index
      %19 = vector.load %arg4[%c0_17, %c0_18] : memref<64x1xf32, #tpu.memory_space<vmem>>, vector<64x1xf32>
      tpu.vector_store %arg4[%c0_17, %c0_18], %18 {strides = array<i32>} : memref<64x1xf32, #tpu.memory_space<vmem>>, vector<64x1xf32>,
      %cst_19 = arith.constant 0.000000e+00 : f32
      %20 = vector.broadcast %cst_19 : f32 to vector<64x1xf32>
      %c0_20 = arith.constant 0 : index
      %c0_21 = arith.constant 0 : index
      %21 = vector.load %arg5[%c0_20, %c0_21] : memref<64x1xf32, #tpu.memory_space<vmem>>, vector<64x1xf32>
      tpu.vector_store %arg5[%c0_20, %c0_21], %20 {strides = array<i32>} : memref<64x1xf32, #tpu.memory_space<vmem>>, vector<64x1xf32>,
    } else {
    }
    %c0_6 = arith.constant 0 : index
    %c0_7 = arith.constant 0 : index
    %7 = vector.load %arg4[%c0_6, %c0_7] : memref<64x1xf32, #tpu.memory_space<vmem>>, vector<64x1xf32>
    %cst_8 = arith.constant dense<0.000000e+00> : vector<64xf32>
    %8 = vector.multi_reduction <add>, %2, %cst_8 [1] : vector<64x8xf32> to vector<64xf32>
    %9 = vector.shape_cast %8 : vector<64xf32> to vector<64x1xf32>
    %10 = arith.addf %7, %9 : vector<64x1xf32>
    %c0_9 = arith.constant 0 : index
    %c0_10 = arith.constant 0 : index
    %11 = vector.load %arg4[%c0_9, %c0_10] : memref<64x1xf32, #tpu.memory_space<vmem>>, vector<64x1xf32>
    tpu.vector_store %arg4[%c0_9, %c0_10], %10 {strides = array<i32>} : memref<64x1xf32, #tpu.memory_space<vmem>>, vector<64x1xf32>,
    %c0_11 = arith.constant 0 : index
    %c0_12 = arith.constant 0 : index
    %12 = vector.load %arg5[%c0_11, %c0_12] : memref<64x1xf32, #tpu.memory_space<vmem>>, vector<64x1xf32>
    %13 = arith.mulf %2, %2 : vector<64x8xf32>
    %cst_13 = arith.constant dense<0.000000e+00> : vector<64xf32>
    %14 = vector.multi_reduction <add>, %13, %cst_13 [1] : vector<64x8xf32> to vector<64xf32>
    %15 = vector.shape_cast %14 : vector<64xf32> to vector<64x1xf32>
    %16 = arith.addf %12, %15 : vector<64x1xf32>
    %c0_14 = arith.constant 0 : index
    %c0_15 = arith.constant 0 : index
    %17 = vector.load %arg5[%c0_14, %c0_15] : memref<64x1xf32, #tpu.memory_space<vmem>>, vector<64x1xf32>
    tpu.vector_store %arg5[%c0_14, %c0_15], %16 {strides = array<i32>} : memref<64x1xf32, #tpu.memory_space<vmem>>, vector<64x1xf32>,
    return
  }
  func.func @transform_0(%arg0: i32) -> (i32, i32) {
    %c0_i32 = arith.constant 0 : i32
    %c0_i32_0 = arith.constant 0 : i32
    %c0_i32_1 = arith.constant 0 : i32
    return %c0_i32, %c0_i32_0 : i32, i32
  }
  func.func @transform_1(%arg0: i32) -> (i32, i32) {
    %c0_i32 = arith.constant 0 : i32
    %c0_i32_0 = arith.constant 0 : i32
    return %c0_i32, %arg0 : i32, i32
  }
  func.func @transform_2(%arg0: i32) -> (i32, i32) {
    %c0_i32 = arith.constant 0 : i32
    %c0_i32_0 = arith.constant 0 : i32
    return %c0_i32, %arg0 : i32, i32
  }
  func.func @transform_3(%arg0: i32) -> (i32, i32) {
    %c0_i32 = arith.constant 0 : i32
    %c0_i32_0 = arith.constant 0 : i32
    %c0_i32_1 = arith.constant 0 : i32
    return %c0_i32, %c0_i32_0 : i32, i32
  }
  func.func @transform_4(%arg0: i32) -> (i32, i32) {
    %c0_i32 = arith.constant 0 : i32
    %c0_i32_0 = arith.constant 0 : i32
    %c0_i32_1 = arith.constant 0 : i32
    return %c0_i32, %c0_i32_0 : i32, i32
  }
}

module attributes {stable_mosaic.version = 11 : i64} {
  func.func @kernel(%arg0: i32, %arg1: memref<64x8xf32, #tpu.memory_space<vmem>>, %arg2: memref<64x1xf32, #tpu.memory_space<vmem>>, %arg3: memref<64x1xf32, #tpu.memory_space<vmem>>, %arg4: memref<64x8xf32, #tpu.memory_space<vmem>>) attributes {dimension_semantics = [#tpu.dimension_semantics<parallel>], iteration_bounds = array<i64: 1>, scalar_prefetch = 0 : i64, scratch_operands = 0 : i64, tpu.core_type = #tpu.core_type<tc>, window_params = [{transform_indices = @transform_0, window_bounds = array<i64: 64, 8>}, {pipeline_mode = #tpu.pipeline_mode<synchronous>, transform_indices = @transform_1, window_bounds = array<i64: 64, 1>}, {pipeline_mode = #tpu.pipeline_mode<synchronous>, transform_indices = @transform_2, window_bounds = array<i64: 64, 1>}, {transform_indices = @transform_3, window_bounds = array<i64: 64, 8>}]} {
    %c0 = arith.constant 0 : index
    %c0_0 = arith.constant 0 : index
    %0 = vector.load %arg1[%c0, %c0_0] : memref<64x8xf32, #tpu.memory_space<vmem>>, vector<64x8xf32>
    %c0_1 = arith.constant 0 : index
    %c0_2 = arith.constant 0 : index
    %1 = vector.load %arg2[%c0_1, %c0_2] : memref<64x1xf32, #tpu.memory_space<vmem>>, vector<64x1xf32>
    %2 = vector.broadcast %1 : vector<64x1xf32> to vector<64x8xf32>
    %3 = arith.mulf %0, %2 : vector<64x8xf32>
    %c0_3 = arith.constant 0 : index
    %c0_4 = arith.constant 0 : index
    %4 = vector.load %arg3[%c0_3, %c0_4] : memref<64x1xf32, #tpu.memory_space<vmem>>, vector<64x1xf32>
    %5 = vector.broadcast %4 : vector<64x1xf32> to vector<64x8xf32>
    %6 = arith.addf %3, %5 : vector<64x8xf32>
    %cst = arith.constant 0.000000e+00 : f32
    %7 = vector.broadcast %cst : f32 to vector<64x8xf32>
    %8 = arith.maximumf %6, %7 : vector<64x8xf32>
    %c0_5 = arith.constant 0 : index
    %c0_6 = arith.constant 0 : index
    %9 = vector.load %arg4[%c0_5, %c0_6] : memref<64x8xf32, #tpu.memory_space<vmem>>, vector<64x8xf32>
    tpu.vector_store %arg4[%c0_5, %c0_6], %8 {strides = array<i32>} : memref<64x8xf32, #tpu.memory_space<vmem>>, vector<64x8xf32>,
    return
  }
  func.func @transform_0(%arg0: i32) -> (i32, i32) {
    %c0_i32 = arith.constant 0 : i32
    %c0_i32_0 = arith.constant 0 : i32
    return %c0_i32, %arg0 : i32, i32
  }
  func.func @transform_1(%arg0: i32) -> (i32, i32) {
    %c0_i32 = arith.constant 0 : i32
    %c0_i32_0 = arith.constant 0 : i32
    %c0_i32_1 = arith.constant 0 : i32
    return %c0_i32, %c0_i32_0 : i32, i32
  }
  func.func @transform_2(%arg0: i32) -> (i32, i32) {
    %c0_i32 = arith.constant 0 : i32
    %c0_i32_0 = arith.constant 0 : i32
    %c0_i32_1 = arith.constant 0 : i32
    return %c0_i32, %c0_i32_0 : i32, i32
  }
  func.func @transform_3(%arg0: i32) -> (i32, i32) {
    %c0_i32 = arith.constant 0 : i32
    %c0_i32_0 = arith.constant 0 : i32
    return %c0_i32, %arg0 : i32, i32
  }
}

module attributes {stable_mosaic.version = 11 : i64} {
  func.func @_matmul_stats_kernel(%arg0: i32, %arg1: memref<64x576xbf16, #tpu.memory_space<vmem>>, %arg2: memref<576x8xbf16, #tpu.memory_space<vmem>>, %arg3: memref<64x8xf32, #tpu.memory_space<vmem>>, %arg4: memref<64x1xf32, #tpu.memory_space<vmem>>, %arg5: memref<64x1xf32, #tpu.memory_space<vmem>>) attributes {dimension_semantics = [#tpu.dimension_semantics<arbitrary>], iteration_bounds = array<i64: 1>, scalar_prefetch = 0 : i64, scratch_operands = 0 : i64, tpu.core_type = #tpu.core_type<tc>, window_params = [{pipeline_mode = #tpu.pipeline_mode<synchronous>, transform_indices = @transform_0, window_bounds = array<i64: 64, 576>}, {transform_indices = @transform_1, window_bounds = array<i64: 576, 8>}, {transform_indices = @transform_2, window_bounds = array<i64: 64, 8>}, {pipeline_mode = #tpu.pipeline_mode<synchronous>, transform_indices = @transform_3, window_bounds = array<i64: 64, 1>}, {pipeline_mode = #tpu.pipeline_mode<synchronous>, transform_indices = @transform_4, window_bounds = array<i64: 64, 1>}]} {
    %c0 = arith.constant 0 : index
    %c0_0 = arith.constant 0 : index
    %0 = vector.load %arg1[%c0, %c0_0] : memref<64x576xbf16, #tpu.memory_space<vmem>>, vector<64x576xbf16>
    %c0_1 = arith.constant 0 : index
    %c0_2 = arith.constant 0 : index
    %1 = vector.load %arg2[%c0_1, %c0_2] : memref<576x8xbf16, #tpu.memory_space<vmem>>, vector<576x8xbf16>
    %cst = arith.constant dense<0.000000e+00> : vector<64x8xf32>
    %2 = tpu.matmul %0, %1, %cst {dimension_numbers = #tpu.dot_dimension_numbers<[1], [0], [0], [1], [0, 0, 1, 1], [], []>} : vector<64x576xbf16>, vector<576x8xbf16>, vector<64x8xf32> -> vector<64x8xf32>
    %c0_3 = arith.constant 0 : index
    %c0_4 = arith.constant 0 : index
    %3 = vector.load %arg3[%c0_3, %c0_4] : memref<64x8xf32, #tpu.memory_space<vmem>>, vector<64x8xf32>
    tpu.vector_store %arg3[%c0_3, %c0_4], %2 {strides = array<i32>} : memref<64x8xf32, #tpu.memory_space<vmem>>, vector<64x8xf32>,
    %c0_i32 = arith.constant 0 : i32
    %4 = arith.cmpi eq, %arg0, %c0_i32 : i32
    %5 = arith.extui %4 : i1 to i32
    %c0_i32_5 = arith.constant 0 : i32
    %6 = arith.cmpi ne, %5, %c0_i32_5 : i32
    scf.if %6 {
      %cst_16 = arith.constant 0.000000e+00 : f32
      %18 = vector.broadcast %cst_16 : f32 to vector<64x1xf32>
      %c0_17 = arith.constant 0 : index
      %c0_18 = arith.constant 0 : index
      %19 = vector.load %arg4[%c0_17, %c0_18] : memref<64x1xf32, #tpu.memory_space<vmem>>, vector<64x1xf32>
      tpu.vector_store %arg4[%c0_17, %c0_18], %18 {strides = array<i32>} : memref<64x1xf32, #tpu.memory_space<vmem>>, vector<64x1xf32>,
      %cst_19 = arith.constant 0.000000e+00 : f32
      %20 = vector.broadcast %cst_19 : f32 to vector<64x1xf32>
      %c0_20 = arith.constant 0 : index
      %c0_21 = arith.constant 0 : index
      %21 = vector.load %arg5[%c0_20, %c0_21] : memref<64x1xf32, #tpu.memory_space<vmem>>, vector<64x1xf32>
      tpu.vector_store %arg5[%c0_20, %c0_21], %20 {strides = array<i32>} : memref<64x1xf32, #tpu.memory_space<vmem>>, vector<64x1xf32>,
    } else {
    }
    %c0_6 = arith.constant 0 : index
    %c0_7 = arith.constant 0 : index
    %7 = vector.load %arg4[%c0_6, %c0_7] : memref<64x1xf32, #tpu.memory_space<vmem>>, vector<64x1xf32>
    %cst_8 = arith.constant dense<0.000000e+00> : vector<64xf32>
    %8 = vector.multi_reduction <add>, %2, %cst_8 [1] : vector<64x8xf32> to vector<64xf32>
    %9 = vector.shape_cast %8 : vector<64xf32> to vector<64x1xf32>
    %10 = arith.addf %7, %9 : vector<64x1xf32>
    %c0_9 = arith.constant 0 : index
    %c0_10 = arith.constant 0 : index
    %11 = vector.load %arg4[%c0_9, %c0_10] : memref<64x1xf32, #tpu.memory_space<vmem>>, vector<64x1xf32>
    tpu.vector_store %arg4[%c0_9, %c0_10], %10 {strides = array<i32>} : memref<64x1xf32, #tpu.memory_space<vmem>>, vector<64x1xf32>,
    %c0_11 = arith.constant 0 : index
    %c0_12 = arith.constant 0 : index
    %12 = vector.load %arg5[%c0_11, %c0_12] : memref<64x1xf32, #tpu.memory_space<vmem>>, vector<64x1xf32>
    %13 = arith.mulf %2, %2 : vector<64x8xf32>
    %cst_13 = arith.constant dense<0.000000e+00> : vector<64xf32>
    %14 = vector.multi_reduction <add>, %13, %cst_13 [1] : vector<64x8xf32> to vector<64xf32>
    %15 = vector.shape_cast %14 : vector<64xf32> to vector<64x1xf32>
    %16 = arith.addf %12, %15 : vector<64x1xf32>
    %c0_14 = arith.constant 0 : index
    %c0_15 = arith.constant 0 : index
    %17 = vector.load %arg5[%c0_14, %c0_15] : memref<64x1xf32, #tpu.memory_space<vmem>>, vector<64x1xf32>
    tpu.vector_store %arg5[%c0_14, %c0_15], %16 {strides = array<i32>} : memref<64x1xf32, #tpu.memory_space<vmem>>, vector<64x1xf32>,
    return
  }
  func.func @transform_0(%arg0: i32) -> (i32, i32) {
    %c0_i32 = arith.constant 0 : i32
    %c0_i32_0 = arith.constant 0 : i32
    %c0_i32_1 = arith.constant 0 : i32
    return %c0_i32, %c0_i32_0 : i32, i32
  }
  func.func @transform_1(%arg0: i32) -> (i32, i32) {
    %c0_i32 = arith.constant 0 : i32
    %c0_i32_0 = arith.constant 0 : i32
    return %c0_i32, %arg0 : i32, i32
  }
  func.func @transform_2(%arg0: i32) -> (i32, i32) {
    %c0_i32 = arith.constant 0 : i32
    %c0_i32_0 = arith.constant 0 : i32
    return %c0_i32, %arg0 : i32, i32
  }
  func.func @transform_3(%arg0: i32) -> (i32, i32) {
    %c0_i32 = arith.constant 0 : i32
    %c0_i32_0 = arith.constant 0 : i32
    %c0_i32_1 = arith.constant 0 : i32
    return %c0_i32, %c0_i32_0 : i32, i32
  }
  func.func @transform_4(%arg0: i32) -> (i32, i32) {
    %c0_i32 = arith.constant 0 : i32
    %c0_i32_0 = arith.constant 0 : i32
    %c0_i32_1 = arith.constant 0 : i32
    return %c0_i32, %c0_i32_0 : i32, i32
  }
}

module attributes {stable_mosaic.version = 11 : i64} {
  func.func @kernel(%arg0: i32, %arg1: memref<64x8xf32, #tpu.memory_space<vmem>>, %arg2: memref<64x1xf32, #tpu.memory_space<vmem>>, %arg3: memref<64x1xf32, #tpu.memory_space<vmem>>, %arg4: memref<64x8xf32, #tpu.memory_space<vmem>>, %arg5: memref<64x8xf32, #tpu.memory_space<vmem>>) attributes {dimension_semantics = [#tpu.dimension_semantics<parallel>], iteration_bounds = array<i64: 1>, scalar_prefetch = 0 : i64, scratch_operands = 0 : i64, tpu.core_type = #tpu.core_type<tc>, window_params = [{transform_indices = @transform_0, window_bounds = array<i64: 64, 8>}, {pipeline_mode = #tpu.pipeline_mode<synchronous>, transform_indices = @transform_1, window_bounds = array<i64: 64, 1>}, {pipeline_mode = #tpu.pipeline_mode<synchronous>, transform_indices = @transform_2, window_bounds = array<i64: 64, 1>}, {transform_indices = @transform_3, window_bounds = array<i64: 64, 8>}, {transform_indices = @transform_4, window_bounds = array<i64: 64, 8>}]} {
    %c0 = arith.constant 0 : index
    %c0_0 = arith.constant 0 : index
    %0 = vector.load %arg1[%c0, %c0_0] : memref<64x8xf32, #tpu.memory_space<vmem>>, vector<64x8xf32>
    %c0_1 = arith.constant 0 : index
    %c0_2 = arith.constant 0 : index
    %1 = vector.load %arg2[%c0_1, %c0_2] : memref<64x1xf32, #tpu.memory_space<vmem>>, vector<64x1xf32>
    %2 = vector.broadcast %1 : vector<64x1xf32> to vector<64x8xf32>
    %3 = arith.mulf %0, %2 : vector<64x8xf32>
    %c0_3 = arith.constant 0 : index
    %c0_4 = arith.constant 0 : index
    %4 = vector.load %arg3[%c0_3, %c0_4] : memref<64x1xf32, #tpu.memory_space<vmem>>, vector<64x1xf32>
    %5 = vector.broadcast %4 : vector<64x1xf32> to vector<64x8xf32>
    %6 = arith.addf %3, %5 : vector<64x8xf32>
    %c0_5 = arith.constant 0 : index
    %c0_6 = arith.constant 0 : index
    %7 = vector.load %arg4[%c0_5, %c0_6] : memref<64x8xf32, #tpu.memory_space<vmem>>, vector<64x8xf32>
    %8 = arith.addf %6, %7 : vector<64x8xf32>
    %cst = arith.constant 0.000000e+00 : f32
    %9 = vector.broadcast %cst : f32 to vector<64x8xf32>
    %10 = arith.maximumf %8, %9 : vector<64x8xf32>
    %c0_7 = arith.constant 0 : index
    %c0_8 = arith.constant 0 : index
    %11 = vector.load %arg5[%c0_7, %c0_8] : memref<64x8xf32, #tpu.memory_space<vmem>>, vector<64x8xf32>
    tpu.vector_store %arg5[%c0_7, %c0_8], %10 {strides = array<i32>} : memref<64x8xf32, #tpu.memory_space<vmem>>, vector<64x8xf32>,
    return
  }
  func.func @transform_0(%arg0: i32) -> (i32, i32) {
    %c0_i32 = arith.constant 0 : i32
    %c0_i32_0 = arith.constant 0 : i32
    return %c0_i32, %arg0 : i32, i32
  }
  func.func @transform_1(%arg0: i32) -> (i32, i32) {
    %c0_i32 = arith.constant 0 : i32
    %c0_i32_0 = arith.constant 0 : i32
    %c0_i32_1 = arith.constant 0 : i32
    return %c0_i32, %c0_i32_0 : i32, i32
  }
  func.func @transform_2(%arg0: i32) -> (i32, i32) {
    %c0_i32 = arith.constant 0 : i32
    %c0_i32_0 = arith.constant 0 : i32
    %c0_i32_1 = arith.constant 0 : i32
    return %c0_i32, %c0_i32_0 : i32, i32
  }
  func.func @transform_3(%arg0: i32) -> (i32, i32) {
    %c0_i32 = arith.constant 0 : i32
    %c0_i32_0 = arith.constant 0 : i32
    return %c0_i32, %arg0 : i32, i32
  }
  func.func @transform_4(%arg0: i32) -> (i32, i32) {
    %c0_i32 = arith.constant 0 : i32
    %c0_i32_0 = arith.constant 0 : i32
    return %c0_i32, %arg0 : i32, i32
  }
}

module attributes {stable_mosaic.version = 11 : i64} {
  func.func @_matmul_stats_kernel(%arg0: i32, %arg1: memref<32x576xbf16, #tpu.memory_space<vmem>>, %arg2: memref<576x32xbf16, #tpu.memory_space<vmem>>, %arg3: memref<32x32xf32, #tpu.memory_space<vmem>>, %arg4: memref<32x1xf32, #tpu.memory_space<vmem>>, %arg5: memref<32x1xf32, #tpu.memory_space<vmem>>) attributes {dimension_semantics = [#tpu.dimension_semantics<arbitrary>], iteration_bounds = array<i64: 1>, scalar_prefetch = 0 : i64, scratch_operands = 0 : i64, tpu.core_type = #tpu.core_type<tc>, window_params = [{pipeline_mode = #tpu.pipeline_mode<synchronous>, transform_indices = @transform_0, window_bounds = array<i64: 32, 576>}, {transform_indices = @transform_1, window_bounds = array<i64: 576, 32>}, {transform_indices = @transform_2, window_bounds = array<i64: 32, 32>}, {pipeline_mode = #tpu.pipeline_mode<synchronous>, transform_indices = @transform_3, window_bounds = array<i64: 32, 1>}, {pipeline_mode = #tpu.pipeline_mode<synchronous>, transform_indices = @transform_4, window_bounds = array<i64: 32, 1>}]} {
    %c0 = arith.constant 0 : index
    %c0_0 = arith.constant 0 : index
    %0 = vector.load %arg1[%c0, %c0_0] : memref<32x576xbf16, #tpu.memory_space<vmem>>, vector<32x576xbf16>
    %c0_1 = arith.constant 0 : index
    %c0_2 = arith.constant 0 : index
    %1 = vector.load %arg2[%c0_1, %c0_2] : memref<576x32xbf16, #tpu.memory_space<vmem>>, vector<576x32xbf16>
    %cst = arith.constant dense<0.000000e+00> : vector<32x32xf32>
    %2 = tpu.matmul %0, %1, %cst {dimension_numbers = #tpu.dot_dimension_numbers<[1], [0], [0], [1], [0, 0, 1, 1], [], []>} : vector<32x576xbf16>, vector<576x32xbf16>, vector<32x32xf32> -> vector<32x32xf32>
    %c0_3 = arith.constant 0 : index
    %c0_4 = arith.constant 0 : index
    %3 = vector.load %arg3[%c0_3, %c0_4] : memref<32x32xf32, #tpu.memory_space<vmem>>, vector<32x32xf32>
    tpu.vector_store %arg3[%c0_3, %c0_4], %2 {strides = array<i32>} : memref<32x32xf32, #tpu.memory_space<vmem>>, vector<32x32xf32>,
    %c0_i32 = arith.constant 0 : i32
    %4 = arith.cmpi eq, %arg0, %c0_i32 : i32
    %5 = arith.extui %4 : i1 to i32
    %c0_i32_5 = arith.constant 0 : i32
    %6 = arith.cmpi ne, %5, %c0_i32_5 : i32
    scf.if %6 {
      %cst_16 = arith.constant 0.000000e+00 : f32
      %18 = vector.broadcast %cst_16 : f32 to vector<32x1xf32>
      %c0_17 = arith.constant 0 : index
      %c0_18 = arith.constant 0 : index
      %19 = vector.load %arg4[%c0_17, %c0_18] : memref<32x1xf32, #tpu.memory_space<vmem>>, vector<32x1xf32>
      tpu.vector_store %arg4[%c0_17, %c0_18], %18 {strides = array<i32>} : memref<32x1xf32, #tpu.memory_space<vmem>>, vector<32x1xf32>,
      %cst_19 = arith.constant 0.000000e+00 : f32
      %20 = vector.broadcast %cst_19 : f32 to vector<32x1xf32>
      %c0_20 = arith.constant 0 : index
      %c0_21 = arith.constant 0 : index
      %21 = vector.load %arg5[%c0_20, %c0_21] : memref<32x1xf32, #tpu.memory_space<vmem>>, vector<32x1xf32>
      tpu.vector_store %arg5[%c0_20, %c0_21], %20 {strides = array<i32>} : memref<32x1xf32, #tpu.memory_space<vmem>>, vector<32x1xf32>,
    } else {
    }
    %c0_6 = arith.constant 0 : index
    %c0_7 = arith.constant 0 : index
    %7 = vector.load %arg4[%c0_6, %c0_7] : memref<32x1xf32, #tpu.memory_space<vmem>>, vector<32x1xf32>
    %cst_8 = arith.constant dense<0.000000e+00> : vector<32xf32>
    %8 = vector.multi_reduction <add>, %2, %cst_8 [1] : vector<32x32xf32> to vector<32xf32>
    %9 = vector.shape_cast %8 : vector<32xf32> to vector<32x1xf32>
    %10 = arith.addf %7, %9 : vector<32x1xf32>
    %c0_9 = arith.constant 0 : index
    %c0_10 = arith.constant 0 : index
    %11 = vector.load %arg4[%c0_9, %c0_10] : memref<32x1xf32, #tpu.memory_space<vmem>>, vector<32x1xf32>
    tpu.vector_store %arg4[%c0_9, %c0_10], %10 {strides = array<i32>} : memref<32x1xf32, #tpu.memory_space<vmem>>, vector<32x1xf32>,
    %c0_11 = arith.constant 0 : index
    %c0_12 = arith.constant 0 : index
    %12 = vector.load %arg5[%c0_11, %c0_12] : memref<32x1xf32, #tpu.memory_space<vmem>>, vector<32x1xf32>
    %13 = arith.mulf %2, %2 : vector<32x32xf32>
    %cst_13 = arith.constant dense<0.000000e+00> : vector<32xf32>
    %14 = vector.multi_reduction <add>, %13, %cst_13 [1] : vector<32x32xf32> to vector<32xf32>
    %15 = vector.shape_cast %14 : vector<32xf32> to vector<32x1xf32>
    %16 = arith.addf %12, %15 : vector<32x1xf32>
    %c0_14 = arith.constant 0 : index
    %c0_15 = arith.constant 0 : index
    %17 = vector.load %arg5[%c0_14, %c0_15] : memref<32x1xf32, #tpu.memory_space<vmem>>, vector<32x1xf32>
    tpu.vector_store %arg5[%c0_14, %c0_15], %16 {strides = array<i32>} : memref<32x1xf32, #tpu.memory_space<vmem>>, vector<32x1xf32>,
    return
  }
  func.func @transform_0(%arg0: i32) -> (i32, i32) {
    %c0_i32 = arith.constant 0 : i32
    %c0_i32_0 = arith.constant 0 : i32
    %c0_i32_1 = arith.constant 0 : i32
    return %c0_i32, %c0_i32_0 : i32, i32
  }
  func.func @transform_1(%arg0: i32) -> (i32, i32) {
    %c0_i32 = arith.constant 0 : i32
    %c0_i32_0 = arith.constant 0 : i32
    return %c0_i32, %arg0 : i32, i32
  }
  func.func @transform_2(%arg0: i32) -> (i32, i32) {
    %c0_i32 = arith.constant 0 : i32
    %c0_i32_0 = arith.constant 0 : i32
    return %c0_i32, %arg0 : i32, i32
  }
  func.func @transform_3(%arg0: i32) -> (i32, i32) {
    %c0_i32 = arith.constant 0 : i32
    %c0_i32_0 = arith.constant 0 : i32
    %c0_i32_1 = arith.constant 0 : i32
    return %c0_i32, %c0_i32_0 : i32, i32
  }
  func.func @transform_4(%arg0: i32) -> (i32, i32) {
    %c0_i32 = arith.constant 0 : i32
    %c0_i32_0 = arith.constant 0 : i32
    %c0_i32_1 = arith.constant 0 : i32
    return %c0_i32, %c0_i32_0 : i32, i32
  }
}

module attributes {stable_mosaic.version = 11 : i64} {
  func.func @kernel(%arg0: i32, %arg1: memref<32x32xf32, #tpu.memory_space<vmem>>, %arg2: memref<32x1xf32, #tpu.memory_space<vmem>>, %arg3: memref<32x1xf32, #tpu.memory_space<vmem>>, %arg4: memref<32x32xf32, #tpu.memory_space<vmem>>, %arg5: memref<32x32xf32, #tpu.memory_space<vmem>>) attributes {dimension_semantics = [#tpu.dimension_semantics<parallel>], iteration_bounds = array<i64: 1>, scalar_prefetch = 0 : i64, scratch_operands = 0 : i64, tpu.core_type = #tpu.core_type<tc>, window_params = [{transform_indices = @transform_0, window_bounds = array<i64: 32, 32>}, {pipeline_mode = #tpu.pipeline_mode<synchronous>, transform_indices = @transform_1, window_bounds = array<i64: 32, 1>}, {pipeline_mode = #tpu.pipeline_mode<synchronous>, transform_indices = @transform_2, window_bounds = array<i64: 32, 1>}, {transform_indices = @transform_3, window_bounds = array<i64: 32, 32>}, {transform_indices = @transform_4, window_bounds = array<i64: 32, 32>}]} {
    %c0 = arith.constant 0 : index
    %c0_0 = arith.constant 0 : index
    %0 = vector.load %arg1[%c0, %c0_0] : memref<32x32xf32, #tpu.memory_space<vmem>>, vector<32x32xf32>
    %c0_1 = arith.constant 0 : index
    %c0_2 = arith.constant 0 : index
    %1 = vector.load %arg2[%c0_1, %c0_2] : memref<32x1xf32, #tpu.memory_space<vmem>>, vector<32x1xf32>
    %2 = vector.broadcast %1 : vector<32x1xf32> to vector<32x32xf32>
    %3 = arith.mulf %0, %2 : vector<32x32xf32>
    %c0_3 = arith.constant 0 : index
    %c0_4 = arith.constant 0 : index
    %4 = vector.load %arg3[%c0_3, %c0_4] : memref<32x1xf32, #tpu.memory_space<vmem>>, vector<32x1xf32>
    %5 = vector.broadcast %4 : vector<32x1xf32> to vector<32x32xf32>
    %6 = arith.addf %3, %5 : vector<32x32xf32>
    %cst = arith.constant 0.000000e+00 : f32
    %7 = vector.broadcast %cst : f32 to vector<32x32xf32>
    %8 = arith.maximumf %6, %7 : vector<32x32xf32>
    %c0_5 = arith.constant 0 : index
    %c0_6 = arith.constant 0 : index
    %9 = vector.load %arg4[%c0_5, %c0_6] : memref<32x32xf32, #tpu.memory_space<vmem>>, vector<32x32xf32>
    %10 = arith.addf %8, %9 : vector<32x32xf32>
    %c0_7 = arith.constant 0 : index
    %c0_8 = arith.constant 0 : index
    %11 = vector.load %arg5[%c0_7, %c0_8] : memref<32x32xf32, #tpu.memory_space<vmem>>, vector<32x32xf32>
    tpu.vector_store %arg5[%c0_7, %c0_8], %10 {strides = array<i32>} : memref<32x32xf32, #tpu.memory_space<vmem>>, vector<32x32xf32>,
    return
  }
  func.func @transform_0(%arg0: i32) -> (i32, i32) {
    %c0_i32 = arith.constant 0 : i32
    %c0_i32_0 = arith.constant 0 : i32
    return %c0_i32, %arg0 : i32, i32
  }
  func.func @transform_1(%arg0: i32) -> (i32, i32) {
    %c0_i32 = arith.constant 0 : i32
    %c0_i32_0 = arith.constant 0 : i32
    %c0_i32_1 = arith.constant 0 : i32
    return %c0_i32, %c0_i32_0 : i32, i32
  }
  func.func @transform_2(%arg0: i32) -> (i32, i32) {
    %c0_i32 = arith.constant 0 : i32
    %c0_i32_0 = arith.constant 0 : i32
    %c0_i32_1 = arith.constant 0 : i32
    return %c0_i32, %c0_i32_0 : i32, i32
  }
  func.func @transform_3(%arg0: i32) -> (i32, i32) {
    %c0_i32 = arith.constant 0 : i32
    %c0_i32_0 = arith.constant 0 : i32
    return %c0_i32, %arg0 : i32, i32
  }
  func.func @transform_4(%arg0: i32) -> (i32, i32) {
    %c0_i32 = arith.constant 0 : i32
    %c0_i32_0 = arith.constant 0 : i32
    return %c0_i32, %arg0 : i32, i32
  }
}

module attributes {stable_mosaic.version = 11 : i64} {
  func.func @_matmul_stats_kernel(%arg0: i32, %arg1: memref<16x288xbf16, #tpu.memory_space<vmem>>, %arg2: memref<288x128xbf16, #tpu.memory_space<vmem>>, %arg3: memref<16x128xf32, #tpu.memory_space<vmem>>, %arg4: memref<16x1xf32, #tpu.memory_space<vmem>>, %arg5: memref<16x1xf32, #tpu.memory_space<vmem>>) attributes {dimension_semantics = [#tpu.dimension_semantics<arbitrary>], iteration_bounds = array<i64: 1>, scalar_prefetch = 0 : i64, scratch_operands = 0 : i64, tpu.core_type = #tpu.core_type<tc>, window_params = [{pipeline_mode = #tpu.pipeline_mode<synchronous>, transform_indices = @transform_0, window_bounds = array<i64: 16, 288>}, {transform_indices = @transform_1, window_bounds = array<i64: 288, 128>}, {transform_indices = @transform_2, window_bounds = array<i64: 16, 128>}, {pipeline_mode = #tpu.pipeline_mode<synchronous>, transform_indices = @transform_3, window_bounds = array<i64: 16, 1>}, {pipeline_mode = #tpu.pipeline_mode<synchronous>, transform_indices = @transform_4, window_bounds = array<i64: 16, 1>}]} {
    %c0 = arith.constant 0 : index
    %c0_0 = arith.constant 0 : index
    %0 = vector.load %arg1[%c0, %c0_0] : memref<16x288xbf16, #tpu.memory_space<vmem>>, vector<16x288xbf16>
    %c0_1 = arith.constant 0 : index
    %c0_2 = arith.constant 0 : index
    %1 = vector.load %arg2[%c0_1, %c0_2] : memref<288x128xbf16, #tpu.memory_space<vmem>>, vector<288x128xbf16>
    %cst = arith.constant dense<0.000000e+00> : vector<16x128xf32>
    %2 = tpu.matmul %0, %1, %cst {dimension_numbers = #tpu.dot_dimension_numbers<[1], [0], [0], [1], [0, 0, 1, 1], [], []>} : vector<16x288xbf16>, vector<288x128xbf16>, vector<16x128xf32> -> vector<16x128xf32>
    %c0_3 = arith.constant 0 : index
    %c0_4 = arith.constant 0 : index
    %3 = vector.load %arg3[%c0_3, %c0_4] : memref<16x128xf32, #tpu.memory_space<vmem>>, vector<16x128xf32>
    tpu.vector_store %arg3[%c0_3, %c0_4], %2 {strides = array<i32>} : memref<16x128xf32, #tpu.memory_space<vmem>>, vector<16x128xf32>,
    %c0_i32 = arith.constant 0 : i32
    %4 = arith.cmpi eq, %arg0, %c0_i32 : i32
    %5 = arith.extui %4 : i1 to i32
    %c0_i32_5 = arith.constant 0 : i32
    %6 = arith.cmpi ne, %5, %c0_i32_5 : i32
    scf.if %6 {
      %cst_16 = arith.constant 0.000000e+00 : f32
      %18 = vector.broadcast %cst_16 : f32 to vector<16x1xf32>
      %c0_17 = arith.constant 0 : index
      %c0_18 = arith.constant 0 : index
      %19 = vector.load %arg4[%c0_17, %c0_18] : memref<16x1xf32, #tpu.memory_space<vmem>>, vector<16x1xf32>
      tpu.vector_store %arg4[%c0_17, %c0_18], %18 {strides = array<i32>} : memref<16x1xf32, #tpu.memory_space<vmem>>, vector<16x1xf32>,
      %cst_19 = arith.constant 0.000000e+00 : f32
      %20 = vector.broadcast %cst_19 : f32 to vector<16x1xf32>
      %c0_20 = arith.constant 0 : index
      %c0_21 = arith.constant 0 : index
      %21 = vector.load %arg5[%c0_20, %c0_21] : memref<16x1xf32, #tpu.memory_space<vmem>>, vector<16x1xf32>
      tpu.vector_store %arg5[%c0_20, %c0_21], %20 {strides = array<i32>} : memref<16x1xf32, #tpu.memory_space<vmem>>, vector<16x1xf32>,
    } else {
    }
    %c0_6 = arith.constant 0 : index
    %c0_7 = arith.constant 0 : index
    %7 = vector.load %arg4[%c0_6, %c0_7] : memref<16x1xf32, #tpu.memory_space<vmem>>, vector<16x1xf32>
    %cst_8 = arith.constant dense<0.000000e+00> : vector<16xf32>
    %8 = vector.multi_reduction <add>, %2, %cst_8 [1] : vector<16x128xf32> to vector<16xf32>
    %9 = vector.shape_cast %8 : vector<16xf32> to vector<16x1xf32>
    %10 = arith.addf %7, %9 : vector<16x1xf32>
    %c0_9 = arith.constant 0 : index
    %c0_10 = arith.constant 0 : index
    %11 = vector.load %arg4[%c0_9, %c0_10] : memref<16x1xf32, #tpu.memory_space<vmem>>, vector<16x1xf32>
    tpu.vector_store %arg4[%c0_9, %c0_10], %10 {strides = array<i32>} : memref<16x1xf32, #tpu.memory_space<vmem>>, vector<16x1xf32>,
    %c0_11 = arith.constant 0 : index
    %c0_12 = arith.constant 0 : index
    %12 = vector.load %arg5[%c0_11, %c0_12] : memref<16x1xf32, #tpu.memory_space<vmem>>, vector<16x1xf32>
    %13 = arith.mulf %2, %2 : vector<16x128xf32>
    %cst_13 = arith.constant dense<0.000000e+00> : vector<16xf32>
    %14 = vector.multi_reduction <add>, %13, %cst_13 [1] : vector<16x128xf32> to vector<16xf32>
    %15 = vector.shape_cast %14 : vector<16xf32> to vector<16x1xf32>
    %16 = arith.addf %12, %15 : vector<16x1xf32>
    %c0_14 = arith.constant 0 : index
    %c0_15 = arith.constant 0 : index
    %17 = vector.load %arg5[%c0_14, %c0_15] : memref<16x1xf32, #tpu.memory_space<vmem>>, vector<16x1xf32>
    tpu.vector_store %arg5[%c0_14, %c0_15], %16 {strides = array<i32>} : memref<16x1xf32, #tpu.memory_space<vmem>>, vector<16x1xf32>,
    return
  }
  func.func @transform_0(%arg0: i32) -> (i32, i32) {
    %c0_i32 = arith.constant 0 : i32
    %c0_i32_0 = arith.constant 0 : i32
    %c0_i32_1 = arith.constant 0 : i32
    return %c0_i32, %c0_i32_0 : i32, i32
  }
  func.func @transform_1(%arg0: i32) -> (i32, i32) {
    %c0_i32 = arith.constant 0 : i32
    %c0_i32_0 = arith.constant 0 : i32
    return %c0_i32, %arg0 : i32, i32
  }
  func.func @transform_2(%arg0: i32) -> (i32, i32) {
    %c0_i32 = arith.constant 0 : i32
    %c0_i32_0 = arith.constant 0 : i32
    return %c0_i32, %arg0 : i32, i32
  }
  func.func @transform_3(%arg0: i32) -> (i32, i32) {
    %c0_i32 = arith.constant 0 : i32
    %c0_i32_0 = arith.constant 0 : i32
    %c0_i32_1 = arith.constant 0 : i32
    return %c0_i32, %c0_i32_0 : i32, i32
  }
  func.func @transform_4(%arg0: i32) -> (i32, i32) {
    %c0_i32 = arith.constant 0 : i32
    %c0_i32_0 = arith.constant 0 : i32
    %c0_i32_1 = arith.constant 0 : i32
    return %c0_i32, %c0_i32_0 : i32, i32
  }
}

module attributes {stable_mosaic.version = 11 : i64} {
  func.func @kernel(%arg0: i32, %arg1: memref<16x128xf32, #tpu.memory_space<vmem>>, %arg2: memref<16x1xf32, #tpu.memory_space<vmem>>, %arg3: memref<16x1xf32, #tpu.memory_space<vmem>>, %arg4: memref<16x128xf32, #tpu.memory_space<vmem>>, %arg5: memref<16x128xf32, #tpu.memory_space<vmem>>) attributes {dimension_semantics = [#tpu.dimension_semantics<parallel>], iteration_bounds = array<i64: 1>, scalar_prefetch = 0 : i64, scratch_operands = 0 : i64, tpu.core_type = #tpu.core_type<tc>, window_params = [{transform_indices = @transform_0, window_bounds = array<i64: 16, 128>}, {pipeline_mode = #tpu.pipeline_mode<synchronous>, transform_indices = @transform_1, window_bounds = array<i64: 16, 1>}, {pipeline_mode = #tpu.pipeline_mode<synchronous>, transform_indices = @transform_2, window_bounds = array<i64: 16, 1>}, {transform_indices = @transform_3, window_bounds = array<i64: 16, 128>}, {transform_indices = @transform_4, window_bounds = array<i64: 16, 128>}]} {
    %c0 = arith.constant 0 : index
    %c0_0 = arith.constant 0 : index
    %0 = vector.load %arg1[%c0, %c0_0] : memref<16x128xf32, #tpu.memory_space<vmem>>, vector<16x128xf32>
    %c0_1 = arith.constant 0 : index
    %c0_2 = arith.constant 0 : index
    %1 = vector.load %arg2[%c0_1, %c0_2] : memref<16x1xf32, #tpu.memory_space<vmem>>, vector<16x1xf32>
    %2 = vector.broadcast %1 : vector<16x1xf32> to vector<16x128xf32>
    %3 = arith.mulf %0, %2 : vector<16x128xf32>
    %c0_3 = arith.constant 0 : index
    %c0_4 = arith.constant 0 : index
    %4 = vector.load %arg3[%c0_3, %c0_4] : memref<16x1xf32, #tpu.memory_space<vmem>>, vector<16x1xf32>
    %5 = vector.broadcast %4 : vector<16x1xf32> to vector<16x128xf32>
    %6 = arith.addf %3, %5 : vector<16x128xf32>
    %cst = arith.constant 0.000000e+00 : f32
    %7 = vector.broadcast %cst : f32 to vector<16x128xf32>
    %8 = arith.maximumf %6, %7 : vector<16x128xf32>
    %c0_5 = arith.constant 0 : index
    %c0_6 = arith.constant 0 : index
    %9 = vector.load %arg4[%c0_5, %c0_6] : memref<16x128xf32, #tpu.memory_space<vmem>>, vector<16x128xf32>
    %10 = arith.addf %8, %9 : vector<16x128xf32>
    %c0_7 = arith.constant 0 : index
    %c0_8 = arith.constant 0 : index
    %11 = vector.load %arg5[%c0_7, %c0_8] : memref<16x128xf32, #tpu.memory_space<vmem>>, vector<16x128xf32>
    tpu.vector_store %arg5[%c0_7, %c0_8], %10 {strides = array<i32>} : memref<16x128xf32, #tpu.memory_space<vmem>>, vector<16x128xf32>,
    return
  }
  func.func @transform_0(%arg0: i32) -> (i32, i32) {
    %c0_i32 = arith.constant 0 : i32
    %c0_i32_0 = arith.constant 0 : i32
    return %c0_i32, %arg0 : i32, i32
  }
  func.func @transform_1(%arg0: i32) -> (i32, i32) {
    %c0_i32 = arith.constant 0 : i32
    %c0_i32_0 = arith.constant 0 : i32
    %c0_i32_1 = arith.constant 0 : i32
    return %c0_i32, %c0_i32_0 : i32, i32
  }
  func.func @transform_2(%arg0: i32) -> (i32, i32) {
    %c0_i32 = arith.constant 0 : i32
    %c0_i32_0 = arith.constant 0 : i32
    %c0_i32_1 = arith.constant 0 : i32
    return %c0_i32, %c0_i32_0 : i32, i32
  }
  func.func @transform_3(%arg0: i32) -> (i32, i32) {
    %c0_i32 = arith.constant 0 : i32
    %c0_i32_0 = arith.constant 0 : i32
    return %c0_i32, %arg0 : i32, i32
  }
  func.func @transform_4(%arg0: i32) -> (i32, i32) {
    %c0_i32 = arith.constant 0 : i32
    %c0_i32_0 = arith.constant 0 : i32
    return %c0_i32, %arg0 : i32, i32
  }
}

module attributes {stable_mosaic.version = 11 : i64} {
  func.func @_matmul_stats_kernel(%arg0: i32, %arg1: memref<8x144xbf16, #tpu.memory_space<vmem>>, %arg2: memref<144x256xbf16, #tpu.memory_space<vmem>>, %arg3: memref<8x256xf32, #tpu.memory_space<vmem>>, %arg4: memref<8x1xf32, #tpu.memory_space<vmem>>, %arg5: memref<8x1xf32, #tpu.memory_space<vmem>>) attributes {dimension_semantics = [#tpu.dimension_semantics<arbitrary>], iteration_bounds = array<i64: 2>, scalar_prefetch = 0 : i64, scratch_operands = 0 : i64, tpu.core_type = #tpu.core_type<tc>, window_params = [{pipeline_mode = #tpu.pipeline_mode<synchronous>, transform_indices = @transform_0, window_bounds = array<i64: 8, 144>}, {transform_indices = @transform_1, window_bounds = array<i64: 144, 256>}, {transform_indices = @transform_2, window_bounds = array<i64: 8, 256>}, {pipeline_mode = #tpu.pipeline_mode<synchronous>, transform_indices = @transform_3, window_bounds = array<i64: 8, 1>}, {pipeline_mode = #tpu.pipeline_mode<synchronous>, transform_indices = @transform_4, window_bounds = array<i64: 8, 1>}]} {
    %c0 = arith.constant 0 : index
    %c0_0 = arith.constant 0 : index
    %0 = vector.load %arg1[%c0, %c0_0] : memref<8x144xbf16, #tpu.memory_space<vmem>>, vector<8x144xbf16>
    %c0_1 = arith.constant 0 : index
    %c0_2 = arith.constant 0 : index
    %1 = vector.load %arg2[%c0_1, %c0_2] : memref<144x256xbf16, #tpu.memory_space<vmem>>, vector<144x256xbf16>
    %cst = arith.constant dense<0.000000e+00> : vector<8x256xf32>
    %2 = tpu.matmul %0, %1, %cst {dimension_numbers = #tpu.dot_dimension_numbers<[1], [0], [0], [1], [0, 0, 1, 1], [], []>} : vector<8x144xbf16>, vector<144x256xbf16>, vector<8x256xf32> -> vector<8x256xf32>
    %c0_3 = arith.constant 0 : index
    %c0_4 = arith.constant 0 : index
    %3 = vector.load %arg3[%c0_3, %c0_4] : memref<8x256xf32, #tpu.memory_space<vmem>>, vector<8x256xf32>
    tpu.vector_store %arg3[%c0_3, %c0_4], %2 {strides = array<i32>} : memref<8x256xf32, #tpu.memory_space<vmem>>, vector<8x256xf32>,
    %c0_i32 = arith.constant 0 : i32
    %4 = arith.cmpi eq, %arg0, %c0_i32 : i32
    %5 = arith.extui %4 : i1 to i32
    %c0_i32_5 = arith.constant 0 : i32
    %6 = arith.cmpi ne, %5, %c0_i32_5 : i32
    scf.if %6 {
      %cst_16 = arith.constant 0.000000e+00 : f32
      %18 = vector.broadcast %cst_16 : f32 to vector<8x1xf32>
      %c0_17 = arith.constant 0 : index
      %c0_18 = arith.constant 0 : index
      %19 = vector.load %arg4[%c0_17, %c0_18] : memref<8x1xf32, #tpu.memory_space<vmem>>, vector<8x1xf32>
      tpu.vector_store %arg4[%c0_17, %c0_18], %18 {strides = array<i32>} : memref<8x1xf32, #tpu.memory_space<vmem>>, vector<8x1xf32>,
      %cst_19 = arith.constant 0.000000e+00 : f32
      %20 = vector.broadcast %cst_19 : f32 to vector<8x1xf32>
      %c0_20 = arith.constant 0 : index
      %c0_21 = arith.constant 0 : index
      %21 = vector.load %arg5[%c0_20, %c0_21] : memref<8x1xf32, #tpu.memory_space<vmem>>, vector<8x1xf32>
      tpu.vector_store %arg5[%c0_20, %c0_21], %20 {strides = array<i32>} : memref<8x1xf32, #tpu.memory_space<vmem>>, vector<8x1xf32>,
    } else {
    }
    %c0_6 = arith.constant 0 : index
    %c0_7 = arith.constant 0 : index
    %7 = vector.load %arg4[%c0_6, %c0_7] : memref<8x1xf32, #tpu.memory_space<vmem>>, vector<8x1xf32>
    %cst_8 = arith.constant dense<0.000000e+00> : vector<8xf32>
    %8 = vector.multi_reduction <add>, %2, %cst_8 [1] : vector<8x256xf32> to vector<8xf32>
    %9 = vector.shape_cast %8 : vector<8xf32> to vector<8x1xf32>
    %10 = arith.addf %7, %9 : vector<8x1xf32>
    %c0_9 = arith.constant 0 : index
    %c0_10 = arith.constant 0 : index
    %11 = vector.load %arg4[%c0_9, %c0_10] : memref<8x1xf32, #tpu.memory_space<vmem>>, vector<8x1xf32>
    tpu.vector_store %arg4[%c0_9, %c0_10], %10 {strides = array<i32>} : memref<8x1xf32, #tpu.memory_space<vmem>>, vector<8x1xf32>,
    %c0_11 = arith.constant 0 : index
    %c0_12 = arith.constant 0 : index
    %12 = vector.load %arg5[%c0_11, %c0_12] : memref<8x1xf32, #tpu.memory_space<vmem>>, vector<8x1xf32>
    %13 = arith.mulf %2, %2 : vector<8x256xf32>
    %cst_13 = arith.constant dense<0.000000e+00> : vector<8xf32>
    %14 = vector.multi_reduction <add>, %13, %cst_13 [1] : vector<8x256xf32> to vector<8xf32>
    %15 = vector.shape_cast %14 : vector<8xf32> to vector<8x1xf32>
    %16 = arith.addf %12, %15 : vector<8x1xf32>
    %c0_14 = arith.constant 0 : index
    %c0_15 = arith.constant 0 : index
    %17 = vector.load %arg5[%c0_14, %c0_15] : memref<8x1xf32, #tpu.memory_space<vmem>>, vector<8x1xf32>
    tpu.vector_store %arg5[%c0_14, %c0_15], %16 {strides = array<i32>} : memref<8x1xf32, #tpu.memory_space<vmem>>, vector<8x1xf32>,
    return
  }
  func.func @transform_0(%arg0: i32) -> (i32, i32) {
    %c0_i32 = arith.constant 0 : i32
    %c0_i32_0 = arith.constant 0 : i32
    %c0_i32_1 = arith.constant 0 : i32
    return %c0_i32, %c0_i32_0 : i32, i32
  }
  func.func @transform_1(%arg0: i32) -> (i32, i32) {
    %c0_i32 = arith.constant 0 : i32
    %c0_i32_0 = arith.constant 0 : i32
    return %c0_i32, %arg0 : i32, i32
  }
  func.func @transform_2(%arg0: i32) -> (i32, i32) {
    %c0_i32 = arith.constant 0 : i32
    %c0_i32_0 = arith.constant 0 : i32
    return %c0_i32, %arg0 : i32, i32
  }
  func.func @transform_3(%arg0: i32) -> (i32, i32) {
    %c0_i32 = arith.constant 0 : i32
    %c0_i32_0 = arith.constant 0 : i32
    %c0_i32_1 = arith.constant 0 : i32
    return %c0_i32, %c0_i32_0 : i32, i32
  }
  func.func @transform_4(%arg0: i32) -> (i32, i32) {
    %c0_i32 = arith.constant 0 : i32
    %c0_i32_0 = arith.constant 0 : i32
    %c0_i32_1 = arith.constant 0 : i32
    return %c0_i32, %c0_i32_0 : i32, i32
  }
}

module attributes {stable_mosaic.version = 11 : i64} {
  func.func @kernel(%arg0: i32, %arg1: memref<8x256xf32, #tpu.memory_space<vmem>>, %arg2: memref<8x1xf32, #tpu.memory_space<vmem>>, %arg3: memref<8x1xf32, #tpu.memory_space<vmem>>, %arg4: memref<8x256xf32, #tpu.memory_space<vmem>>, %arg5: memref<8x256xf32, #tpu.memory_space<vmem>>) attributes {dimension_semantics = [#tpu.dimension_semantics<parallel>], iteration_bounds = array<i64: 2>, scalar_prefetch = 0 : i64, scratch_operands = 0 : i64, tpu.core_type = #tpu.core_type<tc>, window_params = [{transform_indices = @transform_0, window_bounds = array<i64: 8, 256>}, {pipeline_mode = #tpu.pipeline_mode<synchronous>, transform_indices = @transform_1, window_bounds = array<i64: 8, 1>}, {pipeline_mode = #tpu.pipeline_mode<synchronous>, transform_indices = @transform_2, window_bounds = array<i64: 8, 1>}, {transform_indices = @transform_3, window_bounds = array<i64: 8, 256>}, {transform_indices = @transform_4, window_bounds = array<i64: 8, 256>}]} {
    %c0 = arith.constant 0 : index
    %c0_0 = arith.constant 0 : index
    %0 = vector.load %arg1[%c0, %c0_0] : memref<8x256xf32, #tpu.memory_space<vmem>>, vector<8x256xf32>
    %c0_1 = arith.constant 0 : index
    %c0_2 = arith.constant 0 : index
    %1 = vector.load %arg2[%c0_1, %c0_2] : memref<8x1xf32, #tpu.memory_space<vmem>>, vector<8x1xf32>
    %2 = vector.broadcast %1 : vector<8x1xf32> to vector<8x256xf32>
    %3 = arith.mulf %0, %2 : vector<8x256xf32>
    %c0_3 = arith.constant 0 : index
    %c0_4 = arith.constant 0 : index
    %4 = vector.load %arg3[%c0_3, %c0_4] : memref<8x1xf32, #tpu.memory_space<vmem>>, vector<8x1xf32>
    %5 = vector.broadcast %4 : vector<8x1xf32> to vector<8x256xf32>
    %6 = arith.addf %3, %5 : vector<8x256xf32>
    %cst = arith.constant 0.000000e+00 : f32
    %7 = vector.broadcast %cst : f32 to vector<8x256xf32>
    %8 = arith.maximumf %6, %7 : vector<8x256xf32>
    %c0_5 = arith.constant 0 : index
    %c0_6 = arith.constant 0 : index
    %9 = vector.load %arg4[%c0_5, %c0_6] : memref<8x256xf32, #tpu.memory_space<vmem>>, vector<8x256xf32>
    %10 = arith.addf %8, %9 : vector<8x256xf32>
    %c0_7 = arith.constant 0 : index
    %c0_8 = arith.constant 0 : index
    %11 = vector.load %arg5[%c0_7, %c0_8] : memref<8x256xf32, #tpu.memory_space<vmem>>, vector<8x256xf32>
    tpu.vector_store %arg5[%c0_7, %c0_8], %10 {strides = array<i32>} : memref<8x256xf32, #tpu.memory_space<vmem>>, vector<8x256xf32>,
    return
  }
  func.func @transform_0(%arg0: i32) -> (i32, i32) {
    %c0_i32 = arith.constant 0 : i32
    %c0_i32_0 = arith.constant 0 : i32
    return %c0_i32, %arg0 : i32, i32
  }
  func.func @transform_1(%arg0: i32) -> (i32, i32) {
    %c0_i32 = arith.constant 0 : i32
    %c0_i32_0 = arith.constant 0 : i32
    %c0_i32_1 = arith.constant 0 : i32
    return %c0_i32, %c0_i32_0 : i32, i32
  }
  func.func @transform_2(%arg0: i32) -> (i32, i32) {
    %c0_i32 = arith.constant 0 : i32
    %c0_i32_0 = arith.constant 0 : i32
    %c0_i32_1 = arith.constant 0 : i32
    return %c0_i32, %c0_i32_0 : i32, i32
  }
  func.func @transform_3(%arg0: i32) -> (i32, i32) {
    %c0_i32 = arith.constant 0 : i32
    %c0_i32_0 = arith.constant 0 : i32
    return %c0_i32, %arg0 : i32, i32
  }
  func.func @transform_4(%arg0: i32) -> (i32, i32) {
    %c0_i32 = arith.constant 0 : i32
    %c0_i32_0 = arith.constant 0 : i32
    return %c0_i32, %arg0 : i32, i32
  }
}

module attributes {stable_mosaic.version = 11 : i64} {
  func.func @_matmul_stats_kernel(%arg0: i32, %arg1: memref<3x392xbf16, #tpu.memory_space<vmem>>, %arg2: memref<392x256xbf16, #tpu.memory_space<vmem>>, %arg3: memref<3x256xf32, #tpu.memory_space<vmem>>, %arg4: memref<3x1xf32, #tpu.memory_space<vmem>>, %arg5: memref<3x1xf32, #tpu.memory_space<vmem>>) attributes {dimension_semantics = [#tpu.dimension_semantics<arbitrary>], iteration_bounds = array<i64: 2>, scalar_prefetch = 0 : i64, scratch_operands = 0 : i64, tpu.core_type = #tpu.core_type<tc>, window_params = [{pipeline_mode = #tpu.pipeline_mode<synchronous>, transform_indices = @transform_0, window_bounds = array<i64: 3, 392>}, {transform_indices = @transform_1, window_bounds = array<i64: 392, 256>}, {transform_indices = @transform_2, window_bounds = array<i64: 3, 256>}, {pipeline_mode = #tpu.pipeline_mode<synchronous>, transform_indices = @transform_3, window_bounds = array<i64: 3, 1>}, {pipeline_mode = #tpu.pipeline_mode<synchronous>, transform_indices = @transform_4, window_bounds = array<i64: 3, 1>}]} {
    %c0 = arith.constant 0 : index
    %c0_0 = arith.constant 0 : index
    %0 = vector.load %arg1[%c0, %c0_0] : memref<3x392xbf16, #tpu.memory_space<vmem>>, vector<3x392xbf16>
    %c0_1 = arith.constant 0 : index
    %c0_2 = arith.constant 0 : index
    %1 = vector.load %arg2[%c0_1, %c0_2] : memref<392x256xbf16, #tpu.memory_space<vmem>>, vector<392x256xbf16>
    %cst = arith.constant dense<0.000000e+00> : vector<3x256xf32>
    %2 = tpu.matmul %0, %1, %cst {dimension_numbers = #tpu.dot_dimension_numbers<[1], [0], [0], [1], [0, 0, 1, 1], [], []>} : vector<3x392xbf16>, vector<392x256xbf16>, vector<3x256xf32> -> vector<3x256xf32>
    %c0_3 = arith.constant 0 : index
    %c0_4 = arith.constant 0 : index
    %3 = vector.load %arg3[%c0_3, %c0_4] : memref<3x256xf32, #tpu.memory_space<vmem>>, vector<3x256xf32>
    tpu.vector_store %arg3[%c0_3, %c0_4], %2 {strides = array<i32>} : memref<3x256xf32, #tpu.memory_space<vmem>>, vector<3x256xf32>,
    %c0_i32 = arith.constant 0 : i32
    %4 = arith.cmpi eq, %arg0, %c0_i32 : i32
    %5 = arith.extui %4 : i1 to i32
    %c0_i32_5 = arith.constant 0 : i32
    %6 = arith.cmpi ne, %5, %c0_i32_5 : i32
    scf.if %6 {
      %cst_16 = arith.constant 0.000000e+00 : f32
      %18 = vector.broadcast %cst_16 : f32 to vector<3x1xf32>
      %c0_17 = arith.constant 0 : index
      %c0_18 = arith.constant 0 : index
      %19 = vector.load %arg4[%c0_17, %c0_18] : memref<3x1xf32, #tpu.memory_space<vmem>>, vector<3x1xf32>
      tpu.vector_store %arg4[%c0_17, %c0_18], %18 {strides = array<i32>} : memref<3x1xf32, #tpu.memory_space<vmem>>, vector<3x1xf32>,
      %cst_19 = arith.constant 0.000000e+00 : f32
      %20 = vector.broadcast %cst_19 : f32 to vector<3x1xf32>
      %c0_20 = arith.constant 0 : index
      %c0_21 = arith.constant 0 : index
      %21 = vector.load %arg5[%c0_20, %c0_21] : memref<3x1xf32, #tpu.memory_space<vmem>>, vector<3x1xf32>
      tpu.vector_store %arg5[%c0_20, %c0_21], %20 {strides = array<i32>} : memref<3x1xf32, #tpu.memory_space<vmem>>, vector<3x1xf32>,
    } else {
    }
    %c0_6 = arith.constant 0 : index
    %c0_7 = arith.constant 0 : index
    %7 = vector.load %arg4[%c0_6, %c0_7] : memref<3x1xf32, #tpu.memory_space<vmem>>, vector<3x1xf32>
    %cst_8 = arith.constant dense<0.000000e+00> : vector<3xf32>
    %8 = vector.multi_reduction <add>, %2, %cst_8 [1] : vector<3x256xf32> to vector<3xf32>
    %9 = vector.shape_cast %8 : vector<3xf32> to vector<3x1xf32>
    %10 = arith.addf %7, %9 : vector<3x1xf32>
    %c0_9 = arith.constant 0 : index
    %c0_10 = arith.constant 0 : index
    %11 = vector.load %arg4[%c0_9, %c0_10] : memref<3x1xf32, #tpu.memory_space<vmem>>, vector<3x1xf32>
    tpu.vector_store %arg4[%c0_9, %c0_10], %10 {strides = array<i32>} : memref<3x1xf32, #tpu.memory_space<vmem>>, vector<3x1xf32>,
    %c0_11 = arith.constant 0 : index
    %c0_12 = arith.constant 0 : index
    %12 = vector.load %arg5[%c0_11, %c0_12] : memref<3x1xf32, #tpu.memory_space<vmem>>, vector<3x1xf32>
    %13 = arith.mulf %2, %2 : vector<3x256xf32>
    %cst_13 = arith.constant dense<0.000000e+00> : vector<3xf32>
    %14 = vector.multi_reduction <add>, %13, %cst_13 [1] : vector<3x256xf32> to vector<3xf32>
    %15 = vector.shape_cast %14 : vector<3xf32> to vector<3x1xf32>
    %16 = arith.addf %12, %15 : vector<3x1xf32>
    %c0_14 = arith.constant 0 : index
    %c0_15 = arith.constant 0 : index
    %17 = vector.load %arg5[%c0_14, %c0_15] : memref<3x1xf32, #tpu.memory_space<vmem>>, vector<3x1xf32>
    tpu.vector_store %arg5[%c0_14, %c0_15], %16 {strides = array<i32>} : memref<3x1xf32, #tpu.memory_space<vmem>>, vector<3x1xf32>,
    return
  }
  func.func @transform_0(%arg0: i32) -> (i32, i32) {
    %c0_i32 = arith.constant 0 : i32
    %c0_i32_0 = arith.constant 0 : i32
    %c0_i32_1 = arith.constant 0 : i32
    return %c0_i32, %c0_i32_0 : i32, i32
  }
  func.func @transform_1(%arg0: i32) -> (i32, i32) {
    %c0_i32 = arith.constant 0 : i32
    %c0_i32_0 = arith.constant 0 : i32
    return %c0_i32, %arg0 : i32, i32
  }
  func.func @transform_2(%arg0: i32) -> (i32, i32) {
    %c0_i32 = arith.constant 0 : i32
    %c0_i32_0 = arith.constant 0 : i32
    return %c0_i32, %arg0 : i32, i32
  }
  func.func @transform_3(%arg0: i32) -> (i32, i32) {
    %c0_i32 = arith.constant 0 : i32
    %c0_i32_0 = arith.constant 0 : i32
    %c0_i32_1 = arith.constant 0 : i32
    return %c0_i32, %c0_i32_0 : i32, i32
  }
  func.func @transform_4(%arg0: i32) -> (i32, i32) {
    %c0_i32 = arith.constant 0 : i32
    %c0_i32_0 = arith.constant 0 : i32
    %c0_i32_1 = arith.constant 0 : i32
    return %c0_i32, %c0_i32_0 : i32, i32
  }
}

module attributes {stable_mosaic.version = 11 : i64} {
  func.func @kernel(%arg0: i32, %arg1: memref<3x256xf32, #tpu.memory_space<vmem>>, %arg2: memref<3x1xf32, #tpu.memory_space<vmem>>, %arg3: memref<3x1xf32, #tpu.memory_space<vmem>>, %arg4: memref<3x256xf32, #tpu.memory_space<vmem>>) attributes {dimension_semantics = [#tpu.dimension_semantics<parallel>], iteration_bounds = array<i64: 2>, scalar_prefetch = 0 : i64, scratch_operands = 0 : i64, tpu.core_type = #tpu.core_type<tc>, window_params = [{transform_indices = @transform_0, window_bounds = array<i64: 3, 256>}, {pipeline_mode = #tpu.pipeline_mode<synchronous>, transform_indices = @transform_1, window_bounds = array<i64: 3, 1>}, {pipeline_mode = #tpu.pipeline_mode<synchronous>, transform_indices = @transform_2, window_bounds = array<i64: 3, 1>}, {transform_indices = @transform_3, window_bounds = array<i64: 3, 256>}]} {
    %c0 = arith.constant 0 : index
    %c0_0 = arith.constant 0 : index
    %0 = vector.load %arg1[%c0, %c0_0] : memref<3x256xf32, #tpu.memory_space<vmem>>, vector<3x256xf32>
    %c0_1 = arith.constant 0 : index
    %c0_2 = arith.constant 0 : index
    %1 = vector.load %arg2[%c0_1, %c0_2] : memref<3x1xf32, #tpu.memory_space<vmem>>, vector<3x1xf32>
    %2 = vector.broadcast %1 : vector<3x1xf32> to vector<3x256xf32>
    %3 = arith.mulf %0, %2 : vector<3x256xf32>
    %c0_3 = arith.constant 0 : index
    %c0_4 = arith.constant 0 : index
    %4 = vector.load %arg3[%c0_3, %c0_4] : memref<3x1xf32, #tpu.memory_space<vmem>>, vector<3x1xf32>
    %5 = vector.broadcast %4 : vector<3x1xf32> to vector<3x256xf32>
    %6 = arith.addf %3, %5 : vector<3x256xf32>
    %7 = math.tanh %6 : vector<3x256xf32>
    %c0_5 = arith.constant 0 : index
    %c0_6 = arith.constant 0 : index
    %8 = vector.load %arg4[%c0_5, %c0_6] : memref<3x256xf32, #tpu.memory_space<vmem>>, vector<3x256xf32>
    tpu.vector_store %arg4[%c0_5, %c0_6], %7 {strides = array<i32>} : memref<3x256xf32, #tpu.memory_space<vmem>>, vector<3x256xf32>,
    return
  }
  func.func @transform_0(%arg0: i32) -> (i32, i32) {
    %c0_i32 = arith.constant 0 : i32
    %c0_i32_0 = arith.constant 0 : i32
    return %c0_i32, %arg0 : i32, i32
  }
  func.func @transform_1(%arg0: i32) -> (i32, i32) {
    %c0_i32 = arith.constant 0 : i32
    %c0_i32_0 = arith.constant 0 : i32
    %c0_i32_1 = arith.constant 0 : i32
    return %c0_i32, %c0_i32_0 : i32, i32
  }
  func.func @transform_2(%arg0: i32) -> (i32, i32) {
    %c0_i32 = arith.constant 0 : i32
    %c0_i32_0 = arith.constant 0 : i32
    %c0_i32_1 = arith.constant 0 : i32
    return %c0_i32, %c0_i32_0 : i32, i32
  }
  func.func @transform_3(%arg0: i32) -> (i32, i32) {
    %c0_i32 = arith.constant 0 : i32
    %c0_i32_0 = arith.constant 0 : i32
    return %c0_i32, %arg0 : i32, i32
  }
}

</mosaic_0001>

<llo_original>
// kernel: res_unet_att_forward.35
$region0: #{res_unet_att_forward.35}
  #allocation0 [shape = 'u32[]', space=smem, size = 0x4, offset = 0x4, fixed_abs, tag = 'smem constant byte address 0x4 - core index']
  #allocation1 [shape = 'u32[144,128]{1,0:T(1,128)}', space=vmem, size = 0x12000, scoped, tag = 'internal scratch']
  %s0 = inlined_call_operand.vmem [shape: f32[8,512], index: 0, kind: input, shape index: {}]
  %s1 = inlined_call_operand.vmem [shape: f32[8,1], index: 1, kind: input, shape index: {}]
  %s2 = inlined_call_operand.vmem [shape: f32[8,1], index: 2, kind: input, shape index: {}]
  %s3 = inlined_call_operand.vmem [shape: f32[8,512], index: 3, kind: output, shape index: {}]
  %s4 = sld [smem:[#allocation0]]
  $region45: #{res_unet_att_forward.35} parent=0
    _
  %s6 = ssub.s32 1, %s4
  %s7 = scalar_select 0, %s6, %s4
  loop: start=0, step=1, limit=4
  $region2: #{res_unet_att_forward.35} parent=0 // loop_pre_header
    _
  $region3: #{res_unet_att_forward.35} parent=0 // loop_header
    %s9 = sphi 0, %s13
    %p10 = scmp.ge.s32.totalorder %s9, 4
    %s19 = sphi 0, %s21
    %s22 = sphi 0, %s19
    %s23 = sphi 0, %s22
    %s39 = sphi 0, %s23
    %s43 = sphi 0, %s43
    %s45 = sphi 0, %s43
    %s46 = sphi 0, %s45
    %s60 = sphi 0, %s46
    %s64 = sphi 0, %s64
    %s66 = sphi 0, %s64
    %s67 = sphi 0, %s66
    %s81 = sphi 0, %s67
    %s87 = sphi 0, %s89
    %s90 = sphi 0, %s87
    %s91 = sphi 0, %s90
    %s107 = sphi 0, %s91
  $region4: #{res_unet_att_forward.35} parent=0 // loop_header_branch
    %12 = sbr.rel (%p10) target = $region8
  $region5: #{res_unet_att_forward.35} parent=0 // loop_body
    %s14 = ssub.s32 %s9, 1
    %s15 = ssub.s32 %s9, 2
    %s16 = sadd.s32 %s9, 1
    %s17 = ssub.s32 %s9, %s16
    %p18 = scmp.eq.s32.totalorder %s17, 0
    %s20 = sadd.s32 %s19, 1
    %s21 = scalar_select %p18, %s19, %s20
    %p24 = pneg %p18
    %p25 = scmp.eq.s32.totalorder %s9, 1
    %p26 = por %p24, %p25
    %p27 = scmp.ne.s32.totalorder %s19, %s22
    %p28 = scmp.eq.s32.totalorder %s9, 0
    %p29 = por %p27, %p28
    %p30 = scmp.ne.s32.totalorder %s19, %s22
    %p31 = scmp.eq.s32.totalorder %s14, 1
    %p32 = por %p30, %p31
    %p33 = scmp.ne.s32.totalorder %s22, %s23
    %p34 = scmp.eq.s32.totalorder %s14, 0
    %p35 = por %p33, %p34
    %p36 = scmp.ne.s32.totalorder %s22, %s23
    %p37 = scmp.eq.s32.totalorder %s15, 1
    %p38 = por %p36, %p37
    %p40 = scmp.ne.s32.totalorder %s23, %s39
    %p41 = scmp.eq.s32.totalorder %s15, 0
    %p42 = por %p40, %p41
    %s44 = sadd.s32 %s43, 1
    %p47 = scmp.eq.s32.totalorder %s9, 1
    %p48 = scmp.ne.s32.totalorder %s43, %s45
    %p49 = scmp.eq.s32.totalorder %s9, 0
    %p50 = por %p48, %p49
    %p51 = scmp.ne.s32.totalorder %s43, %s45
    %p52 = scmp.eq.s32.totalorder %s14, 1
    %p53 = por %p51, %p52
    %p54 = scmp.ne.s32.totalorder %s45, %s46
    %p55 = scmp.eq.s32.totalorder %s14, 0
    %p56 = por %p54, %p55
    %p57 = scmp.ne.s32.totalorder %s45, %s46
    %p58 = scmp.eq.s32.totalorder %s15, 1
    %p59 = por %p57, %p58
    %p61 = scmp.ne.s32.totalorder %s46, %s60
    %p62 = scmp.eq.s32.totalorder %s15, 0
    %p63 = por %p61, %p62
    %s65 = sadd.s32 %s64, 1
    %p68 = scmp.eq.s32.totalorder %s9, 1
    %p69 = scmp.ne.s32.totalorder %s64, %s66
    %p70 = scmp.eq.s32.totalorder %s9, 0
    %p71 = por %p69, %p70
    %p72 = scmp.ne.s32.totalorder %s64, %s66
    %p73 = scmp.eq.s32.totalorder %s14, 1
    %p74 = por %p72, %p73
    %p75 = scmp.ne.s32.totalorder %s66, %s67
    %p76 = scmp.eq.s32.totalorder %s14, 0
    %p77 = por %p75, %p76
    %p78 = scmp.ne.s32.totalorder %s66, %s67
    %p79 = scmp.eq.s32.totalorder %s15, 1
    %p80 = por %p78, %p79
    %p82 = scmp.ne.s32.totalorder %s67, %s81
    %p83 = scmp.eq.s32.totalorder %s15, 0
    %p84 = por %p82, %p83
    %s85 = ssub.s32 %s9, %s16
    %p86 = scmp.eq.s32.totalorder %s85, 0
    %s88 = sadd.s32 %s87, 1
    %s89 = scalar_select %p86, %s87, %s88
    %p92 = pneg %p86
    %p93 = scmp.eq.s32.totalorder %s9, 1
    %p94 = por %p92, %p93
    %p95 = scmp.ne.s32.totalorder %s87, %s90
    %p96 = scmp.eq.s32.totalorder %s9, 0
    %p97 = por %p95, %p96
    %p98 = scmp.ne.s32.totalorder %s87, %s90
    %p99 = scmp.eq.s32.totalorder %s14, 1
    %p100 = por %p98, %p99
    %p101 = scmp.ne.s32.totalorder %s90, %s91
    %p102 = scmp.eq.s32.totalorder %s14, 0
    %p103 = por %p101, %p102
    %p104 = scmp.ne.s32.totalorder %s90, %s91
    %p105 = scmp.eq.s32.totalorder %s15, 1
    %p106 = por %p104, %p105
    %p108 = scmp.ne.s32.totalorder %s91, %s107
    %p109 = scmp.eq.s32.totalorder %s15, 0
    %p110 = por %p108, %p109
    %p111 = scmp.le.s32.totalorder 1, %s9
    %p112 = scmp.lt.s32.totalorder %s9, 3
    %p113 = pnand %p111, %p112
    %p114 = pneg %p113
    // Predicated region
    $region9: #{res_unet_att_forward.35} parent=5 // pred_check
      _
    $region10: #{res_unet_att_forward.35} parent=5 // pred_check_branch
      %116 = sbr.rel (%p113) target = $region12
    $region11: #{res_unet_att_forward.35} parent=5 // pred_region
      %s117 = ssub.s32 %s9, 1
      // Predicated region
      $region13: #{res_unet_att_forward.35} parent=11 // pred_check
        %p118 = pneg %p56
      $region14: #{res_unet_att_forward.35} parent=11 // pred_check_branch
        %120 = sbr.rel (%p118) target = $region16
      $region15: #{res_unet_att_forward.35} parent=11 // pred_region
        _
      $region16: #{res_unet_att_forward.35} parent=11 // pred_fallthru
        _
      // Predicated region
      $region17: #{res_unet_att_forward.35} parent=11 // pred_check
        %p121 = pneg %p77
      $region18: #{res_unet_att_forward.35} parent=11 // pred_check_branch
        %123 = sbr.rel (%p121) target = $region20
      $region19: #{res_unet_att_forward.35} parent=11 // pred_region
        _
      $region20: #{res_unet_att_forward.35} parent=11 // pred_fallthru
        _
    $region12: #{res_unet_att_forward.35} parent=5 // pred_fallthru
      _
    %p124 = scmp.lt.s32.totalorder %s9, 2
    // Predicated region
    $region21: #{res_unet_att_forward.35} parent=5 // pred_check
      %p125 = pneg %p124
    $region22: #{res_unet_att_forward.35} parent=5 // pred_check_branch
      %127 = sbr.rel (%p125) target = $region24
    $region23: #{res_unet_att_forward.35} parent=5 // pred_region
      // Predicated region
      $region25: #{res_unet_att_forward.35} parent=23 // pred_check
        %p128 = pneg %p29
      $region26: #{res_unet_att_forward.35} parent=23 // pred_check_branch
        %130 = sbr.rel (%p128) target = $region28
      $region27: #{res_unet_att_forward.35} parent=23 // pred_region
        %s131 = smul.u32 2, %s9
        %p132 = scmp.lt.s32.totalorder %s131, 3
        %s133 = scalar_select %p132, %s131, 3
        %s134 = smul.addr %s133, 8
        %s135 = scalar_lea.vmem %s0, %s134
        %s136 = smul.u32 2, %s9
      $region28: #{res_unet_att_forward.35} parent=23 // pred_fallthru
        _
    $region24: #{res_unet_att_forward.35} parent=5 // pred_fallthru
      _
    %p137 = scmp.le.s32.totalorder 1, %s9
    %p138 = scmp.lt.s32.totalorder %s9, 3
    %p139 = pnand %p137, %p138
    %p140 = pneg %p139
    // Predicated region
    $region29: #{res_unet_att_forward.35} parent=5 // pred_check
      _
    $region30: #{res_unet_att_forward.35} parent=5 // pred_check_branch
      %142 = sbr.rel (%p139) target = $region32
    $region31: #{res_unet_att_forward.35} parent=5 // pred_region
      %s143 = ssub.s32 %s9, 1
      %s144 = smul.u32 2, %s14
      %p145 = scmp.lt.s32.totalorder %s144, 3
      %s146 = scalar_select %p145, %s144, 3
      %s147 = smul.addr %s146, 8
      %s148 = scalar_lea.vmem %s0, %s147
      %p149 = pneg %p35
      %p150 = pneg %p32
      %p151 = pneg %p56
      %p152 = pneg %p53
      %p153 = pneg %p77
      %p154 = pneg %p74
      %p155 = pneg %p103
      %p156 = pneg %p100
      %s157 = smul.u32 2, %s14
      %p158 = scmp.lt.s32.totalorder %s157, 3
      %s159 = scalar_select %p158, %s157, 3
      %s160 = smul.addr %s159, 8
      %s161 = scalar_lea.vmem %s3, %s160
      %s162 = smul.u32 2, %s14
      %p163 = scmp.lt.s32.totalorder %s162, 3
      %s164 = scalar_select %p163, %s162, 3
      %s165 = smul.addr %s164, 8
      %s166 = scalar_lea.vmem %s0, %s165
      %s167 = smul.u32 2, %s14
      %s168 = smul.u32 2, %s14
      %p169 = scmp.lt.s32.totalorder %s168, 3
      %s170 = scalar_select %p169, %s168, 3
      %s171 = smul.addr %s170, 8
      %s172 = scalar_lea.vmem %s3, %s171
      %s173 = smul.u32 2, %s14
      %v174 = vld [vmem:[%s166] sm:$0xff]
      %v175 = vld [vmem:[%s166 + $0x8] sm:$0xff]
      %v176 = vld [vmem:[%s1] sm:$0xff]
      %178 = vset.pattern.permute.xlu0 0
      %179 = vperm.xlu0 %178, %v176
      %v180 = vpop.permute.xlu0 %179
      %v182 = vmul.f32 %v174, %v180
      %v183 = vmul.f32 %v175, %v180
      %v184 = vld [vmem:[%s2] sm:$0xff]
      %186 = vset.pattern.permute.xlu0 0
      %187 = vperm.xlu0 %186, %v184
      %v188 = vpop.permute.xlu0 %187
      %v190 = vadd.f32 %v182, %v188
      %v191 = vadd.f32 %v183, %v188
      %v192 = vmax.f32 %v190, 0.0
      %v193 = vmax.f32 %v191, 0.0
      %194 = vst [vmem:[%s172] sm:$0xff] %v192
      %195 = vst [vmem:[%s172 + $0x8] sm:$0xff] %v193
      %s196 = smul.u32 2, %s14
      %p197 = scmp.lt.s32.totalorder %s196, 3
      %s198 = scalar_select %p197, %s196, 3
      %s199 = smul.addr %s198, 8
      %s200 = scalar_lea.vmem %s3, %s199
      // Predicated region
      $region33: #{res_unet_att_forward.35} parent=31 // pred_check
        %p201 = pneg %p100
      $region34: #{res_unet_att_forward.35} parent=31 // pred_check_branch
        %203 = sbr.rel (%p201) target = $region36
      $region35: #{res_unet_att_forward.35} parent=31 // pred_region
        %s204 = smul.u32 2, %s14
      $region36: #{res_unet_att_forward.35} parent=31 // pred_fallthru
        _
    $region32: #{res_unet_att_forward.35} parent=5 // pred_fallthru
      _
    %p205 = scmp.le.s32.totalorder 2, %s9
    // Predicated region
    $region37: #{res_unet_att_forward.35} parent=5 // pred_check
      %p206 = pneg %p205
    $region38: #{res_unet_att_forward.35} parent=5 // pred_check_branch
      %208 = sbr.rel (%p206) target = $region40
    $region39: #{res_unet_att_forward.35} parent=5 // pred_region
      %s209 = ssub.s32 %s9, 2
      // Predicated region
      $region41: #{res_unet_att_forward.35} parent=39 // pred_check
        %p210 = pneg %p106
      $region42: #{res_unet_att_forward.35} parent=39 // pred_check_branch
        %212 = sbr.rel (%p210) target = $region44
      $region43: #{res_unet_att_forward.35} parent=39 // pred_region
        %s213 = smul.u32 2, %s15
        %p214 = scmp.lt.s32.totalorder %s213, 3
        %s215 = scalar_select %p214, %s213, 3
        %s216 = smul.addr %s215, 8
        %s217 = scalar_lea.vmem %s3, %s216
      $region44: #{res_unet_att_forward.35} parent=39 // pred_fallthru
        _
    $region40: #{res_unet_att_forward.35} parent=5 // pred_fallthru
      _
  $region6: #{res_unet_att_forward.35} parent=0 // loop_footer
    %s13 = sadd.s32 1, %s9
  $region7: #{res_unet_att_forward.35} parent=0 // loop_footer_branch
    %8 = sbr.rel target = $region3
  $region8: #{res_unet_att_forward.35} parent=0 // loop_exit
    _

// kernel: res_unet_att_forward.34
$region0: #{res_unet_att_forward.34}
  #allocation0 [shape = 'u32[]', space=smem, size = 0x4, offset = 0x4, fixed_abs, tag = 'smem constant byte address 0x4 - core index']
  #allocation1 [shape = 'u32[144,128]{1,0:T(1,128)}', space=vmem, size = 0x12000, scoped, tag = 'internal scratch']
  %s0 = inlined_call_operand.vmem [shape: bf16[8,147], index: 0, kind: input, shape index: {}]
  %s1 = inlined_call_operand.vmem [shape: bf16[147,512], index: 1, kind: input, shape index: {}]
  %s2 = inlined_call_operand.vmem [shape: f32[8,512], index: 2, kind: output, shape index: {0}]
  %s3 = inlined_call_operand.vmem [shape: f32[8,1], index: 3, kind: output, shape index: {1}]
  %s4 = inlined_call_operand.vmem [shape: f32[8,1], index: 4, kind: output, shape index: {2}]
  %5 = xla_tuple %s2, %s3, %s4
  %s6 = sld [smem:[#allocation0]]
  $region99: #{res_unet_att_forward.34} parent=0
    _
  %s8 = ssub.s32 1, %s6
  %s9 = scalar_select 0, %s8, %s6
  $region1: #{res_unet_att_forward.34} parent=0
    #allocation2 [shape = 'u8[155648]{0}', space=vmem, size = 0x26000, scoped, tag = 'input window, operand 1']
    loop: start=0, step=1, limit=4
    $region2: #{res_unet_att_forward.34} parent=1 // loop_pre_header
      _
    $region3: #{res_unet_att_forward.34} parent=1 // loop_header
      %s11 = sphi 0, %s15
      %p12 = scmp.ge.s32.totalorder %s11, 4
      %s19 = sphi 0, %s19
      %s21 = sphi 0, %s19
      %s22 = sphi 0, %s21
      %s36 = sphi 0, %s22
      %s42 = sphi 0, %s44
      %s45 = sphi 0, %s42
      %s46 = sphi 0, %s45
      %s62 = sphi 0, %s46
      %s68 = sphi 0, %s70
      %s71 = sphi 0, %s68
      %s72 = sphi 0, %s71
      %s88 = sphi 0, %s72
      %s92 = sphi 0, %s92
      %s94 = sphi 0, %s92
      %s95 = sphi 0, %s94
      %s109 = sphi 0, %s95
      %s113 = sphi 0, %s113
      %s115 = sphi 0, %s113
      %s116 = sphi 0, %s115
      %s130 = sphi 0, %s116
    $region4: #{res_unet_att_forward.34} parent=1 // loop_header_branch
      %14 = sbr.rel (%p12) target = $region8
    $region5: #{res_unet_att_forward.34} parent=1 // loop_body
      %s16 = ssub.s32 %s11, 1
      %s17 = ssub.s32 %s11, 2
      %s18 = sadd.s32 %s11, 1
      %s20 = sadd.s32 %s19, 1
      %p23 = scmp.eq.s32.totalorder %s11, 1
      %p24 = scmp.ne.s32.totalorder %s19, %s21
      %p25 = scmp.eq.s32.totalorder %s11, 0
      %p26 = por %p24, %p25
      %p27 = scmp.ne.s32.totalorder %s19, %s21
      %p28 = scmp.eq.s32.totalorder %s16, 1
      %p29 = por %p27, %p28
      %p30 = scmp.ne.s32.totalorder %s21, %s22
      %p31 = scmp.eq.s32.totalorder %s16, 0
      %p32 = por %p30, %p31
      %p33 = scmp.ne.s32.totalorder %s21, %s22
      %p34 = scmp.eq.s32.totalorder %s17, 1
      %p35 = por %p33, %p34
      %p37 = scmp.ne.s32.totalorder %s22, %s36
      %p38 = scmp.eq.s32.totalorder %s17, 0
      %p39 = por %p37, %p38
      %s40 = ssub.s32 %s11, %s18
      %p41 = scmp.eq.s32.totalorder %s40, 0
      %s43 = sadd.s32 %s42, 1
      %s44 = scalar_select %p41, %s42, %s43
      %p47 = pneg %p41
      %p48 = scmp.eq.s32.totalorder %s11, 1
      %p49 = por %p47, %p48
      %p50 = scmp.ne.s32.totalorder %s42, %s45
      %p51 = scmp.eq.s32.totalorder %s11, 0
      %p52 = por %p50, %p51
      %p53 = scmp.ne.s32.totalorder %s42, %s45
      %p54 = scmp.eq.s32.totalorder %s16, 1
      %p55 = por %p53, %p54
      %p56 = scmp.ne.s32.totalorder %s45, %s46
      %p57 = scmp.eq.s32.totalorder %s16, 0
      %p58 = por %p56, %p57
      %p59 = scmp.ne.s32.totalorder %s45, %s46
      %p60 = scmp.eq.s32.totalorder %s17, 1
      %p61 = por %p59, %p60
      %p63 = scmp.ne.s32.totalorder %s46, %s62
      %p64 = scmp.eq.s32.totalorder %s17, 0
      %p65 = por %p63, %p64
      %s66 = ssub.s32 %s11, %s18
      %p67 = scmp.eq.s32.totalorder %s66, 0
      %s69 = sadd.s32 %s68, 1
      %s70 = scalar_select %p67, %s68, %s69
      %p73 = pneg %p67
      %p74 = scmp.eq.s32.totalorder %s11, 1
      %p75 = por %p73, %p74
      %p76 = scmp.ne.s32.totalorder %s68, %s71
      %p77 = scmp.eq.s32.totalorder %s11, 0
      %p78 = por %p76, %p77
      %p79 = scmp.ne.s32.totalorder %s68, %s71
      %p80 = scmp.eq.s32.totalorder %s16, 1
      %p81 = por %p79, %p80
      %p82 = scmp.ne.s32.totalorder %s71, %s72
      %p83 = scmp.eq.s32.totalorder %s16, 0
      %p84 = por %p82, %p83
      %p85 = scmp.ne.s32.totalorder %s71, %s72
      %p86 = scmp.eq.s32.totalorder %s17, 1
      %p87 = por %p85, %p86
      %p89 = scmp.ne.s32.totalorder %s72, %s88
      %p90 = scmp.eq.s32.totalorder %s17, 0
      %p91 = por %p89, %p90
      %s93 = sadd.s32 %s92, 1
      %p96 = scmp.eq.s32.totalorder %s11, 1
      %p97 = scmp.ne.s32.totalorder %s92, %s94
      %p98 = scmp.eq.s32.totalorder %s11, 0
      %p99 = por %p97, %p98
      %p100 = scmp.ne.s32.totalorder %s92, %s94
      %p101 = scmp.eq.s32.totalorder %s16, 1
      %p102 = por %p100, %p101
      %p103 = scmp.ne.s32.totalorder %s94, %s95
      %p104 = scmp.eq.s32.totalorder %s16, 0
      %p105 = por %p103, %p104
      %p106 = scmp.ne.s32.totalorder %s94, %s95
      %p107 = scmp.eq.s32.totalorder %s17, 1
      %p108 = por %p106, %p107
      %p110 = scmp.ne.s32.totalorder %s95, %s109
      %p111 = scmp.eq.s32.totalorder %s17, 0
      %p112 = por %p110, %p111
      %s114 = sadd.s32 %s113, 1
      %p117 = scmp.eq.s32.totalorder %s11, 1
      %p118 = scmp.ne.s32.totalorder %s113, %s115
      %p119 = scmp.eq.s32.totalorder %s11, 0
      %p120 = por %p118, %p119
      %p121 = scmp.ne.s32.totalorder %s113, %s115
      %p122 = scmp.eq.s32.totalorder %s16, 1
      %p123 = por %p121, %p122
      %p124 = scmp.ne.s32.totalorder %s115, %s116
      %p125 = scmp.eq.s32.totalorder %s16, 0
      %p126 = por %p124, %p125
      %p127 = scmp.ne.s32.totalorder %s115, %s116
      %p128 = scmp.eq.s32.totalorder %s17, 1
      %p129 = por %p127, %p128
      %p131 = scmp.ne.s32.totalorder %s116, %s130
      %p132 = scmp.eq.s32.totalorder %s17, 0
      %p133 = por %p131, %p132
      %p134 = scmp.le.s32.totalorder 1, %s11
      %p135 = scmp.lt.s32.totalorder %s11, 3
      %p136 = pnand %p134, %p135
      %p137 = pneg %p136
      // Predicated region
      $region9: #{res_unet_att_forward.34} parent=5 // pred_check
        _
      $region10: #{res_unet_att_forward.34} parent=5 // pred_check_branch
        %139 = sbr.rel (%p136) target = $region12
      $region11: #{res_unet_att_forward.34} parent=5 // pred_region
        %s140 = ssub.s32 %s11, 1
        // Predicated region
        $region13: #{res_unet_att_forward.34} parent=11 // pred_check
          %p141 = pneg %p32
        $region14: #{res_unet_att_forward.34} parent=11 // pred_check_branch
          %143 = sbr.rel (%p141) target = $region16
        $region15: #{res_unet_att_forward.34} parent=11 // pred_region
          _
        $region16: #{res_unet_att_forward.34} parent=11 // pred_fallthru
          _
      $region12: #{res_unet_att_forward.34} parent=5 // pred_fallthru
        _
      %p144 = scmp.lt.s32.totalorder %s11, 2
      // Predicated region
      $region17: #{res_unet_att_forward.34} parent=5 // pred_check
        %p145 = pneg %p144
      $region18: #{res_unet_att_forward.34} parent=5 // pred_check_branch
        %147 = sbr.rel (%p145) target = $region20
      $region19: #{res_unet_att_forward.34} parent=5 // pred_region
        // Predicated region
        $region21: #{res_unet_att_forward.34} parent=19 // pred_check
          %p148 = pneg %p52
        $region22: #{res_unet_att_forward.34} parent=19 // pred_check_branch
          %150 = sbr.rel (%p148) target = $region24
        $region23: #{res_unet_att_forward.34} parent=19 // pred_region
          %s151 = sand.u32 %s42, 1
          %s152 = sand.u32 %s42, 1
          %s153 = smul.addr %s152, 152
          %s154 = scalar_lea.vmem [#allocation2], %s153
          %s155 = smul.u32 2, %s11
          %s156 = smul.addr %s155, 4
          %s157 = scalar_lea.vmem %s1, %s156
          // Predicated region
          $region25: #{res_unet_att_forward.34} parent=23 // pred_check
            _
          $region26: #{res_unet_att_forward.34} parent=23 // pred_check_branch
            %159 = sbr.rel (0) target = $region28
          $region27: #{res_unet_att_forward.34} parent=23 // pred_region
            // Predicated region
            $region29: #{res_unet_att_forward.34} parent=27 // pred_check
              _
            $region30: #{res_unet_att_forward.34} parent=27 // pred_check_branch
              %161 = sbr.rel (0) target = $region32
            $region31: #{res_unet_att_forward.34} parent=27 // pred_region
              // Predicated region
              $region44: #{res_unet_att_forward.34} parent=31 // pred_check
                _
              $region45: #{res_unet_att_forward.34} parent=31 // pred_check_branch
                %212 = sbr.rel (0) target = $region47
              $region46: #{res_unet_att_forward.34} parent=31 // pred_region
                loop: start=0, step=1, limit=1
                $region48: #{res_unet_att_forward.34} parent=46 // loop_pre_header
                  _
                $region49: #{res_unet_att_forward.34} parent=46 // loop_header
                  %s214 = sphi 0, %s218
                  %p215 = scmp.ge.s32.totalorder %s214, 1
                  %s219 = sphi %s157, %s157
                  %s220 = sphi %s154, %s154
                $region50: #{res_unet_att_forward.34} parent=46 // loop_header_branch
                  %217 = sbr.rel (%p215) target = $region54
                $region51: #{res_unet_att_forward.34} parent=46 // loop_body
                  %v221 = vld [vmem:[%s219] sm:$0xff]
                  %222 = vst [vmem:[%s220] sm:$0xff] %v221
                  %v223 = vld [vmem:[%s219 + $0x10] sm:$0xff]
                  %224 = vst [vmem:[%s220 + $0x8] sm:$0xff] %v223
                  %v225 = vld [vmem:[%s219 + $0x20] sm:$0xff]
                  %226 = vst [vmem:[%s220 + $0x10] sm:$0xff] %v225
                  %v227 = vld [vmem:[%s219 + $0x30] sm:$0xff]
                  %228 = vst [vmem:[%s220 + $0x18] sm:$0xff] %v227
                  %v229 = vld [vmem:[%s219 + $0x40] sm:$0xff]
                  %230 = vst [vmem:[%s220 + $0x20] sm:$0xff] %v229
                  %v231 = vld [vmem:[%s219 + $0x50] sm:$0xff]
                  %232 = vst [vmem:[%s220 + $0x28] sm:$0xff] %v231
                  %v233 = vld [vmem:[%s219 + $0x60] sm:$0xff]
                  %234 = vst [vmem:[%s220 + $0x30] sm:$0xff] %v233
                  %v235 = vld [vmem:[%s219 + $0x70] sm:$0xff]
                  %236 = vst [vmem:[%s220 + $0x38] sm:$0xff] %v235
                  %v237 = vld [vmem:[%s219 + $0x80] sm:$0xff]
                  %238 = vst [vmem:[%s220 + $0x40] sm:$0xff] %v237
                  %v239 = vld [vmem:[%s219 + $0x90] sm:$0xff]
                  %240 = vst [vmem:[%s220 + $0x48] sm:$0xff] %v239
                  %v241 = vld [vmem:[%s219 + $0xa0] sm:$0xff]
                  %242 = vst [vmem:[%s220 + $0x50] sm:$0xff] %v241
                  %v243 = vld [vmem:[%s219 + $0xb0] sm:$0xff]
                  %244 = vst [vmem:[%s220 + $0x58] sm:$0xff] %v243
                  %v245 = vld [vmem:[%s219 + $0xc0] sm:$0xff]
                  %246 = vst [vmem:[%s220 + $0x60] sm:$0xff] %v245
                  %v247 = vld [vmem:[%s219 + $0xd0] sm:$0xff]
                  %248 = vst [vmem:[%s220 + $0x68] sm:$0xff] %v247
                  %v249 = vld [vmem:[%s219 + $0xe0] sm:$0xff]
                  %250 = vst [vmem:[%s220 + $0x70] sm:$0xff] %v249
                  %v251 = vld [vmem:[%s219 + $0xf0] sm:$0xff]
                  %252 = vst [vmem:[%s220 + $0x78] sm:$0xff] %v251
                  %v253 = vld [vmem:[%s219 + $0x100] sm:$0xff]
                  %254 = vst [vmem:[%s220 + $0x80] sm:$0xff] %v253
                  %v255 = vld [vmem:[%s219 + $0x110] sm:$0xff]
                  %256 = vst [vmem:[%s220 + $0x88] sm:$0xff] %v255
                  %v257 = vld [vmem:[%s219 + $0x120] sm:$0xff]
                  %258 = vst [vmem:[%s220 + $0x90] sm:$0xff] %v257
                $region52: #{res_unet_att_forward.34} parent=46 // loop_footer
                  %s218 = sadd.s32 1, %s214
                $region53: #{res_unet_att_forward.34} parent=46 // loop_footer_branch
                  %213 = sbr.rel target = $region49
                $region54: #{res_unet_att_forward.34} parent=46 // loop_exit
                  _
              $region47: #{res_unet_att_forward.34} parent=31 // pred_fallthru
                _
              // Predicated region
              $region55: #{res_unet_att_forward.34} parent=31 // pred_check
                _
              $region56: #{res_unet_att_forward.34} parent=31 // pred_check_branch
                %260 = sbr.rel target = $region58
              $region57: #{res_unet_att_forward.34} parent=31 // pred_region
                _
              $region58: #{res_unet_att_forward.34} parent=31 // pred_fallthru
                _
            $region32: #{res_unet_att_forward.34} parent=27 // pred_fallthru
              _
            // Predicated region
            $region33: #{res_unet_att_forward.34} parent=27 // pred_check
              _
            $region34: #{res_unet_att_forward.34} parent=27 // pred_check_branch
              %163 = sbr.rel target = $region36
            $region35: #{res_unet_att_forward.34} parent=27 // pred_region
              loop: start=0, step=1, limit=1
              $region37: #{res_unet_att_forward.34} parent=35 // loop_pre_header
                _
              $region38: #{res_unet_att_forward.34} parent=35 // loop_header
                %s166 = sphi 0, %s170
                %p167 = scmp.ge.s32.totalorder %s166, 1
                %s171 = sphi %s157, %s157
                %s172 = sphi %s154, %s154
              $region39: #{res_unet_att_forward.34} parent=35 // loop_header_branch
                %169 = sbr.rel (%p167) target = $region43
              $region40: #{res_unet_att_forward.34} parent=35 // loop_body
                %v173 = vld [vmem:[%s171] sm:$0xff]
                %174 = vst [vmem:[%s172] sm:$0xff] %v173
                %v175 = vld [vmem:[%s171 + $0x10] sm:$0xff]
                %176 = vst [vmem:[%s172 + $0x8] sm:$0xff] %v175
                %v177 = vld [vmem:[%s171 + $0x20] sm:$0xff]
                %178 = vst [vmem:[%s172 + $0x10] sm:$0xff] %v177
                %v179 = vld [vmem:[%s171 + $0x30] sm:$0xff]
                %180 = vst [vmem:[%s172 + $0x18] sm:$0xff] %v179
                %v181 = vld [vmem:[%s171 + $0x40] sm:$0xff]
                %182 = vst [vmem:[%s172 + $0x20] sm:$0xff] %v181
                %v183 = vld [vmem:[%s171 + $0x50] sm:$0xff]
                %184 = vst [vmem:[%s172 + $0x28] sm:$0xff] %v183
                %v185 = vld [vmem:[%s171 + $0x60] sm:$0xff]
                %186 = vst [vmem:[%s172 + $0x30] sm:$0xff] %v185
                %v187 = vld [vmem:[%s171 + $0x70] sm:$0xff]
                %188 = vst [vmem:[%s172 + $0x38] sm:$0xff] %v187
                %v189 = vld [vmem:[%s171 + $0x80] sm:$0xff]
                %190 = vst [vmem:[%s172 + $0x40] sm:$0xff] %v189
                %v191 = vld [vmem:[%s171 + $0x90] sm:$0xff]
                %192 = vst [vmem:[%s172 + $0x48] sm:$0xff] %v191
                %v193 = vld [vmem:[%s171 + $0xa0] sm:$0xff]
                %194 = vst [vmem:[%s172 + $0x50] sm:$0xff] %v193
                %v195 = vld [vmem:[%s171 + $0xb0] sm:$0xff]
                %196 = vst [vmem:[%s172 + $0x58] sm:$0xff] %v195
                %v197 = vld [vmem:[%s171 + $0xc0] sm:$0xff]
                %198 = vst [vmem:[%s172 + $0x60] sm:$0xff] %v197
                %v199 = vld [vmem:[%s171 + $0xd0] sm:$0xff]
                %200 = vst [vmem:[%s172 + $0x68] sm:$0xff] %v199
                %v201 = vld [vmem:[%s171 + $0xe0] sm:$0xff]
                %202 = vst [vmem:[%s172 + $0x70] sm:$0xff] %v201
                %v203 = vld [vmem:[%s171 + $0xf0] sm:$0xff]
                %204 = vst [vmem:[%s172 + $0x78] sm:$0xff] %v203
                %v205 = vld [vmem:[%s171 + $0x100] sm:$0xff]
                %206 = vst [vmem:[%s172 + $0x80] sm:$0xff] %v205
                %v207 = vld [vmem:[%s171 + $0x110] sm:$0xff]
                %208 = vst [vmem:[%s172 + $0x88] sm:$0xff] %v207
                %v209 = vld [vmem:[%s171 + $0x120] sm:$0xff]
                %210 = vst [vmem:[%s172 + $0x90] sm:$0xff] %v209
              $region41: #{res_unet_att_forward.34} parent=35 // loop_footer
                %s170 = sadd.s32 1, %s166
              $region42: #{res_unet_att_forward.34} parent=35 // loop_footer_branch
                %165 = sbr.rel target = $region38
              $region43: #{res_unet_att_forward.34} parent=35 // loop_exit
                _
            $region36: #{res_unet_att_forward.34} parent=27 // pred_fallthru
              _
          $region28: #{res_unet_att_forward.34} parent=23 // pred_fallthru
            _
          %261 = vnop
        $region24: #{res_unet_att_forward.34} parent=19 // pred_fallthru
          _
      $region20: #{res_unet_att_forward.34} parent=5 // pred_fallthru
        _
      %p262 = scmp.le.s32.totalorder 1, %s11
      %p263 = scmp.lt.s32.totalorder %s11, 3
      %p264 = pnand %p262, %p263
      %p265 = pneg %p264
      // Predicated region
      $region59: #{res_unet_att_forward.34} parent=5 // pred_check
        _
      $region60: #{res_unet_att_forward.34} parent=5 // pred_check_branch
        %267 = sbr.rel (%p264) target = $region62
      $region61: #{res_unet_att_forward.34} parent=5 // pred_region
        %s268 = ssub.s32 %s11, 1
        %s269 = sand.u32 %s45, 1
        %s270 = sand.u32 %s45, 1
        %s271 = smul.addr %s270, 152
        %s272 = scalar_lea.vmem [#allocation2], %s271
        // Predicated region
        $region63: #{res_unet_att_forward.34} parent=61 // pred_check
          %p273 = pneg %p58
        $region64: #{res_unet_att_forward.34} parent=61 // pred_check_branch
          %275 = sbr.rel (%p273) target = $region66
        $region65: #{res_unet_att_forward.34} parent=61 // pred_region
          _
        $region66: #{res_unet_att_forward.34} parent=61 // pred_fallthru
          _
        %p276 = pneg %p32
        %p277 = pneg %p29
        %s278 = sand.u32 %s45, 1
        %s279 = sand.u32 %s45, 1
        %s280 = smul.addr %s279, 152
        %s281 = scalar_lea.vmem [#allocation2], %s280
        %p282 = pneg %p58
        %p283 = pneg %p55
        %p284 = pneg %p84
        %p285 = pneg %p81
        %s286 = smul.u32 2, %s16
        %p287 = scmp.lt.s32.totalorder %s286, 3
        %s288 = scalar_select %p287, %s286, 3
        %s289 = smul.addr %s288, 8
        %s290 = scalar_lea.vmem %s2, %s289
        %p291 = pneg %p105
        %p292 = pneg %p102
        %p293 = pneg %p126
        %p294 = pneg %p123
        %s295 = smul.u32 2, %s16
        %s296 = smul.u32 2, %s16
        %p297 = scmp.lt.s32.totalorder %s296, 3
        %s298 = scalar_select %p297, %s296, 3
        %s299 = smul.addr %s298, 8
        %s300 = scalar_lea.vmem %s2, %s299
        %s301 = smul.u32 2, %s16
        %v303 = vld [vmem:[%s0] sm:$0xff]
        %v304 = vld [vmem:[%s272] sm:$0xff]
        %v305 = vld [vmem:[%s272 + $0x8] sm:$0xff]
        %v306 = vld [vmem:[%s272 + $0x10] sm:$0xff]
        %v307 = vld [vmem:[%s272 + $0x18] sm:$0xff]
        %v308 = vld [vmem:[%s272 + $0x20] sm:$0xff]
        %v309 = vld [vmem:[%s272 + $0x28] sm:$0xff]
        %v310 = vld [vmem:[%s272 + $0x30] sm:$0xff]
        %v311 = vld [vmem:[%s272 + $0x38] sm:$0xff]
        %v312 = vld [vmem:[%s272 + $0x40] sm:$0xff]
        %v313 = vld [vmem:[%s272 + $0x48] sm:$0xff]
        %v314 = vld [vmem:[%s272 + $0x50] sm:$0xff]
        %v315 = vld [vmem:[%s272 + $0x58] sm:$0xff]
        %v316 = vld [vmem:[%s272 + $0x60] sm:$0xff]
        %v317 = vld [vmem:[%s272 + $0x68] sm:$0xff]
        %v318 = vld [vmem:[%s272 + $0x70] sm:$0xff]
        %v319 = vld [vmem:[%s272 + $0x78] sm:$0xff]
        %v320 = vld [vmem:[%s272 + $0x80] sm:$0xff]
        %v321 = vld [vmem:[%s272 + $0x88] sm:$0xff]
        %v322 = vld [vmem:[%s272 + $0x90] sm:$0x33]
        %v324 = vunpack.c.l.b16 %v303
        %v325 = vunpack.c.h.b16 %v303
        %v326 = vpack.c.b16 %v324, %v324
        %v327 = vpack.c.b16 %v325, %v325
        %v348 = vunpack.c.l.b16 %v304
        %v349 = vunpack.c.h.b16 %v304
        %v350 = vunpack.c.l.b16 %v305
        %v351 = vunpack.c.h.b16 %v305
        %v352 = vunpack.c.l.b16 %v306
        %v353 = vunpack.c.h.b16 %v306
        %v354 = vunpack.c.l.b16 %v307
        %v355 = vunpack.c.h.b16 %v307
        %v356 = vunpack.c.l.b16 %v308
        %v357 = vunpack.c.h.b16 %v308
        %v358 = vunpack.c.l.b16 %v309
        %v359 = vunpack.c.h.b16 %v309
        %v360 = vunpack.c.l.b16 %v310
        %v361 = vunpack.c.h.b16 %v310
        %v362 = vunpack.c.l.b16 %v311
        %v363 = vunpack.c.h.b16 %v311
        %v364 = vunpack.c.l.b16 %v312
        %v365 = vunpack.c.h.b16 %v312
        %v366 = vunpack.c.l.b16 %v313
        %v367 = vunpack.c.h.b16 %v313
        %v368 = vunpack.c.l.b16 %v314
        %v369 = vunpack.c.h.b16 %v314
        %v370 = vunpack.c.l.b16 %v315
        %v371 = vunpack.c.h.b16 %v315
        %v372 = vunpack.c.l.b16 %v316
        %v373 = vunpack.c.h.b16 %v316
        %v374 = vunpack.c.l.b16 %v317
        %v375 = vunpack.c.h.b16 %v317
        %v376 = vunpack.c.l.b16 %v318
        %v377 = vunpack.c.h.b16 %v318
        %v378 = vunpack.c.l.b16 %v319
        %v379 = vunpack.c.h.b16 %v319
        %v380 = vunpack.c.l.b16 %v320
        %v381 = vunpack.c.h.b16 %v320
        %v382 = vunpack.c.l.b16 %v321
        %v383 = vunpack.c.h.b16 %v321
        %v384 = vunpack.c.l.b16 %v322
        %v385 = vunpack.c.h.b16 %v322
        %v386 = vpack.c.b16 %v350, %v348
        %v387 = vpack.c.b16 %v351, %v349
        %v388 = vpack.c.b16 %v354, %v352
        %v389 = vpack.c.b16 %v355, %v353
        %v390 = vpack.c.b16 %v358, %v356
        %v391 = vpack.c.b16 %v359, %v357
        %v392 = vpack.c.b16 %v362, %v360
        %v393 = vpack.c.b16 %v363, %v361
        %v394 = vpack.c.b16 %v366, %v364
        %v395 = vpack.c.b16 %v367, %v365
        %v396 = vpack.c.b16 %v370, %v368
        %v397 = vpack.c.b16 %v371, %v369
        %v398 = vpack.c.b16 %v374, %v372
        %v399 = vpack.c.b16 %v375, %v373
        %v400 = vpack.c.b16 %v378, %v376
        %v401 = vpack.c.b16 %v379, %v377
        %v402 = vpack.c.b16 %v382, %v380
        %v403 = vpack.c.b16 %v383, %v381
        %v404 = vpack.c.b16 %v384, %v384
        %v405 = vpack.c.b16 %v385, %v385
        %vm424 = vcmask 154624
        %v426 = vsel %vm424, %v327, 0
        %vm428 = vcmask 1040384
        %vm429 = vcmask 1041408
        %v430 = vsel %vm428, 4294967295, 65535
        %v431 = vsel %vm429, %v430, 0
        %v433 = vand.u32 %v404, %v431
        %v436 = vand.u32 %v405, %v431
        %438 = vmatprep.subr.bf16.mxu0 %v387
        %439 = vmatpush1.bf16.msra.mxu0 %v386
        %440 = vmatprep.subr.bf16.mxu0 %v389
        %441 = vmatpush1.bf16.msra.mxu0 %v388
        %442 = vmatprep.subr.bf16.mxu0 %v391
        %443 = vmatpush1.bf16.msra.mxu0 %v390
        %444 = vmatprep.subr.bf16.mxu0 %v393
        %445 = vmatpush1.bf16.msra.mxu0 %v392
        %446 = vmatprep.subr.bf16.mxu0 %v395
        %447 = vmatpush1.bf16.msra.mxu0 %v394
        %448 = vmatprep.subr.bf16.mxu0 %v397
        %449 = vmatpush1.bf16.msra.mxu0 %v396
        %450 = vmatprep.subr.bf16.mxu0 %v399
        %451 = vmatpush1.bf16.msra.mxu0 %v398
        %452 = vmatprep.subr.bf16.mxu0 %v401
        %453 = vmatpush1.bf16.msra.mxu0 %v400
        %454 = vmatprep.subr.bf16.mxu0 %v403
        %455 = vmatpush1.bf16.msra.mxu0 %v402
        %456 = vmatprep.subr.bf16.mxu0 %v436
        %457 = vmatpush1.bf16.msra.mxu0 %v433
        %458 = vmatprep.subr.bf16.mxu0 0
        %459 = vmatpush1.bf16.msra.mxu0 0
        %460 = vmatprep.subr.bf16.mxu0 0
        %461 = vmatpush1.bf16.msra.mxu0 0
        %462 = vmatprep.subr.bf16.mxu0 0
        %463 = vmatpush1.bf16.msra.mxu0 0
        %464 = vmatprep.subr.bf16.mxu0 0
        %465 = vmatpush1.bf16.msra.mxu0 0
        %466 = vmatprep.subr.bf16.mxu0 0
        %467 = vmatpush1.bf16.msra.mxu0 0
        %468 = vmatprep.subr.bf16.mxu0 0
        %469 = vmatpush1.bf16.msra.mxu0 0
        %470 = vmatprep.mubr.bf16.mxu0 %v426
        %471 = vmatmul.mubr.bf16.gmra.mrb[0].mxu0 %v326
        %v472 = vpop.f32.mrb[0].mxu0
        %v473 = vadd.f32 0.0, %v472
        %v474 = vpop.f32.mrb[0].mxu0
        %v475 = vadd.f32 0.0, %v474
        %v476 = vpop.f32.mrb[0].mxu0
        %v477 = vpop.f32.mrb[0].mxu0
        %478 = vdwg.mxu0
        %479 = vst [vmem:[%s300] sm:$0xff] %v473
        %480 = vst [vmem:[%s300 + $0x8] sm:$0xff] %v475
        %p481 = scmp.eq.s32.totalorder %s16, 0
        // Predicated region
        $region67: #{res_unet_att_forward.34} parent=61 // pred_check
          %p482 = pneg %p481
        $region68: #{res_unet_att_forward.34} parent=61 // pred_check_branch
          %484 = sbr.rel (%p482) target = $region70
        $region69: #{res_unet_att_forward.34} parent=61 // pred_region
          %vm485 = vcmask 7168
          %486 = vst.msk [vmem:[%s3] sm:$0xff] %vm485, 0.0
          %487 = vst.msk [vmem:[%s4] sm:$0xff] %vm485, 0.0
        $region70: #{res_unet_att_forward.34} parent=61 // pred_fallthru
          _
        %v488 = vld [vmem:[%s3] sm:$0xff]
        %v489 = vadd.f32 %v473, %v475
        %490 = vadd.xlane.f32.xlu0 %v489
        %v491 = vpop.xlane.xlu0 %490
        %v492 = vadd.f32 %v488, %v491
        %vm493 = vcmask 7168
        %494 = vst.msk [vmem:[%s3] sm:$0xff] %vm493, %v492
        %v495 = vld [vmem:[%s4] sm:$0xff]
        %v496 = vmul.f32 %v473, %v473
        %v497 = vmul.f32 %v475, %v475
        %v498 = vadd.f32 %v496, %v497
        %499 = vadd.xlane.f32.xlu0 %v498
        %v500 = vpop.xlane.xlu0 %499
        %v501 = vadd.f32 %v495, %v500
        %502 = vst.msk [vmem:[%s4] sm:$0xff] %vm493, %v501
        %s503 = smul.u32 2, %s16
        %p504 = scmp.lt.s32.totalorder %s503, 3
        %s505 = scalar_select %p504, %s503, 3
        %s506 = smul.addr %s505, 8
        %s507 = scalar_lea.vmem %s2, %s506
        // Predicated region
        $region71: #{res_unet_att_forward.34} parent=61 // pred_check
          %p508 = pneg %p81
        $region72: #{res_unet_att_forward.34} parent=61 // pred_check_branch
          %510 = sbr.rel (%p508) target = $region74
        $region73: #{res_unet_att_forward.34} parent=61 // pred_region
          %s511 = smul.u32 2, %s16
        $region74: #{res_unet_att_forward.34} parent=61 // pred_fallthru
          _
        // Predicated region
        $region75: #{res_unet_att_forward.34} parent=61 // pred_check
          %p512 = pneg %p102
        $region76: #{res_unet_att_forward.34} parent=61 // pred_check_branch
          %514 = sbr.rel (%p512) target = $region78
        $region77: #{res_unet_att_forward.34} parent=61 // pred_region
          _
        $region78: #{res_unet_att_forward.34} parent=61 // pred_fallthru
          _
        // Predicated region
        $region79: #{res_unet_att_forward.34} parent=61 // pred_check
          %p515 = pneg %p123
        $region80: #{res_unet_att_forward.34} parent=61 // pred_check_branch
          %517 = sbr.rel (%p515) target = $region82
        $region81: #{res_unet_att_forward.34} parent=61 // pred_region
          _
        $region82: #{res_unet_att_forward.34} parent=61 // pred_fallthru
          _
        // Predicated region
        $region83: #{res_unet_att_forward.34} parent=61 // pred_check
          %p518 = pneg %p102
        $region84: #{res_unet_att_forward.34} parent=61 // pred_check_branch
          %520 = sbr.rel (%p518) target = $region86
        $region85: #{res_unet_att_forward.34} parent=61 // pred_region
          _
        $region86: #{res_unet_att_forward.34} parent=61 // pred_fallthru
          _
        // Predicated region
        $region87: #{res_unet_att_forward.34} parent=61 // pred_check
          %p521 = pneg %p123
        $region88: #{res_unet_att_forward.34} parent=61 // pred_check_branch
          %523 = sbr.rel (%p521) target = $region90
        $region89: #{res_unet_att_forward.34} parent=61 // pred_region
          _
        $region90: #{res_unet_att_forward.34} parent=61 // pred_fallthru
          _
      $region62: #{res_unet_att_forward.34} parent=5 // pred_fallthru
        _
      %p524 = scmp.le.s32.totalorder 2, %s11
      // Predicated region
      $region91: #{res_unet_att_forward.34} parent=5 // pred_check
        %p525 = pneg %p524
      $region92: #{res_unet_att_forward.34} parent=5 // pred_check_branch
        %527 = sbr.rel (%p525) target = $region94
      $region93: #{res_unet_att_forward.34} parent=5 // pred_region
        %s528 = ssub.s32 %s11, 2
        // Predicated region
        $region95: #{res_unet_att_forward.34} parent=93 // pred_check
          %p529 = pneg %p87
        $region96: #{res_unet_att_forward.34} parent=93 // pred_check_branch
          %531 = sbr.rel (%p529) target = $region98
        $region97: #{res_unet_att_forward.34} parent=93 // pred_region
          %s532 = smul.u32 2, %s17
          %p533 = scmp.lt.s32.totalorder %s532, 3
          %s534 = scalar_select %p533, %s532, 3
          %s535 = smul.addr %s534, 8
          %s536 = scalar_lea.vmem %s2, %s535
        $region98: #{res_unet_att_forward.34} parent=93 // pred_fallthru
          _
      $region94: #{res_unet_att_forward.34} parent=5 // pred_fallthru
        _
    $region6: #{res_unet_att_forward.34} parent=1 // loop_footer
      %s15 = sadd.s32 1, %s11
    $region7: #{res_unet_att_forward.34} parent=1 // loop_footer_branch
      %10 = sbr.rel target = $region3
    $region8: #{res_unet_att_forward.34} parent=1 // loop_exit
      _

// kernel: res_unet_att_forward.37
$region0: #{res_unet_att_forward.37}
  #allocation0 [shape = 'u32[]', space=smem, size = 0x4, offset = 0x4, fixed_abs, tag = 'smem constant byte address 0x4 - core index']
  #allocation1 [shape = 'u32[144,128]{1,0:T(1,128)}', space=vmem, size = 0x12000, scoped, tag = 'internal scratch']
  %s0 = inlined_call_operand.vmem [shape: f32[16,128], index: 0, kind: input, shape index: {}]
  %s1 = inlined_call_operand.vmem [shape: f32[16,1], index: 1, kind: input, shape index: {}]
  %s2 = inlined_call_operand.vmem [shape: f32[16,1], index: 2, kind: input, shape index: {}]
  %s3 = inlined_call_operand.vmem [shape: f32[16,128], index: 3, kind: output, shape index: {}]
  %s4 = sld [smem:[#allocation0]]
  $region22: #{res_unet_att_forward.37} parent=0
    _
  %s6 = ssub.s32 1, %s4
  %s7 = scalar_select 0, %s6, %s4
  // Predicated region
  $region2: #{res_unet_att_forward.37} parent=0 // pred_check
    _
  $region3: #{res_unet_att_forward.37} parent=0 // pred_check_branch
    %9 = sbr.rel (0) target = $region5
  $region4: #{res_unet_att_forward.37} parent=0 // pred_region
    _
  $region5: #{res_unet_att_forward.37} parent=0 // pred_fallthru
    _
  // Predicated region
  $region6: #{res_unet_att_forward.37} parent=0 // pred_check
    _
  $region7: #{res_unet_att_forward.37} parent=0 // pred_check_branch
    %11 = sbr.rel (0) target = $region9
  $region8: #{res_unet_att_forward.37} parent=0 // pred_region
    _
  $region9: #{res_unet_att_forward.37} parent=0 // pred_fallthru
    _
  // Predicated region
  $region10: #{res_unet_att_forward.37} parent=0 // pred_check
    _
  $region11: #{res_unet_att_forward.37} parent=0 // pred_check_branch
    %13 = sbr.rel (0) target = $region13
  $region12: #{res_unet_att_forward.37} parent=0 // pred_region
    _
  $region13: #{res_unet_att_forward.37} parent=0 // pred_fallthru
    _
  %v14 = vld [vmem:[%s0] sm:$0xff]
  %v15 = vld [vmem:[%s0 + $0x8] sm:$0xff]
  %v16 = vld [vmem:[%s1] sm:$0xff]
  %v17 = vld [vmem:[%s1 + $0x8] sm:$0xff]
  %19 = vset.pattern.permute.xlu0 0
  %20 = vperm.xlu0 %19, %v16
  %v21 = vpop.permute.xlu0 %20
  %24 = vset.pattern.permute.xlu0 0
  %25 = vperm.xlu0 %24, %v17
  %v26 = vpop.permute.xlu0 %25
  %v28 = vmul.f32 %v14, %v21
  %v29 = vmul.f32 %v15, %v26
  %v30 = vld [vmem:[%s2] sm:$0xff]
  %v31 = vld [vmem:[%s2 + $0x8] sm:$0xff]
  %33 = vset.pattern.permute.xlu0 0
  %34 = vperm.xlu0 %33, %v30
  %v35 = vpop.permute.xlu0 %34
  %38 = vset.pattern.permute.xlu0 0
  %39 = vperm.xlu0 %38, %v31
  %v40 = vpop.permute.xlu0 %39
  %v42 = vadd.f32 %v28, %v35
  %v43 = vadd.f32 %v29, %v40
  %v44 = vmax.f32 %v42, 0.0
  %v45 = vmax.f32 %v43, 0.0
  %46 = vst [vmem:[%s3] sm:$0xff] %v44
  %47 = vst [vmem:[%s3 + $0x8] sm:$0xff] %v45
  // Predicated region
  $region14: #{res_unet_att_forward.37} parent=0 // pred_check
    _
  $region15: #{res_unet_att_forward.37} parent=0 // pred_check_branch
    %49 = sbr.rel (0) target = $region17
  $region16: #{res_unet_att_forward.37} parent=0 // pred_region
    _
  $region17: #{res_unet_att_forward.37} parent=0 // pred_fallthru
    _
  // Predicated region
  $region18: #{res_unet_att_forward.37} parent=0 // pred_check
    _
  $region19: #{res_unet_att_forward.37} parent=0 // pred_check_branch
    %51 = sbr.rel (0) target = $region21
  $region20: #{res_unet_att_forward.37} parent=0 // pred_region
    _
  $region21: #{res_unet_att_forward.37} parent=0 // pred_fallthru
    _

// kernel: res_unet_att_forward.36
$region0: #{res_unet_att_forward.36}
  #allocation0 [shape = 'u32[]', space=smem, size = 0x4, offset = 0x4, fixed_abs, tag = 'smem constant byte address 0x4 - core index']
  #allocation1 [shape = 'u32[144,128]{1,0:T(1,128)}', space=vmem, size = 0x12000, scoped, tag = 'internal scratch']
  %s0 = inlined_call_operand.vmem [shape: bf16[16,72], index: 0, kind: input, shape index: {}]
  %s1 = inlined_call_operand.vmem [shape: bf16[72,128], index: 1, kind: input, shape index: {}]
  %s2 = inlined_call_operand.vmem [shape: f32[16,128], index: 2, kind: output, shape index: {0}]
  %s3 = inlined_call_operand.vmem [shape: f32[16,1], index: 3, kind: output, shape index: {1}]
  %s4 = inlined_call_operand.vmem [shape: f32[16,1], index: 4, kind: output, shape index: {2}]
  %5 = xla_tuple %s2, %s3, %s4
  %s6 = sld [smem:[#allocation0]]
  $region38: #{res_unet_att_forward.36} parent=0
    _
  %s8 = ssub.s32 1, %s6
  %s9 = scalar_select 0, %s8, %s6
  // Predicated region
  $region2: #{res_unet_att_forward.36} parent=0 // pred_check
    _
  $region3: #{res_unet_att_forward.36} parent=0 // pred_check_branch
    %11 = sbr.rel (0) target = $region5
  $region4: #{res_unet_att_forward.36} parent=0 // pred_region
    _
  $region5: #{res_unet_att_forward.36} parent=0 // pred_fallthru
    _
  // Predicated region
  $region6: #{res_unet_att_forward.36} parent=0 // pred_check
    _
  $region7: #{res_unet_att_forward.36} parent=0 // pred_check_branch
    %13 = sbr.rel (0) target = $region9
  $region8: #{res_unet_att_forward.36} parent=0 // pred_region
    _
  $region9: #{res_unet_att_forward.36} parent=0 // pred_fallthru
    _
  %v15 = vld [vmem:[%s0] sm:$0xf]
  %v16 = vld [vmem:[%s0 + $0x4] sm:$0xf]
  %v17 = vld [vmem:[%s1] sm:$0xf]
  %v18 = vld [vmem:[%s1 + $0x4] sm:$0xf]
  %v19 = vld [vmem:[%s1 + $0x8] sm:$0xf]
  %v20 = vld [vmem:[%s1 + $0xc] sm:$0xf]
  %v21 = vld [vmem:[%s1 + $0x10] sm:$0xf]
  %v22 = vld [vmem:[%s1 + $0x14] sm:$0xf]
  %v23 = vld [vmem:[%s1 + $0x18] sm:$0xf]
  %v24 = vld [vmem:[%s1 + $0x1c] sm:$0xf]
  %v25 = vld [vmem:[%s1 + $0x20] sm:$0xf]
  %v28 = vunpack.c.l.b16 %v15
  %v29 = vunpack.c.l.b16 %v16
  %v30 = vpack.c.b16 %v29, %v28
  %v40 = vunpack.c.l.b16 %v17
  %v41 = vunpack.c.l.b16 %v18
  %v42 = vunpack.c.l.b16 %v19
  %v43 = vunpack.c.l.b16 %v20
  %v44 = vunpack.c.l.b16 %v21
  %v45 = vunpack.c.l.b16 %v22
  %v46 = vunpack.c.l.b16 %v23
  %v47 = vunpack.c.l.b16 %v24
  %v48 = vunpack.c.l.b16 %v25
  %v49 = vpack.c.b16 %v41, %v40
  %v50 = vpack.c.b16 %v43, %v42
  %v51 = vpack.c.b16 %v45, %v44
  %v52 = vpack.c.b16 %v47, %v46
  %v53 = vpack.c.b16 %v48, %v48
  %vm58 = vcmask 588800
  %v60 = vsel %vm58, %v30, 0
  %vm62 = vcmask 1043456
  %v64 = vsel %vm62, %v53, 0
  %66 = vmatprep.subr.bf16.mxu0 0
  %67 = vmatpush1.bf16.msra.mxu0 %v49
  %68 = vmatprep.subr.bf16.mxu0 0
  %69 = vmatpush1.bf16.msra.mxu0 %v50
  %70 = vmatprep.subr.bf16.mxu0 0
  %71 = vmatpush1.bf16.msra.mxu0 %v51
  %72 = vmatprep.subr.bf16.mxu0 0
  %73 = vmatpush1.bf16.msra.mxu0 %v52
  %74 = vmatprep.subr.bf16.mxu0 0
  %75 = vmatpush1.bf16.msra.mxu0 %v64
  %76 = vmatprep.subr.bf16.mxu0 0
  %77 = vmatpush1.bf16.msra.mxu0 0
  %78 = vmatprep.subr.bf16.mxu0 0
  %79 = vmatpush1.bf16.msra.mxu0 0
  %80 = vmatprep.subr.bf16.mxu0 0
  %81 = vmatpush1.bf16.msra.mxu0 0
  %82 = vmatprep.subr.bf16.mxu0 0
  %83 = vmatpush1.bf16.msra.mxu0 0
  %84 = vmatprep.subr.bf16.mxu0 0
  %85 = vmatpush1.bf16.msra.mxu0 0
  %86 = vmatprep.subr.bf16.mxu0 0
  %87 = vmatpush1.bf16.msra.mxu0 0
  %88 = vmatprep.subr.bf16.mxu0 0
  %89 = vmatpush1.bf16.msra.mxu0 0
  %90 = vmatprep.subr.bf16.mxu0 0
  %91 = vmatpush1.bf16.msra.mxu0 0
  %92 = vmatprep.subr.bf16.mxu0 0
  %93 = vmatpush1.bf16.msra.mxu0 0
  %94 = vmatprep.subr.bf16.mxu0 0
  %95 = vmatpush1.bf16.msra.mxu0 0
  %96 = vmatprep.subr.bf16.mxu0 0
  %97 = vmatpush1.bf16.msra.mxu0 0
  %98 = vmatprep.mubr.bf16.mxu0 0
  %99 = vmatmul.mubr.bf16.gmra.mrb[0].mxu0 %v60
  %v100 = vpop.f32.mrb[0].mxu0
  %v101 = vadd.f32 0.0, %v100
  %v102 = vpop.f32.mrb[0].mxu0
  %v103 = vpop.f32.mrb[0].mxu0
  %v104 = vadd.f32 0.0, %v103
  %v105 = vpop.f32.mrb[0].mxu0
  %106 = vdwg.mxu0
  %107 = vst [vmem:[%s2] sm:$0xff] %v101
  %108 = vst [vmem:[%s2 + $0x8] sm:$0xff] %v104
  %p109 = scmp.eq.s32.totalorder 0, 0
  // Predicated region
  $region10: #{res_unet_att_forward.36} parent=0 // pred_check
    %p110 = pneg %p109
  $region11: #{res_unet_att_forward.36} parent=0 // pred_check_branch
    %112 = sbr.rel (%p110) target = $region13
  $region12: #{res_unet_att_forward.36} parent=0 // pred_region
    %vm113 = vcmask 7168
    %114 = vst.msk [vmem:[%s3] sm:$0xff] %vm113, 0.0
    %115 = vst.msk [vmem:[%s3 + $0x8] sm:$0xff] %vm113, 0.0
    %116 = vst.msk [vmem:[%s4] sm:$0xff] %vm113, 0.0
    %117 = vst.msk [vmem:[%s4 + $0x8] sm:$0xff] %vm113, 0.0
  $region13: #{res_unet_att_forward.36} parent=0 // pred_fallthru
    _
  %v118 = vld [vmem:[%s3] sm:$0xff]
  %v119 = vld [vmem:[%s3 + $0x8] sm:$0xff]
  %120 = vadd.xlane.f32.xlu0 %v101
  %v121 = vpop.xlane.xlu0 %120
  %122 = vadd.xlane.f32.xlu0 %v104
  %v123 = vpop.xlane.xlu0 %122
  %v124 = vadd.f32 %v118, %v121
  %v125 = vadd.f32 %v119, %v123
  %vm126 = vcmask 7168
  %127 = vst.msk [vmem:[%s3] sm:$0xff] %vm126, %v124
  %128 = vst.msk [vmem:[%s3 + $0x8] sm:$0xff] %vm126, %v125
  %v129 = vld [vmem:[%s4] sm:$0xff]
  %v130 = vld [vmem:[%s4 + $0x8] sm:$0xff]
  %v131 = vmul.f32 %v101, %v101
  %v132 = vmul.f32 %v104, %v104
  %133 = vadd.xlane.f32.xlu0 %v131
  %v134 = vpop.xlane.xlu0 %133
  %135 = vadd.xlane.f32.xlu0 %v132
  %v136 = vpop.xlane.xlu0 %135
  %v137 = vadd.f32 %v129, %v134
  %v138 = vadd.f32 %v130, %v136
  %139 = vst.msk [vmem:[%s4] sm:$0xff] %vm126, %v137
  %140 = vst.msk [vmem:[%s4 + $0x8] sm:$0xff] %vm126, %v138
  // Predicated region
  $region14: #{res_unet_att_forward.36} parent=0 // pred_check
    _
  $region15: #{res_unet_att_forward.36} parent=0 // pred_check_branch
    %142 = sbr.rel (0) target = $region17
  $region16: #{res_unet_att_forward.36} parent=0 // pred_region
    _
  $region17: #{res_unet_att_forward.36} parent=0 // pred_fallthru
    _
  // Predicated region
  $region18: #{res_unet_att_forward.36} parent=0 // pred_check
    _
  $region19: #{res_unet_att_forward.36} parent=0 // pred_check_branch
    %144 = sbr.rel (0) target = $region21
  $region20: #{res_unet_att_forward.36} parent=0 // pred_region
    _
  $region21: #{res_unet_att_forward.36} parent=0 // pred_fallthru
    _
  // Predicated region
  $region22: #{res_unet_att_forward.36} parent=0 // pred_check
    _
  $region23: #{res_unet_att_forward.36} parent=0 // pred_check_branch
    %146 = sbr.rel (0) target = $region25
  $region24: #{res_unet_att_forward.36} parent=0 // pred_region
    _
  $region25: #{res_unet_att_forward.36} parent=0 // pred_fallthru
    _
  // Predicated region
  $region26: #{res_unet_att_forward.36} parent=0 // pred_check
    _
  $region27: #{res_unet_att_forward.36} parent=0 // pred_check_branch
    %148 = sbr.rel (0) target = $region29
  $region28: #{res_unet_att_forward.36} parent=0 // pred_region
    _
  $region29: #{res_unet_att_forward.36} parent=0 // pred_fallthru
    _
  // Predicated region
  $region30: #{res_unet_att_forward.36} parent=0 // pred_check
    _
  $region31: #{res_unet_att_forward.36} parent=0 // pred_check_branch
    %150 = sbr.rel (0) target = $region33
  $region32: #{res_unet_att_forward.36} parent=0 // pred_region
    _
  $region33: #{res_unet_att_forward.36} parent=0 // pred_fallthru
    _
  // Predicated region
  $region34: #{res_unet_att_forward.36} parent=0 // pred_check
    _
  $region35: #{res_unet_att_forward.36} parent=0 // pred_check_branch
    %152 = sbr.rel (0) target = $region37
  $region36: #{res_unet_att_forward.36} parent=0 // pred_region
    _
  $region37: #{res_unet_att_forward.36} parent=0 // pred_fallthru
    _

// kernel: res_unet_att_forward.38
$region0: #{res_unet_att_forward.38}
  #allocation0 [shape = 'u32[]', space=smem, size = 0x4, offset = 0x4, fixed_abs, tag = 'smem constant byte address 0x4 - core index']
  #allocation1 [shape = 'u32[144,128]{1,0:T(1,128)}', space=vmem, size = 0x12000, scoped, tag = 'internal scratch']
  %s0 = inlined_call_operand.vmem [shape: bf16[16,144], index: 0, kind: input, shape index: {}]
  %s1 = inlined_call_operand.vmem [shape: bf16[144,128], index: 1, kind: input, shape index: {}]
  %s2 = inlined_call_operand.vmem [shape: f32[16,128], index: 2, kind: output, shape index: {0}]
  %s3 = inlined_call_operand.vmem [shape: f32[16,1], index: 3, kind: output, shape index: {1}]
  %s4 = inlined_call_operand.vmem [shape: f32[16,1], index: 4, kind: output, shape index: {2}]
  %5 = xla_tuple %s2, %s3, %s4
  %s6 = sld [smem:[#allocation0]]
  $region38: #{res_unet_att_forward.38} parent=0
    _
  %s8 = ssub.s32 1, %s6
  %s9 = scalar_select 0, %s8, %s6
  // Predicated region
  $region2: #{res_unet_att_forward.38} parent=0 // pred_check
    _
  $region3: #{res_unet_att_forward.38} parent=0 // pred_check_branch
    %11 = sbr.rel (0) target = $region5
  $region4: #{res_unet_att_forward.38} parent=0 // pred_region
    _
  $region5: #{res_unet_att_forward.38} parent=0 // pred_fallthru
    _
  // Predicated region
  $region6: #{res_unet_att_forward.38} parent=0 // pred_check
    _
  $region7: #{res_unet_att_forward.38} parent=0 // pred_check_branch
    %13 = sbr.rel (0) target = $region9
  $region8: #{res_unet_att_forward.38} parent=0 // pred_region
    _
  $region9: #{res_unet_att_forward.38} parent=0 // pred_fallthru
    _
  %v15 = vld [vmem:[%s0] sm:$0xff]
  %v16 = vld [vmem:[%s0 + $0x8] sm:$0xff]
  %v17 = vld [vmem:[%s1] sm:$0xf]
  %v18 = vld [vmem:[%s1 + $0x4] sm:$0xf]
  %v19 = vld [vmem:[%s1 + $0x8] sm:$0xf]
  %v20 = vld [vmem:[%s1 + $0xc] sm:$0xf]
  %v21 = vld [vmem:[%s1 + $0x10] sm:$0xf]
  %v22 = vld [vmem:[%s1 + $0x14] sm:$0xf]
  %v23 = vld [vmem:[%s1 + $0x18] sm:$0xf]
  %v24 = vld [vmem:[%s1 + $0x1c] sm:$0xf]
  %v25 = vld [vmem:[%s1 + $0x20] sm:$0xf]
  %v26 = vld [vmem:[%s1 + $0x24] sm:$0xf]
  %v27 = vld [vmem:[%s1 + $0x28] sm:$0xf]
  %v28 = vld [vmem:[%s1 + $0x2c] sm:$0xf]
  %v29 = vld [vmem:[%s1 + $0x30] sm:$0xf]
  %v30 = vld [vmem:[%s1 + $0x34] sm:$0xf]
  %v31 = vld [vmem:[%s1 + $0x38] sm:$0xf]
  %v32 = vld [vmem:[%s1 + $0x3c] sm:$0xf]
  %v33 = vld [vmem:[%s1 + $0x40] sm:$0xf]
  %v34 = vld [vmem:[%s1 + $0x44] sm:$0xf]
  %v37 = vunpack.c.l.b16 %v15
  %v38 = vunpack.c.h.b16 %v15
  %v39 = vunpack.c.l.b16 %v16
  %v40 = vunpack.c.h.b16 %v16
  %v41 = vpack.c.b16 %v39, %v37
  %v42 = vpack.c.b16 %v40, %v38
  %v62 = vunpack.c.l.b16 %v17
  %v63 = vunpack.c.l.b16 %v18
  %v64 = vunpack.c.l.b16 %v19
  %v65 = vunpack.c.l.b16 %v20
  %v66 = vunpack.c.l.b16 %v21
  %v67 = vunpack.c.l.b16 %v22
  %v68 = vunpack.c.l.b16 %v23
  %v69 = vunpack.c.l.b16 %v24
  %v70 = vunpack.c.l.b16 %v25
  %v71 = vunpack.c.l.b16 %v26
  %v72 = vunpack.c.l.b16 %v27
  %v73 = vunpack.c.l.b16 %v28
  %v74 = vunpack.c.l.b16 %v29
  %v75 = vunpack.c.l.b16 %v30
  %v76 = vunpack.c.l.b16 %v31
  %v77 = vunpack.c.l.b16 %v32
  %v78 = vunpack.c.l.b16 %v33
  %v79 = vunpack.c.l.b16 %v34
  %v80 = vpack.c.b16 %v63, %v62
  %v81 = vpack.c.b16 %v65, %v64
  %v82 = vpack.c.b16 %v67, %v66
  %v83 = vpack.c.b16 %v69, %v68
  %v84 = vpack.c.b16 %v71, %v70
  %v85 = vpack.c.b16 %v73, %v72
  %v86 = vpack.c.b16 %v75, %v74
  %v87 = vpack.c.b16 %v77, %v76
  %v88 = vpack.c.b16 %v79, %v78
  %vm98 = vcmask 130048
  %v100 = vsel %vm98, %v42, 0
  %102 = vmatprep.subr.bf16.mxu0 0
  %103 = vmatpush1.bf16.msra.mxu0 %v80
  %104 = vmatprep.subr.bf16.mxu0 0
  %105 = vmatpush1.bf16.msra.mxu0 %v81
  %106 = vmatprep.subr.bf16.mxu0 0
  %107 = vmatpush1.bf16.msra.mxu0 %v82
  %108 = vmatprep.subr.bf16.mxu0 0
  %109 = vmatpush1.bf16.msra.mxu0 %v83
  %110 = vmatprep.subr.bf16.mxu0 0
  %111 = vmatpush1.bf16.msra.mxu0 %v84
  %112 = vmatprep.subr.bf16.mxu0 0
  %113 = vmatpush1.bf16.msra.mxu0 %v85
  %114 = vmatprep.subr.bf16.mxu0 0
  %115 = vmatpush1.bf16.msra.mxu0 %v86
  %116 = vmatprep.subr.bf16.mxu0 0
  %117 = vmatpush1.bf16.msra.mxu0 %v87
  %118 = vmatprep.subr.bf16.mxu0 0
  %119 = vmatpush1.bf16.msra.mxu0 %v88
  %120 = vmatprep.subr.bf16.mxu0 0
  %121 = vmatpush1.bf16.msra.mxu0 0
  %122 = vmatprep.subr.bf16.mxu0 0
  %123 = vmatpush1.bf16.msra.mxu0 0
  %124 = vmatprep.subr.bf16.mxu0 0
  %125 = vmatpush1.bf16.msra.mxu0 0
  %126 = vmatprep.subr.bf16.mxu0 0
  %127 = vmatpush1.bf16.msra.mxu0 0
  %128 = vmatprep.subr.bf16.mxu0 0
  %129 = vmatpush1.bf16.msra.mxu0 0
  %130 = vmatprep.subr.bf16.mxu0 0
  %131 = vmatpush1.bf16.msra.mxu0 0
  %132 = vmatprep.subr.bf16.mxu0 0
  %133 = vmatpush1.bf16.msra.mxu0 0
  %134 = vmatprep.mubr.bf16.mxu0 %v100
  %135 = vmatmul.mubr.bf16.gmra.mrb[0].mxu0 %v41
  %v136 = vpop.f32.mrb[0].mxu0
  %v137 = vadd.f32 0.0, %v136
  %v138 = vpop.f32.mrb[0].mxu0
  %v139 = vpop.f32.mrb[0].mxu0
  %v140 = vadd.f32 0.0, %v139
  %v141 = vpop.f32.mrb[0].mxu0
  %142 = vdwg.mxu0
  %143 = vst [vmem:[%s2] sm:$0xff] %v137
  %144 = vst [vmem:[%s2 + $0x8] sm:$0xff] %v140
  %p145 = scmp.eq.s32.totalorder 0, 0
  // Predicated region
  $region10: #{res_unet_att_forward.38} parent=0 // pred_check
    %p146 = pneg %p145
  $region11: #{res_unet_att_forward.38} parent=0 // pred_check_branch
    %148 = sbr.rel (%p146) target = $region13
  $region12: #{res_unet_att_forward.38} parent=0 // pred_region
    %vm149 = vcmask 7168
    %150 = vst.msk [vmem:[%s3] sm:$0xff] %vm149, 0.0
    %151 = vst.msk [vmem:[%s3 + $0x8] sm:$0xff] %vm149, 0.0
    %152 = vst.msk [vmem:[%s4] sm:$0xff] %vm149, 0.0
    %153 = vst.msk [vmem:[%s4 + $0x8] sm:$0xff] %vm149, 0.0
  $region13: #{res_unet_att_forward.38} parent=0 // pred_fallthru
    _
  %v154 = vld [vmem:[%s3] sm:$0xff]
  %v155 = vld [vmem:[%s3 + $0x8] sm:$0xff]
  %156 = vadd.xlane.f32.xlu0 %v137
  %v157 = vpop.xlane.xlu0 %156
  %158 = vadd.xlane.f32.xlu0 %v140
  %v159 = vpop.xlane.xlu0 %158
  %v160 = vadd.f32 %v154, %v157
  %v161 = vadd.f32 %v155, %v159
  %vm162 = vcmask 7168
  %163 = vst.msk [vmem:[%s3] sm:$0xff] %vm162, %v160
  %164 = vst.msk [vmem:[%s3 + $0x8] sm:$0xff] %vm162, %v161
  %v165 = vld [vmem:[%s4] sm:$0xff]
  %v166 = vld [vmem:[%s4 + $0x8] sm:$0xff]
  %v167 = vmul.f32 %v137, %v137
  %v168 = vmul.f32 %v140, %v140
  %169 = vadd.xlane.f32.xlu0 %v167
  %v170 = vpop.xlane.xlu0 %169
  %171 = vadd.xlane.f32.xlu0 %v168
  %v172 = vpop.xlane.xlu0 %171
  %v173 = vadd.f32 %v165, %v170
  %v174 = vadd.f32 %v166, %v172
  %175 = vst.msk [vmem:[%s4] sm:$0xff] %vm162, %v173
  %176 = vst.msk [vmem:[%s4 + $0x8] sm:$0xff] %vm162, %v174
  // Predicated region
  $region14: #{res_unet_att_forward.38} parent=0 // pred_check
    _
  $region15: #{res_unet_att_forward.38} parent=0 // pred_check_branch
    %178 = sbr.rel (0) target = $region17
  $region16: #{res_unet_att_forward.38} parent=0 // pred_region
    _
  $region17: #{res_unet_att_forward.38} parent=0 // pred_fallthru
    _
  // Predicated region
  $region18: #{res_unet_att_forward.38} parent=0 // pred_check
    _
  $region19: #{res_unet_att_forward.38} parent=0 // pred_check_branch
    %180 = sbr.rel (0) target = $region21
  $region20: #{res_unet_att_forward.38} parent=0 // pred_region
    _
  $region21: #{res_unet_att_forward.38} parent=0 // pred_fallthru
    _
  // Predicated region
  $region22: #{res_unet_att_forward.38} parent=0 // pred_check
    _
  $region23: #{res_unet_att_forward.38} parent=0 // pred_check_branch
    %182 = sbr.rel (0) target = $region25
  $region24: #{res_unet_att_forward.38} parent=0 // pred_region
    _
  $region25: #{res_unet_att_forward.38} parent=0 // pred_fallthru
    _
  // Predicated region
  $region26: #{res_unet_att_forward.38} parent=0 // pred_check
    _
  $region27: #{res_unet_att_forward.38} parent=0 // pred_check_branch
    %184 = sbr.rel (0) target = $region29
  $region28: #{res_unet_att_forward.38} parent=0 // pred_region
    _
  $region29: #{res_unet_att_forward.38} parent=0 // pred_fallthru
    _
  // Predicated region
  $region30: #{res_unet_att_forward.38} parent=0 // pred_check
    _
  $region31: #{res_unet_att_forward.38} parent=0 // pred_check_branch
    %186 = sbr.rel (0) target = $region33
  $region32: #{res_unet_att_forward.38} parent=0 // pred_region
    _
  $region33: #{res_unet_att_forward.38} parent=0 // pred_fallthru
    _
  // Predicated region
  $region34: #{res_unet_att_forward.38} parent=0 // pred_check
    _
  $region35: #{res_unet_att_forward.38} parent=0 // pred_check_branch
    %188 = sbr.rel (0) target = $region37
  $region36: #{res_unet_att_forward.38} parent=0 // pred_region
    _
  $region37: #{res_unet_att_forward.38} parent=0 // pred_fallthru
    _

// kernel: res_unet_att_forward.41
$region0: #{res_unet_att_forward.41}
  #allocation0 [shape = 'u32[]', space=smem, size = 0x4, offset = 0x4, fixed_abs, tag = 'smem constant byte address 0x4 - core index']
  #allocation1 [shape = 'u32[144,128]{1,0:T(1,128)}', space=vmem, size = 0x12000, scoped, tag = 'internal scratch']
  %s0 = inlined_call_operand.vmem [shape: f32[32,32], index: 0, kind: input, shape index: {}]
  %s1 = inlined_call_operand.vmem [shape: f32[32,1], index: 1, kind: input, shape index: {}]
  %s2 = inlined_call_operand.vmem [shape: f32[32,1], index: 2, kind: input, shape index: {}]
  %s3 = inlined_call_operand.vmem [shape: f32[32,32], index: 3, kind: output, shape index: {}]
  %s4 = sld [smem:[#allocation0]]
  $region22: #{res_unet_att_forward.41} parent=0
    _
  %s6 = ssub.s32 1, %s4
  %s7 = scalar_select 0, %s6, %s4
  // Predicated region
  $region2: #{res_unet_att_forward.41} parent=0 // pred_check
    _
  $region3: #{res_unet_att_forward.41} parent=0 // pred_check_branch
    %9 = sbr.rel (0) target = $region5
  $region4: #{res_unet_att_forward.41} parent=0 // pred_region
    _
  $region5: #{res_unet_att_forward.41} parent=0 // pred_fallthru
    _
  // Predicated region
  $region6: #{res_unet_att_forward.41} parent=0 // pred_check
    _
  $region7: #{res_unet_att_forward.41} parent=0 // pred_check_branch
    %11 = sbr.rel (0) target = $region9
  $region8: #{res_unet_att_forward.41} parent=0 // pred_region
    _
  $region9: #{res_unet_att_forward.41} parent=0 // pred_fallthru
    _
  // Predicated region
  $region10: #{res_unet_att_forward.41} parent=0 // pred_check
    _
  $region11: #{res_unet_att_forward.41} parent=0 // pred_check_branch
    %13 = sbr.rel (0) target = $region13
  $region12: #{res_unet_att_forward.41} parent=0 // pred_region
    _
  $region13: #{res_unet_att_forward.41} parent=0 // pred_fallthru
    _
  %v14 = vld [vmem:[%s0] sm:$0xff]
  %v15 = vld [vmem:[%s0 + $0x8] sm:$0xff]
  %v16 = vld [vmem:[%s0 + $0x10] sm:$0xff]
  %v17 = vld [vmem:[%s0 + $0x18] sm:$0xff]
  %v18 = vld [vmem:[%s1] sm:$0xff]
  %v19 = vld [vmem:[%s1 + $0x8] sm:$0xff]
  %v20 = vld [vmem:[%s1 + $0x10] sm:$0xff]
  %v21 = vld [vmem:[%s1 + $0x18] sm:$0xff]
  %23 = vset.pattern.permute.xlu0 0
  %24 = vperm.xlu0 %23, %v18
  %v25 = vpop.permute.xlu0 %24
  %28 = vset.pattern.permute.xlu0 0
  %29 = vperm.xlu0 %28, %v19
  %v30 = vpop.permute.xlu0 %29
  %33 = vset.pattern.permute.xlu0 0
  %34 = vperm.xlu0 %33, %v20
  %v35 = vpop.permute.xlu0 %34
  %38 = vset.pattern.permute.xlu0 0
  %39 = vperm.xlu0 %38, %v21
  %v40 = vpop.permute.xlu0 %39
  %v42 = vmul.f32 %v14, %v25
  %v43 = vmul.f32 %v15, %v30
  %v44 = vmul.f32 %v16, %v35
  %v45 = vmul.f32 %v17, %v40
  %v46 = vld [vmem:[%s2] sm:$0xff]
  %v47 = vld [vmem:[%s2 + $0x8] sm:$0xff]
  %v48 = vld [vmem:[%s2 + $0x10] sm:$0xff]
  %v49 = vld [vmem:[%s2 + $0x18] sm:$0xff]
  %51 = vset.pattern.permute.xlu0 0
  %52 = vperm.xlu0 %51, %v46
  %v53 = vpop.permute.xlu0 %52
  %56 = vset.pattern.permute.xlu0 0
  %57 = vperm.xlu0 %56, %v47
  %v58 = vpop.permute.xlu0 %57
  %61 = vset.pattern.permute.xlu0 0
  %62 = vperm.xlu0 %61, %v48
  %v63 = vpop.permute.xlu0 %62
  %66 = vset.pattern.permute.xlu0 0
  %67 = vperm.xlu0 %66, %v49
  %v68 = vpop.permute.xlu0 %67
  %v70 = vadd.f32 %v42, %v53
  %v71 = vadd.f32 %v43, %v58
  %v72 = vadd.f32 %v44, %v63
  %v73 = vadd.f32 %v45, %v68
  %v74 = vmax.f32 %v70, 0.0
  %v75 = vmax.f32 %v71, 0.0
  %v76 = vmax.f32 %v72, 0.0
  %v77 = vmax.f32 %v73, 0.0
  %vm78 = vcmask 261120
  %79 = vst.msk [vmem:[%s3] sm:$0xff] %vm78, %v74
  %80 = vst.msk [vmem:[%s3 + $0x8] sm:$0xff] %vm78, %v75
  %81 = vst.msk [vmem:[%s3 + $0x10] sm:$0xff] %vm78, %v76
  %82 = vst.msk [vmem:[%s3 + $0x18] sm:$0xff] %vm78, %v77
  // Predicated region
  $region14: #{res_unet_att_forward.41} parent=0 // pred_check
    _
  $region15: #{res_unet_att_forward.41} parent=0 // pred_check_branch
    %84 = sbr.rel (0) target = $region17
  $region16: #{res_unet_att_forward.41} parent=0 // pred_region
    _
  $region17: #{res_unet_att_forward.41} parent=0 // pred_fallthru
    _
  // Predicated region
  $region18: #{res_unet_att_forward.41} parent=0 // pred_check
    _
  $region19: #{res_unet_att_forward.41} parent=0 // pred_check_branch
    %86 = sbr.rel (0) target = $region21
  $region20: #{res_unet_att_forward.41} parent=0 // pred_region
    _
  $region21: #{res_unet_att_forward.41} parent=0 // pred_fallthru
    _

// kernel: res_unet_att_forward.40
$region0: #{res_unet_att_forward.40}
  #allocation0 [shape = 'u32[]', space=smem, size = 0x4, offset = 0x4, fixed_abs, tag = 'smem constant byte address 0x4 - core index']
  #allocation1 [shape = 'u32[144,128]{1,0:T(1,128)}', space=vmem, size = 0x12000, scoped, tag = 'internal scratch']
  %s0 = inlined_call_operand.vmem [shape: bf16[32,144], index: 0, kind: input, shape index: {}]
  %s1 = inlined_call_operand.vmem [shape: bf16[144,32], index: 1, kind: input, shape index: {}]
  %s2 = inlined_call_operand.vmem [shape: f32[32,32], index: 2, kind: output, shape index: {0}]
  %s3 = inlined_call_operand.vmem [shape: f32[32,1], index: 3, kind: output, shape index: {1}]
  %s4 = inlined_call_operand.vmem [shape: f32[32,1], index: 4, kind: output, shape index: {2}]
  %5 = xla_tuple %s2, %s3, %s4
  %s6 = sld [smem:[#allocation0]]
  $region38: #{res_unet_att_forward.40} parent=0
    _
  %s8 = ssub.s32 1, %s6
  %s9 = scalar_select 0, %s8, %s6
  // Predicated region
  $region2: #{res_unet_att_forward.40} parent=0 // pred_check
    _
  $region3: #{res_unet_att_forward.40} parent=0 // pred_check_branch
    %11 = sbr.rel (0) target = $region5
  $region4: #{res_unet_att_forward.40} parent=0 // pred_region
    _
  $region5: #{res_unet_att_forward.40} parent=0 // pred_fallthru
    _
  // Predicated region
  $region6: #{res_unet_att_forward.40} parent=0 // pred_check
    _
  $region7: #{res_unet_att_forward.40} parent=0 // pred_check_branch
    %13 = sbr.rel (0) target = $region9
  $region8: #{res_unet_att_forward.40} parent=0 // pred_region
    _
  $region9: #{res_unet_att_forward.40} parent=0 // pred_fallthru
    _
  %v15 = vld [vmem:[%s0] sm:$0xff]
  %v16 = vld [vmem:[%s0 + $0x8] sm:$0xff]
  %v17 = vld [vmem:[%s0 + $0x10] sm:$0xff]
  %v18 = vld [vmem:[%s0 + $0x18] sm:$0xff]
  %v19 = vld [vmem:[%s1] sm:$0xf]
  %v20 = vld [vmem:[%s1 + $0x4] sm:$0xf]
  %v21 = vld [vmem:[%s1 + $0x8] sm:$0xf]
  %v22 = vld [vmem:[%s1 + $0xc] sm:$0xf]
  %v23 = vld [vmem:[%s1 + $0x10] sm:$0xf]
  %v24 = vld [vmem:[%s1 + $0x14] sm:$0xf]
  %v25 = vld [vmem:[%s1 + $0x18] sm:$0xf]
  %v26 = vld [vmem:[%s1 + $0x1c] sm:$0xf]
  %v27 = vld [vmem:[%s1 + $0x20] sm:$0xf]
  %v28 = vld [vmem:[%s1 + $0x24] sm:$0xf]
  %v29 = vld [vmem:[%s1 + $0x28] sm:$0xf]
  %v30 = vld [vmem:[%s1 + $0x2c] sm:$0xf]
  %v31 = vld [vmem:[%s1 + $0x30] sm:$0xf]
  %v32 = vld [vmem:[%s1 + $0x34] sm:$0xf]
  %v33 = vld [vmem:[%s1 + $0x38] sm:$0xf]
  %v34 = vld [vmem:[%s1 + $0x3c] sm:$0xf]
  %v35 = vld [vmem:[%s1 + $0x40] sm:$0xf]
  %v36 = vld [vmem:[%s1 + $0x44] sm:$0xf]
  %v41 = vunpack.c.l.b16 %v15
  %v42 = vunpack.c.h.b16 %v15
  %v43 = vunpack.c.l.b16 %v16
  %v44 = vunpack.c.h.b16 %v16
  %v45 = vunpack.c.l.b16 %v17
  %v46 = vunpack.c.h.b16 %v17
  %v47 = vunpack.c.l.b16 %v18
  %v48 = vunpack.c.h.b16 %v18
  %v49 = vpack.c.b16 %v43, %v41
  %v50 = vpack.c.b16 %v44, %v42
  %v51 = vpack.c.b16 %v47, %v45
  %v52 = vpack.c.b16 %v48, %v46
  %v73 = vunpack.c.l.b16 %v19
  %v74 = vunpack.c.l.b16 %v20
  %v75 = vunpack.c.l.b16 %v21
  %v76 = vunpack.c.l.b16 %v22
  %v77 = vunpack.c.l.b16 %v23
  %v78 = vunpack.c.l.b16 %v24
  %v79 = vunpack.c.l.b16 %v25
  %v80 = vunpack.c.l.b16 %v26
  %v81 = vunpack.c.l.b16 %v27
  %v82 = vunpack.c.l.b16 %v28
  %v83 = vunpack.c.l.b16 %v29
  %v84 = vunpack.c.l.b16 %v30
  %v85 = vunpack.c.l.b16 %v31
  %v86 = vunpack.c.l.b16 %v32
  %v87 = vunpack.c.l.b16 %v33
  %v88 = vunpack.c.l.b16 %v34
  %v89 = vunpack.c.l.b16 %v35
  %v90 = vunpack.c.l.b16 %v36
  %v91 = vpack.c.b16 %v74, %v73
  %v92 = vpack.c.b16 %v76, %v75
  %v93 = vpack.c.b16 %v78, %v77
  %v94 = vpack.c.b16 %v80, %v79
  %v95 = vpack.c.b16 %v82, %v81
  %v96 = vpack.c.b16 %v84, %v83
  %v97 = vpack.c.b16 %v86, %v85
  %v98 = vpack.c.b16 %v88, %v87
  %v99 = vpack.c.b16 %v90, %v89
  %vm109 = vcmask 130048
  %v111 = vsel %vm109, %v50, 0
  %v114 = vsel %vm109, %v52, 0
  %116 = vmatprep.subr.bf16.mxu0 0
  %117 = vmatpush1.bf16.msra.mxu0 %v91
  %118 = vmatprep.subr.bf16.mxu0 0
  %119 = vmatpush1.bf16.msra.mxu0 %v92
  %120 = vmatprep.subr.bf16.mxu0 0
  %121 = vmatpush1.bf16.msra.mxu0 %v93
  %122 = vmatprep.subr.bf16.mxu0 0
  %123 = vmatpush1.bf16.msra.mxu0 %v94
  %124 = vmatprep.subr.bf16.mxu0 0
  %125 = vmatpush1.bf16.msra.mxu0 %v95
  %126 = vmatprep.subr.bf16.mxu0 0
  %127 = vmatpush1.bf16.msra.mxu0 %v96
  %128 = vmatprep.subr.bf16.mxu0 0
  %129 = vmatpush1.bf16.msra.mxu0 %v97
  %130 = vmatprep.subr.bf16.mxu0 0
  %131 = vmatpush1.bf16.msra.mxu0 %v98
  %132 = vmatprep.subr.bf16.mxu0 0
  %133 = vmatpush1.bf16.msra.mxu0 %v99
  %134 = vmatprep.subr.bf16.mxu0 0
  %135 = vmatpush1.bf16.msra.mxu0 0
  %136 = vmatprep.subr.bf16.mxu0 0
  %137 = vmatpush1.bf16.msra.mxu0 0
  %138 = vmatprep.subr.bf16.mxu0 0
  %139 = vmatpush1.bf16.msra.mxu0 0
  %140 = vmatprep.subr.bf16.mxu0 0
  %141 = vmatpush1.bf16.msra.mxu0 0
  %142 = vmatprep.subr.bf16.mxu0 0
  %143 = vmatpush1.bf16.msra.mxu0 0
  %144 = vmatprep.subr.bf16.mxu0 0
  %145 = vmatpush1.bf16.msra.mxu0 0
  %146 = vmatprep.subr.bf16.mxu0 0
  %147 = vmatpush1.bf16.msra.mxu0 0
  %148 = vmatprep.mubr.bf16.mxu0 %v111
  %149 = vmatmul.mubr.bf16.gmra.mrb[0].mxu0 %v49
  %v150 = vpop.f32.mrb[0].mxu0
  %v151 = vadd.f32 0.0, %v150
  %v152 = vpop.f32.mrb[0].mxu0
  %v153 = vpop.f32.mrb[0].mxu0
  %v154 = vadd.f32 0.0, %v153
  %v155 = vpop.f32.mrb[0].mxu0
  %156 = vmatprep.mubr.bf16.mxu0 %v114
  %157 = vmatmul.mubr.bf16.gmra.mrb[0].mxu0 %v51
  %v158 = vpop.f32.mrb[0].mxu0
  %v159 = vadd.f32 0.0, %v158
  %v160 = vpop.f32.mrb[0].mxu0
  %v161 = vpop.f32.mrb[0].mxu0
  %v162 = vadd.f32 0.0, %v161
  %v163 = vpop.f32.mrb[0].mxu0
  %164 = vdwg.mxu0
  %vm165 = vcmask 261120
  %166 = vst.msk [vmem:[%s2] sm:$0xff] %vm165, %v151
  %167 = vst.msk [vmem:[%s2 + $0x8] sm:$0xff] %vm165, %v154
  %168 = vst.msk [vmem:[%s2 + $0x10] sm:$0xff] %vm165, %v159
  %169 = vst.msk [vmem:[%s2 + $0x18] sm:$0xff] %vm165, %v162
  %p170 = scmp.eq.s32.totalorder 0, 0
  // Predicated region
  $region10: #{res_unet_att_forward.40} parent=0 // pred_check
    %p171 = pneg %p170
  $region11: #{res_unet_att_forward.40} parent=0 // pred_check_branch
    %173 = sbr.rel (%p171) target = $region13
  $region12: #{res_unet_att_forward.40} parent=0 // pred_region
    %vm174 = vcmask 7168
    %175 = vst.msk [vmem:[%s3] sm:$0xff] %vm174, 0.0
    %176 = vst.msk [vmem:[%s3 + $0x8] sm:$0xff] %vm174, 0.0
    %177 = vst.msk [vmem:[%s3 + $0x10] sm:$0xff] %vm174, 0.0
    %178 = vst.msk [vmem:[%s3 + $0x18] sm:$0xff] %vm174, 0.0
    %179 = vst.msk [vmem:[%s4] sm:$0xff] %vm174, 0.0
    %180 = vst.msk [vmem:[%s4 + $0x8] sm:$0xff] %vm174, 0.0
    %181 = vst.msk [vmem:[%s4 + $0x10] sm:$0xff] %vm174, 0.0
    %182 = vst.msk [vmem:[%s4 + $0x18] sm:$0xff] %vm174, 0.0
  $region13: #{res_unet_att_forward.40} parent=0 // pred_fallthru
    _
  %v183 = vld [vmem:[%s3] sm:$0xff]
  %v184 = vld [vmem:[%s3 + $0x8] sm:$0xff]
  %v185 = vld [vmem:[%s3 + $0x10] sm:$0xff]
  %v186 = vld [vmem:[%s3 + $0x18] sm:$0xff]
  %v187 = vsel %vm165, %v151, 0.0
  %188 = vadd.xlane.f32.xlu0 %v187
  %v189 = vpop.xlane.xlu0 %188
  %v190 = vsel %vm165, %v154, 0.0
  %191 = vadd.xlane.f32.xlu0 %v190
  %v192 = vpop.xlane.xlu0 %191
  %v193 = vsel %vm165, %v159, 0.0
  %194 = vadd.xlane.f32.xlu0 %v193
  %v195 = vpop.xlane.xlu0 %194
  %v196 = vsel %vm165, %v162, 0.0
  %197 = vadd.xlane.f32.xlu0 %v196
  %v198 = vpop.xlane.xlu0 %197
  %v199 = vadd.f32 %v183, %v189
  %v200 = vadd.f32 %v184, %v192
  %v201 = vadd.f32 %v185, %v195
  %v202 = vadd.f32 %v186, %v198
  %vm203 = vcmask 7168
  %204 = vst.msk [vmem:[%s3] sm:$0xff] %vm203, %v199
  %205 = vst.msk [vmem:[%s3 + $0x8] sm:$0xff] %vm203, %v200
  %206 = vst.msk [vmem:[%s3 + $0x10] sm:$0xff] %vm203, %v201
  %207 = vst.msk [vmem:[%s3 + $0x18] sm:$0xff] %vm203, %v202
  %v208 = vld [vmem:[%s4] sm:$0xff]
  %v209 = vld [vmem:[%s4 + $0x8] sm:$0xff]
  %v210 = vld [vmem:[%s4 + $0x10] sm:$0xff]
  %v211 = vld [vmem:[%s4 + $0x18] sm:$0xff]
  %v212 = vmul.f32 %v151, %v151
  %v213 = vmul.f32 %v154, %v154
  %v214 = vmul.f32 %v159, %v159
  %v215 = vmul.f32 %v162, %v162
  %v216 = vsel %vm165, %v212, 0.0
  %217 = vadd.xlane.f32.xlu0 %v216
  %v218 = vpop.xlane.xlu0 %217
  %v219 = vsel %vm165, %v213, 0.0
  %220 = vadd.xlane.f32.xlu0 %v219
  %v221 = vpop.xlane.xlu0 %220
  %v222 = vsel %vm165, %v214, 0.0
  %223 = vadd.xlane.f32.xlu0 %v222
  %v224 = vpop.xlane.xlu0 %223
  %v225 = vsel %vm165, %v215, 0.0
  %226 = vadd.xlane.f32.xlu0 %v225
  %v227 = vpop.xlane.xlu0 %226
  %v228 = vadd.f32 %v208, %v218
  %v229 = vadd.f32 %v209, %v221
  %v230 = vadd.f32 %v210, %v224
  %v231 = vadd.f32 %v211, %v227
  %232 = vst.msk [vmem:[%s4] sm:$0xff] %vm203, %v228
  %233 = vst.msk [vmem:[%s4 + $0x8] sm:$0xff] %vm203, %v229
  %234 = vst.msk [vmem:[%s4 + $0x10] sm:$0xff] %vm203, %v230
  %235 = vst.msk [vmem:[%s4 + $0x18] sm:$0xff] %vm203, %v231
  // Predicated region
  $region14: #{res_unet_att_forward.40} parent=0 // pred_check
    _
  $region15: #{res_unet_att_forward.40} parent=0 // pred_check_branch
    %237 = sbr.rel (0) target = $region17
  $region16: #{res_unet_att_forward.40} parent=0 // pred_region
    _
  $region17: #{res_unet_att_forward.40} parent=0 // pred_fallthru
    _
  // Predicated region
  $region18: #{res_unet_att_forward.40} parent=0 // pred_check
    _
  $region19: #{res_unet_att_forward.40} parent=0 // pred_check_branch
    %239 = sbr.rel (0) target = $region21
  $region20: #{res_unet_att_forward.40} parent=0 // pred_region
    _
  $region21: #{res_unet_att_forward.40} parent=0 // pred_fallthru
    _
  // Predicated region
  $region22: #{res_unet_att_forward.40} parent=0 // pred_check
    _
  $region23: #{res_unet_att_forward.40} parent=0 // pred_check_branch
    %241 = sbr.rel (0) target = $region25
  $region24: #{res_unet_att_forward.40} parent=0 // pred_region
    _
  $region25: #{res_unet_att_forward.40} parent=0 // pred_fallthru
    _
  // Predicated region
  $region26: #{res_unet_att_forward.40} parent=0 // pred_check
    _
  $region27: #{res_unet_att_forward.40} parent=0 // pred_check_branch
    %243 = sbr.rel (0) target = $region29
  $region28: #{res_unet_att_forward.40} parent=0 // pred_region
    _
  $region29: #{res_unet_att_forward.40} parent=0 // pred_fallthru
    _
  // Predicated region
  $region30: #{res_unet_att_forward.40} parent=0 // pred_check
    _
  $region31: #{res_unet_att_forward.40} parent=0 // pred_check_branch
    %245 = sbr.rel (0) target = $region33
  $region32: #{res_unet_att_forward.40} parent=0 // pred_region
    _
  $region33: #{res_unet_att_forward.40} parent=0 // pred_fallthru
    _
  // Predicated region
  $region34: #{res_unet_att_forward.40} parent=0 // pred_check
    _
  $region35: #{res_unet_att_forward.40} parent=0 // pred_check_branch
    %247 = sbr.rel (0) target = $region37
  $region36: #{res_unet_att_forward.40} parent=0 // pred_region
    _
  $region37: #{res_unet_att_forward.40} parent=0 // pred_fallthru
    _

// kernel: res_unet_att_forward.42
$region0: #{res_unet_att_forward.42}
  #allocation0 [shape = 'u32[]', space=smem, size = 0x4, offset = 0x4, fixed_abs, tag = 'smem constant byte address 0x4 - core index']
  #allocation1 [shape = 'u32[144,128]{1,0:T(1,128)}', space=vmem, size = 0x12000, scoped, tag = 'internal scratch']
  %s0 = inlined_call_operand.vmem [shape: bf16[32,288], index: 0, kind: input, shape index: {}]
  %s1 = inlined_call_operand.vmem [shape: bf16[288,32], index: 1, kind: input, shape index: {}]
  %s2 = inlined_call_operand.vmem [shape: f32[32,32], index: 2, kind: output, shape index: {0}]
  %s3 = inlined_call_operand.vmem [shape: f32[32,1], index: 3, kind: output, shape index: {1}]
  %s4 = inlined_call_operand.vmem [shape: f32[32,1], index: 4, kind: output, shape index: {2}]
  %5 = xla_tuple %s2, %s3, %s4
  %s6 = sld [smem:[#allocation0]]
  $region38: #{res_unet_att_forward.42} parent=0
    _
  %s8 = ssub.s32 1, %s6
  %s9 = scalar_select 0, %s8, %s6
  // Predicated region
  $region2: #{res_unet_att_forward.42} parent=0 // pred_check
    _
  $region3: #{res_unet_att_forward.42} parent=0 // pred_check_branch
    %11 = sbr.rel (0) target = $region5
  $region4: #{res_unet_att_forward.42} parent=0 // pred_region
    _
  $region5: #{res_unet_att_forward.42} parent=0 // pred_fallthru
    _
  // Predicated region
  $region6: #{res_unet_att_forward.42} parent=0 // pred_check
    _
  $region7: #{res_unet_att_forward.42} parent=0 // pred_check_branch
    %13 = sbr.rel (0) target = $region9
  $region8: #{res_unet_att_forward.42} parent=0 // pred_region
    _
  $region9: #{res_unet_att_forward.42} parent=0 // pred_fallthru
    _
  %v15 = vld [vmem:[%s0] sm:$0xff]
  %v16 = vld [vmem:[%s0 + $0x8] sm:$0xf]
  %v17 = vld [vmem:[%s0 + $0xc] sm:$0xff]
  %v18 = vld [vmem:[%s0 + $0x14] sm:$0xf]
  %v19 = vld [vmem:[%s0 + $0x18] sm:$0xff]
  %v20 = vld [vmem:[%s0 + $0x20] sm:$0xf]
  %v21 = vld [vmem:[%s0 + $0x24] sm:$0xff]
  %v22 = vld [vmem:[%s0 + $0x2c] sm:$0xf]
  %v23 = vld [vmem:[%s1] sm:$0xf]
  %v24 = vld [vmem:[%s1 + $0x4] sm:$0xf]
  %v25 = vld [vmem:[%s1 + $0x8] sm:$0xf]
  %v26 = vld [vmem:[%s1 + $0xc] sm:$0xf]
  %v27 = vld [vmem:[%s1 + $0x10] sm:$0xf]
  %v28 = vld [vmem:[%s1 + $0x14] sm:$0xf]
  %v29 = vld [vmem:[%s1 + $0x18] sm:$0xf]
  %v30 = vld [vmem:[%s1 + $0x1c] sm:$0xf]
  %v31 = vld [vmem:[%s1 + $0x20] sm:$0xf]
  %v32 = vld [vmem:[%s1 + $0x24] sm:$0xf]
  %v33 = vld [vmem:[%s1 + $0x28] sm:$0xf]
  %v34 = vld [vmem:[%s1 + $0x2c] sm:$0xf]
  %v35 = vld [vmem:[%s1 + $0x30] sm:$0xf]
  %v36 = vld [vmem:[%s1 + $0x34] sm:$0xf]
  %v37 = vld [vmem:[%s1 + $0x38] sm:$0xf]
  %v38 = vld [vmem:[%s1 + $0x3c] sm:$0xf]
  %v39 = vld [vmem:[%s1 + $0x40] sm:$0xf]
  %v40 = vld [vmem:[%s1 + $0x44] sm:$0xf]
  %v41 = vld [vmem:[%s1 + $0x48] sm:$0xf]
  %v42 = vld [vmem:[%s1 + $0x4c] sm:$0xf]
  %v43 = vld [vmem:[%s1 + $0x50] sm:$0xf]
  %v44 = vld [vmem:[%s1 + $0x54] sm:$0xf]
  %v45 = vld [vmem:[%s1 + $0x58] sm:$0xf]
  %v46 = vld [vmem:[%s1 + $0x5c] sm:$0xf]
  %v47 = vld [vmem:[%s1 + $0x60] sm:$0xf]
  %v48 = vld [vmem:[%s1 + $0x64] sm:$0xf]
  %v49 = vld [vmem:[%s1 + $0x68] sm:$0xf]
  %v50 = vld [vmem:[%s1 + $0x6c] sm:$0xf]
  %v51 = vld [vmem:[%s1 + $0x70] sm:$0xf]
  %v52 = vld [vmem:[%s1 + $0x74] sm:$0xf]
  %v53 = vld [vmem:[%s1 + $0x78] sm:$0xf]
  %v54 = vld [vmem:[%s1 + $0x7c] sm:$0xf]
  %v55 = vld [vmem:[%s1 + $0x80] sm:$0xf]
  %v56 = vld [vmem:[%s1 + $0x84] sm:$0xf]
  %v57 = vld [vmem:[%s1 + $0x88] sm:$0xf]
  %v58 = vld [vmem:[%s1 + $0x8c] sm:$0xf]
  %v67 = vunpack.c.l.b16 %v15
  %v68 = vunpack.c.h.b16 %v15
  %v69 = vunpack.c.l.b16 %v16
  %v70 = vunpack.c.l.b16 %v17
  %v71 = vunpack.c.h.b16 %v17
  %v72 = vunpack.c.l.b16 %v18
  %v73 = vunpack.c.l.b16 %v19
  %v74 = vunpack.c.h.b16 %v19
  %v75 = vunpack.c.l.b16 %v20
  %v76 = vunpack.c.l.b16 %v21
  %v77 = vunpack.c.h.b16 %v21
  %v78 = vunpack.c.l.b16 %v22
  %v79 = vpack.c.b16 %v70, %v67
  %v80 = vpack.c.b16 %v71, %v68
  %v81 = vpack.c.b16 %v72, %v69
  %v82 = vpack.c.b16 %v76, %v73
  %v83 = vpack.c.b16 %v77, %v74
  %v84 = vpack.c.b16 %v78, %v75
  %v125 = vunpack.c.l.b16 %v23
  %v126 = vunpack.c.l.b16 %v24
  %v127 = vunpack.c.l.b16 %v25
  %v128 = vunpack.c.l.b16 %v26
  %v129 = vunpack.c.l.b16 %v27
  %v130 = vunpack.c.l.b16 %v28
  %v131 = vunpack.c.l.b16 %v29
  %v132 = vunpack.c.l.b16 %v30
  %v133 = vunpack.c.l.b16 %v31
  %v134 = vunpack.c.l.b16 %v32
  %v135 = vunpack.c.l.b16 %v33
  %v136 = vunpack.c.l.b16 %v34
  %v137 = vunpack.c.l.b16 %v35
  %v138 = vunpack.c.l.b16 %v36
  %v139 = vunpack.c.l.b16 %v37
  %v140 = vunpack.c.l.b16 %v38
  %v141 = vunpack.c.l.b16 %v39
  %v142 = vunpack.c.l.b16 %v40
  %v143 = vunpack.c.l.b16 %v41
  %v144 = vunpack.c.l.b16 %v42
  %v145 = vunpack.c.l.b16 %v43
  %v146 = vunpack.c.l.b16 %v44
  %v147 = vunpack.c.l.b16 %v45
  %v148 = vunpack.c.l.b16 %v46
  %v149 = vunpack.c.l.b16 %v47
  %v150 = vunpack.c.l.b16 %v48
  %v151 = vunpack.c.l.b16 %v49
  %v152 = vunpack.c.l.b16 %v50
  %v153 = vunpack.c.l.b16 %v51
  %v154 = vunpack.c.l.b16 %v52
  %v155 = vunpack.c.l.b16 %v53
  %v156 = vunpack.c.l.b16 %v54
  %v157 = vunpack.c.l.b16 %v55
  %v158 = vunpack.c.l.b16 %v56
  %v159 = vunpack.c.l.b16 %v57
  %v160 = vunpack.c.l.b16 %v58
  %v161 = vpack.c.b16 %v126, %v125
  %v162 = vpack.c.b16 %v128, %v127
  %v163 = vpack.c.b16 %v130, %v129
  %v164 = vpack.c.b16 %v132, %v131
  %v165 = vpack.c.b16 %v134, %v133
  %v166 = vpack.c.b16 %v136, %v135
  %v167 = vpack.c.b16 %v138, %v137
  %v168 = vpack.c.b16 %v140, %v139
  %v169 = vpack.c.b16 %v142, %v141
  %v170 = vpack.c.b16 %v144, %v143
  %v171 = vpack.c.b16 %v146, %v145
  %v172 = vpack.c.b16 %v148, %v147
  %v173 = vpack.c.b16 %v150, %v149
  %v174 = vpack.c.b16 %v152, %v151
  %v175 = vpack.c.b16 %v154, %v153
  %v176 = vpack.c.b16 %v156, %v155
  %v177 = vpack.c.b16 %v158, %v157
  %v178 = vpack.c.b16 %v160, %v159
  %vm197 = vcmask 261120
  %v199 = vsel %vm197, %v81, 0
  %v202 = vsel %vm197, %v84, 0
  %204 = vmatprep.subr.bf16.mxu0 0
  %205 = vmatpush1.bf16.msra.mxu0 %v161
  %206 = vmatprep.subr.bf16.mxu0 0
  %207 = vmatpush1.bf16.msra.mxu0 %v162
  %208 = vmatprep.subr.bf16.mxu0 0
  %209 = vmatpush1.bf16.msra.mxu0 %v163
  %210 = vmatprep.subr.bf16.mxu0 0
  %211 = vmatpush1.bf16.msra.mxu0 %v164
  %212 = vmatprep.subr.bf16.mxu0 0
  %213 = vmatpush1.bf16.msra.mxu0 %v165
  %214 = vmatprep.subr.bf16.mxu0 0
  %215 = vmatpush1.bf16.msra.mxu0 %v166
  %216 = vmatprep.subr.bf16.mxu0 0
  %217 = vmatpush1.bf16.msra.mxu0 %v167
  %218 = vmatprep.subr.bf16.mxu0 0
  %219 = vmatpush1.bf16.msra.mxu0 %v168
  %220 = vmatprep.subr.bf16.mxu0 0
  %221 = vmatpush1.bf16.msra.mxu0 %v169
  %222 = vmatprep.subr.bf16.mxu0 0
  %223 = vmatpush1.bf16.msra.mxu0 %v170
  %224 = vmatprep.subr.bf16.mxu0 0
  %225 = vmatpush1.bf16.msra.mxu0 %v171
  %226 = vmatprep.subr.bf16.mxu0 0
  %227 = vmatpush1.bf16.msra.mxu0 %v172
  %228 = vmatprep.subr.bf16.mxu0 0
  %229 = vmatpush1.bf16.msra.mxu0 %v173
  %230 = vmatprep.subr.bf16.mxu0 0
  %231 = vmatpush1.bf16.msra.mxu0 %v174
  %232 = vmatprep.subr.bf16.mxu0 0
  %233 = vmatpush1.bf16.msra.mxu0 %v175
  %234 = vmatprep.subr.bf16.mxu0 0
  %235 = vmatpush1.bf16.msra.mxu0 %v176
  %236 = vmatprep.mubr.bf16.mxu0 %v80
  %237 = vmatmul.mubr.bf16.gmra.mrb[0].mxu0 %v79
  %v238 = vpop.f32.mrb[0].mxu0
  %v239 = vadd.f32 0.0, %v238
  %v240 = vpop.f32.mrb[0].mxu0
  %v241 = vpop.f32.mrb[0].mxu0
  %v242 = vadd.f32 0.0, %v241
  %v243 = vpop.f32.mrb[0].mxu0
  %244 = vmatprep.mubr.bf16.mxu0 %v83
  %245 = vmatmul.mubr.bf16.gmra.mrb[0].mxu0 %v82
  %v246 = vpop.f32.mrb[0].mxu0
  %v247 = vadd.f32 0.0, %v246
  %v248 = vpop.f32.mrb[0].mxu0
  %v249 = vpop.f32.mrb[0].mxu0
  %v250 = vadd.f32 0.0, %v249
  %v251 = vpop.f32.mrb[0].mxu0
  %252 = vdwg.mxu0
  %253 = vmatprep.subr.bf16.mxu0 0
  %254 = vmatpush1.bf16.msra.mxu0 %v177
  %255 = vmatprep.subr.bf16.mxu0 0
  %256 = vmatpush1.bf16.msra.mxu0 %v178
  %257 = vmatprep.subr.bf16.mxu0 0
  %258 = vmatpush1.bf16.msra.mxu0 0
  %259 = vmatprep.subr.bf16.mxu0 0
  %260 = vmatpush1.bf16.msra.mxu0 0
  %261 = vmatprep.subr.bf16.mxu0 0
  %262 = vmatpush1.bf16.msra.mxu0 0
  %263 = vmatprep.subr.bf16.mxu0 0
  %264 = vmatpush1.bf16.msra.mxu0 0
  %265 = vmatprep.subr.bf16.mxu0 0
  %266 = vmatpush1.bf16.msra.mxu0 0
  %267 = vmatprep.subr.bf16.mxu0 0
  %268 = vmatpush1.bf16.msra.mxu0 0
  %269 = vmatprep.subr.bf16.mxu0 0
  %270 = vmatpush1.bf16.msra.mxu0 0
  %271 = vmatprep.subr.bf16.mxu0 0
  %272 = vmatpush1.bf16.msra.mxu0 0
  %273 = vmatprep.subr.bf16.mxu0 0
  %274 = vmatpush1.bf16.msra.mxu0 0
  %275 = vmatprep.subr.bf16.mxu0 0
  %276 = vmatpush1.bf16.msra.mxu0 0
  %277 = vmatprep.subr.bf16.mxu0 0
  %278 = vmatpush1.bf16.msra.mxu0 0
  %279 = vmatprep.subr.bf16.mxu0 0
  %280 = vmatpush1.bf16.msra.mxu0 0
  %281 = vmatprep.subr.bf16.mxu0 0
  %282 = vmatpush1.bf16.msra.mxu0 0
  %283 = vmatprep.subr.bf16.mxu0 0
  %284 = vmatpush1.bf16.msra.mxu0 0
  %285 = vmatprep.mubr.bf16.mxu0 0
  %286 = vmatmul.mubr.bf16.gmra.mrb[0].mxu0 %v199
  %v287 = vpop.f32.mrb[0].mxu0
  %v288 = vadd.f32 %v239, %v287
  %v289 = vpop.f32.mrb[0].mxu0
  %v290 = vpop.f32.mrb[0].mxu0
  %v291 = vadd.f32 %v242, %v290
  %v292 = vpop.f32.mrb[0].mxu0
  %293 = vmatprep.mubr.bf16.mxu0 0
  %294 = vmatmul.mubr.bf16.gmra.mrb[0].mxu0 %v202
  %v295 = vpop.f32.mrb[0].mxu0
  %v296 = vadd.f32 %v247, %v295
  %v297 = vpop.f32.mrb[0].mxu0
  %v298 = vpop.f32.mrb[0].mxu0
  %v299 = vadd.f32 %v250, %v298
  %v300 = vpop.f32.mrb[0].mxu0
  %301 = vdwg.mxu0
  %302 = vst.msk [vmem:[%s2] sm:$0xff] %vm197, %v288
  %303 = vst.msk [vmem:[%s2 + $0x8] sm:$0xff] %vm197, %v291
  %304 = vst.msk [vmem:[%s2 + $0x10] sm:$0xff] %vm197, %v296
  %305 = vst.msk [vmem:[%s2 + $0x18] sm:$0xff] %vm197, %v299
  %p306 = scmp.eq.s32.totalorder 0, 0
  // Predicated region
  $region10: #{res_unet_att_forward.42} parent=0 // pred_check
    %p307 = pneg %p306
  $region11: #{res_unet_att_forward.42} parent=0 // pred_check_branch
    %309 = sbr.rel (%p307) target = $region13
  $region12: #{res_unet_att_forward.42} parent=0 // pred_region
    %vm310 = vcmask 7168
    %311 = vst.msk [vmem:[%s3] sm:$0xff] %vm310, 0.0
    %312 = vst.msk [vmem:[%s3 + $0x8] sm:$0xff] %vm310, 0.0
    %313 = vst.msk [vmem:[%s3 + $0x10] sm:$0xff] %vm310, 0.0
    %314 = vst.msk [vmem:[%s3 + $0x18] sm:$0xff] %vm310, 0.0
    %315 = vst.msk [vmem:[%s4] sm:$0xff] %vm310, 0.0
    %316 = vst.msk [vmem:[%s4 + $0x8] sm:$0xff] %vm310, 0.0
    %317 = vst.msk [vmem:[%s4 + $0x10] sm:$0xff] %vm310, 0.0
    %318 = vst.msk [vmem:[%s4 + $0x18] sm:$0xff] %vm310, 0.0
  $region13: #{res_unet_att_forward.42} parent=0 // pred_fallthru
    _
  %v319 = vld [vmem:[%s3] sm:$0xff]
  %v320 = vld [vmem:[%s3 + $0x8] sm:$0xff]
  %v321 = vld [vmem:[%s3 + $0x10] sm:$0xff]
  %v322 = vld [vmem:[%s3 + $0x18] sm:$0xff]
  %v323 = vsel %vm197, %v288, 0.0
  %324 = vadd.xlane.f32.xlu0 %v323
  %v325 = vpop.xlane.xlu0 %324
  %v326 = vsel %vm197, %v291, 0.0
  %327 = vadd.xlane.f32.xlu0 %v326
  %v328 = vpop.xlane.xlu0 %327
  %v329 = vsel %vm197, %v296, 0.0
  %330 = vadd.xlane.f32.xlu0 %v329
  %v331 = vpop.xlane.xlu0 %330
  %v332 = vsel %vm197, %v299, 0.0
  %333 = vadd.xlane.f32.xlu0 %v332
  %v334 = vpop.xlane.xlu0 %333
  %v335 = vadd.f32 %v319, %v325
  %v336 = vadd.f32 %v320, %v328
  %v337 = vadd.f32 %v321, %v331
  %v338 = vadd.f32 %v322, %v334
  %vm339 = vcmask 7168
  %340 = vst.msk [vmem:[%s3] sm:$0xff] %vm339, %v335
  %341 = vst.msk [vmem:[%s3 + $0x8] sm:$0xff] %vm339, %v336
  %342 = vst.msk [vmem:[%s3 + $0x10] sm:$0xff] %vm339, %v337
  %343 = vst.msk [vmem:[%s3 + $0x18] sm:$0xff] %vm339, %v338
  %v344 = vld [vmem:[%s4] sm:$0xff]
  %v345 = vld [vmem:[%s4 + $0x8] sm:$0xff]
  %v346 = vld [vmem:[%s4 + $0x10] sm:$0xff]
  %v347 = vld [vmem:[%s4 + $0x18] sm:$0xff]
  %v348 = vmul.f32 %v288, %v288
  %v349 = vmul.f32 %v291, %v291
  %v350 = vmul.f32 %v296, %v296
  %v351 = vmul.f32 %v299, %v299
  %v352 = vsel %vm197, %v348, 0.0
  %353 = vadd.xlane.f32.xlu0 %v352
  %v354 = vpop.xlane.xlu0 %353
  %v355 = vsel %vm197, %v349, 0.0
  %356 = vadd.xlane.f32.xlu0 %v355
  %v357 = vpop.xlane.xlu0 %356
  %v358 = vsel %vm197, %v350, 0.0
  %359 = vadd.xlane.f32.xlu0 %v358
  %v360 = vpop.xlane.xlu0 %359
  %v361 = vsel %vm197, %v351, 0.0
  %362 = vadd.xlane.f32.xlu0 %v361
  %v363 = vpop.xlane.xlu0 %362
  %v364 = vadd.f32 %v344, %v354
  %v365 = vadd.f32 %v345, %v357
  %v366 = vadd.f32 %v346, %v360
  %v367 = vadd.f32 %v347, %v363
  %368 = vst.msk [vmem:[%s4] sm:$0xff] %vm339, %v364
  %369 = vst.msk [vmem:[%s4 + $0x8] sm:$0xff] %vm339, %v365
  %370 = vst.msk [vmem:[%s4 + $0x10] sm:$0xff] %vm339, %v366
  %371 = vst.msk [vmem:[%s4 + $0x18] sm:$0xff] %vm339, %v367
  // Predicated region
  $region14: #{res_unet_att_forward.42} parent=0 // pred_check
    _
  $region15: #{res_unet_att_forward.42} parent=0 // pred_check_branch
    %373 = sbr.rel (0) target = $region17
  $region16: #{res_unet_att_forward.42} parent=0 // pred_region
    _
  $region17: #{res_unet_att_forward.42} parent=0 // pred_fallthru
    _
  // Predicated region
  $region18: #{res_unet_att_forward.42} parent=0 // pred_check
    _
  $region19: #{res_unet_att_forward.42} parent=0 // pred_check_branch
    %375 = sbr.rel (0) target = $region21
  $region20: #{res_unet_att_forward.42} parent=0 // pred_region
    _
  $region21: #{res_unet_att_forward.42} parent=0 // pred_fallthru
    _
  // Predicated region
  $region22: #{res_unet_att_forward.42} parent=0 // pred_check
    _
  $region23: #{res_unet_att_forward.42} parent=0 // pred_check_branch
    %377 = sbr.rel (0) target = $region25
  $region24: #{res_unet_att_forward.42} parent=0 // pred_region
    _
  $region25: #{res_unet_att_forward.42} parent=0 // pred_fallthru
    _
  // Predicated region
  $region26: #{res_unet_att_forward.42} parent=0 // pred_check
    _
  $region27: #{res_unet_att_forward.42} parent=0 // pred_check_branch
    %379 = sbr.rel (0) target = $region29
  $region28: #{res_unet_att_forward.42} parent=0 // pred_region
    _
  $region29: #{res_unet_att_forward.42} parent=0 // pred_fallthru
    _
  // Predicated region
  $region30: #{res_unet_att_forward.42} parent=0 // pred_check
    _
  $region31: #{res_unet_att_forward.42} parent=0 // pred_check_branch
    %381 = sbr.rel (0) target = $region33
  $region32: #{res_unet_att_forward.42} parent=0 // pred_region
    _
  $region33: #{res_unet_att_forward.42} parent=0 // pred_fallthru
    _
  // Predicated region
  $region34: #{res_unet_att_forward.42} parent=0 // pred_check
    _
  $region35: #{res_unet_att_forward.42} parent=0 // pred_check_branch
    %383 = sbr.rel (0) target = $region37
  $region36: #{res_unet_att_forward.42} parent=0 // pred_region
    _
  $region37: #{res_unet_att_forward.42} parent=0 // pred_fallthru
    _

// kernel: res_unet_att_forward.45
$region0: #{res_unet_att_forward.45}
  #allocation0 [shape = 'u32[]', space=smem, size = 0x4, offset = 0x4, fixed_abs, tag = 'smem constant byte address 0x4 - core index']
  #allocation1 [shape = 'u32[144,128]{1,0:T(1,128)}', space=vmem, size = 0x12000, scoped, tag = 'internal scratch']
  %s0 = inlined_call_operand.vmem [shape: f32[64,8], index: 0, kind: input, shape index: {}]
  %s1 = inlined_call_operand.vmem [shape: f32[64,1], index: 1, kind: input, shape index: {}]
  %s2 = inlined_call_operand.vmem [shape: f32[64,1], index: 2, kind: input, shape index: {}]
  %s3 = inlined_call_operand.vmem [shape: f32[64,8], index: 3, kind: output, shape index: {}]
  %s4 = sld [smem:[#allocation0]]
  $region22: #{res_unet_att_forward.45} parent=0
    _
  %s6 = ssub.s32 1, %s4
  %s7 = scalar_select 0, %s6, %s4
  // Predicated region
  $region2: #{res_unet_att_forward.45} parent=0 // pred_check
    _
  $region3: #{res_unet_att_forward.45} parent=0 // pred_check_branch
    %9 = sbr.rel (0) target = $region5
  $region4: #{res_unet_att_forward.45} parent=0 // pred_region
    _
  $region5: #{res_unet_att_forward.45} parent=0 // pred_fallthru
    _
  // Predicated region
  $region6: #{res_unet_att_forward.45} parent=0 // pred_check
    _
  $region7: #{res_unet_att_forward.45} parent=0 // pred_check_branch
    %11 = sbr.rel (0) target = $region9
  $region8: #{res_unet_att_forward.45} parent=0 // pred_region
    _
  $region9: #{res_unet_att_forward.45} parent=0 // pred_fallthru
    _
  // Predicated region
  $region10: #{res_unet_att_forward.45} parent=0 // pred_check
    _
  $region11: #{res_unet_att_forward.45} parent=0 // pred_check_branch
    %13 = sbr.rel (0) target = $region13
  $region12: #{res_unet_att_forward.45} parent=0 // pred_region
    _
  $region13: #{res_unet_att_forward.45} parent=0 // pred_fallthru
    _
  %v14 = vld [vmem:[%s0] sm:$0xff]
  %v15 = vld [vmem:[%s0 + $0x8] sm:$0xff]
  %v16 = vld [vmem:[%s0 + $0x10] sm:$0xff]
  %v17 = vld [vmem:[%s0 + $0x18] sm:$0xff]
  %v18 = vld [vmem:[%s0 + $0x20] sm:$0xff]
  %v19 = vld [vmem:[%s0 + $0x28] sm:$0xff]
  %v20 = vld [vmem:[%s0 + $0x30] sm:$0xff]
  %v21 = vld [vmem:[%s0 + $0x38] sm:$0xff]
  %v22 = vld [vmem:[%s1] sm:$0xff]
  %v23 = vld [vmem:[%s1 + $0x8] sm:$0xff]
  %v24 = vld [vmem:[%s1 + $0x10] sm:$0xff]
  %v25 = vld [vmem:[%s1 + $0x18] sm:$0xff]
  %v26 = vld [vmem:[%s1 + $0x20] sm:$0xff]
  %v27 = vld [vmem:[%s1 + $0x28] sm:$0xff]
  %v28 = vld [vmem:[%s1 + $0x30] sm:$0xff]
  %v29 = vld [vmem:[%s1 + $0x38] sm:$0xff]
  %31 = vset.pattern.permute.xlu0 0
  %32 = vperm.xlu0 %31, %v22
  %v33 = vpop.permute.xlu0 %32
  %36 = vset.pattern.permute.xlu0 0
  %37 = vperm.xlu0 %36, %v23
  %v38 = vpop.permute.xlu0 %37
  %41 = vset.pattern.permute.xlu0 0
  %42 = vperm.xlu0 %41, %v24
  %v43 = vpop.permute.xlu0 %42
  %46 = vset.pattern.permute.xlu0 0
  %47 = vperm.xlu0 %46, %v25
  %v48 = vpop.permute.xlu0 %47
  %51 = vset.pattern.permute.xlu0 0
  %52 = vperm.xlu0 %51, %v26
  %v53 = vpop.permute.xlu0 %52
  %56 = vset.pattern.permute.xlu0 0
  %57 = vperm.xlu0 %56, %v27
  %v58 = vpop.permute.xlu0 %57
  %61 = vset.pattern.permute.xlu0 0
  %62 = vperm.xlu0 %61, %v28
  %v63 = vpop.permute.xlu0 %62
  %66 = vset.pattern.permute.xlu0 0
  %67 = vperm.xlu0 %66, %v29
  %v68 = vpop.permute.xlu0 %67
  %v70 = vmul.f32 %v14, %v33
  %v71 = vmul.f32 %v15, %v38
  %v72 = vmul.f32 %v16, %v43
  %v73 = vmul.f32 %v17, %v48
  %v74 = vmul.f32 %v18, %v53
  %v75 = vmul.f32 %v19, %v58
  %v76 = vmul.f32 %v20, %v63
  %v77 = vmul.f32 %v21, %v68
  %v78 = vld [vmem:[%s2] sm:$0xff]
  %v79 = vld [vmem:[%s2 + $0x8] sm:$0xff]
  %v80 = vld [vmem:[%s2 + $0x10] sm:$0xff]
  %v81 = vld [vmem:[%s2 + $0x18] sm:$0xff]
  %v82 = vld [vmem:[%s2 + $0x20] sm:$0xff]
  %v83 = vld [vmem:[%s2 + $0x28] sm:$0xff]
  %v84 = vld [vmem:[%s2 + $0x30] sm:$0xff]
  %v85 = vld [vmem:[%s2 + $0x38] sm:$0xff]
  %87 = vset.pattern.permute.xlu0 0
  %88 = vperm.xlu0 %87, %v78
  %v89 = vpop.permute.xlu0 %88
  %92 = vset.pattern.permute.xlu0 0
  %93 = vperm.xlu0 %92, %v79
  %v94 = vpop.permute.xlu0 %93
  %97 = vset.pattern.permute.xlu0 0
  %98 = vperm.xlu0 %97, %v80
  %v99 = vpop.permute.xlu0 %98
  %102 = vset.pattern.permute.xlu0 0
  %103 = vperm.xlu0 %102, %v81
  %v104 = vpop.permute.xlu0 %103
  %107 = vset.pattern.permute.xlu0 0
  %108 = vperm.xlu0 %107, %v82
  %v109 = vpop.permute.xlu0 %108
  %112 = vset.pattern.permute.xlu0 0
  %113 = vperm.xlu0 %112, %v83
  %v114 = vpop.permute.xlu0 %113
  %117 = vset.pattern.permute.xlu0 0
  %118 = vperm.xlu0 %117, %v84
  %v119 = vpop.permute.xlu0 %118
  %122 = vset.pattern.permute.xlu0 0
  %123 = vperm.xlu0 %122, %v85
  %v124 = vpop.permute.xlu0 %123
  %v126 = vadd.f32 %v70, %v89
  %v127 = vadd.f32 %v71, %v94
  %v128 = vadd.f32 %v72, %v99
  %v129 = vadd.f32 %v73, %v104
  %v130 = vadd.f32 %v74, %v109
  %v131 = vadd.f32 %v75, %v114
  %v132 = vadd.f32 %v76, %v119
  %v133 = vadd.f32 %v77, %v124
  %v134 = vmax.f32 %v126, 0.0
  %v135 = vmax.f32 %v127, 0.0
  %v136 = vmax.f32 %v128, 0.0
  %v137 = vmax.f32 %v129, 0.0
  %v138 = vmax.f32 %v130, 0.0
  %v139 = vmax.f32 %v131, 0.0
  %v140 = vmax.f32 %v132, 0.0
  %v141 = vmax.f32 %v133, 0.0
  %vm142 = vcmask 64512
  %143 = vst.msk [vmem:[%s3] sm:$0xff] %vm142, %v134
  %144 = vst.msk [vmem:[%s3 + $0x8] sm:$0xff] %vm142, %v135
  %145 = vst.msk [vmem:[%s3 + $0x10] sm:$0xff] %vm142, %v136
  %146 = vst.msk [vmem:[%s3 + $0x18] sm:$0xff] %vm142, %v137
  %147 = vst.msk [vmem:[%s3 + $0x20] sm:$0xff] %vm142, %v138
  %148 = vst.msk [vmem:[%s3 + $0x28] sm:$0xff] %vm142, %v139
  %149 = vst.msk [vmem:[%s3 + $0x30] sm:$0xff] %vm142, %v140
  %150 = vst.msk [vmem:[%s3 + $0x38] sm:$0xff] %vm142, %v141
  // Predicated region
  $region14: #{res_unet_att_forward.45} parent=0 // pred_check
    _
  $region15: #{res_unet_att_forward.45} parent=0 // pred_check_branch
    %152 = sbr.rel (0) target = $region17
  $region16: #{res_unet_att_forward.45} parent=0 // pred_region
    _
  $region17: #{res_unet_att_forward.45} parent=0 // pred_fallthru
    _
  // Predicated region
  $region18: #{res_unet_att_forward.45} parent=0 // pred_check
    _
  $region19: #{res_unet_att_forward.45} parent=0 // pred_check_branch
    %154 = sbr.rel (0) target = $region21
  $region20: #{res_unet_att_forward.45} parent=0 // pred_region
    _
  $region21: #{res_unet_att_forward.45} parent=0 // pred_fallthru
    _

// kernel: res_unet_att_forward.44
$region0: #{res_unet_att_forward.44}
  #allocation0 [shape = 'u32[]', space=smem, size = 0x4, offset = 0x4, fixed_abs, tag = 'smem constant byte address 0x4 - core index']
  #allocation1 [shape = 'u32[144,128]{1,0:T(1,128)}', space=vmem, size = 0x12000, scoped, tag = 'internal scratch']
  %s0 = inlined_call_operand.vmem [shape: bf16[64,288], index: 0, kind: input, shape index: {}]
  %s1 = inlined_call_operand.vmem [shape: bf16[288,8], index: 1, kind: input, shape index: {}]
  %s2 = inlined_call_operand.vmem [shape: f32[64,8], index: 2, kind: output, shape index: {0}]
  %s3 = inlined_call_operand.vmem [shape: f32[64,1], index: 3, kind: output, shape index: {1}]
  %s4 = inlined_call_operand.vmem [shape: f32[64,1], index: 4, kind: output, shape index: {2}]
  %5 = xla_tuple %s2, %s3, %s4
  %s6 = sld [smem:[#allocation0]]
  $region38: #{res_unet_att_forward.44} parent=0
    _
  %s8 = ssub.s32 1, %s6
  %s9 = scalar_select 0, %s8, %s6
  // Predicated region
  $region2: #{res_unet_att_forward.44} parent=0 // pred_check
    _
  $region3: #{res_unet_att_forward.44} parent=0 // pred_check_branch
    %11 = sbr.rel (0) target = $region5
  $region4: #{res_unet_att_forward.44} parent=0 // pred_region
    _
  $region5: #{res_unet_att_forward.44} parent=0 // pred_fallthru
    _
  // Predicated region
  $region6: #{res_unet_att_forward.44} parent=0 // pred_check
    _
  $region7: #{res_unet_att_forward.44} parent=0 // pred_check_branch
    %13 = sbr.rel (0) target = $region9
  $region8: #{res_unet_att_forward.44} parent=0 // pred_region
    _
  $region9: #{res_unet_att_forward.44} parent=0 // pred_fallthru
    _
  %v15 = vld [vmem:[%s0] sm:$0xff]
  %v16 = vld [vmem:[%s0 + $0x8] sm:$0xf]
  %v17 = vld [vmem:[%s0 + $0xc] sm:$0xff]
  %v18 = vld [vmem:[%s0 + $0x14] sm:$0xf]
  %v19 = vld [vmem:[%s0 + $0x18] sm:$0xff]
  %v20 = vld [vmem:[%s0 + $0x20] sm:$0xf]
  %v21 = vld [vmem:[%s0 + $0x24] sm:$0xff]
  %v22 = vld [vmem:[%s0 + $0x2c] sm:$0xf]
  %v23 = vld [vmem:[%s0 + $0x30] sm:$0xff]
  %v24 = vld [vmem:[%s0 + $0x38] sm:$0xf]
  %v25 = vld [vmem:[%s0 + $0x3c] sm:$0xff]
  %v26 = vld [vmem:[%s0 + $0x44] sm:$0xf]
  %v27 = vld [vmem:[%s0 + $0x48] sm:$0xff]
  %v28 = vld [vmem:[%s0 + $0x50] sm:$0xf]
  %v29 = vld [vmem:[%s0 + $0x54] sm:$0xff]
  %v30 = vld [vmem:[%s0 + $0x5c] sm:$0xf]
  %v31 = vld [vmem:[%s1] sm:$0xf]
  %v32 = vld [vmem:[%s1 + $0x4] sm:$0xf]
  %v33 = vld [vmem:[%s1 + $0x8] sm:$0xf]
  %v34 = vld [vmem:[%s1 + $0xc] sm:$0xf]
  %v35 = vld [vmem:[%s1 + $0x10] sm:$0xf]
  %v36 = vld [vmem:[%s1 + $0x14] sm:$0xf]
  %v37 = vld [vmem:[%s1 + $0x18] sm:$0xf]
  %v38 = vld [vmem:[%s1 + $0x1c] sm:$0xf]
  %v39 = vld [vmem:[%s1 + $0x20] sm:$0xf]
  %v40 = vld [vmem:[%s1 + $0x24] sm:$0xf]
  %v41 = vld [vmem:[%s1 + $0x28] sm:$0xf]
  %v42 = vld [vmem:[%s1 + $0x2c] sm:$0xf]
  %v43 = vld [vmem:[%s1 + $0x30] sm:$0xf]
  %v44 = vld [vmem:[%s1 + $0x34] sm:$0xf]
  %v45 = vld [vmem:[%s1 + $0x38] sm:$0xf]
  %v46 = vld [vmem:[%s1 + $0x3c] sm:$0xf]
  %v47 = vld [vmem:[%s1 + $0x40] sm:$0xf]
  %v48 = vld [vmem:[%s1 + $0x44] sm:$0xf]
  %v49 = vld [vmem:[%s1 + $0x48] sm:$0xf]
  %v50 = vld [vmem:[%s1 + $0x4c] sm:$0xf]
  %v51 = vld [vmem:[%s1 + $0x50] sm:$0xf]
  %v52 = vld [vmem:[%s1 + $0x54] sm:$0xf]
  %v53 = vld [vmem:[%s1 + $0x58] sm:$0xf]
  %v54 = vld [vmem:[%s1 + $0x5c] sm:$0xf]
  %v55 = vld [vmem:[%s1 + $0x60] sm:$0xf]
  %v56 = vld [vmem:[%s1 + $0x64] sm:$0xf]
  %v57 = vld [vmem:[%s1 + $0x68] sm:$0xf]
  %v58 = vld [vmem:[%s1 + $0x6c] sm:$0xf]
  %v59 = vld [vmem:[%s1 + $0x70] sm:$0xf]
  %v60 = vld [vmem:[%s1 + $0x74] sm:$0xf]
  %v61 = vld [vmem:[%s1 + $0x78] sm:$0xf]
  %v62 = vld [vmem:[%s1 + $0x7c] sm:$0xf]
  %v63 = vld [vmem:[%s1 + $0x80] sm:$0xf]
  %v64 = vld [vmem:[%s1 + $0x84] sm:$0xf]
  %v65 = vld [vmem:[%s1 + $0x88] sm:$0xf]
  %v66 = vld [vmem:[%s1 + $0x8c] sm:$0xf]
  %v83 = vunpack.c.l.b16 %v15
  %v84 = vunpack.c.h.b16 %v15
  %v85 = vunpack.c.l.b16 %v16
  %v86 = vunpack.c.l.b16 %v17
  %v87 = vunpack.c.h.b16 %v17
  %v88 = vunpack.c.l.b16 %v18
  %v89 = vunpack.c.l.b16 %v19
  %v90 = vunpack.c.h.b16 %v19
  %v91 = vunpack.c.l.b16 %v20
  %v92 = vunpack.c.l.b16 %v21
  %v93 = vunpack.c.h.b16 %v21
  %v94 = vunpack.c.l.b16 %v22
  %v95 = vunpack.c.l.b16 %v23
  %v96 = vunpack.c.h.b16 %v23
  %v97 = vunpack.c.l.b16 %v24
  %v98 = vunpack.c.l.b16 %v25
  %v99 = vunpack.c.h.b16 %v25
  %v100 = vunpack.c.l.b16 %v26
  %v101 = vunpack.c.l.b16 %v27
  %v102 = vunpack.c.h.b16 %v27
  %v103 = vunpack.c.l.b16 %v28
  %v104 = vunpack.c.l.b16 %v29
  %v105 = vunpack.c.h.b16 %v29
  %v106 = vunpack.c.l.b16 %v30
  %v107 = vpack.c.b16 %v86, %v83
  %v108 = vpack.c.b16 %v87, %v84
  %v109 = vpack.c.b16 %v88, %v85
  %v110 = vpack.c.b16 %v92, %v89
  %v111 = vpack.c.b16 %v93, %v90
  %v112 = vpack.c.b16 %v94, %v91
  %v113 = vpack.c.b16 %v98, %v95
  %v114 = vpack.c.b16 %v99, %v96
  %v115 = vpack.c.b16 %v100, %v97
  %v116 = vpack.c.b16 %v104, %v101
  %v117 = vpack.c.b16 %v105, %v102
  %v118 = vpack.c.b16 %v106, %v103
  %v163 = vunpack.c.l.b16 %v31
  %v164 = vunpack.c.l.b16 %v32
  %v165 = vunpack.c.l.b16 %v33
  %v166 = vunpack.c.l.b16 %v34
  %v167 = vunpack.c.l.b16 %v35
  %v168 = vunpack.c.l.b16 %v36
  %v169 = vunpack.c.l.b16 %v37
  %v170 = vunpack.c.l.b16 %v38
  %v171 = vunpack.c.l.b16 %v39
  %v172 = vunpack.c.l.b16 %v40
  %v173 = vunpack.c.l.b16 %v41
  %v174 = vunpack.c.l.b16 %v42
  %v175 = vunpack.c.l.b16 %v43
  %v176 = vunpack.c.l.b16 %v44
  %v177 = vunpack.c.l.b16 %v45
  %v178 = vunpack.c.l.b16 %v46
  %v179 = vunpack.c.l.b16 %v47
  %v180 = vunpack.c.l.b16 %v48
  %v181 = vunpack.c.l.b16 %v49
  %v182 = vunpack.c.l.b16 %v50
  %v183 = vunpack.c.l.b16 %v51
  %v184 = vunpack.c.l.b16 %v52
  %v185 = vunpack.c.l.b16 %v53
  %v186 = vunpack.c.l.b16 %v54
  %v187 = vunpack.c.l.b16 %v55
  %v188 = vunpack.c.l.b16 %v56
  %v189 = vunpack.c.l.b16 %v57
  %v190 = vunpack.c.l.b16 %v58
  %v191 = vunpack.c.l.b16 %v59
  %v192 = vunpack.c.l.b16 %v60
  %v193 = vunpack.c.l.b16 %v61
  %v194 = vunpack.c.l.b16 %v62
  %v195 = vunpack.c.l.b16 %v63
  %v196 = vunpack.c.l.b16 %v64
  %v197 = vunpack.c.l.b16 %v65
  %v198 = vunpack.c.l.b16 %v66
  %v199 = vpack.c.b16 %v164, %v163
  %v200 = vpack.c.b16 %v166, %v165
  %v201 = vpack.c.b16 %v168, %v167
  %v202 = vpack.c.b16 %v170, %v169
  %v203 = vpack.c.b16 %v172, %v171
  %v204 = vpack.c.b16 %v174, %v173
  %v205 = vpack.c.b16 %v176, %v175
  %v206 = vpack.c.b16 %v178, %v177
  %v207 = vpack.c.b16 %v180, %v179
  %v208 = vpack.c.b16 %v182, %v181
  %v209 = vpack.c.b16 %v184, %v183
  %v210 = vpack.c.b16 %v186, %v185
  %v211 = vpack.c.b16 %v188, %v187
  %v212 = vpack.c.b16 %v190, %v189
  %v213 = vpack.c.b16 %v192, %v191
  %v214 = vpack.c.b16 %v194, %v193
  %v215 = vpack.c.b16 %v196, %v195
  %v216 = vpack.c.b16 %v198, %v197
  %vm235 = vcmask 261120
  %v237 = vsel %vm235, %v109, 0
  %v240 = vsel %vm235, %v112, 0
  %v243 = vsel %vm235, %v115, 0
  %v246 = vsel %vm235, %v118, 0
  %248 = vmatprep.subr.bf16.mxu0 0
  %249 = vmatpush1.bf16.msra.mxu0 %v199
  %250 = vmatprep.subr.bf16.mxu0 0
  %251 = vmatpush1.bf16.msra.mxu0 %v200
  %252 = vmatprep.subr.bf16.mxu0 0
  %253 = vmatpush1.bf16.msra.mxu0 %v201
  %254 = vmatprep.subr.bf16.mxu0 0
  %255 = vmatpush1.bf16.msra.mxu0 %v202
  %256 = vmatprep.subr.bf16.mxu0 0
  %257 = vmatpush1.bf16.msra.mxu0 %v203
  %258 = vmatprep.subr.bf16.mxu0 0
  %259 = vmatpush1.bf16.msra.mxu0 %v204
  %260 = vmatprep.subr.bf16.mxu0 0
  %261 = vmatpush1.bf16.msra.mxu0 %v205
  %262 = vmatprep.subr.bf16.mxu0 0
  %263 = vmatpush1.bf16.msra.mxu0 %v206
  %264 = vmatprep.subr.bf16.mxu0 0
  %265 = vmatpush1.bf16.msra.mxu0 %v207
  %266 = vmatprep.subr.bf16.mxu0 0
  %267 = vmatpush1.bf16.msra.mxu0 %v208
  %268 = vmatprep.subr.bf16.mxu0 0
  %269 = vmatpush1.bf16.msra.mxu0 %v209
  %270 = vmatprep.subr.bf16.mxu0 0
  %271 = vmatpush1.bf16.msra.mxu0 %v210
  %272 = vmatprep.subr.bf16.mxu0 0
  %273 = vmatpush1.bf16.msra.mxu0 %v211
  %274 = vmatprep.subr.bf16.mxu0 0
  %275 = vmatpush1.bf16.msra.mxu0 %v212
  %276 = vmatprep.subr.bf16.mxu0 0
  %277 = vmatpush1.bf16.msra.mxu0 %v213
  %278 = vmatprep.subr.bf16.mxu0 0
  %279 = vmatpush1.bf16.msra.mxu0 %v214
  %280 = vmatprep.mubr.bf16.mxu0 %v108
  %281 = vmatmul.mubr.bf16.gmra.mrb[0].mxu0 %v107
  %v282 = vpop.f32.mrb[0].mxu0
  %v283 = vadd.f32 0.0, %v282
  %v284 = vpop.f32.mrb[0].mxu0
  %v285 = vpop.f32.mrb[0].mxu0
  %v286 = vadd.f32 0.0, %v285
  %v287 = vpop.f32.mrb[0].mxu0
  %288 = vmatprep.mubr.bf16.mxu0 %v111
  %289 = vmatmul.mubr.bf16.gmra.mrb[0].mxu0 %v110
  %v290 = vpop.f32.mrb[0].mxu0
  %v291 = vadd.f32 0.0, %v290
  %v292 = vpop.f32.mrb[0].mxu0
  %v293 = vpop.f32.mrb[0].mxu0
  %v294 = vadd.f32 0.0, %v293
  %v295 = vpop.f32.mrb[0].mxu0
  %296 = vmatprep.mubr.bf16.mxu0 %v114
  %297 = vmatmul.mubr.bf16.gmra.mrb[0].mxu0 %v113
  %v298 = vpop.f32.mrb[0].mxu0
  %v299 = vadd.f32 0.0, %v298
  %v300 = vpop.f32.mrb[0].mxu0
  %v301 = vpop.f32.mrb[0].mxu0
  %v302 = vadd.f32 0.0, %v301
  %v303 = vpop.f32.mrb[0].mxu0
  %304 = vmatprep.mubr.bf16.mxu0 %v117
  %305 = vmatmul.mubr.bf16.gmra.mrb[0].mxu0 %v116
  %v306 = vpop.f32.mrb[0].mxu0
  %v307 = vadd.f32 0.0, %v306
  %v308 = vpop.f32.mrb[0].mxu0
  %v309 = vpop.f32.mrb[0].mxu0
  %v310 = vadd.f32 0.0, %v309
  %v311 = vpop.f32.mrb[0].mxu0
  %312 = vdwg.mxu0
  %313 = vmatprep.subr.bf16.mxu0 0
  %314 = vmatpush1.bf16.msra.mxu0 %v215
  %315 = vmatprep.subr.bf16.mxu0 0
  %316 = vmatpush1.bf16.msra.mxu0 %v216
  %317 = vmatprep.subr.bf16.mxu0 0
  %318 = vmatpush1.bf16.msra.mxu0 0
  %319 = vmatprep.subr.bf16.mxu0 0
  %320 = vmatpush1.bf16.msra.mxu0 0
  %321 = vmatprep.subr.bf16.mxu0 0
  %322 = vmatpush1.bf16.msra.mxu0 0
  %323 = vmatprep.subr.bf16.mxu0 0
  %324 = vmatpush1.bf16.msra.mxu0 0
  %325 = vmatprep.subr.bf16.mxu0 0
  %326 = vmatpush1.bf16.msra.mxu0 0
  %327 = vmatprep.subr.bf16.mxu0 0
  %328 = vmatpush1.bf16.msra.mxu0 0
  %329 = vmatprep.subr.bf16.mxu0 0
  %330 = vmatpush1.bf16.msra.mxu0 0
  %331 = vmatprep.subr.bf16.mxu0 0
  %332 = vmatpush1.bf16.msra.mxu0 0
  %333 = vmatprep.subr.bf16.mxu0 0
  %334 = vmatpush1.bf16.msra.mxu0 0
  %335 = vmatprep.subr.bf16.mxu0 0
  %336 = vmatpush1.bf16.msra.mxu0 0
  %337 = vmatprep.subr.bf16.mxu0 0
  %338 = vmatpush1.bf16.msra.mxu0 0
  %339 = vmatprep.subr.bf16.mxu0 0
  %340 = vmatpush1.bf16.msra.mxu0 0
  %341 = vmatprep.subr.bf16.mxu0 0
  %342 = vmatpush1.bf16.msra.mxu0 0
  %343 = vmatprep.subr.bf16.mxu0 0
  %344 = vmatpush1.bf16.msra.mxu0 0
  %345 = vmatprep.mubr.bf16.mxu0 0
  %346 = vmatmul.mubr.bf16.gmra.mrb[0].mxu0 %v237
  %v347 = vpop.f32.mrb[0].mxu0
  %v348 = vadd.f32 %v283, %v347
  %v349 = vpop.f32.mrb[0].mxu0
  %v350 = vpop.f32.mrb[0].mxu0
  %v351 = vadd.f32 %v286, %v350
  %v352 = vpop.f32.mrb[0].mxu0
  %353 = vmatprep.mubr.bf16.mxu0 0
  %354 = vmatmul.mubr.bf16.gmra.mrb[0].mxu0 %v240
  %v355 = vpop.f32.mrb[0].mxu0
  %v356 = vadd.f32 %v291, %v355
  %v357 = vpop.f32.mrb[0].mxu0
  %v358 = vpop.f32.mrb[0].mxu0
  %v359 = vadd.f32 %v294, %v358
  %v360 = vpop.f32.mrb[0].mxu0
  %361 = vmatprep.mubr.bf16.mxu0 0
  %362 = vmatmul.mubr.bf16.gmra.mrb[0].mxu0 %v243
  %v363 = vpop.f32.mrb[0].mxu0
  %v364 = vadd.f32 %v299, %v363
  %v365 = vpop.f32.mrb[0].mxu0
  %v366 = vpop.f32.mrb[0].mxu0
  %v367 = vadd.f32 %v302, %v366
  %v368 = vpop.f32.mrb[0].mxu0
  %369 = vmatprep.mubr.bf16.mxu0 0
  %370 = vmatmul.mubr.bf16.gmra.mrb[0].mxu0 %v246
  %v371 = vpop.f32.mrb[0].mxu0
  %v372 = vadd.f32 %v307, %v371
  %v373 = vpop.f32.mrb[0].mxu0
  %v374 = vpop.f32.mrb[0].mxu0
  %v375 = vadd.f32 %v310, %v374
  %v376 = vpop.f32.mrb[0].mxu0
  %377 = vdwg.mxu0
  %vm378 = vcmask 64512
  %379 = vst.msk [vmem:[%s2] sm:$0xff] %vm378, %v348
  %380 = vst.msk [vmem:[%s2 + $0x8] sm:$0xff] %vm378, %v351
  %381 = vst.msk [vmem:[%s2 + $0x10] sm:$0xff] %vm378, %v356
  %382 = vst.msk [vmem:[%s2 + $0x18] sm:$0xff] %vm378, %v359
  %383 = vst.msk [vmem:[%s2 + $0x20] sm:$0xff] %vm378, %v364
  %384 = vst.msk [vmem:[%s2 + $0x28] sm:$0xff] %vm378, %v367
  %385 = vst.msk [vmem:[%s2 + $0x30] sm:$0xff] %vm378, %v372
  %386 = vst.msk [vmem:[%s2 + $0x38] sm:$0xff] %vm378, %v375
  %p387 = scmp.eq.s32.totalorder 0, 0
  // Predicated region
  $region10: #{res_unet_att_forward.44} parent=0 // pred_check
    %p388 = pneg %p387
  $region11: #{res_unet_att_forward.44} parent=0 // pred_check_branch
    %390 = sbr.rel (%p388) target = $region13
  $region12: #{res_unet_att_forward.44} parent=0 // pred_region
    %vm391 = vcmask 7168
    %392 = vst.msk [vmem:[%s3] sm:$0xff] %vm391, 0.0
    %393 = vst.msk [vmem:[%s3 + $0x8] sm:$0xff] %vm391, 0.0
    %394 = vst.msk [vmem:[%s3 + $0x10] sm:$0xff] %vm391, 0.0
    %395 = vst.msk [vmem:[%s3 + $0x18] sm:$0xff] %vm391, 0.0
    %396 = vst.msk [vmem:[%s3 + $0x20] sm:$0xff] %vm391, 0.0
    %397 = vst.msk [vmem:[%s3 + $0x28] sm:$0xff] %vm391, 0.0
    %398 = vst.msk [vmem:[%s3 + $0x30] sm:$0xff] %vm391, 0.0
    %399 = vst.msk [vmem:[%s3 + $0x38] sm:$0xff] %vm391, 0.0
    %400 = vst.msk [vmem:[%s4] sm:$0xff] %vm391, 0.0
    %401 = vst.msk [vmem:[%s4 + $0x8] sm:$0xff] %vm391, 0.0
    %402 = vst.msk [vmem:[%s4 + $0x10] sm:$0xff] %vm391, 0.0
    %403 = vst.msk [vmem:[%s4 + $0x18] sm:$0xff] %vm391, 0.0
    %404 = vst.msk [vmem:[%s4 + $0x20] sm:$0xff] %vm391, 0.0
    %405 = vst.msk [vmem:[%s4 + $0x28] sm:$0xff] %vm391, 0.0
    %406 = vst.msk [vmem:[%s4 + $0x30] sm:$0xff] %vm391, 0.0
    %407 = vst.msk [vmem:[%s4 + $0x38] sm:$0xff] %vm391, 0.0
  $region13: #{res_unet_att_forward.44} parent=0 // pred_fallthru
    _
  %v408 = vld [vmem:[%s3] sm:$0xff]
  %v409 = vld [vmem:[%s3 + $0x8] sm:$0xff]
  %v410 = vld [vmem:[%s3 + $0x10] sm:$0xff]
  %v411 = vld [vmem:[%s3 + $0x18] sm:$0xff]
  %v412 = vld [vmem:[%s3 + $0x20] sm:$0xff]
  %v413 = vld [vmem:[%s3 + $0x28] sm:$0xff]
  %v414 = vld [vmem:[%s3 + $0x30] sm:$0xff]
  %v415 = vld [vmem:[%s3 + $0x38] sm:$0xff]
  %v416 = vsel %vm378, %v348, 0.0
  %417 = vadd.xlane.f32.xlu0 %v416
  %v418 = vpop.xlane.xlu0 %417
  %v419 = vsel %vm378, %v351, 0.0
  %420 = vadd.xlane.f32.xlu0 %v419
  %v421 = vpop.xlane.xlu0 %420
  %v422 = vsel %vm378, %v356, 0.0
  %423 = vadd.xlane.f32.xlu0 %v422
  %v424 = vpop.xlane.xlu0 %423
  %v425 = vsel %vm378, %v359, 0.0
  %426 = vadd.xlane.f32.xlu0 %v425
  %v427 = vpop.xlane.xlu0 %426
  %v428 = vsel %vm378, %v364, 0.0
  %429 = vadd.xlane.f32.xlu0 %v428
  %v430 = vpop.xlane.xlu0 %429
  %v431 = vsel %vm378, %v367, 0.0
  %432 = vadd.xlane.f32.xlu0 %v431
  %v433 = vpop.xlane.xlu0 %432
  %v434 = vsel %vm378, %v372, 0.0
  %435 = vadd.xlane.f32.xlu0 %v434
  %v436 = vpop.xlane.xlu0 %435
  %v437 = vsel %vm378, %v375, 0.0
  %438 = vadd.xlane.f32.xlu0 %v437
  %v439 = vpop.xlane.xlu0 %438
  %v440 = vadd.f32 %v408, %v418
  %v441 = vadd.f32 %v409, %v421
  %v442 = vadd.f32 %v410, %v424
  %v443 = vadd.f32 %v411, %v427
  %v444 = vadd.f32 %v412, %v430
  %v445 = vadd.f32 %v413, %v433
  %v446 = vadd.f32 %v414, %v436
  %v447 = vadd.f32 %v415, %v439
  %vm448 = vcmask 7168
  %449 = vst.msk [vmem:[%s3] sm:$0xff] %vm448, %v440
  %450 = vst.msk [vmem:[%s3 + $0x8] sm:$0xff] %vm448, %v441
  %451 = vst.msk [vmem:[%s3 + $0x10] sm:$0xff] %vm448, %v442
  %452 = vst.msk [vmem:[%s3 + $0x18] sm:$0xff] %vm448, %v443
  %453 = vst.msk [vmem:[%s3 + $0x20] sm:$0xff] %vm448, %v444
  %454 = vst.msk [vmem:[%s3 + $0x28] sm:$0xff] %vm448, %v445
  %455 = vst.msk [vmem:[%s3 + $0x30] sm:$0xff] %vm448, %v446
  %456 = vst.msk [vmem:[%s3 + $0x38] sm:$0xff] %vm448, %v447
  %v457 = vld [vmem:[%s4] sm:$0xff]
  %v458 = vld [vmem:[%s4 + $0x8] sm:$0xff]
  %v459 = vld [vmem:[%s4 + $0x10] sm:$0xff]
  %v460 = vld [vmem:[%s4 + $0x18] sm:$0xff]
  %v461 = vld [vmem:[%s4 + $0x20] sm:$0xff]
  %v462 = vld [vmem:[%s4 + $0x28] sm:$0xff]
  %v463 = vld [vmem:[%s4 + $0x30] sm:$0xff]
  %v464 = vld [vmem:[%s4 + $0x38] sm:$0xff]
  %v465 = vmul.f32 %v348, %v348
  %v466 = vmul.f32 %v351, %v351
  %v467 = vmul.f32 %v356, %v356
  %v468 = vmul.f32 %v359, %v359
  %v469 = vmul.f32 %v364, %v364
  %v470 = vmul.f32 %v367, %v367
  %v471 = vmul.f32 %v372, %v372
  %v472 = vmul.f32 %v375, %v375
  %v473 = vsel %vm378, %v465, 0.0
  %474 = vadd.xlane.f32.xlu0 %v473
  %v475 = vpop.xlane.xlu0 %474
  %v476 = vsel %vm378, %v466, 0.0
  %477 = vadd.xlane.f32.xlu0 %v476
  %v478 = vpop.xlane.xlu0 %477
  %v479 = vsel %vm378, %v467, 0.0
  %480 = vadd.xlane.f32.xlu0 %v479
  %v481 = vpop.xlane.xlu0 %480
  %v482 = vsel %vm378, %v468, 0.0
  %483 = vadd.xlane.f32.xlu0 %v482
  %v484 = vpop.xlane.xlu0 %483
  %v485 = vsel %vm378, %v469, 0.0
  %486 = vadd.xlane.f32.xlu0 %v485
  %v487 = vpop.xlane.xlu0 %486
  %v488 = vsel %vm378, %v470, 0.0
  %489 = vadd.xlane.f32.xlu0 %v488
  %v490 = vpop.xlane.xlu0 %489
  %v491 = vsel %vm378, %v471, 0.0
  %492 = vadd.xlane.f32.xlu0 %v491
  %v493 = vpop.xlane.xlu0 %492
  %v494 = vsel %vm378, %v472, 0.0
  %495 = vadd.xlane.f32.xlu0 %v494
  %v496 = vpop.xlane.xlu0 %495
  %v497 = vadd.f32 %v457, %v475
  %v498 = vadd.f32 %v458, %v478
  %v499 = vadd.f32 %v459, %v481
  %v500 = vadd.f32 %v460, %v484
  %v501 = vadd.f32 %v461, %v487
  %v502 = vadd.f32 %v462, %v490
  %v503 = vadd.f32 %v463, %v493
  %v504 = vadd.f32 %v464, %v496
  %505 = vst.msk [vmem:[%s4] sm:$0xff] %vm448, %v497
  %506 = vst.msk [vmem:[%s4 + $0x8] sm:$0xff] %vm448, %v498
  %507 = vst.msk [vmem:[%s4 + $0x10] sm:$0xff] %vm448, %v499
  %508 = vst.msk [vmem:[%s4 + $0x18] sm:$0xff] %vm448, %v500
  %509 = vst.msk [vmem:[%s4 + $0x20] sm:$0xff] %vm448, %v501
  %510 = vst.msk [vmem:[%s4 + $0x28] sm:$0xff] %vm448, %v502
  %511 = vst.msk [vmem:[%s4 + $0x30] sm:$0xff] %vm448, %v503
  %512 = vst.msk [vmem:[%s4 + $0x38] sm:$0xff] %vm448, %v504
  // Predicated region
  $region14: #{res_unet_att_forward.44} parent=0 // pred_check
    _
  $region15: #{res_unet_att_forward.44} parent=0 // pred_check_branch
    %514 = sbr.rel (0) target = $region17
  $region16: #{res_unet_att_forward.44} parent=0 // pred_region
    _
  $region17: #{res_unet_att_forward.44} parent=0 // pred_fallthru
    _
  // Predicated region
  $region18: #{res_unet_att_forward.44} parent=0 // pred_check
    _
  $region19: #{res_unet_att_forward.44} parent=0 // pred_check_branch
    %516 = sbr.rel (0) target = $region21
  $region20: #{res_unet_att_forward.44} parent=0 // pred_region
    _
  $region21: #{res_unet_att_forward.44} parent=0 // pred_fallthru
    _
  // Predicated region
  $region22: #{res_unet_att_forward.44} parent=0 // pred_check
    _
  $region23: #{res_unet_att_forward.44} parent=0 // pred_check_branch
    %518 = sbr.rel (0) target = $region25
  $region24: #{res_unet_att_forward.44} parent=0 // pred_region
    _
  $region25: #{res_unet_att_forward.44} parent=0 // pred_fallthru
    _
  // Predicated region
  $region26: #{res_unet_att_forward.44} parent=0 // pred_check
    _
  $region27: #{res_unet_att_forward.44} parent=0 // pred_check_branch
    %520 = sbr.rel (0) target = $region29
  $region28: #{res_unet_att_forward.44} parent=0 // pred_region
    _
  $region29: #{res_unet_att_forward.44} parent=0 // pred_fallthru
    _
  // Predicated region
  $region30: #{res_unet_att_forward.44} parent=0 // pred_check
    _
  $region31: #{res_unet_att_forward.44} parent=0 // pred_check_branch
    %522 = sbr.rel (0) target = $region33
  $region32: #{res_unet_att_forward.44} parent=0 // pred_region
    _
  $region33: #{res_unet_att_forward.44} parent=0 // pred_fallthru
    _
  // Predicated region
  $region34: #{res_unet_att_forward.44} parent=0 // pred_check
    _
  $region35: #{res_unet_att_forward.44} parent=0 // pred_check_branch
    %524 = sbr.rel (0) target = $region37
  $region36: #{res_unet_att_forward.44} parent=0 // pred_region
    _
  $region37: #{res_unet_att_forward.44} parent=0 // pred_fallthru
    _

// kernel: res_unet_att_forward.46
$region0: #{res_unet_att_forward.46}
  #allocation0 [shape = 'u32[]', space=smem, size = 0x4, offset = 0x4, fixed_abs, tag = 'smem constant byte address 0x4 - core index']
  #allocation1 [shape = 'u32[144,128]{1,0:T(1,128)}', space=vmem, size = 0x12000, scoped, tag = 'internal scratch']
  %s0 = inlined_call_operand.vmem [shape: bf16[64,576], index: 0, kind: input, shape index: {}]
  %s1 = inlined_call_operand.vmem [shape: bf16[576,8], index: 1, kind: input, shape index: {}]
  %s2 = inlined_call_operand.vmem [shape: f32[64,8], index: 2, kind: output, shape index: {0}]
  %s3 = inlined_call_operand.vmem [shape: f32[64,1], index: 3, kind: output, shape index: {1}]
  %s4 = inlined_call_operand.vmem [shape: f32[64,1], index: 4, kind: output, shape index: {2}]
  %5 = xla_tuple %s2, %s3, %s4
  %s6 = sld [smem:[#allocation0]]
  $region38: #{res_unet_att_forward.46} parent=0
    _
  %s8 = ssub.s32 1, %s6
  %s9 = scalar_select 0, %s8, %s6
  // Predicated region
  $region2: #{res_unet_att_forward.46} parent=0 // pred_check
    _
  $region3: #{res_unet_att_forward.46} parent=0 // pred_check_branch
    %11 = sbr.rel (0) target = $region5
  $region4: #{res_unet_att_forward.46} parent=0 // pred_region
    _
  $region5: #{res_unet_att_forward.46} parent=0 // pred_fallthru
    _
  // Predicated region
  $region6: #{res_unet_att_forward.46} parent=0 // pred_check
    _
  $region7: #{res_unet_att_forward.46} parent=0 // pred_check_branch
    %13 = sbr.rel (0) target = $region9
  $region8: #{res_unet_att_forward.46} parent=0 // pred_region
    _
  $region9: #{res_unet_att_forward.46} parent=0 // pred_fallthru
    _
  %v15 = vld [vmem:[%s0] sm:$0xff]
  %v16 = vld [vmem:[%s0 + $0x8] sm:$0xff]
  %v17 = vld [vmem:[%s0 + $0x10] sm:$0xf]
  %v18 = vld [vmem:[%s0 + $0x14] sm:$0xff]
  %v19 = vld [vmem:[%s0 + $0x1c] sm:$0xff]
  %v20 = vld [vmem:[%s0 + $0x24] sm:$0xf]
  %v21 = vld [vmem:[%s0 + $0x28] sm:$0xff]
  %v22 = vld [vmem:[%s0 + $0x30] sm:$0xff]
  %v23 = vld [vmem:[%s0 + $0x38] sm:$0xf]
  %v24 = vld [vmem:[%s0 + $0x3c] sm:$0xff]
  %v25 = vld [vmem:[%s0 + $0x44] sm:$0xff]
  %v26 = vld [vmem:[%s0 + $0x4c] sm:$0xf]
  %v27 = vld [vmem:[%s0 + $0x50] sm:$0xff]
  %v28 = vld [vmem:[%s0 + $0x58] sm:$0xff]
  %v29 = vld [vmem:[%s0 + $0x60] sm:$0xf]
  %v30 = vld [vmem:[%s0 + $0x64] sm:$0xff]
  %v31 = vld [vmem:[%s0 + $0x6c] sm:$0xff]
  %v32 = vld [vmem:[%s0 + $0x74] sm:$0xf]
  %v33 = vld [vmem:[%s0 + $0x78] sm:$0xff]
  %v34 = vld [vmem:[%s0 + $0x80] sm:$0xff]
  %v35 = vld [vmem:[%s0 + $0x88] sm:$0xf]
  %v36 = vld [vmem:[%s0 + $0x8c] sm:$0xff]
  %v37 = vld [vmem:[%s0 + $0x94] sm:$0xff]
  %v38 = vld [vmem:[%s0 + $0x9c] sm:$0xf]
  %v39 = vld [vmem:[%s1] sm:$0xf]
  %v40 = vld [vmem:[%s1 + $0x4] sm:$0xf]
  %v41 = vld [vmem:[%s1 + $0x8] sm:$0xf]
  %v42 = vld [vmem:[%s1 + $0xc] sm:$0xf]
  %v43 = vld [vmem:[%s1 + $0x10] sm:$0xf]
  %v44 = vld [vmem:[%s1 + $0x14] sm:$0xf]
  %v45 = vld [vmem:[%s1 + $0x18] sm:$0xf]
  %v46 = vld [vmem:[%s1 + $0x1c] sm:$0xf]
  %v47 = vld [vmem:[%s1 + $0x20] sm:$0xf]
  %v48 = vld [vmem:[%s1 + $0x24] sm:$0xf]
  %v49 = vld [vmem:[%s1 + $0x28] sm:$0xf]
  %v50 = vld [vmem:[%s1 + $0x2c] sm:$0xf]
  %v51 = vld [vmem:[%s1 + $0x30] sm:$0xf]
  %v52 = vld [vmem:[%s1 + $0x34] sm:$0xf]
  %v53 = vld [vmem:[%s1 + $0x38] sm:$0xf]
  %v54 = vld [vmem:[%s1 + $0x3c] sm:$0xf]
  %v55 = vld [vmem:[%s1 + $0x40] sm:$0xf]
  %v56 = vld [vmem:[%s1 + $0x44] sm:$0xf]
  %v57 = vld [vmem:[%s1 + $0x48] sm:$0xf]
  %v58 = vld [vmem:[%s1 + $0x4c] sm:$0xf]
  %v59 = vld [vmem:[%s1 + $0x50] sm:$0xf]
  %v60 = vld [vmem:[%s1 + $0x54] sm:$0xf]
  %v61 = vld [vmem:[%s1 + $0x58] sm:$0xf]
  %v62 = vld [vmem:[%s1 + $0x5c] sm:$0xf]
  %v63 = vld [vmem:[%s1 + $0x60] sm:$0xf]
  %v64 = vld [vmem:[%s1 + $0x64] sm:$0xf]
  %v65 = vld [vmem:[%s1 + $0x68] sm:$0xf]
  %v66 = vld [vmem:[%s1 + $0x6c] sm:$0xf]
  %v67 = vld [vmem:[%s1 + $0x70] sm:$0xf]
  %v68 = vld [vmem:[%s1 + $0x74] sm:$0xf]
  %v69 = vld [vmem:[%s1 + $0x78] sm:$0xf]
  %v70 = vld [vmem:[%s1 + $0x7c] sm:$0xf]
  %v71 = vld [vmem:[%s1 + $0x80] sm:$0xf]
  %v72 = vld [vmem:[%s1 + $0x84] sm:$0xf]
  %v73 = vld [vmem:[%s1 + $0x88] sm:$0xf]
  %v74 = vld [vmem:[%s1 + $0x8c] sm:$0xf]
  %v75 = vld [vmem:[%s1 + $0x90] sm:$0xf]
  %v76 = vld [vmem:[%s1 + $0x94] sm:$0xf]
  %v77 = vld [vmem:[%s1 + $0x98] sm:$0xf]
  %v78 = vld [vmem:[%s1 + $0x9c] sm:$0xf]
  %v79 = vld [vmem:[%s1 + $0xa0] sm:$0xf]
  %v80 = vld [vmem:[%s1 + $0xa4] sm:$0xf]
  %v81 = vld [vmem:[%s1 + $0xa8] sm:$0xf]
  %v82 = vld [vmem:[%s1 + $0xac] sm:$0xf]
  %v83 = vld [vmem:[%s1 + $0xb0] sm:$0xf]
  %v84 = vld [vmem:[%s1 + $0xb4] sm:$0xf]
  %v85 = vld [vmem:[%s1 + $0xb8] sm:$0xf]
  %v86 = vld [vmem:[%s1 + $0xbc] sm:$0xf]
  %v87 = vld [vmem:[%s1 + $0xc0] sm:$0xf]
  %v88 = vld [vmem:[%s1 + $0xc4] sm:$0xf]
  %v89 = vld [vmem:[%s1 + $0xc8] sm:$0xf]
  %v90 = vld [vmem:[%s1 + $0xcc] sm:$0xf]
  %v91 = vld [vmem:[%s1 + $0xd0] sm:$0xf]
  %v92 = vld [vmem:[%s1 + $0xd4] sm:$0xf]
  %v93 = vld [vmem:[%s1 + $0xd8] sm:$0xf]
  %v94 = vld [vmem:[%s1 + $0xdc] sm:$0xf]
  %v95 = vld [vmem:[%s1 + $0xe0] sm:$0xf]
  %v96 = vld [vmem:[%s1 + $0xe4] sm:$0xf]
  %v97 = vld [vmem:[%s1 + $0xe8] sm:$0xf]
  %v98 = vld [vmem:[%s1 + $0xec] sm:$0xf]
  %v99 = vld [vmem:[%s1 + $0xf0] sm:$0xf]
  %v100 = vld [vmem:[%s1 + $0xf4] sm:$0xf]
  %v101 = vld [vmem:[%s1 + $0xf8] sm:$0xf]
  %v102 = vld [vmem:[%s1 + $0xfc] sm:$0xf]
  %v103 = vld [vmem:[%s1 + $0x100] sm:$0xf]
  %v104 = vld [vmem:[%s1 + $0x104] sm:$0xf]
  %v105 = vld [vmem:[%s1 + $0x108] sm:$0xf]
  %v106 = vld [vmem:[%s1 + $0x10c] sm:$0xf]
  %v107 = vld [vmem:[%s1 + $0x110] sm:$0xf]
  %v108 = vld [vmem:[%s1 + $0x114] sm:$0xf]
  %v109 = vld [vmem:[%s1 + $0x118] sm:$0xf]
  %v110 = vld [vmem:[%s1 + $0x11c] sm:$0xf]
  %v135 = vunpack.c.l.b16 %v15
  %v136 = vunpack.c.h.b16 %v15
  %v137 = vunpack.c.l.b16 %v16
  %v138 = vunpack.c.h.b16 %v16
  %v139 = vunpack.c.l.b16 %v17
  %v140 = vunpack.c.l.b16 %v18
  %v141 = vunpack.c.h.b16 %v18
  %v142 = vunpack.c.l.b16 %v19
  %v143 = vunpack.c.h.b16 %v19
  %v144 = vunpack.c.l.b16 %v20
  %v145 = vunpack.c.l.b16 %v21
  %v146 = vunpack.c.h.b16 %v21
  %v147 = vunpack.c.l.b16 %v22
  %v148 = vunpack.c.h.b16 %v22
  %v149 = vunpack.c.l.b16 %v23
  %v150 = vunpack.c.l.b16 %v24
  %v151 = vunpack.c.h.b16 %v24
  %v152 = vunpack.c.l.b16 %v25
  %v153 = vunpack.c.h.b16 %v25
  %v154 = vunpack.c.l.b16 %v26
  %v155 = vunpack.c.l.b16 %v27
  %v156 = vunpack.c.h.b16 %v27
  %v157 = vunpack.c.l.b16 %v28
  %v158 = vunpack.c.h.b16 %v28
  %v159 = vunpack.c.l.b16 %v29
  %v160 = vunpack.c.l.b16 %v30
  %v161 = vunpack.c.h.b16 %v30
  %v162 = vunpack.c.l.b16 %v31
  %v163 = vunpack.c.h.b16 %v31
  %v164 = vunpack.c.l.b16 %v32
  %v165 = vunpack.c.l.b16 %v33
  %v166 = vunpack.c.h.b16 %v33
  %v167 = vunpack.c.l.b16 %v34
  %v168 = vunpack.c.h.b16 %v34
  %v169 = vunpack.c.l.b16 %v35
  %v170 = vunpack.c.l.b16 %v36
  %v171 = vunpack.c.h.b16 %v36
  %v172 = vunpack.c.l.b16 %v37
  %v173 = vunpack.c.h.b16 %v37
  %v174 = vunpack.c.l.b16 %v38
  %v175 = vpack.c.b16 %v140, %v135
  %v176 = vpack.c.b16 %v141, %v136
  %v177 = vpack.c.b16 %v142, %v137
  %v178 = vpack.c.b16 %v143, %v138
  %v179 = vpack.c.b16 %v144, %v139
  %v180 = vpack.c.b16 %v150, %v145
  %v181 = vpack.c.b16 %v151, %v146
  %v182 = vpack.c.b16 %v152, %v147
  %v183 = vpack.c.b16 %v153, %v148
  %v184 = vpack.c.b16 %v154, %v149
  %v185 = vpack.c.b16 %v160, %v155
  %v186 = vpack.c.b16 %v161, %v156
  %v187 = vpack.c.b16 %v162, %v157
  %v188 = vpack.c.b16 %v163, %v158
  %v189 = vpack.c.b16 %v164, %v159
  %v190 = vpack.c.b16 %v170, %v165
  %v191 = vpack.c.b16 %v171, %v166
  %v192 = vpack.c.b16 %v172, %v167
  %v193 = vpack.c.b16 %v173, %v168
  %v194 = vpack.c.b16 %v174, %v169
  %v283 = vunpack.c.l.b16 %v39
  %v284 = vunpack.c.l.b16 %v40
  %v285 = vunpack.c.l.b16 %v41
  %v286 = vunpack.c.l.b16 %v42
  %v287 = vunpack.c.l.b16 %v43
  %v288 = vunpack.c.l.b16 %v44
  %v289 = vunpack.c.l.b16 %v45
  %v290 = vunpack.c.l.b16 %v46
  %v291 = vunpack.c.l.b16 %v47
  %v292 = vunpack.c.l.b16 %v48
  %v293 = vunpack.c.l.b16 %v49
  %v294 = vunpack.c.l.b16 %v50
  %v295 = vunpack.c.l.b16 %v51
  %v296 = vunpack.c.l.b16 %v52
  %v297 = vunpack.c.l.b16 %v53
  %v298 = vunpack.c.l.b16 %v54
  %v299 = vunpack.c.l.b16 %v55
  %v300 = vunpack.c.l.b16 %v56
  %v301 = vunpack.c.l.b16 %v57
  %v302 = vunpack.c.l.b16 %v58
  %v303 = vunpack.c.l.b16 %v59
  %v304 = vunpack.c.l.b16 %v60
  %v305 = vunpack.c.l.b16 %v61
  %v306 = vunpack.c.l.b16 %v62
  %v307 = vunpack.c.l.b16 %v63
  %v308 = vunpack.c.l.b16 %v64
  %v309 = vunpack.c.l.b16 %v65
  %v310 = vunpack.c.l.b16 %v66
  %v311 = vunpack.c.l.b16 %v67
  %v312 = vunpack.c.l.b16 %v68
  %v313 = vunpack.c.l.b16 %v69
  %v314 = vunpack.c.l.b16 %v70
  %v315 = vunpack.c.l.b16 %v71
  %v316 = vunpack.c.l.b16 %v72
  %v317 = vunpack.c.l.b16 %v73
  %v318 = vunpack.c.l.b16 %v74
  %v319 = vunpack.c.l.b16 %v75
  %v320 = vunpack.c.l.b16 %v76
  %v321 = vunpack.c.l.b16 %v77
  %v322 = vunpack.c.l.b16 %v78
  %v323 = vunpack.c.l.b16 %v79
  %v324 = vunpack.c.l.b16 %v80
  %v325 = vunpack.c.l.b16 %v81
  %v326 = vunpack.c.l.b16 %v82
  %v327 = vunpack.c.l.b16 %v83
  %v328 = vunpack.c.l.b16 %v84
  %v329 = vunpack.c.l.b16 %v85
  %v330 = vunpack.c.l.b16 %v86
  %v331 = vunpack.c.l.b16 %v87
  %v332 = vunpack.c.l.b16 %v88
  %v333 = vunpack.c.l.b16 %v89
  %v334 = vunpack.c.l.b16 %v90
  %v335 = vunpack.c.l.b16 %v91
  %v336 = vunpack.c.l.b16 %v92
  %v337 = vunpack.c.l.b16 %v93
  %v338 = vunpack.c.l.b16 %v94
  %v339 = vunpack.c.l.b16 %v95
  %v340 = vunpack.c.l.b16 %v96
  %v341 = vunpack.c.l.b16 %v97
  %v342 = vunpack.c.l.b16 %v98
  %v343 = vunpack.c.l.b16 %v99
  %v344 = vunpack.c.l.b16 %v100
  %v345 = vunpack.c.l.b16 %v101
  %v346 = vunpack.c.l.b16 %v102
  %v347 = vunpack.c.l.b16 %v103
  %v348 = vunpack.c.l.b16 %v104
  %v349 = vunpack.c.l.b16 %v105
  %v350 = vunpack.c.l.b16 %v106
  %v351 = vunpack.c.l.b16 %v107
  %v352 = vunpack.c.l.b16 %v108
  %v353 = vunpack.c.l.b16 %v109
  %v354 = vunpack.c.l.b16 %v110
  %v355 = vpack.c.b16 %v284, %v283
  %v356 = vpack.c.b16 %v286, %v285
  %v357 = vpack.c.b16 %v288, %v287
  %v358 = vpack.c.b16 %v290, %v289
  %v359 = vpack.c.b16 %v292, %v291
  %v360 = vpack.c.b16 %v294, %v293
  %v361 = vpack.c.b16 %v296, %v295
  %v362 = vpack.c.b16 %v298, %v297
  %v363 = vpack.c.b16 %v300, %v299
  %v364 = vpack.c.b16 %v302, %v301
  %v365 = vpack.c.b16 %v304, %v303
  %v366 = vpack.c.b16 %v306, %v305
  %v367 = vpack.c.b16 %v308, %v307
  %v368 = vpack.c.b16 %v310, %v309
  %v369 = vpack.c.b16 %v312, %v311
  %v370 = vpack.c.b16 %v314, %v313
  %v371 = vpack.c.b16 %v316, %v315
  %v372 = vpack.c.b16 %v318, %v317
  %v373 = vpack.c.b16 %v320, %v319
  %v374 = vpack.c.b16 %v322, %v321
  %v375 = vpack.c.b16 %v324, %v323
  %v376 = vpack.c.b16 %v326, %v325
  %v377 = vpack.c.b16 %v328, %v327
  %v378 = vpack.c.b16 %v330, %v329
  %v379 = vpack.c.b16 %v332, %v331
  %v380 = vpack.c.b16 %v334, %v333
  %v381 = vpack.c.b16 %v336, %v335
  %v382 = vpack.c.b16 %v338, %v337
  %v383 = vpack.c.b16 %v340, %v339
  %v384 = vpack.c.b16 %v342, %v341
  %v385 = vpack.c.b16 %v344, %v343
  %v386 = vpack.c.b16 %v346, %v345
  %v387 = vpack.c.b16 %v348, %v347
  %v388 = vpack.c.b16 %v350, %v349
  %v389 = vpack.c.b16 %v352, %v351
  %v390 = vpack.c.b16 %v354, %v353
  %vm427 = vcmask 523264
  %v429 = vsel %vm427, %v179, 0
  %v432 = vsel %vm427, %v184, 0
  %v435 = vsel %vm427, %v189, 0
  %v438 = vsel %vm427, %v194, 0
  %440 = vmatprep.subr.bf16.mxu0 0
  %441 = vmatpush1.bf16.msra.mxu0 %v355
  %442 = vmatprep.subr.bf16.mxu0 0
  %443 = vmatpush1.bf16.msra.mxu0 %v356
  %444 = vmatprep.subr.bf16.mxu0 0
  %445 = vmatpush1.bf16.msra.mxu0 %v357
  %446 = vmatprep.subr.bf16.mxu0 0
  %447 = vmatpush1.bf16.msra.mxu0 %v358
  %448 = vmatprep.subr.bf16.mxu0 0
  %449 = vmatpush1.bf16.msra.mxu0 %v359
  %450 = vmatprep.subr.bf16.mxu0 0
  %451 = vmatpush1.bf16.msra.mxu0 %v360
  %452 = vmatprep.subr.bf16.mxu0 0
  %453 = vmatpush1.bf16.msra.mxu0 %v361
  %454 = vmatprep.subr.bf16.mxu0 0
  %455 = vmatpush1.bf16.msra.mxu0 %v362
  %456 = vmatprep.subr.bf16.mxu0 0
  %457 = vmatpush1.bf16.msra.mxu0 %v363
  %458 = vmatprep.subr.bf16.mxu0 0
  %459 = vmatpush1.bf16.msra.mxu0 %v364
  %460 = vmatprep.subr.bf16.mxu0 0
  %461 = vmatpush1.bf16.msra.mxu0 %v365
  %462 = vmatprep.subr.bf16.mxu0 0
  %463 = vmatpush1.bf16.msra.mxu0 %v366
  %464 = vmatprep.subr.bf16.mxu0 0
  %465 = vmatpush1.bf16.msra.mxu0 %v367
  %466 = vmatprep.subr.bf16.mxu0 0
  %467 = vmatpush1.bf16.msra.mxu0 %v368
  %468 = vmatprep.subr.bf16.mxu0 0
  %469 = vmatpush1.bf16.msra.mxu0 %v369
  %470 = vmatprep.subr.bf16.mxu0 0
  %471 = vmatpush1.bf16.msra.mxu0 %v370
  %472 = vmatprep.mubr.bf16.mxu0 %v176
  %473 = vmatmul.mubr.bf16.gmra.mrb[0].mxu0 %v175
  %v474 = vpop.f32.mrb[0].mxu0
  %v475 = vadd.f32 0.0, %v474
  %v476 = vpop.f32.mrb[0].mxu0
  %v477 = vpop.f32.mrb[0].mxu0
  %v478 = vadd.f32 0.0, %v477
  %v479 = vpop.f32.mrb[0].mxu0
  %480 = vmatprep.mubr.bf16.mxu0 %v181
  %481 = vmatmul.mubr.bf16.gmra.mrb[0].mxu0 %v180
  %v482 = vpop.f32.mrb[0].mxu0
  %v483 = vadd.f32 0.0, %v482
  %v484 = vpop.f32.mrb[0].mxu0
  %v485 = vpop.f32.mrb[0].mxu0
  %v486 = vadd.f32 0.0, %v485
  %v487 = vpop.f32.mrb[0].mxu0
  %488 = vmatprep.mubr.bf16.mxu0 %v186
  %489 = vmatmul.mubr.bf16.gmra.mrb[0].mxu0 %v185
  %v490 = vpop.f32.mrb[0].mxu0
  %v491 = vadd.f32 0.0, %v490
  %v492 = vpop.f32.mrb[0].mxu0
  %v493 = vpop.f32.mrb[0].mxu0
  %v494 = vadd.f32 0.0, %v493
  %v495 = vpop.f32.mrb[0].mxu0
  %496 = vmatprep.mubr.bf16.mxu0 %v191
  %497 = vmatmul.mubr.bf16.gmra.mrb[0].mxu0 %v190
  %v498 = vpop.f32.mrb[0].mxu0
  %v499 = vadd.f32 0.0, %v498
  %v500 = vpop.f32.mrb[0].mxu0
  %v501 = vpop.f32.mrb[0].mxu0
  %v502 = vadd.f32 0.0, %v501
  %v503 = vpop.f32.mrb[0].mxu0
  %504 = vdwg.mxu0
  %505 = vmatprep.subr.bf16.mxu0 0
  %506 = vmatpush1.bf16.msra.mxu0 %v371
  %507 = vmatprep.subr.bf16.mxu0 0
  %508 = vmatpush1.bf16.msra.mxu0 %v372
  %509 = vmatprep.subr.bf16.mxu0 0
  %510 = vmatpush1.bf16.msra.mxu0 %v373
  %511 = vmatprep.subr.bf16.mxu0 0
  %512 = vmatpush1.bf16.msra.mxu0 %v374
  %513 = vmatprep.subr.bf16.mxu0 0
  %514 = vmatpush1.bf16.msra.mxu0 %v375
  %515 = vmatprep.subr.bf16.mxu0 0
  %516 = vmatpush1.bf16.msra.mxu0 %v376
  %517 = vmatprep.subr.bf16.mxu0 0
  %518 = vmatpush1.bf16.msra.mxu0 %v377
  %519 = vmatprep.subr.bf16.mxu0 0
  %520 = vmatpush1.bf16.msra.mxu0 %v378
  %521 = vmatprep.subr.bf16.mxu0 0
  %522 = vmatpush1.bf16.msra.mxu0 %v379
  %523 = vmatprep.subr.bf16.mxu0 0
  %524 = vmatpush1.bf16.msra.mxu0 %v380
  %525 = vmatprep.subr.bf16.mxu0 0
  %526 = vmatpush1.bf16.msra.mxu0 %v381
  %527 = vmatprep.subr.bf16.mxu0 0
  %528 = vmatpush1.bf16.msra.mxu0 %v382
  %529 = vmatprep.subr.bf16.mxu0 0
  %530 = vmatpush1.bf16.msra.mxu0 %v383
  %531 = vmatprep.subr.bf16.mxu0 0
  %532 = vmatpush1.bf16.msra.mxu0 %v384
  %533 = vmatprep.subr.bf16.mxu0 0
  %534 = vmatpush1.bf16.msra.mxu0 %v385
  %535 = vmatprep.subr.bf16.mxu0 0
  %536 = vmatpush1.bf16.msra.mxu0 %v386
  %537 = vmatprep.mubr.bf16.mxu0 %v178
  %538 = vmatmul.mubr.bf16.gmra.mrb[0].mxu0 %v177
  %v539 = vpop.f32.mrb[0].mxu0
  %v540 = vadd.f32 %v475, %v539
  %v541 = vpop.f32.mrb[0].mxu0
  %v542 = vpop.f32.mrb[0].mxu0
  %v543 = vadd.f32 %v478, %v542
  %v544 = vpop.f32.mrb[0].mxu0
  %545 = vmatprep.mubr.bf16.mxu0 %v183
  %546 = vmatmul.mubr.bf16.gmra.mrb[0].mxu0 %v182
  %v547 = vpop.f32.mrb[0].mxu0
  %v548 = vadd.f32 %v483, %v547
  %v549 = vpop.f32.mrb[0].mxu0
  %v550 = vpop.f32.mrb[0].mxu0
  %v551 = vadd.f32 %v486, %v550
  %v552 = vpop.f32.mrb[0].mxu0
  %553 = vmatprep.mubr.bf16.mxu0 %v188
  %554 = vmatmul.mubr.bf16.gmra.mrb[0].mxu0 %v187
  %v555 = vpop.f32.mrb[0].mxu0
  %v556 = vadd.f32 %v491, %v555
  %v557 = vpop.f32.mrb[0].mxu0
  %v558 = vpop.f32.mrb[0].mxu0
  %v559 = vadd.f32 %v494, %v558
  %v560 = vpop.f32.mrb[0].mxu0
  %561 = vmatprep.mubr.bf16.mxu0 %v193
  %562 = vmatmul.mubr.bf16.gmra.mrb[0].mxu0 %v192
  %v563 = vpop.f32.mrb[0].mxu0
  %v564 = vadd.f32 %v499, %v563
  %v565 = vpop.f32.mrb[0].mxu0
  %v566 = vpop.f32.mrb[0].mxu0
  %v567 = vadd.f32 %v502, %v566
  %v568 = vpop.f32.mrb[0].mxu0
  %569 = vdwg.mxu0
  %570 = vmatprep.subr.bf16.mxu0 0
  %571 = vmatpush1.bf16.msra.mxu0 %v387
  %572 = vmatprep.subr.bf16.mxu0 0
  %573 = vmatpush1.bf16.msra.mxu0 %v388
  %574 = vmatprep.subr.bf16.mxu0 0
  %575 = vmatpush1.bf16.msra.mxu0 %v389
  %576 = vmatprep.subr.bf16.mxu0 0
  %577 = vmatpush1.bf16.msra.mxu0 %v390
  %578 = vmatprep.subr.bf16.mxu0 0
  %579 = vmatpush1.bf16.msra.mxu0 0
  %580 = vmatprep.subr.bf16.mxu0 0
  %581 = vmatpush1.bf16.msra.mxu0 0
  %582 = vmatprep.subr.bf16.mxu0 0
  %583 = vmatpush1.bf16.msra.mxu0 0
  %584 = vmatprep.subr.bf16.mxu0 0
  %585 = vmatpush1.bf16.msra.mxu0 0
  %586 = vmatprep.subr.bf16.mxu0 0
  %587 = vmatpush1.bf16.msra.mxu0 0
  %588 = vmatprep.subr.bf16.mxu0 0
  %589 = vmatpush1.bf16.msra.mxu0 0
  %590 = vmatprep.subr.bf16.mxu0 0
  %591 = vmatpush1.bf16.msra.mxu0 0
  %592 = vmatprep.subr.bf16.mxu0 0
  %593 = vmatpush1.bf16.msra.mxu0 0
  %594 = vmatprep.subr.bf16.mxu0 0
  %595 = vmatpush1.bf16.msra.mxu0 0
  %596 = vmatprep.subr.bf16.mxu0 0
  %597 = vmatpush1.bf16.msra.mxu0 0
  %598 = vmatprep.subr.bf16.mxu0 0
  %599 = vmatpush1.bf16.msra.mxu0 0
  %600 = vmatprep.subr.bf16.mxu0 0
  %601 = vmatpush1.bf16.msra.mxu0 0
  %602 = vmatprep.mubr.bf16.mxu0 0
  %603 = vmatmul.mubr.bf16.gmra.mrb[0].mxu0 %v429
  %v604 = vpop.f32.mrb[0].mxu0
  %v605 = vadd.f32 %v540, %v604
  %v606 = vpop.f32.mrb[0].mxu0
  %v607 = vpop.f32.mrb[0].mxu0
  %v608 = vadd.f32 %v543, %v607
  %v609 = vpop.f32.mrb[0].mxu0
  %610 = vmatprep.mubr.bf16.mxu0 0
  %611 = vmatmul.mubr.bf16.gmra.mrb[0].mxu0 %v432
  %v612 = vpop.f32.mrb[0].mxu0
  %v613 = vadd.f32 %v548, %v612
  %v614 = vpop.f32.mrb[0].mxu0
  %v615 = vpop.f32.mrb[0].mxu0
  %v616 = vadd.f32 %v551, %v615
  %v617 = vpop.f32.mrb[0].mxu0
  %618 = vmatprep.mubr.bf16.mxu0 0
  %619 = vmatmul.mubr.bf16.gmra.mrb[0].mxu0 %v435
  %v620 = vpop.f32.mrb[0].mxu0
  %v621 = vadd.f32 %v556, %v620
  %v622 = vpop.f32.mrb[0].mxu0
  %v623 = vpop.f32.mrb[0].mxu0
  %v624 = vadd.f32 %v559, %v623
  %v625 = vpop.f32.mrb[0].mxu0
  %626 = vmatprep.mubr.bf16.mxu0 0
  %627 = vmatmul.mubr.bf16.gmra.mrb[0].mxu0 %v438
  %v628 = vpop.f32.mrb[0].mxu0
  %v629 = vadd.f32 %v564, %v628
  %v630 = vpop.f32.mrb[0].mxu0
  %v631 = vpop.f32.mrb[0].mxu0
  %v632 = vadd.f32 %v567, %v631
  %v633 = vpop.f32.mrb[0].mxu0
  %634 = vdwg.mxu0
  %vm635 = vcmask 64512
  %636 = vst.msk [vmem:[%s2] sm:$0xff] %vm635, %v605
  %637 = vst.msk [vmem:[%s2 + $0x8] sm:$0xff] %vm635, %v608
  %638 = vst.msk [vmem:[%s2 + $0x10] sm:$0xff] %vm635, %v613
  %639 = vst.msk [vmem:[%s2 + $0x18] sm:$0xff] %vm635, %v616
  %640 = vst.msk [vmem:[%s2 + $0x20] sm:$0xff] %vm635, %v621
  %641 = vst.msk [vmem:[%s2 + $0x28] sm:$0xff] %vm635, %v624
  %642 = vst.msk [vmem:[%s2 + $0x30] sm:$0xff] %vm635, %v629
  %643 = vst.msk [vmem:[%s2 + $0x38] sm:$0xff] %vm635, %v632
  %p644 = scmp.eq.s32.totalorder 0, 0
  // Predicated region
  $region10: #{res_unet_att_forward.46} parent=0 // pred_check
    %p645 = pneg %p644
  $region11: #{res_unet_att_forward.46} parent=0 // pred_check_branch
    %647 = sbr.rel (%p645) target = $region13
  $region12: #{res_unet_att_forward.46} parent=0 // pred_region
    %vm648 = vcmask 7168
    %649 = vst.msk [vmem:[%s3] sm:$0xff] %vm648, 0.0
    %650 = vst.msk [vmem:[%s3 + $0x8] sm:$0xff] %vm648, 0.0
    %651 = vst.msk [vmem:[%s3 + $0x10] sm:$0xff] %vm648, 0.0
    %652 = vst.msk [vmem:[%s3 + $0x18] sm:$0xff] %vm648, 0.0
    %653 = vst.msk [vmem:[%s3 + $0x20] sm:$0xff] %vm648, 0.0
    %654 = vst.msk [vmem:[%s3 + $0x28] sm:$0xff] %vm648, 0.0
    %655 = vst.msk [vmem:[%s3 + $0x30] sm:$0xff] %vm648, 0.0
    %656 = vst.msk [vmem:[%s3 + $0x38] sm:$0xff] %vm648, 0.0
    %657 = vst.msk [vmem:[%s4] sm:$0xff] %vm648, 0.0
    %658 = vst.msk [vmem:[%s4 + $0x8] sm:$0xff] %vm648, 0.0
    %659 = vst.msk [vmem:[%s4 + $0x10] sm:$0xff] %vm648, 0.0
    %660 = vst.msk [vmem:[%s4 + $0x18] sm:$0xff] %vm648, 0.0
    %661 = vst.msk [vmem:[%s4 + $0x20] sm:$0xff] %vm648, 0.0
    %662 = vst.msk [vmem:[%s4 + $0x28] sm:$0xff] %vm648, 0.0
    %663 = vst.msk [vmem:[%s4 + $0x30] sm:$0xff] %vm648, 0.0
    %664 = vst.msk [vmem:[%s4 + $0x38] sm:$0xff] %vm648, 0.0
  $region13: #{res_unet_att_forward.46} parent=0 // pred_fallthru
    _
  %v665 = vld [vmem:[%s3] sm:$0xff]
  %v666 = vld [vmem:[%s3 + $0x8] sm:$0xff]
  %v667 = vld [vmem:[%s3 + $0x10] sm:$0xff]
  %v668 = vld [vmem:[%s3 + $0x18] sm:$0xff]
  %v669 = vld [vmem:[%s3 + $0x20] sm:$0xff]
  %v670 = vld [vmem:[%s3 + $0x28] sm:$0xff]
  %v671 = vld [vmem:[%s3 + $0x30] sm:$0xff]
  %v672 = vld [vmem:[%s3 + $0x38] sm:$0xff]
  %v673 = vsel %vm635, %v605, 0.0
  %674 = vadd.xlane.f32.xlu0 %v673
  %v675 = vpop.xlane.xlu0 %674
  %v676 = vsel %vm635, %v608, 0.0
  %677 = vadd.xlane.f32.xlu0 %v676
  %v678 = vpop.xlane.xlu0 %677
  %v679 = vsel %vm635, %v613, 0.0
  %680 = vadd.xlane.f32.xlu0 %v679
  %v681 = vpop.xlane.xlu0 %680
  %v682 = vsel %vm635, %v616, 0.0
  %683 = vadd.xlane.f32.xlu0 %v682
  %v684 = vpop.xlane.xlu0 %683
  %v685 = vsel %vm635, %v621, 0.0
  %686 = vadd.xlane.f32.xlu0 %v685
  %v687 = vpop.xlane.xlu0 %686
  %v688 = vsel %vm635, %v624, 0.0
  %689 = vadd.xlane.f32.xlu0 %v688
  %v690 = vpop.xlane.xlu0 %689
  %v691 = vsel %vm635, %v629, 0.0
  %692 = vadd.xlane.f32.xlu0 %v691
  %v693 = vpop.xlane.xlu0 %692
  %v694 = vsel %vm635, %v632, 0.0
  %695 = vadd.xlane.f32.xlu0 %v694
  %v696 = vpop.xlane.xlu0 %695
  %v697 = vadd.f32 %v665, %v675
  %v698 = vadd.f32 %v666, %v678
  %v699 = vadd.f32 %v667, %v681
  %v700 = vadd.f32 %v668, %v684
  %v701 = vadd.f32 %v669, %v687
  %v702 = vadd.f32 %v670, %v690
  %v703 = vadd.f32 %v671, %v693
  %v704 = vadd.f32 %v672, %v696
  %vm705 = vcmask 7168
  %706 = vst.msk [vmem:[%s3] sm:$0xff] %vm705, %v697
  %707 = vst.msk [vmem:[%s3 + $0x8] sm:$0xff] %vm705, %v698
  %708 = vst.msk [vmem:[%s3 + $0x10] sm:$0xff] %vm705, %v699
  %709 = vst.msk [vmem:[%s3 + $0x18] sm:$0xff] %vm705, %v700
  %710 = vst.msk [vmem:[%s3 + $0x20] sm:$0xff] %vm705, %v701
  %711 = vst.msk [vmem:[%s3 + $0x28] sm:$0xff] %vm705, %v702
  %712 = vst.msk [vmem:[%s3 + $0x30] sm:$0xff] %vm705, %v703
  %713 = vst.msk [vmem:[%s3 + $0x38] sm:$0xff] %vm705, %v704
  %v714 = vld [vmem:[%s4] sm:$0xff]
  %v715 = vld [vmem:[%s4 + $0x8] sm:$0xff]
  %v716 = vld [vmem:[%s4 + $0x10] sm:$0xff]
  %v717 = vld [vmem:[%s4 + $0x18] sm:$0xff]
  %v718 = vld [vmem:[%s4 + $0x20] sm:$0xff]
  %v719 = vld [vmem:[%s4 + $0x28] sm:$0xff]
  %v720 = vld [vmem:[%s4 + $0x30] sm:$0xff]
  %v721 = vld [vmem:[%s4 + $0x38] sm:$0xff]
  %v722 = vmul.f32 %v605, %v605
  %v723 = vmul.f32 %v608, %v608
  %v724 = vmul.f32 %v613, %v613
  %v725 = vmul.f32 %v616, %v616
  %v726 = vmul.f32 %v621, %v621
  %v727 = vmul.f32 %v624, %v624
  %v728 = vmul.f32 %v629, %v629
  %v729 = vmul.f32 %v632, %v632
  %v730 = vsel %vm635, %v722, 0.0
  %731 = vadd.xlane.f32.xlu0 %v730
  %v732 = vpop.xlane.xlu0 %731
  %v733 = vsel %vm635, %v723, 0.0
  %734 = vadd.xlane.f32.xlu0 %v733
  %v735 = vpop.xlane.xlu0 %734
  %v736 = vsel %vm635, %v724, 0.0
  %737 = vadd.xlane.f32.xlu0 %v736
  %v738 = vpop.xlane.xlu0 %737
  %v739 = vsel %vm635, %v725, 0.0
  %740 = vadd.xlane.f32.xlu0 %v739
  %v741 = vpop.xlane.xlu0 %740
  %v742 = vsel %vm635, %v726, 0.0
  %743 = vadd.xlane.f32.xlu0 %v742
  %v744 = vpop.xlane.xlu0 %743
  %v745 = vsel %vm635, %v727, 0.0
  %746 = vadd.xlane.f32.xlu0 %v745
  %v747 = vpop.xlane.xlu0 %746
  %v748 = vsel %vm635, %v728, 0.0
  %749 = vadd.xlane.f32.xlu0 %v748
  %v750 = vpop.xlane.xlu0 %749
  %v751 = vsel %vm635, %v729, 0.0
  %752 = vadd.xlane.f32.xlu0 %v751
  %v753 = vpop.xlane.xlu0 %752
  %v754 = vadd.f32 %v714, %v732
  %v755 = vadd.f32 %v715, %v735
  %v756 = vadd.f32 %v716, %v738
  %v757 = vadd.f32 %v717, %v741
  %v758 = vadd.f32 %v718, %v744
  %v759 = vadd.f32 %v719, %v747
  %v760 = vadd.f32 %v720, %v750
  %v761 = vadd.f32 %v721, %v753
  %762 = vst.msk [vmem:[%s4] sm:$0xff] %vm705, %v754
  %763 = vst.msk [vmem:[%s4 + $0x8] sm:$0xff] %vm705, %v755
  %764 = vst.msk [vmem:[%s4 + $0x10] sm:$0xff] %vm705, %v756
  %765 = vst.msk [vmem:[%s4 + $0x18] sm:$0xff] %vm705, %v757
  %766 = vst.msk [vmem:[%s4 + $0x20] sm:$0xff] %vm705, %v758
  %767 = vst.msk [vmem:[%s4 + $0x28] sm:$0xff] %vm705, %v759
  %768 = vst.msk [vmem:[%s4 + $0x30] sm:$0xff] %vm705, %v760
  %769 = vst.msk [vmem:[%s4 + $0x38] sm:$0xff] %vm705, %v761
  // Predicated region
  $region14: #{res_unet_att_forward.46} parent=0 // pred_check
    _
  $region15: #{res_unet_att_forward.46} parent=0 // pred_check_branch
    %771 = sbr.rel (0) target = $region17
  $region16: #{res_unet_att_forward.46} parent=0 // pred_region
    _
  $region17: #{res_unet_att_forward.46} parent=0 // pred_fallthru
    _
  // Predicated region
  $region18: #{res_unet_att_forward.46} parent=0 // pred_check
    _
  $region19: #{res_unet_att_forward.46} parent=0 // pred_check_branch
    %773 = sbr.rel (0) target = $region21
  $region20: #{res_unet_att_forward.46} parent=0 // pred_region
    _
  $region21: #{res_unet_att_forward.46} parent=0 // pred_fallthru
    _
  // Predicated region
  $region22: #{res_unet_att_forward.46} parent=0 // pred_check
    _
  $region23: #{res_unet_att_forward.46} parent=0 // pred_check_branch
    %775 = sbr.rel (0) target = $region25
  $region24: #{res_unet_att_forward.46} parent=0 // pred_region
    _
  $region25: #{res_unet_att_forward.46} parent=0 // pred_fallthru
    _
  // Predicated region
  $region26: #{res_unet_att_forward.46} parent=0 // pred_check
    _
  $region27: #{res_unet_att_forward.46} parent=0 // pred_check_branch
    %777 = sbr.rel (0) target = $region29
  $region28: #{res_unet_att_forward.46} parent=0 // pred_region
    _
  $region29: #{res_unet_att_forward.46} parent=0 // pred_fallthru
    _
  // Predicated region
  $region30: #{res_unet_att_forward.46} parent=0 // pred_check
    _
  $region31: #{res_unet_att_forward.46} parent=0 // pred_check_branch
    %779 = sbr.rel (0) target = $region33
  $region32: #{res_unet_att_forward.46} parent=0 // pred_region
    _
  $region33: #{res_unet_att_forward.46} parent=0 // pred_fallthru
    _
  // Predicated region
  $region34: #{res_unet_att_forward.46} parent=0 // pred_check
    _
  $region35: #{res_unet_att_forward.46} parent=0 // pred_check_branch
    %781 = sbr.rel (0) target = $region37
  $region36: #{res_unet_att_forward.46} parent=0 // pred_region
    _
  $region37: #{res_unet_att_forward.46} parent=0 // pred_fallthru
    _

// kernel: res_unet_att_forward.51
$region0: #{res_unet_att_forward.51}
  #allocation0 [shape = 'u32[]', space=smem, size = 0x4, offset = 0x4, fixed_abs, tag = 'smem constant byte address 0x4 - core index']
  #allocation1 [shape = 'u32[144,128]{1,0:T(1,128)}', space=vmem, size = 0x12000, scoped, tag = 'internal scratch']
  %s0 = inlined_call_operand.vmem [shape: f32[64,8], index: 0, kind: input, shape index: {}]
  %s1 = inlined_call_operand.vmem [shape: f32[64,1], index: 1, kind: input, shape index: {}]
  %s2 = inlined_call_operand.vmem [shape: f32[64,1], index: 2, kind: input, shape index: {}]
  %s3 = inlined_call_operand.vmem [shape: f32[64,8], index: 3, kind: input, shape index: {}]
  %s4 = inlined_call_operand.vmem [shape: f32[64,8], index: 4, kind: output, shape index: {}]
  %s5 = sld [smem:[#allocation0]]
  $region26: #{res_unet_att_forward.51} parent=0
    _
  %s7 = ssub.s32 1, %s5
  %s8 = scalar_select 0, %s7, %s5
  // Predicated region
  $region2: #{res_unet_att_forward.51} parent=0 // pred_check
    _
  $region3: #{res_unet_att_forward.51} parent=0 // pred_check_branch
    %10 = sbr.rel (0) target = $region5
  $region4: #{res_unet_att_forward.51} parent=0 // pred_region
    _
  $region5: #{res_unet_att_forward.51} parent=0 // pred_fallthru
    _
  // Predicated region
  $region6: #{res_unet_att_forward.51} parent=0 // pred_check
    _
  $region7: #{res_unet_att_forward.51} parent=0 // pred_check_branch
    %12 = sbr.rel (0) target = $region9
  $region8: #{res_unet_att_forward.51} parent=0 // pred_region
    _
  $region9: #{res_unet_att_forward.51} parent=0 // pred_fallthru
    _
  // Predicated region
  $region10: #{res_unet_att_forward.51} parent=0 // pred_check
    _
  $region11: #{res_unet_att_forward.51} parent=0 // pred_check_branch
    %14 = sbr.rel (0) target = $region13
  $region12: #{res_unet_att_forward.51} parent=0 // pred_region
    _
  $region13: #{res_unet_att_forward.51} parent=0 // pred_fallthru
    _
  // Predicated region
  $region14: #{res_unet_att_forward.51} parent=0 // pred_check
    _
  $region15: #{res_unet_att_forward.51} parent=0 // pred_check_branch
    %16 = sbr.rel (0) target = $region17
  $region16: #{res_unet_att_forward.51} parent=0 // pred_region
    _
  $region17: #{res_unet_att_forward.51} parent=0 // pred_fallthru
    _
  %v17 = vld [vmem:[%s0] sm:$0xff]
  %v18 = vld [vmem:[%s0 + $0x8] sm:$0xff]
  %v19 = vld [vmem:[%s0 + $0x10] sm:$0xff]
  %v20 = vld [vmem:[%s0 + $0x18] sm:$0xff]
  %v21 = vld [vmem:[%s0 + $0x20] sm:$0xff]
  %v22 = vld [vmem:[%s0 + $0x28] sm:$0xff]
  %v23 = vld [vmem:[%s0 + $0x30] sm:$0xff]
  %v24 = vld [vmem:[%s0 + $0x38] sm:$0xff]
  %v25 = vld [vmem:[%s1] sm:$0xff]
  %v26 = vld [vmem:[%s1 + $0x8] sm:$0xff]
  %v27 = vld [vmem:[%s1 + $0x10] sm:$0xff]
  %v28 = vld [vmem:[%s1 + $0x18] sm:$0xff]
  %v29 = vld [vmem:[%s1 + $0x20] sm:$0xff]
  %v30 = vld [vmem:[%s1 + $0x28] sm:$0xff]
  %v31 = vld [vmem:[%s1 + $0x30] sm:$0xff]
  %v32 = vld [vmem:[%s1 + $0x38] sm:$0xff]
  %34 = vset.pattern.permute.xlu0 0
  %35 = vperm.xlu0 %34, %v25
  %v36 = vpop.permute.xlu0 %35
  %39 = vset.pattern.permute.xlu0 0
  %40 = vperm.xlu0 %39, %v26
  %v41 = vpop.permute.xlu0 %40
  %44 = vset.pattern.permute.xlu0 0
  %45 = vperm.xlu0 %44, %v27
  %v46 = vpop.permute.xlu0 %45
  %49 = vset.pattern.permute.xlu0 0
  %50 = vperm.xlu0 %49, %v28
  %v51 = vpop.permute.xlu0 %50
  %54 = vset.pattern.permute.xlu0 0
  %55 = vperm.xlu0 %54, %v29
  %v56 = vpop.permute.xlu0 %55
  %59 = vset.pattern.permute.xlu0 0
  %60 = vperm.xlu0 %59, %v30
  %v61 = vpop.permute.xlu0 %60
  %64 = vset.pattern.permute.xlu0 0
  %65 = vperm.xlu0 %64, %v31
  %v66 = vpop.permute.xlu0 %65
  %69 = vset.pattern.permute.xlu0 0
  %70 = vperm.xlu0 %69, %v32
  %v71 = vpop.permute.xlu0 %70
  %v73 = vmul.f32 %v17, %v36
  %v74 = vmul.f32 %v18, %v41
  %v75 = vmul.f32 %v19, %v46
  %v76 = vmul.f32 %v20, %v51
  %v77 = vmul.f32 %v21, %v56
  %v78 = vmul.f32 %v22, %v61
  %v79 = vmul.f32 %v23, %v66
  %v80 = vmul.f32 %v24, %v71
  %v81 = vld [vmem:[%s2] sm:$0xff]
  %v82 = vld [vmem:[%s2 + $0x8] sm:$0xff]
  %v83 = vld [vmem:[%s2 + $0x10] sm:$0xff]
  %v84 = vld [vmem:[%s2 + $0x18] sm:$0xff]
  %v85 = vld [vmem:[%s2 + $0x20] sm:$0xff]
  %v86 = vld [vmem:[%s2 + $0x28] sm:$0xff]
  %v87 = vld [vmem:[%s2 + $0x30] sm:$0xff]
  %v88 = vld [vmem:[%s2 + $0x38] sm:$0xff]
  %90 = vset.pattern.permute.xlu0 0
  %91 = vperm.xlu0 %90, %v81
  %v92 = vpop.permute.xlu0 %91
  %95 = vset.pattern.permute.xlu0 0
  %96 = vperm.xlu0 %95, %v82
  %v97 = vpop.permute.xlu0 %96
  %100 = vset.pattern.permute.xlu0 0
  %101 = vperm.xlu0 %100, %v83
  %v102 = vpop.permute.xlu0 %101
  %105 = vset.pattern.permute.xlu0 0
  %106 = vperm.xlu0 %105, %v84
  %v107 = vpop.permute.xlu0 %106
  %110 = vset.pattern.permute.xlu0 0
  %111 = vperm.xlu0 %110, %v85
  %v112 = vpop.permute.xlu0 %111
  %115 = vset.pattern.permute.xlu0 0
  %116 = vperm.xlu0 %115, %v86
  %v117 = vpop.permute.xlu0 %116
  %120 = vset.pattern.permute.xlu0 0
  %121 = vperm.xlu0 %120, %v87
  %v122 = vpop.permute.xlu0 %121
  %125 = vset.pattern.permute.xlu0 0
  %126 = vperm.xlu0 %125, %v88
  %v127 = vpop.permute.xlu0 %126
  %v129 = vadd.f32 %v73, %v92
  %v130 = vadd.f32 %v74, %v97
  %v131 = vadd.f32 %v75, %v102
  %v132 = vadd.f32 %v76, %v107
  %v133 = vadd.f32 %v77, %v112
  %v134 = vadd.f32 %v78, %v117
  %v135 = vadd.f32 %v79, %v122
  %v136 = vadd.f32 %v80, %v127
  %v137 = vld [vmem:[%s3] sm:$0xff]
  %v138 = vld [vmem:[%s3 + $0x8] sm:$0xff]
  %v139 = vld [vmem:[%s3 + $0x10] sm:$0xff]
  %v140 = vld [vmem:[%s3 + $0x18] sm:$0xff]
  %v141 = vld [vmem:[%s3 + $0x20] sm:$0xff]
  %v142 = vld [vmem:[%s3 + $0x28] sm:$0xff]
  %v143 = vld [vmem:[%s3 + $0x30] sm:$0xff]
  %v144 = vld [vmem:[%s3 + $0x38] sm:$0xff]
  %v145 = vadd.f32 %v129, %v137
  %v146 = vadd.f32 %v130, %v138
  %v147 = vadd.f32 %v131, %v139
  %v148 = vadd.f32 %v132, %v140
  %v149 = vadd.f32 %v133, %v141
  %v150 = vadd.f32 %v134, %v142
  %v151 = vadd.f32 %v135, %v143
  %v152 = vadd.f32 %v136, %v144
  %v153 = vmax.f32 %v145, 0.0
  %v154 = vmax.f32 %v146, 0.0
  %v155 = vmax.f32 %v147, 0.0
  %v156 = vmax.f32 %v148, 0.0
  %v157 = vmax.f32 %v149, 0.0
  %v158 = vmax.f32 %v150, 0.0
  %v159 = vmax.f32 %v151, 0.0
  %v160 = vmax.f32 %v152, 0.0
  %vm161 = vcmask 64512
  %162 = vst.msk [vmem:[%s4] sm:$0xff] %vm161, %v153
  %163 = vst.msk [vmem:[%s4 + $0x8] sm:$0xff] %vm161, %v154
  %164 = vst.msk [vmem:[%s4 + $0x10] sm:$0xff] %vm161, %v155
  %165 = vst.msk [vmem:[%s4 + $0x18] sm:$0xff] %vm161, %v156
  %166 = vst.msk [vmem:[%s4 + $0x20] sm:$0xff] %vm161, %v157
  %167 = vst.msk [vmem:[%s4 + $0x28] sm:$0xff] %vm161, %v158
  %168 = vst.msk [vmem:[%s4 + $0x30] sm:$0xff] %vm161, %v159
  %169 = vst.msk [vmem:[%s4 + $0x38] sm:$0xff] %vm161, %v160
  // Predicated region
  $region18: #{res_unet_att_forward.51} parent=0 // pred_check
    _
  $region19: #{res_unet_att_forward.51} parent=0 // pred_check_branch
    %171 = sbr.rel (0) target = $region21
  $region20: #{res_unet_att_forward.51} parent=0 // pred_region
    _
  $region21: #{res_unet_att_forward.51} parent=0 // pred_fallthru
    _
  // Predicated region
  $region22: #{res_unet_att_forward.51} parent=0 // pred_check
    _
  $region23: #{res_unet_att_forward.51} parent=0 // pred_check_branch
    %173 = sbr.rel (0) target = $region25
  $region24: #{res_unet_att_forward.51} parent=0 // pred_region
    _
  $region25: #{res_unet_att_forward.51} parent=0 // pred_fallthru
    _

// kernel: res_unet_att_forward.61
$region0: #{res_unet_att_forward.61}
  #allocation0 [shape = 'u32[]', space=smem, size = 0x4, offset = 0x4, fixed_abs, tag = 'smem constant byte address 0x4 - core index']
  #allocation1 [shape = 'u32[144,128]{1,0:T(1,128)}', space=vmem, size = 0x12000, scoped, tag = 'internal scratch']
  %s0 = inlined_call_operand.vmem [shape: f32[32,32], index: 0, kind: input, shape index: {}]
  %s1 = inlined_call_operand.vmem [shape: f32[32,1], index: 1, kind: input, shape index: {}]
  %s2 = inlined_call_operand.vmem [shape: f32[32,1], index: 2, kind: input, shape index: {}]
  %s3 = inlined_call_operand.vmem [shape: f32[32,32], index: 3, kind: input, shape index: {}]
  %s4 = inlined_call_operand.vmem [shape: f32[32,32], index: 4, kind: output, shape index: {}]
  %s5 = sld [smem:[#allocation0]]
  $region26: #{res_unet_att_forward.61} parent=0
    _
  %s7 = ssub.s32 1, %s5
  %s8 = scalar_select 0, %s7, %s5
  // Predicated region
  $region2: #{res_unet_att_forward.61} parent=0 // pred_check
    _
  $region3: #{res_unet_att_forward.61} parent=0 // pred_check_branch
    %10 = sbr.rel (0) target = $region5
  $region4: #{res_unet_att_forward.61} parent=0 // pred_region
    _
  $region5: #{res_unet_att_forward.61} parent=0 // pred_fallthru
    _
  // Predicated region
  $region6: #{res_unet_att_forward.61} parent=0 // pred_check
    _
  $region7: #{res_unet_att_forward.61} parent=0 // pred_check_branch
    %12 = sbr.rel (0) target = $region9
  $region8: #{res_unet_att_forward.61} parent=0 // pred_region
    _
  $region9: #{res_unet_att_forward.61} parent=0 // pred_fallthru
    _
  // Predicated region
  $region10: #{res_unet_att_forward.61} parent=0 // pred_check
    _
  $region11: #{res_unet_att_forward.61} parent=0 // pred_check_branch
    %14 = sbr.rel (0) target = $region13
  $region12: #{res_unet_att_forward.61} parent=0 // pred_region
    _
  $region13: #{res_unet_att_forward.61} parent=0 // pred_fallthru
    _
  // Predicated region
  $region14: #{res_unet_att_forward.61} parent=0 // pred_check
    _
  $region15: #{res_unet_att_forward.61} parent=0 // pred_check_branch
    %16 = sbr.rel (0) target = $region17
  $region16: #{res_unet_att_forward.61} parent=0 // pred_region
    _
  $region17: #{res_unet_att_forward.61} parent=0 // pred_fallthru
    _
  %v17 = vld [vmem:[%s0] sm:$0xff]
  %v18 = vld [vmem:[%s0 + $0x8] sm:$0xff]
  %v19 = vld [vmem:[%s0 + $0x10] sm:$0xff]
  %v20 = vld [vmem:[%s0 + $0x18] sm:$0xff]
  %v21 = vld [vmem:[%s1] sm:$0xff]
  %v22 = vld [vmem:[%s1 + $0x8] sm:$0xff]
  %v23 = vld [vmem:[%s1 + $0x10] sm:$0xff]
  %v24 = vld [vmem:[%s1 + $0x18] sm:$0xff]
  %26 = vset.pattern.permute.xlu0 0
  %27 = vperm.xlu0 %26, %v21
  %v28 = vpop.permute.xlu0 %27
  %31 = vset.pattern.permute.xlu0 0
  %32 = vperm.xlu0 %31, %v22
  %v33 = vpop.permute.xlu0 %32
  %36 = vset.pattern.permute.xlu0 0
  %37 = vperm.xlu0 %36, %v23
  %v38 = vpop.permute.xlu0 %37
  %41 = vset.pattern.permute.xlu0 0
  %42 = vperm.xlu0 %41, %v24
  %v43 = vpop.permute.xlu0 %42
  %v45 = vmul.f32 %v17, %v28
  %v46 = vmul.f32 %v18, %v33
  %v47 = vmul.f32 %v19, %v38
  %v48 = vmul.f32 %v20, %v43
  %v49 = vld [vmem:[%s2] sm:$0xff]
  %v50 = vld [vmem:[%s2 + $0x8] sm:$0xff]
  %v51 = vld [vmem:[%s2 + $0x10] sm:$0xff]
  %v52 = vld [vmem:[%s2 + $0x18] sm:$0xff]
  %54 = vset.pattern.permute.xlu0 0
  %55 = vperm.xlu0 %54, %v49
  %v56 = vpop.permute.xlu0 %55
  %59 = vset.pattern.permute.xlu0 0
  %60 = vperm.xlu0 %59, %v50
  %v61 = vpop.permute.xlu0 %60
  %64 = vset.pattern.permute.xlu0 0
  %65 = vperm.xlu0 %64, %v51
  %v66 = vpop.permute.xlu0 %65
  %69 = vset.pattern.permute.xlu0 0
  %70 = vperm.xlu0 %69, %v52
  %v71 = vpop.permute.xlu0 %70
  %v73 = vadd.f32 %v45, %v56
  %v74 = vadd.f32 %v46, %v61
  %v75 = vadd.f32 %v47, %v66
  %v76 = vadd.f32 %v48, %v71
  %v77 = vmax.f32 %v73, 0.0
  %v78 = vmax.f32 %v74, 0.0
  %v79 = vmax.f32 %v75, 0.0
  %v80 = vmax.f32 %v76, 0.0
  %v81 = vld [vmem:[%s3] sm:$0xff]
  %v82 = vld [vmem:[%s3 + $0x8] sm:$0xff]
  %v83 = vld [vmem:[%s3 + $0x10] sm:$0xff]
  %v84 = vld [vmem:[%s3 + $0x18] sm:$0xff]
  %v85 = vadd.f32 %v77, %v81
  %v86 = vadd.f32 %v78, %v82
  %v87 = vadd.f32 %v79, %v83
  %v88 = vadd.f32 %v80, %v84
  %vm89 = vcmask 261120
  %90 = vst.msk [vmem:[%s4] sm:$0xff] %vm89, %v85
  %91 = vst.msk [vmem:[%s4 + $0x8] sm:$0xff] %vm89, %v86
  %92 = vst.msk [vmem:[%s4 + $0x10] sm:$0xff] %vm89, %v87
  %93 = vst.msk [vmem:[%s4 + $0x18] sm:$0xff] %vm89, %v88
  // Predicated region
  $region18: #{res_unet_att_forward.61} parent=0 // pred_check
    _
  $region19: #{res_unet_att_forward.61} parent=0 // pred_check_branch
    %95 = sbr.rel (0) target = $region21
  $region20: #{res_unet_att_forward.61} parent=0 // pred_region
    _
  $region21: #{res_unet_att_forward.61} parent=0 // pred_fallthru
    _
  // Predicated region
  $region22: #{res_unet_att_forward.61} parent=0 // pred_check
    _
  $region23: #{res_unet_att_forward.61} parent=0 // pred_check_branch
    %97 = sbr.rel (0) target = $region25
  $region24: #{res_unet_att_forward.61} parent=0 // pred_region
    _
  $region25: #{res_unet_att_forward.61} parent=0 // pred_fallthru
    _

// kernel: res_unet_att_forward.60
$region0: #{res_unet_att_forward.60}
  #allocation0 [shape = 'u32[]', space=smem, size = 0x4, offset = 0x4, fixed_abs, tag = 'smem constant byte address 0x4 - core index']
  #allocation1 [shape = 'u32[144,128]{1,0:T(1,128)}', space=vmem, size = 0x12000, scoped, tag = 'internal scratch']
  %s0 = inlined_call_operand.vmem [shape: bf16[32,576], index: 0, kind: input, shape index: {}]
  %s1 = inlined_call_operand.vmem [shape: bf16[576,32], index: 1, kind: input, shape index: {}]
  %s2 = inlined_call_operand.vmem [shape: f32[32,32], index: 2, kind: output, shape index: {0}]
  %s3 = inlined_call_operand.vmem [shape: f32[32,1], index: 3, kind: output, shape index: {1}]
  %s4 = inlined_call_operand.vmem [shape: f32[32,1], index: 4, kind: output, shape index: {2}]
  %5 = xla_tuple %s2, %s3, %s4
  %s6 = sld [smem:[#allocation0]]
  $region38: #{res_unet_att_forward.60} parent=0
    _
  %s8 = ssub.s32 1, %s6
  %s9 = scalar_select 0, %s8, %s6
  // Predicated region
  $region2: #{res_unet_att_forward.60} parent=0 // pred_check
    _
  $region3: #{res_unet_att_forward.60} parent=0 // pred_check_branch
    %11 = sbr.rel (0) target = $region5
  $region4: #{res_unet_att_forward.60} parent=0 // pred_region
    _
  $region5: #{res_unet_att_forward.60} parent=0 // pred_fallthru
    _
  // Predicated region
  $region6: #{res_unet_att_forward.60} parent=0 // pred_check
    _
  $region7: #{res_unet_att_forward.60} parent=0 // pred_check_branch
    %13 = sbr.rel (0) target = $region9
  $region8: #{res_unet_att_forward.60} parent=0 // pred_region
    _
  $region9: #{res_unet_att_forward.60} parent=0 // pred_fallthru
    _
  %v15 = vld [vmem:[%s0] sm:$0xff]
  %v16 = vld [vmem:[%s0 + $0x8] sm:$0xff]
  %v17 = vld [vmem:[%s0 + $0x10] sm:$0xf]
  %v18 = vld [vmem:[%s0 + $0x14] sm:$0xff]
  %v19 = vld [vmem:[%s0 + $0x1c] sm:$0xff]
  %v20 = vld [vmem:[%s0 + $0x24] sm:$0xf]
  %v21 = vld [vmem:[%s0 + $0x28] sm:$0xff]
  %v22 = vld [vmem:[%s0 + $0x30] sm:$0xff]
  %v23 = vld [vmem:[%s0 + $0x38] sm:$0xf]
  %v24 = vld [vmem:[%s0 + $0x3c] sm:$0xff]
  %v25 = vld [vmem:[%s0 + $0x44] sm:$0xff]
  %v26 = vld [vmem:[%s0 + $0x4c] sm:$0xf]
  %v27 = vld [vmem:[%s1] sm:$0xf]
  %v28 = vld [vmem:[%s1 + $0x4] sm:$0xf]
  %v29 = vld [vmem:[%s1 + $0x8] sm:$0xf]
  %v30 = vld [vmem:[%s1 + $0xc] sm:$0xf]
  %v31 = vld [vmem:[%s1 + $0x10] sm:$0xf]
  %v32 = vld [vmem:[%s1 + $0x14] sm:$0xf]
  %v33 = vld [vmem:[%s1 + $0x18] sm:$0xf]
  %v34 = vld [vmem:[%s1 + $0x1c] sm:$0xf]
  %v35 = vld [vmem:[%s1 + $0x20] sm:$0xf]
  %v36 = vld [vmem:[%s1 + $0x24] sm:$0xf]
  %v37 = vld [vmem:[%s1 + $0x28] sm:$0xf]
  %v38 = vld [vmem:[%s1 + $0x2c] sm:$0xf]
  %v39 = vld [vmem:[%s1 + $0x30] sm:$0xf]
  %v40 = vld [vmem:[%s1 + $0x34] sm:$0xf]
  %v41 = vld [vmem:[%s1 + $0x38] sm:$0xf]
  %v42 = vld [vmem:[%s1 + $0x3c] sm:$0xf]
  %v43 = vld [vmem:[%s1 + $0x40] sm:$0xf]
  %v44 = vld [vmem:[%s1 + $0x44] sm:$0xf]
  %v45 = vld [vmem:[%s1 + $0x48] sm:$0xf]
  %v46 = vld [vmem:[%s1 + $0x4c] sm:$0xf]
  %v47 = vld [vmem:[%s1 + $0x50] sm:$0xf]
  %v48 = vld [vmem:[%s1 + $0x54] sm:$0xf]
  %v49 = vld [vmem:[%s1 + $0x58] sm:$0xf]
  %v50 = vld [vmem:[%s1 + $0x5c] sm:$0xf]
  %v51 = vld [vmem:[%s1 + $0x60] sm:$0xf]
  %v52 = vld [vmem:[%s1 + $0x64] sm:$0xf]
  %v53 = vld [vmem:[%s1 + $0x68] sm:$0xf]
  %v54 = vld [vmem:[%s1 + $0x6c] sm:$0xf]
  %v55 = vld [vmem:[%s1 + $0x70] sm:$0xf]
  %v56 = vld [vmem:[%s1 + $0x74] sm:$0xf]
  %v57 = vld [vmem:[%s1 + $0x78] sm:$0xf]
  %v58 = vld [vmem:[%s1 + $0x7c] sm:$0xf]
  %v59 = vld [vmem:[%s1 + $0x80] sm:$0xf]
  %v60 = vld [vmem:[%s1 + $0x84] sm:$0xf]
  %v61 = vld [vmem:[%s1 + $0x88] sm:$0xf]
  %v62 = vld [vmem:[%s1 + $0x8c] sm:$0xf]
  %v63 = vld [vmem:[%s1 + $0x90] sm:$0xf]
  %v64 = vld [vmem:[%s1 + $0x94] sm:$0xf]
  %v65 = vld [vmem:[%s1 + $0x98] sm:$0xf]
  %v66 = vld [vmem:[%s1 + $0x9c] sm:$0xf]
  %v67 = vld [vmem:[%s1 + $0xa0] sm:$0xf]
  %v68 = vld [vmem:[%s1 + $0xa4] sm:$0xf]
  %v69 = vld [vmem:[%s1 + $0xa8] sm:$0xf]
  %v70 = vld [vmem:[%s1 + $0xac] sm:$0xf]
  %v71 = vld [vmem:[%s1 + $0xb0] sm:$0xf]
  %v72 = vld [vmem:[%s1 + $0xb4] sm:$0xf]
  %v73 = vld [vmem:[%s1 + $0xb8] sm:$0xf]
  %v74 = vld [vmem:[%s1 + $0xbc] sm:$0xf]
  %v75 = vld [vmem:[%s1 + $0xc0] sm:$0xf]
  %v76 = vld [vmem:[%s1 + $0xc4] sm:$0xf]
  %v77 = vld [vmem:[%s1 + $0xc8] sm:$0xf]
  %v78 = vld [vmem:[%s1 + $0xcc] sm:$0xf]
  %v79 = vld [vmem:[%s1 + $0xd0] sm:$0xf]
  %v80 = vld [vmem:[%s1 + $0xd4] sm:$0xf]
  %v81 = vld [vmem:[%s1 + $0xd8] sm:$0xf]
  %v82 = vld [vmem:[%s1 + $0xdc] sm:$0xf]
  %v83 = vld [vmem:[%s1 + $0xe0] sm:$0xf]
  %v84 = vld [vmem:[%s1 + $0xe4] sm:$0xf]
  %v85 = vld [vmem:[%s1 + $0xe8] sm:$0xf]
  %v86 = vld [vmem:[%s1 + $0xec] sm:$0xf]
  %v87 = vld [vmem:[%s1 + $0xf0] sm:$0xf]
  %v88 = vld [vmem:[%s1 + $0xf4] sm:$0xf]
  %v89 = vld [vmem:[%s1 + $0xf8] sm:$0xf]
  %v90 = vld [vmem:[%s1 + $0xfc] sm:$0xf]
  %v91 = vld [vmem:[%s1 + $0x100] sm:$0xf]
  %v92 = vld [vmem:[%s1 + $0x104] sm:$0xf]
  %v93 = vld [vmem:[%s1 + $0x108] sm:$0xf]
  %v94 = vld [vmem:[%s1 + $0x10c] sm:$0xf]
  %v95 = vld [vmem:[%s1 + $0x110] sm:$0xf]
  %v96 = vld [vmem:[%s1 + $0x114] sm:$0xf]
  %v97 = vld [vmem:[%s1 + $0x118] sm:$0xf]
  %v98 = vld [vmem:[%s1 + $0x11c] sm:$0xf]
  %v111 = vunpack.c.l.b16 %v15
  %v112 = vunpack.c.h.b16 %v15
  %v113 = vunpack.c.l.b16 %v16
  %v114 = vunpack.c.h.b16 %v16
  %v115 = vunpack.c.l.b16 %v17
  %v116 = vunpack.c.l.b16 %v18
  %v117 = vunpack.c.h.b16 %v18
  %v118 = vunpack.c.l.b16 %v19
  %v119 = vunpack.c.h.b16 %v19
  %v120 = vunpack.c.l.b16 %v20
  %v121 = vunpack.c.l.b16 %v21
  %v122 = vunpack.c.h.b16 %v21
  %v123 = vunpack.c.l.b16 %v22
  %v124 = vunpack.c.h.b16 %v22
  %v125 = vunpack.c.l.b16 %v23
  %v126 = vunpack.c.l.b16 %v24
  %v127 = vunpack.c.h.b16 %v24
  %v128 = vunpack.c.l.b16 %v25
  %v129 = vunpack.c.h.b16 %v25
  %v130 = vunpack.c.l.b16 %v26
  %v131 = vpack.c.b16 %v116, %v111
  %v132 = vpack.c.b16 %v117, %v112
  %v133 = vpack.c.b16 %v118, %v113
  %v134 = vpack.c.b16 %v119, %v114
  %v135 = vpack.c.b16 %v120, %v115
  %v136 = vpack.c.b16 %v126, %v121
  %v137 = vpack.c.b16 %v127, %v122
  %v138 = vpack.c.b16 %v128, %v123
  %v139 = vpack.c.b16 %v129, %v124
  %v140 = vpack.c.b16 %v130, %v125
  %v221 = vunpack.c.l.b16 %v27
  %v222 = vunpack.c.l.b16 %v28
  %v223 = vunpack.c.l.b16 %v29
  %v224 = vunpack.c.l.b16 %v30
  %v225 = vunpack.c.l.b16 %v31
  %v226 = vunpack.c.l.b16 %v32
  %v227 = vunpack.c.l.b16 %v33
  %v228 = vunpack.c.l.b16 %v34
  %v229 = vunpack.c.l.b16 %v35
  %v230 = vunpack.c.l.b16 %v36
  %v231 = vunpack.c.l.b16 %v37
  %v232 = vunpack.c.l.b16 %v38
  %v233 = vunpack.c.l.b16 %v39
  %v234 = vunpack.c.l.b16 %v40
  %v235 = vunpack.c.l.b16 %v41
  %v236 = vunpack.c.l.b16 %v42
  %v237 = vunpack.c.l.b16 %v43
  %v238 = vunpack.c.l.b16 %v44
  %v239 = vunpack.c.l.b16 %v45
  %v240 = vunpack.c.l.b16 %v46
  %v241 = vunpack.c.l.b16 %v47
  %v242 = vunpack.c.l.b16 %v48
  %v243 = vunpack.c.l.b16 %v49
  %v244 = vunpack.c.l.b16 %v50
  %v245 = vunpack.c.l.b16 %v51
  %v246 = vunpack.c.l.b16 %v52
  %v247 = vunpack.c.l.b16 %v53
  %v248 = vunpack.c.l.b16 %v54
  %v249 = vunpack.c.l.b16 %v55
  %v250 = vunpack.c.l.b16 %v56
  %v251 = vunpack.c.l.b16 %v57
  %v252 = vunpack.c.l.b16 %v58
  %v253 = vunpack.c.l.b16 %v59
  %v254 = vunpack.c.l.b16 %v60
  %v255 = vunpack.c.l.b16 %v61
  %v256 = vunpack.c.l.b16 %v62
  %v257 = vunpack.c.l.b16 %v63
  %v258 = vunpack.c.l.b16 %v64
  %v259 = vunpack.c.l.b16 %v65
  %v260 = vunpack.c.l.b16 %v66
  %v261 = vunpack.c.l.b16 %v67
  %v262 = vunpack.c.l.b16 %v68
  %v263 = vunpack.c.l.b16 %v69
  %v264 = vunpack.c.l.b16 %v70
  %v265 = vunpack.c.l.b16 %v71
  %v266 = vunpack.c.l.b16 %v72
  %v267 = vunpack.c.l.b16 %v73
  %v268 = vunpack.c.l.b16 %v74
  %v269 = vunpack.c.l.b16 %v75
  %v270 = vunpack.c.l.b16 %v76
  %v271 = vunpack.c.l.b16 %v77
  %v272 = vunpack.c.l.b16 %v78
  %v273 = vunpack.c.l.b16 %v79
  %v274 = vunpack.c.l.b16 %v80
  %v275 = vunpack.c.l.b16 %v81
  %v276 = vunpack.c.l.b16 %v82
  %v277 = vunpack.c.l.b16 %v83
  %v278 = vunpack.c.l.b16 %v84
  %v279 = vunpack.c.l.b16 %v85
  %v280 = vunpack.c.l.b16 %v86
  %v281 = vunpack.c.l.b16 %v87
  %v282 = vunpack.c.l.b16 %v88
  %v283 = vunpack.c.l.b16 %v89
  %v284 = vunpack.c.l.b16 %v90
  %v285 = vunpack.c.l.b16 %v91
  %v286 = vunpack.c.l.b16 %v92
  %v287 = vunpack.c.l.b16 %v93
  %v288 = vunpack.c.l.b16 %v94
  %v289 = vunpack.c.l.b16 %v95
  %v290 = vunpack.c.l.b16 %v96
  %v291 = vunpack.c.l.b16 %v97
  %v292 = vunpack.c.l.b16 %v98
  %v293 = vpack.c.b16 %v222, %v221
  %v294 = vpack.c.b16 %v224, %v223
  %v295 = vpack.c.b16 %v226, %v225
  %v296 = vpack.c.b16 %v228, %v227
  %v297 = vpack.c.b16 %v230, %v229
  %v298 = vpack.c.b16 %v232, %v231
  %v299 = vpack.c.b16 %v234, %v233
  %v300 = vpack.c.b16 %v236, %v235
  %v301 = vpack.c.b16 %v238, %v237
  %v302 = vpack.c.b16 %v240, %v239
  %v303 = vpack.c.b16 %v242, %v241
  %v304 = vpack.c.b16 %v244, %v243
  %v305 = vpack.c.b16 %v246, %v245
  %v306 = vpack.c.b16 %v248, %v247
  %v307 = vpack.c.b16 %v250, %v249
  %v308 = vpack.c.b16 %v252, %v251
  %v309 = vpack.c.b16 %v254, %v253
  %v310 = vpack.c.b16 %v256, %v255
  %v311 = vpack.c.b16 %v258, %v257
  %v312 = vpack.c.b16 %v260, %v259
  %v313 = vpack.c.b16 %v262, %v261
  %v314 = vpack.c.b16 %v264, %v263
  %v315 = vpack.c.b16 %v266, %v265
  %v316 = vpack.c.b16 %v268, %v267
  %v317 = vpack.c.b16 %v270, %v269
  %v318 = vpack.c.b16 %v272, %v271
  %v319 = vpack.c.b16 %v274, %v273
  %v320 = vpack.c.b16 %v276, %v275
  %v321 = vpack.c.b16 %v278, %v277
  %v322 = vpack.c.b16 %v280, %v279
  %v323 = vpack.c.b16 %v282, %v281
  %v324 = vpack.c.b16 %v284, %v283
  %v325 = vpack.c.b16 %v286, %v285
  %v326 = vpack.c.b16 %v288, %v287
  %v327 = vpack.c.b16 %v290, %v289
  %v328 = vpack.c.b16 %v292, %v291
  %vm365 = vcmask 523264
  %v367 = vsel %vm365, %v135, 0
  %v370 = vsel %vm365, %v140, 0
  %372 = vmatprep.subr.bf16.mxu0 0
  %373 = vmatpush1.bf16.msra.mxu0 %v293
  %374 = vmatprep.subr.bf16.mxu0 0
  %375 = vmatpush1.bf16.msra.mxu0 %v294
  %376 = vmatprep.subr.bf16.mxu0 0
  %377 = vmatpush1.bf16.msra.mxu0 %v295
  %378 = vmatprep.subr.bf16.mxu0 0
  %379 = vmatpush1.bf16.msra.mxu0 %v296
  %380 = vmatprep.subr.bf16.mxu0 0
  %381 = vmatpush1.bf16.msra.mxu0 %v297
  %382 = vmatprep.subr.bf16.mxu0 0
  %383 = vmatpush1.bf16.msra.mxu0 %v298
  %384 = vmatprep.subr.bf16.mxu0 0
  %385 = vmatpush1.bf16.msra.mxu0 %v299
  %386 = vmatprep.subr.bf16.mxu0 0
  %387 = vmatpush1.bf16.msra.mxu0 %v300
  %388 = vmatprep.subr.bf16.mxu0 0
  %389 = vmatpush1.bf16.msra.mxu0 %v301
  %390 = vmatprep.subr.bf16.mxu0 0
  %391 = vmatpush1.bf16.msra.mxu0 %v302
  %392 = vmatprep.subr.bf16.mxu0 0
  %393 = vmatpush1.bf16.msra.mxu0 %v303
  %394 = vmatprep.subr.bf16.mxu0 0
  %395 = vmatpush1.bf16.msra.mxu0 %v304
  %396 = vmatprep.subr.bf16.mxu0 0
  %397 = vmatpush1.bf16.msra.mxu0 %v305
  %398 = vmatprep.subr.bf16.mxu0 0
  %399 = vmatpush1.bf16.msra.mxu0 %v306
  %400 = vmatprep.subr.bf16.mxu0 0
  %401 = vmatpush1.bf16.msra.mxu0 %v307
  %402 = vmatprep.subr.bf16.mxu0 0
  %403 = vmatpush1.bf16.msra.mxu0 %v308
  %404 = vmatprep.mubr.bf16.mxu0 %v132
  %405 = vmatmul.mubr.bf16.gmra.mrb[0].mxu0 %v131
  %v406 = vpop.f32.mrb[0].mxu0
  %v407 = vadd.f32 0.0, %v406
  %v408 = vpop.f32.mrb[0].mxu0
  %v409 = vpop.f32.mrb[0].mxu0
  %v410 = vadd.f32 0.0, %v409
  %v411 = vpop.f32.mrb[0].mxu0
  %412 = vmatprep.mubr.bf16.mxu0 %v137
  %413 = vmatmul.mubr.bf16.gmra.mrb[0].mxu0 %v136
  %v414 = vpop.f32.mrb[0].mxu0
  %v415 = vadd.f32 0.0, %v414
  %v416 = vpop.f32.mrb[0].mxu0
  %v417 = vpop.f32.mrb[0].mxu0
  %v418 = vadd.f32 0.0, %v417
  %v419 = vpop.f32.mrb[0].mxu0
  %420 = vdwg.mxu0
  %421 = vmatprep.subr.bf16.mxu0 0
  %422 = vmatpush1.bf16.msra.mxu0 %v309
  %423 = vmatprep.subr.bf16.mxu0 0
  %424 = vmatpush1.bf16.msra.mxu0 %v310
  %425 = vmatprep.subr.bf16.mxu0 0
  %426 = vmatpush1.bf16.msra.mxu0 %v311
  %427 = vmatprep.subr.bf16.mxu0 0
  %428 = vmatpush1.bf16.msra.mxu0 %v312
  %429 = vmatprep.subr.bf16.mxu0 0
  %430 = vmatpush1.bf16.msra.mxu0 %v313
  %431 = vmatprep.subr.bf16.mxu0 0
  %432 = vmatpush1.bf16.msra.mxu0 %v314
  %433 = vmatprep.subr.bf16.mxu0 0
  %434 = vmatpush1.bf16.msra.mxu0 %v315
  %435 = vmatprep.subr.bf16.mxu0 0
  %436 = vmatpush1.bf16.msra.mxu0 %v316
  %437 = vmatprep.subr.bf16.mxu0 0
  %438 = vmatpush1.bf16.msra.mxu0 %v317
  %439 = vmatprep.subr.bf16.mxu0 0
  %440 = vmatpush1.bf16.msra.mxu0 %v318
  %441 = vmatprep.subr.bf16.mxu0 0
  %442 = vmatpush1.bf16.msra.mxu0 %v319
  %443 = vmatprep.subr.bf16.mxu0 0
  %444 = vmatpush1.bf16.msra.mxu0 %v320
  %445 = vmatprep.subr.bf16.mxu0 0
  %446 = vmatpush1.bf16.msra.mxu0 %v321
  %447 = vmatprep.subr.bf16.mxu0 0
  %448 = vmatpush1.bf16.msra.mxu0 %v322
  %449 = vmatprep.subr.bf16.mxu0 0
  %450 = vmatpush1.bf16.msra.mxu0 %v323
  %451 = vmatprep.subr.bf16.mxu0 0
  %452 = vmatpush1.bf16.msra.mxu0 %v324
  %453 = vmatprep.mubr.bf16.mxu0 %v134
  %454 = vmatmul.mubr.bf16.gmra.mrb[0].mxu0 %v133
  %v455 = vpop.f32.mrb[0].mxu0
  %v456 = vadd.f32 %v407, %v455
  %v457 = vpop.f32.mrb[0].mxu0
  %v458 = vpop.f32.mrb[0].mxu0
  %v459 = vadd.f32 %v410, %v458
  %v460 = vpop.f32.mrb[0].mxu0
  %461 = vmatprep.mubr.bf16.mxu0 %v139
  %462 = vmatmul.mubr.bf16.gmra.mrb[0].mxu0 %v138
  %v463 = vpop.f32.mrb[0].mxu0
  %v464 = vadd.f32 %v415, %v463
  %v465 = vpop.f32.mrb[0].mxu0
  %v466 = vpop.f32.mrb[0].mxu0
  %v467 = vadd.f32 %v418, %v466
  %v468 = vpop.f32.mrb[0].mxu0
  %469 = vdwg.mxu0
  %470 = vmatprep.subr.bf16.mxu0 0
  %471 = vmatpush1.bf16.msra.mxu0 %v325
  %472 = vmatprep.subr.bf16.mxu0 0
  %473 = vmatpush1.bf16.msra.mxu0 %v326
  %474 = vmatprep.subr.bf16.mxu0 0
  %475 = vmatpush1.bf16.msra.mxu0 %v327
  %476 = vmatprep.subr.bf16.mxu0 0
  %477 = vmatpush1.bf16.msra.mxu0 %v328
  %478 = vmatprep.subr.bf16.mxu0 0
  %479 = vmatpush1.bf16.msra.mxu0 0
  %480 = vmatprep.subr.bf16.mxu0 0
  %481 = vmatpush1.bf16.msra.mxu0 0
  %482 = vmatprep.subr.bf16.mxu0 0
  %483 = vmatpush1.bf16.msra.mxu0 0
  %484 = vmatprep.subr.bf16.mxu0 0
  %485 = vmatpush1.bf16.msra.mxu0 0
  %486 = vmatprep.subr.bf16.mxu0 0
  %487 = vmatpush1.bf16.msra.mxu0 0
  %488 = vmatprep.subr.bf16.mxu0 0
  %489 = vmatpush1.bf16.msra.mxu0 0
  %490 = vmatprep.subr.bf16.mxu0 0
  %491 = vmatpush1.bf16.msra.mxu0 0
  %492 = vmatprep.subr.bf16.mxu0 0
  %493 = vmatpush1.bf16.msra.mxu0 0
  %494 = vmatprep.subr.bf16.mxu0 0
  %495 = vmatpush1.bf16.msra.mxu0 0
  %496 = vmatprep.subr.bf16.mxu0 0
  %497 = vmatpush1.bf16.msra.mxu0 0
  %498 = vmatprep.subr.bf16.mxu0 0
  %499 = vmatpush1.bf16.msra.mxu0 0
  %500 = vmatprep.subr.bf16.mxu0 0
  %501 = vmatpush1.bf16.msra.mxu0 0
  %502 = vmatprep.mubr.bf16.mxu0 0
  %503 = vmatmul.mubr.bf16.gmra.mrb[0].mxu0 %v367
  %v504 = vpop.f32.mrb[0].mxu0
  %v505 = vadd.f32 %v456, %v504
  %v506 = vpop.f32.mrb[0].mxu0
  %v507 = vpop.f32.mrb[0].mxu0
  %v508 = vadd.f32 %v459, %v507
  %v509 = vpop.f32.mrb[0].mxu0
  %510 = vmatprep.mubr.bf16.mxu0 0
  %511 = vmatmul.mubr.bf16.gmra.mrb[0].mxu0 %v370
  %v512 = vpop.f32.mrb[0].mxu0
  %v513 = vadd.f32 %v464, %v512
  %v514 = vpop.f32.mrb[0].mxu0
  %v515 = vpop.f32.mrb[0].mxu0
  %v516 = vadd.f32 %v467, %v515
  %v517 = vpop.f32.mrb[0].mxu0
  %518 = vdwg.mxu0
  %vm519 = vcmask 261120
  %520 = vst.msk [vmem:[%s2] sm:$0xff] %vm519, %v505
  %521 = vst.msk [vmem:[%s2 + $0x8] sm:$0xff] %vm519, %v508
  %522 = vst.msk [vmem:[%s2 + $0x10] sm:$0xff] %vm519, %v513
  %523 = vst.msk [vmem:[%s2 + $0x18] sm:$0xff] %vm519, %v516
  %p524 = scmp.eq.s32.totalorder 0, 0
  // Predicated region
  $region10: #{res_unet_att_forward.60} parent=0 // pred_check
    %p525 = pneg %p524
  $region11: #{res_unet_att_forward.60} parent=0 // pred_check_branch
    %527 = sbr.rel (%p525) target = $region13
  $region12: #{res_unet_att_forward.60} parent=0 // pred_region
    %vm528 = vcmask 7168
    %529 = vst.msk [vmem:[%s3] sm:$0xff] %vm528, 0.0
    %530 = vst.msk [vmem:[%s3 + $0x8] sm:$0xff] %vm528, 0.0
    %531 = vst.msk [vmem:[%s3 + $0x10] sm:$0xff] %vm528, 0.0
    %532 = vst.msk [vmem:[%s3 + $0x18] sm:$0xff] %vm528, 0.0
    %533 = vst.msk [vmem:[%s4] sm:$0xff] %vm528, 0.0
    %534 = vst.msk [vmem:[%s4 + $0x8] sm:$0xff] %vm528, 0.0
    %535 = vst.msk [vmem:[%s4 + $0x10] sm:$0xff] %vm528, 0.0
    %536 = vst.msk [vmem:[%s4 + $0x18] sm:$0xff] %vm528, 0.0
  $region13: #{res_unet_att_forward.60} parent=0 // pred_fallthru
    _
  %v537 = vld [vmem:[%s3] sm:$0xff]
  %v538 = vld [vmem:[%s3 + $0x8] sm:$0xff]
  %v539 = vld [vmem:[%s3 + $0x10] sm:$0xff]
  %v540 = vld [vmem:[%s3 + $0x18] sm:$0xff]
  %v541 = vsel %vm519, %v505, 0.0
  %542 = vadd.xlane.f32.xlu0 %v541
  %v543 = vpop.xlane.xlu0 %542
  %v544 = vsel %vm519, %v508, 0.0
  %545 = vadd.xlane.f32.xlu0 %v544
  %v546 = vpop.xlane.xlu0 %545
  %v547 = vsel %vm519, %v513, 0.0
  %548 = vadd.xlane.f32.xlu0 %v547
  %v549 = vpop.xlane.xlu0 %548
  %v550 = vsel %vm519, %v516, 0.0
  %551 = vadd.xlane.f32.xlu0 %v550
  %v552 = vpop.xlane.xlu0 %551
  %v553 = vadd.f32 %v537, %v543
  %v554 = vadd.f32 %v538, %v546
  %v555 = vadd.f32 %v539, %v549
  %v556 = vadd.f32 %v540, %v552
  %vm557 = vcmask 7168
  %558 = vst.msk [vmem:[%s3] sm:$0xff] %vm557, %v553
  %559 = vst.msk [vmem:[%s3 + $0x8] sm:$0xff] %vm557, %v554
  %560 = vst.msk [vmem:[%s3 + $0x10] sm:$0xff] %vm557, %v555
  %561 = vst.msk [vmem:[%s3 + $0x18] sm:$0xff] %vm557, %v556
  %v562 = vld [vmem:[%s4] sm:$0xff]
  %v563 = vld [vmem:[%s4 + $0x8] sm:$0xff]
  %v564 = vld [vmem:[%s4 + $0x10] sm:$0xff]
  %v565 = vld [vmem:[%s4 + $0x18] sm:$0xff]
  %v566 = vmul.f32 %v505, %v505
  %v567 = vmul.f32 %v508, %v508
  %v568 = vmul.f32 %v513, %v513
  %v569 = vmul.f32 %v516, %v516
  %v570 = vsel %vm519, %v566, 0.0
  %571 = vadd.xlane.f32.xlu0 %v570
  %v572 = vpop.xlane.xlu0 %571
  %v573 = vsel %vm519, %v567, 0.0
  %574 = vadd.xlane.f32.xlu0 %v573
  %v575 = vpop.xlane.xlu0 %574
  %v576 = vsel %vm519, %v568, 0.0
  %577 = vadd.xlane.f32.xlu0 %v576
  %v578 = vpop.xlane.xlu0 %577
  %v579 = vsel %vm519, %v569, 0.0
  %580 = vadd.xlane.f32.xlu0 %v579
  %v581 = vpop.xlane.xlu0 %580
  %v582 = vadd.f32 %v562, %v572
  %v583 = vadd.f32 %v563, %v575
  %v584 = vadd.f32 %v564, %v578
  %v585 = vadd.f32 %v565, %v581
  %586 = vst.msk [vmem:[%s4] sm:$0xff] %vm557, %v582
  %587 = vst.msk [vmem:[%s4 + $0x8] sm:$0xff] %vm557, %v583
  %588 = vst.msk [vmem:[%s4 + $0x10] sm:$0xff] %vm557, %v584
  %589 = vst.msk [vmem:[%s4 + $0x18] sm:$0xff] %vm557, %v585
  // Predicated region
  $region14: #{res_unet_att_forward.60} parent=0 // pred_check
    _
  $region15: #{res_unet_att_forward.60} parent=0 // pred_check_branch
    %591 = sbr.rel (0) target = $region17
  $region16: #{res_unet_att_forward.60} parent=0 // pred_region
    _
  $region17: #{res_unet_att_forward.60} parent=0 // pred_fallthru
    _
  // Predicated region
  $region18: #{res_unet_att_forward.60} parent=0 // pred_check
    _
  $region19: #{res_unet_att_forward.60} parent=0 // pred_check_branch
    %593 = sbr.rel (0) target = $region21
  $region20: #{res_unet_att_forward.60} parent=0 // pred_region
    _
  $region21: #{res_unet_att_forward.60} parent=0 // pred_fallthru
    _
  // Predicated region
  $region22: #{res_unet_att_forward.60} parent=0 // pred_check
    _
  $region23: #{res_unet_att_forward.60} parent=0 // pred_check_branch
    %595 = sbr.rel (0) target = $region25
  $region24: #{res_unet_att_forward.60} parent=0 // pred_region
    _
  $region25: #{res_unet_att_forward.60} parent=0 // pred_fallthru
    _
  // Predicated region
  $region26: #{res_unet_att_forward.60} parent=0 // pred_check
    _
  $region27: #{res_unet_att_forward.60} parent=0 // pred_check_branch
    %597 = sbr.rel (0) target = $region29
  $region28: #{res_unet_att_forward.60} parent=0 // pred_region
    _
  $region29: #{res_unet_att_forward.60} parent=0 // pred_fallthru
    _
  // Predicated region
  $region30: #{res_unet_att_forward.60} parent=0 // pred_check
    _
  $region31: #{res_unet_att_forward.60} parent=0 // pred_check_branch
    %599 = sbr.rel (0) target = $region33
  $region32: #{res_unet_att_forward.60} parent=0 // pred_region
    _
  $region33: #{res_unet_att_forward.60} parent=0 // pred_fallthru
    _
  // Predicated region
  $region34: #{res_unet_att_forward.60} parent=0 // pred_check
    _
  $region35: #{res_unet_att_forward.60} parent=0 // pred_check_branch
    %601 = sbr.rel (0) target = $region37
  $region36: #{res_unet_att_forward.60} parent=0 // pred_region
    _
  $region37: #{res_unet_att_forward.60} parent=0 // pred_fallthru
    _

// kernel: res_unet_att_forward.62
$region0: #{res_unet_att_forward.62}
  #allocation0 [shape = 'u32[]', space=smem, size = 0x4, offset = 0x4, fixed_abs, tag = 'smem constant byte address 0x4 - core index']
  #allocation1 [shape = 'u32[144,128]{1,0:T(1,128)}', space=vmem, size = 0x12000, scoped, tag = 'internal scratch']
  %s0 = inlined_call_operand.vmem [shape: bf16[16,288], index: 0, kind: input, shape index: {}]
  %s1 = inlined_call_operand.vmem [shape: bf16[288,128], index: 1, kind: input, shape index: {}]
  %s2 = inlined_call_operand.vmem [shape: f32[16,128], index: 2, kind: output, shape index: {0}]
  %s3 = inlined_call_operand.vmem [shape: f32[16,1], index: 3, kind: output, shape index: {1}]
  %s4 = inlined_call_operand.vmem [shape: f32[16,1], index: 4, kind: output, shape index: {2}]
  %5 = xla_tuple %s2, %s3, %s4
  %s6 = sld [smem:[#allocation0]]
  $region38: #{res_unet_att_forward.62} parent=0
    _
  %s8 = ssub.s32 1, %s6
  %s9 = scalar_select 0, %s8, %s6
  // Predicated region
  $region2: #{res_unet_att_forward.62} parent=0 // pred_check
    _
  $region3: #{res_unet_att_forward.62} parent=0 // pred_check_branch
    %11 = sbr.rel (0) target = $region5
  $region4: #{res_unet_att_forward.62} parent=0 // pred_region
    _
  $region5: #{res_unet_att_forward.62} parent=0 // pred_fallthru
    _
  // Predicated region
  $region6: #{res_unet_att_forward.62} parent=0 // pred_check
    _
  $region7: #{res_unet_att_forward.62} parent=0 // pred_check_branch
    %13 = sbr.rel (0) target = $region9
  $region8: #{res_unet_att_forward.62} parent=0 // pred_region
    _
  $region9: #{res_unet_att_forward.62} parent=0 // pred_fallthru
    _
  %v15 = vld [vmem:[%s0] sm:$0xff]
  %v16 = vld [vmem:[%s0 + $0x8] sm:$0xf]
  %v17 = vld [vmem:[%s0 + $0xc] sm:$0xff]
  %v18 = vld [vmem:[%s0 + $0x14] sm:$0xf]
  %v19 = vld [vmem:[%s1] sm:$0xf]
  %v20 = vld [vmem:[%s1 + $0x4] sm:$0xf]
  %v21 = vld [vmem:[%s1 + $0x8] sm:$0xf]
  %v22 = vld [vmem:[%s1 + $0xc] sm:$0xf]
  %v23 = vld [vmem:[%s1 + $0x10] sm:$0xf]
  %v24 = vld [vmem:[%s1 + $0x14] sm:$0xf]
  %v25 = vld [vmem:[%s1 + $0x18] sm:$0xf]
  %v26 = vld [vmem:[%s1 + $0x1c] sm:$0xf]
  %v27 = vld [vmem:[%s1 + $0x20] sm:$0xf]
  %v28 = vld [vmem:[%s1 + $0x24] sm:$0xf]
  %v29 = vld [vmem:[%s1 + $0x28] sm:$0xf]
  %v30 = vld [vmem:[%s1 + $0x2c] sm:$0xf]
  %v31 = vld [vmem:[%s1 + $0x30] sm:$0xf]
  %v32 = vld [vmem:[%s1 + $0x34] sm:$0xf]
  %v33 = vld [vmem:[%s1 + $0x38] sm:$0xf]
  %v34 = vld [vmem:[%s1 + $0x3c] sm:$0xf]
  %v35 = vld [vmem:[%s1 + $0x40] sm:$0xf]
  %v36 = vld [vmem:[%s1 + $0x44] sm:$0xf]
  %v37 = vld [vmem:[%s1 + $0x48] sm:$0xf]
  %v38 = vld [vmem:[%s1 + $0x4c] sm:$0xf]
  %v39 = vld [vmem:[%s1 + $0x50] sm:$0xf]
  %v40 = vld [vmem:[%s1 + $0x54] sm:$0xf]
  %v41 = vld [vmem:[%s1 + $0x58] sm:$0xf]
  %v42 = vld [vmem:[%s1 + $0x5c] sm:$0xf]
  %v43 = vld [vmem:[%s1 + $0x60] sm:$0xf]
  %v44 = vld [vmem:[%s1 + $0x64] sm:$0xf]
  %v45 = vld [vmem:[%s1 + $0x68] sm:$0xf]
  %v46 = vld [vmem:[%s1 + $0x6c] sm:$0xf]
  %v47 = vld [vmem:[%s1 + $0x70] sm:$0xf]
  %v48 = vld [vmem:[%s1 + $0x74] sm:$0xf]
  %v49 = vld [vmem:[%s1 + $0x78] sm:$0xf]
  %v50 = vld [vmem:[%s1 + $0x7c] sm:$0xf]
  %v51 = vld [vmem:[%s1 + $0x80] sm:$0xf]
  %v52 = vld [vmem:[%s1 + $0x84] sm:$0xf]
  %v53 = vld [vmem:[%s1 + $0x88] sm:$0xf]
  %v54 = vld [vmem:[%s1 + $0x8c] sm:$0xf]
  %v59 = vunpack.c.l.b16 %v15
  %v60 = vunpack.c.h.b16 %v15
  %v61 = vunpack.c.l.b16 %v16
  %v62 = vunpack.c.l.b16 %v17
  %v63 = vunpack.c.h.b16 %v17
  %v64 = vunpack.c.l.b16 %v18
  %v65 = vpack.c.b16 %v62, %v59
  %v66 = vpack.c.b16 %v63, %v60
  %v67 = vpack.c.b16 %v64, %v61
  %v106 = vunpack.c.l.b16 %v19
  %v107 = vunpack.c.l.b16 %v20
  %v108 = vunpack.c.l.b16 %v21
  %v109 = vunpack.c.l.b16 %v22
  %v110 = vunpack.c.l.b16 %v23
  %v111 = vunpack.c.l.b16 %v24
  %v112 = vunpack.c.l.b16 %v25
  %v113 = vunpack.c.l.b16 %v26
  %v114 = vunpack.c.l.b16 %v27
  %v115 = vunpack.c.l.b16 %v28
  %v116 = vunpack.c.l.b16 %v29
  %v117 = vunpack.c.l.b16 %v30
  %v118 = vunpack.c.l.b16 %v31
  %v119 = vunpack.c.l.b16 %v32
  %v120 = vunpack.c.l.b16 %v33
  %v121 = vunpack.c.l.b16 %v34
  %v122 = vunpack.c.l.b16 %v35
  %v123 = vunpack.c.l.b16 %v36
  %v124 = vunpack.c.l.b16 %v37
  %v125 = vunpack.c.l.b16 %v38
  %v126 = vunpack.c.l.b16 %v39
  %v127 = vunpack.c.l.b16 %v40
  %v128 = vunpack.c.l.b16 %v41
  %v129 = vunpack.c.l.b16 %v42
  %v130 = vunpack.c.l.b16 %v43
  %v131 = vunpack.c.l.b16 %v44
  %v132 = vunpack.c.l.b16 %v45
  %v133 = vunpack.c.l.b16 %v46
  %v134 = vunpack.c.l.b16 %v47
  %v135 = vunpack.c.l.b16 %v48
  %v136 = vunpack.c.l.b16 %v49
  %v137 = vunpack.c.l.b16 %v50
  %v138 = vunpack.c.l.b16 %v51
  %v139 = vunpack.c.l.b16 %v52
  %v140 = vunpack.c.l.b16 %v53
  %v141 = vunpack.c.l.b16 %v54
  %v142 = vpack.c.b16 %v107, %v106
  %v143 = vpack.c.b16 %v109, %v108
  %v144 = vpack.c.b16 %v111, %v110
  %v145 = vpack.c.b16 %v113, %v112
  %v146 = vpack.c.b16 %v115, %v114
  %v147 = vpack.c.b16 %v117, %v116
  %v148 = vpack.c.b16 %v119, %v118
  %v149 = vpack.c.b16 %v121, %v120
  %v150 = vpack.c.b16 %v123, %v122
  %v151 = vpack.c.b16 %v125, %v124
  %v152 = vpack.c.b16 %v127, %v126
  %v153 = vpack.c.b16 %v129, %v128
  %v154 = vpack.c.b16 %v131, %v130
  %v155 = vpack.c.b16 %v133, %v132
  %v156 = vpack.c.b16 %v135, %v134
  %v157 = vpack.c.b16 %v137, %v136
  %v158 = vpack.c.b16 %v139, %v138
  %v159 = vpack.c.b16 %v141, %v140
  %vm178 = vcmask 261120
  %v180 = vsel %vm178, %v67, 0
  %182 = vmatprep.subr.bf16.mxu0 0
  %183 = vmatpush1.bf16.msra.mxu0 %v142
  %184 = vmatprep.subr.bf16.mxu0 0
  %185 = vmatpush1.bf16.msra.mxu0 %v143
  %186 = vmatprep.subr.bf16.mxu0 0
  %187 = vmatpush1.bf16.msra.mxu0 %v144
  %188 = vmatprep.subr.bf16.mxu0 0
  %189 = vmatpush1.bf16.msra.mxu0 %v145
  %190 = vmatprep.subr.bf16.mxu0 0
  %191 = vmatpush1.bf16.msra.mxu0 %v146
  %192 = vmatprep.subr.bf16.mxu0 0
  %193 = vmatpush1.bf16.msra.mxu0 %v147
  %194 = vmatprep.subr.bf16.mxu0 0
  %195 = vmatpush1.bf16.msra.mxu0 %v148
  %196 = vmatprep.subr.bf16.mxu0 0
  %197 = vmatpush1.bf16.msra.mxu0 %v149
  %198 = vmatprep.subr.bf16.mxu0 0
  %199 = vmatpush1.bf16.msra.mxu0 %v150
  %200 = vmatprep.subr.bf16.mxu0 0
  %201 = vmatpush1.bf16.msra.mxu0 %v151
  %202 = vmatprep.subr.bf16.mxu0 0
  %203 = vmatpush1.bf16.msra.mxu0 %v152
  %204 = vmatprep.subr.bf16.mxu0 0
  %205 = vmatpush1.bf16.msra.mxu0 %v153
  %206 = vmatprep.subr.bf16.mxu0 0
  %207 = vmatpush1.bf16.msra.mxu0 %v154
  %208 = vmatprep.subr.bf16.mxu0 0
  %209 = vmatpush1.bf16.msra.mxu0 %v155
  %210 = vmatprep.subr.bf16.mxu0 0
  %211 = vmatpush1.bf16.msra.mxu0 %v156
  %212 = vmatprep.subr.bf16.mxu0 0
  %213 = vmatpush1.bf16.msra.mxu0 %v157
  %214 = vmatprep.mubr.bf16.mxu0 %v66
  %215 = vmatmul.mubr.bf16.gmra.mrb[0].mxu0 %v65
  %v216 = vpop.f32.mrb[0].mxu0
  %v217 = vadd.f32 0.0, %v216
  %v218 = vpop.f32.mrb[0].mxu0
  %v219 = vpop.f32.mrb[0].mxu0
  %v220 = vadd.f32 0.0, %v219
  %v221 = vpop.f32.mrb[0].mxu0
  %222 = vdwg.mxu0
  %223 = vmatprep.subr.bf16.mxu0 0
  %224 = vmatpush1.bf16.msra.mxu0 %v158
  %225 = vmatprep.subr.bf16.mxu0 0
  %226 = vmatpush1.bf16.msra.mxu0 %v159
  %227 = vmatprep.subr.bf16.mxu0 0
  %228 = vmatpush1.bf16.msra.mxu0 0
  %229 = vmatprep.subr.bf16.mxu0 0
  %230 = vmatpush1.bf16.msra.mxu0 0
  %231 = vmatprep.subr.bf16.mxu0 0
  %232 = vmatpush1.bf16.msra.mxu0 0
  %233 = vmatprep.subr.bf16.mxu0 0
  %234 = vmatpush1.bf16.msra.mxu0 0
  %235 = vmatprep.subr.bf16.mxu0 0
  %236 = vmatpush1.bf16.msra.mxu0 0
  %237 = vmatprep.subr.bf16.mxu0 0
  %238 = vmatpush1.bf16.msra.mxu0 0
  %239 = vmatprep.subr.bf16.mxu0 0
  %240 = vmatpush1.bf16.msra.mxu0 0
  %241 = vmatprep.subr.bf16.mxu0 0
  %242 = vmatpush1.bf16.msra.mxu0 0
  %243 = vmatprep.subr.bf16.mxu0 0
  %244 = vmatpush1.bf16.msra.mxu0 0
  %245 = vmatprep.subr.bf16.mxu0 0
  %246 = vmatpush1.bf16.msra.mxu0 0
  %247 = vmatprep.subr.bf16.mxu0 0
  %248 = vmatpush1.bf16.msra.mxu0 0
  %249 = vmatprep.subr.bf16.mxu0 0
  %250 = vmatpush1.bf16.msra.mxu0 0
  %251 = vmatprep.subr.bf16.mxu0 0
  %252 = vmatpush1.bf16.msra.mxu0 0
  %253 = vmatprep.subr.bf16.mxu0 0
  %254 = vmatpush1.bf16.msra.mxu0 0
  %255 = vmatprep.mubr.bf16.mxu0 0
  %256 = vmatmul.mubr.bf16.gmra.mrb[0].mxu0 %v180
  %v257 = vpop.f32.mrb[0].mxu0
  %v258 = vadd.f32 %v217, %v257
  %v259 = vpop.f32.mrb[0].mxu0
  %v260 = vpop.f32.mrb[0].mxu0
  %v261 = vadd.f32 %v220, %v260
  %v262 = vpop.f32.mrb[0].mxu0
  %263 = vdwg.mxu0
  %264 = vst [vmem:[%s2] sm:$0xff] %v258
  %265 = vst [vmem:[%s2 + $0x8] sm:$0xff] %v261
  %p266 = scmp.eq.s32.totalorder 0, 0
  // Predicated region
  $region10: #{res_unet_att_forward.62} parent=0 // pred_check
    %p267 = pneg %p266
  $region11: #{res_unet_att_forward.62} parent=0 // pred_check_branch
    %269 = sbr.rel (%p267) target = $region13
  $region12: #{res_unet_att_forward.62} parent=0 // pred_region
    %vm270 = vcmask 7168
    %271 = vst.msk [vmem:[%s3] sm:$0xff] %vm270, 0.0
    %272 = vst.msk [vmem:[%s3 + $0x8] sm:$0xff] %vm270, 0.0
    %273 = vst.msk [vmem:[%s4] sm:$0xff] %vm270, 0.0
    %274 = vst.msk [vmem:[%s4 + $0x8] sm:$0xff] %vm270, 0.0
  $region13: #{res_unet_att_forward.62} parent=0 // pred_fallthru
    _
  %v275 = vld [vmem:[%s3] sm:$0xff]
  %v276 = vld [vmem:[%s3 + $0x8] sm:$0xff]
  %277 = vadd.xlane.f32.xlu0 %v258
  %v278 = vpop.xlane.xlu0 %277
  %279 = vadd.xlane.f32.xlu0 %v261
  %v280 = vpop.xlane.xlu0 %279
  %v281 = vadd.f32 %v275, %v278
  %v282 = vadd.f32 %v276, %v280
  %vm283 = vcmask 7168
  %284 = vst.msk [vmem:[%s3] sm:$0xff] %vm283, %v281
  %285 = vst.msk [vmem:[%s3 + $0x8] sm:$0xff] %vm283, %v282
  %v286 = vld [vmem:[%s4] sm:$0xff]
  %v287 = vld [vmem:[%s4 + $0x8] sm:$0xff]
  %v288 = vmul.f32 %v258, %v258
  %v289 = vmul.f32 %v261, %v261
  %290 = vadd.xlane.f32.xlu0 %v288
  %v291 = vpop.xlane.xlu0 %290
  %292 = vadd.xlane.f32.xlu0 %v289
  %v293 = vpop.xlane.xlu0 %292
  %v294 = vadd.f32 %v286, %v291
  %v295 = vadd.f32 %v287, %v293
  %296 = vst.msk [vmem:[%s4] sm:$0xff] %vm283, %v294
  %297 = vst.msk [vmem:[%s4 + $0x8] sm:$0xff] %vm283, %v295
  // Predicated region
  $region14: #{res_unet_att_forward.62} parent=0 // pred_check
    _
  $region15: #{res_unet_att_forward.62} parent=0 // pred_check_branch
    %299 = sbr.rel (0) target = $region17
  $region16: #{res_unet_att_forward.62} parent=0 // pred_region
    _
  $region17: #{res_unet_att_forward.62} parent=0 // pred_fallthru
    _
  // Predicated region
  $region18: #{res_unet_att_forward.62} parent=0 // pred_check
    _
  $region19: #{res_unet_att_forward.62} parent=0 // pred_check_branch
    %301 = sbr.rel (0) target = $region21
  $region20: #{res_unet_att_forward.62} parent=0 // pred_region
    _
  $region21: #{res_unet_att_forward.62} parent=0 // pred_fallthru
    _
  // Predicated region
  $region22: #{res_unet_att_forward.62} parent=0 // pred_check
    _
  $region23: #{res_unet_att_forward.62} parent=0 // pred_check_branch
    %303 = sbr.rel (0) target = $region25
  $region24: #{res_unet_att_forward.62} parent=0 // pred_region
    _
  $region25: #{res_unet_att_forward.62} parent=0 // pred_fallthru
    _
  // Predicated region
  $region26: #{res_unet_att_forward.62} parent=0 // pred_check
    _
  $region27: #{res_unet_att_forward.62} parent=0 // pred_check_branch
    %305 = sbr.rel (0) target = $region29
  $region28: #{res_unet_att_forward.62} parent=0 // pred_region
    _
  $region29: #{res_unet_att_forward.62} parent=0 // pred_fallthru
    _
  // Predicated region
  $region30: #{res_unet_att_forward.62} parent=0 // pred_check
    _
  $region31: #{res_unet_att_forward.62} parent=0 // pred_check_branch
    %307 = sbr.rel (0) target = $region33
  $region32: #{res_unet_att_forward.62} parent=0 // pred_region
    _
  $region33: #{res_unet_att_forward.62} parent=0 // pred_fallthru
    _
  // Predicated region
  $region34: #{res_unet_att_forward.62} parent=0 // pred_check
    _
  $region35: #{res_unet_att_forward.62} parent=0 // pred_check_branch
    %309 = sbr.rel (0) target = $region37
  $region36: #{res_unet_att_forward.62} parent=0 // pred_region
    _
  $region37: #{res_unet_att_forward.62} parent=0 // pred_fallthru
    _

// kernel: res_unet_att_forward.63
$region0: #{res_unet_att_forward.63}
  #allocation0 [shape = 'u32[]', space=smem, size = 0x4, offset = 0x4, fixed_abs, tag = 'smem constant byte address 0x4 - core index']
  #allocation1 [shape = 'u32[144,128]{1,0:T(1,128)}', space=vmem, size = 0x12000, scoped, tag = 'internal scratch']
  %s0 = inlined_call_operand.vmem [shape: f32[16,128], index: 0, kind: input, shape index: {}]
  %s1 = inlined_call_operand.vmem [shape: f32[16,1], index: 1, kind: input, shape index: {}]
  %s2 = inlined_call_operand.vmem [shape: f32[16,1], index: 2, kind: input, shape index: {}]
  %s3 = inlined_call_operand.vmem [shape: f32[16,128], index: 3, kind: input, shape index: {}]
  %s4 = inlined_call_operand.vmem [shape: f32[16,128], index: 4, kind: output, shape index: {}]
  %s5 = sld [smem:[#allocation0]]
  $region26: #{res_unet_att_forward.63} parent=0
    _
  %s7 = ssub.s32 1, %s5
  %s8 = scalar_select 0, %s7, %s5
  // Predicated region
  $region2: #{res_unet_att_forward.63} parent=0 // pred_check
    _
  $region3: #{res_unet_att_forward.63} parent=0 // pred_check_branch
    %10 = sbr.rel (0) target = $region5
  $region4: #{res_unet_att_forward.63} parent=0 // pred_region
    _
  $region5: #{res_unet_att_forward.63} parent=0 // pred_fallthru
    _
  // Predicated region
  $region6: #{res_unet_att_forward.63} parent=0 // pred_check
    _
  $region7: #{res_unet_att_forward.63} parent=0 // pred_check_branch
    %12 = sbr.rel (0) target = $region9
  $region8: #{res_unet_att_forward.63} parent=0 // pred_region
    _
  $region9: #{res_unet_att_forward.63} parent=0 // pred_fallthru
    _
  // Predicated region
  $region10: #{res_unet_att_forward.63} parent=0 // pred_check
    _
  $region11: #{res_unet_att_forward.63} parent=0 // pred_check_branch
    %14 = sbr.rel (0) target = $region13
  $region12: #{res_unet_att_forward.63} parent=0 // pred_region
    _
  $region13: #{res_unet_att_forward.63} parent=0 // pred_fallthru
    _
  // Predicated region
  $region14: #{res_unet_att_forward.63} parent=0 // pred_check
    _
  $region15: #{res_unet_att_forward.63} parent=0 // pred_check_branch
    %16 = sbr.rel (0) target = $region17
  $region16: #{res_unet_att_forward.63} parent=0 // pred_region
    _
  $region17: #{res_unet_att_forward.63} parent=0 // pred_fallthru
    _
  %v17 = vld [vmem:[%s0] sm:$0xff]
  %v18 = vld [vmem:[%s0 + $0x8] sm:$0xff]
  %v19 = vld [vmem:[%s1] sm:$0xff]
  %v20 = vld [vmem:[%s1 + $0x8] sm:$0xff]
  %22 = vset.pattern.permute.xlu0 0
  %23 = vperm.xlu0 %22, %v19
  %v24 = vpop.permute.xlu0 %23
  %27 = vset.pattern.permute.xlu0 0
  %28 = vperm.xlu0 %27, %v20
  %v29 = vpop.permute.xlu0 %28
  %v31 = vmul.f32 %v17, %v24
  %v32 = vmul.f32 %v18, %v29
  %v33 = vld [vmem:[%s2] sm:$0xff]
  %v34 = vld [vmem:[%s2 + $0x8] sm:$0xff]
  %36 = vset.pattern.permute.xlu0 0
  %37 = vperm.xlu0 %36, %v33
  %v38 = vpop.permute.xlu0 %37
  %41 = vset.pattern.permute.xlu0 0
  %42 = vperm.xlu0 %41, %v34
  %v43 = vpop.permute.xlu0 %42
  %v45 = vadd.f32 %v31, %v38
  %v46 = vadd.f32 %v32, %v43
  %v47 = vmax.f32 %v45, 0.0
  %v48 = vmax.f32 %v46, 0.0
  %v49 = vld [vmem:[%s3] sm:$0xff]
  %v50 = vld [vmem:[%s3 + $0x8] sm:$0xff]
  %v51 = vadd.f32 %v47, %v49
  %v52 = vadd.f32 %v48, %v50
  %53 = vst [vmem:[%s4] sm:$0xff] %v51
  %54 = vst [vmem:[%s4 + $0x8] sm:$0xff] %v52
  // Predicated region
  $region18: #{res_unet_att_forward.63} parent=0 // pred_check
    _
  $region19: #{res_unet_att_forward.63} parent=0 // pred_check_branch
    %56 = sbr.rel (0) target = $region21
  $region20: #{res_unet_att_forward.63} parent=0 // pred_region
    _
  $region21: #{res_unet_att_forward.63} parent=0 // pred_fallthru
    _
  // Predicated region
  $region22: #{res_unet_att_forward.63} parent=0 // pred_check
    _
  $region23: #{res_unet_att_forward.63} parent=0 // pred_check_branch
    %58 = sbr.rel (0) target = $region25
  $region24: #{res_unet_att_forward.63} parent=0 // pred_region
    _
  $region25: #{res_unet_att_forward.63} parent=0 // pred_fallthru
    _

// kernel: res_unet_att_forward.64
$region0: #{res_unet_att_forward.64}
  #allocation0 [shape = 'u32[]', space=smem, size = 0x4, offset = 0x4, fixed_abs, tag = 'smem constant byte address 0x4 - core index']
  #allocation1 [shape = 'u32[144,128]{1,0:T(1,128)}', space=vmem, size = 0x12000, scoped, tag = 'internal scratch']
  %s0 = inlined_call_operand.vmem [shape: bf16[8,144], index: 0, kind: input, shape index: {}]
  %s1 = inlined_call_operand.vmem [shape: bf16[144,512], index: 1, kind: input, shape index: {}]
  %s2 = inlined_call_operand.vmem [shape: f32[8,512], index: 2, kind: output, shape index: {0}]
  %s3 = inlined_call_operand.vmem [shape: f32[8,1], index: 3, kind: output, shape index: {1}]
  %s4 = inlined_call_operand.vmem [shape: f32[8,1], index: 4, kind: output, shape index: {2}]
  %5 = xla_tuple %s2, %s3, %s4
  %s6 = sld [smem:[#allocation0]]
  $region99: #{res_unet_att_forward.64} parent=0
    _
  %s8 = ssub.s32 1, %s6
  %s9 = scalar_select 0, %s8, %s6
  $region1: #{res_unet_att_forward.64} parent=0
    #allocation2 [shape = 'u8[147456]{0}', space=vmem, size = 0x24000, scoped, tag = 'input window, operand 1']
    loop: start=0, step=1, limit=4
    $region2: #{res_unet_att_forward.64} parent=1 // loop_pre_header
      _
    $region3: #{res_unet_att_forward.64} parent=1 // loop_header
      %s11 = sphi 0, %s15
      %p12 = scmp.ge.s32.totalorder %s11, 4
      %s19 = sphi 0, %s19
      %s21 = sphi 0, %s19
      %s22 = sphi 0, %s21
      %s36 = sphi 0, %s22
      %s42 = sphi 0, %s44
      %s45 = sphi 0, %s42
      %s46 = sphi 0, %s45
      %s62 = sphi 0, %s46
      %s68 = sphi 0, %s70
      %s71 = sphi 0, %s68
      %s72 = sphi 0, %s71
      %s88 = sphi 0, %s72
      %s92 = sphi 0, %s92
      %s94 = sphi 0, %s92
      %s95 = sphi 0, %s94
      %s109 = sphi 0, %s95
      %s113 = sphi 0, %s113
      %s115 = sphi 0, %s113
      %s116 = sphi 0, %s115
      %s130 = sphi 0, %s116
    $region4: #{res_unet_att_forward.64} parent=1 // loop_header_branch
      %14 = sbr.rel (%p12) target = $region8
    $region5: #{res_unet_att_forward.64} parent=1 // loop_body
      %s16 = ssub.s32 %s11, 1
      %s17 = ssub.s32 %s11, 2
      %s18 = sadd.s32 %s11, 1
      %s20 = sadd.s32 %s19, 1
      %p23 = scmp.eq.s32.totalorder %s11, 1
      %p24 = scmp.ne.s32.totalorder %s19, %s21
      %p25 = scmp.eq.s32.totalorder %s11, 0
      %p26 = por %p24, %p25
      %p27 = scmp.ne.s32.totalorder %s19, %s21
      %p28 = scmp.eq.s32.totalorder %s16, 1
      %p29 = por %p27, %p28
      %p30 = scmp.ne.s32.totalorder %s21, %s22
      %p31 = scmp.eq.s32.totalorder %s16, 0
      %p32 = por %p30, %p31
      %p33 = scmp.ne.s32.totalorder %s21, %s22
      %p34 = scmp.eq.s32.totalorder %s17, 1
      %p35 = por %p33, %p34
      %p37 = scmp.ne.s32.totalorder %s22, %s36
      %p38 = scmp.eq.s32.totalorder %s17, 0
      %p39 = por %p37, %p38
      %s40 = ssub.s32 %s11, %s18
      %p41 = scmp.eq.s32.totalorder %s40, 0
      %s43 = sadd.s32 %s42, 1
      %s44 = scalar_select %p41, %s42, %s43
      %p47 = pneg %p41
      %p48 = scmp.eq.s32.totalorder %s11, 1
      %p49 = por %p47, %p48
      %p50 = scmp.ne.s32.totalorder %s42, %s45
      %p51 = scmp.eq.s32.totalorder %s11, 0
      %p52 = por %p50, %p51
      %p53 = scmp.ne.s32.totalorder %s42, %s45
      %p54 = scmp.eq.s32.totalorder %s16, 1
      %p55 = por %p53, %p54
      %p56 = scmp.ne.s32.totalorder %s45, %s46
      %p57 = scmp.eq.s32.totalorder %s16, 0
      %p58 = por %p56, %p57
      %p59 = scmp.ne.s32.totalorder %s45, %s46
      %p60 = scmp.eq.s32.totalorder %s17, 1
      %p61 = por %p59, %p60
      %p63 = scmp.ne.s32.totalorder %s46, %s62
      %p64 = scmp.eq.s32.totalorder %s17, 0
      %p65 = por %p63, %p64
      %s66 = ssub.s32 %s11, %s18
      %p67 = scmp.eq.s32.totalorder %s66, 0
      %s69 = sadd.s32 %s68, 1
      %s70 = scalar_select %p67, %s68, %s69
      %p73 = pneg %p67
      %p74 = scmp.eq.s32.totalorder %s11, 1
      %p75 = por %p73, %p74
      %p76 = scmp.ne.s32.totalorder %s68, %s71
      %p77 = scmp.eq.s32.totalorder %s11, 0
      %p78 = por %p76, %p77
      %p79 = scmp.ne.s32.totalorder %s68, %s71
      %p80 = scmp.eq.s32.totalorder %s16, 1
      %p81 = por %p79, %p80
      %p82 = scmp.ne.s32.totalorder %s71, %s72
      %p83 = scmp.eq.s32.totalorder %s16, 0
      %p84 = por %p82, %p83
      %p85 = scmp.ne.s32.totalorder %s71, %s72
      %p86 = scmp.eq.s32.totalorder %s17, 1
      %p87 = por %p85, %p86
      %p89 = scmp.ne.s32.totalorder %s72, %s88
      %p90 = scmp.eq.s32.totalorder %s17, 0
      %p91 = por %p89, %p90
      %s93 = sadd.s32 %s92, 1
      %p96 = scmp.eq.s32.totalorder %s11, 1
      %p97 = scmp.ne.s32.totalorder %s92, %s94
      %p98 = scmp.eq.s32.totalorder %s11, 0
      %p99 = por %p97, %p98
      %p100 = scmp.ne.s32.totalorder %s92, %s94
      %p101 = scmp.eq.s32.totalorder %s16, 1
      %p102 = por %p100, %p101
      %p103 = scmp.ne.s32.totalorder %s94, %s95
      %p104 = scmp.eq.s32.totalorder %s16, 0
      %p105 = por %p103, %p104
      %p106 = scmp.ne.s32.totalorder %s94, %s95
      %p107 = scmp.eq.s32.totalorder %s17, 1
      %p108 = por %p106, %p107
      %p110 = scmp.ne.s32.totalorder %s95, %s109
      %p111 = scmp.eq.s32.totalorder %s17, 0
      %p112 = por %p110, %p111
      %s114 = sadd.s32 %s113, 1
      %p117 = scmp.eq.s32.totalorder %s11, 1
      %p118 = scmp.ne.s32.totalorder %s113, %s115
      %p119 = scmp.eq.s32.totalorder %s11, 0
      %p120 = por %p118, %p119
      %p121 = scmp.ne.s32.totalorder %s113, %s115
      %p122 = scmp.eq.s32.totalorder %s16, 1
      %p123 = por %p121, %p122
      %p124 = scmp.ne.s32.totalorder %s115, %s116
      %p125 = scmp.eq.s32.totalorder %s16, 0
      %p126 = por %p124, %p125
      %p127 = scmp.ne.s32.totalorder %s115, %s116
      %p128 = scmp.eq.s32.totalorder %s17, 1
      %p129 = por %p127, %p128
      %p131 = scmp.ne.s32.totalorder %s116, %s130
      %p132 = scmp.eq.s32.totalorder %s17, 0
      %p133 = por %p131, %p132
      %p134 = scmp.le.s32.totalorder 1, %s11
      %p135 = scmp.lt.s32.totalorder %s11, 3
      %p136 = pnand %p134, %p135
      %p137 = pneg %p136
      // Predicated region
      $region9: #{res_unet_att_forward.64} parent=5 // pred_check
        _
      $region10: #{res_unet_att_forward.64} parent=5 // pred_check_branch
        %139 = sbr.rel (%p136) target = $region12
      $region11: #{res_unet_att_forward.64} parent=5 // pred_region
        %s140 = ssub.s32 %s11, 1
        // Predicated region
        $region13: #{res_unet_att_forward.64} parent=11 // pred_check
          %p141 = pneg %p32
        $region14: #{res_unet_att_forward.64} parent=11 // pred_check_branch
          %143 = sbr.rel (%p141) target = $region16
        $region15: #{res_unet_att_forward.64} parent=11 // pred_region
          _
        $region16: #{res_unet_att_forward.64} parent=11 // pred_fallthru
          _
      $region12: #{res_unet_att_forward.64} parent=5 // pred_fallthru
        _
      %p144 = scmp.lt.s32.totalorder %s11, 2
      // Predicated region
      $region17: #{res_unet_att_forward.64} parent=5 // pred_check
        %p145 = pneg %p144
      $region18: #{res_unet_att_forward.64} parent=5 // pred_check_branch
        %147 = sbr.rel (%p145) target = $region20
      $region19: #{res_unet_att_forward.64} parent=5 // pred_region
        // Predicated region
        $region21: #{res_unet_att_forward.64} parent=19 // pred_check
          %p148 = pneg %p52
        $region22: #{res_unet_att_forward.64} parent=19 // pred_check_branch
          %150 = sbr.rel (%p148) target = $region24
        $region23: #{res_unet_att_forward.64} parent=19 // pred_region
          %s151 = sand.u32 %s42, 1
          %s152 = sand.u32 %s42, 1
          %s153 = smul.addr %s152, 144
          %s154 = scalar_lea.vmem [#allocation2], %s153
          %s155 = smul.u32 2, %s11
          %s156 = smul.addr %s155, 4
          %s157 = scalar_lea.vmem %s1, %s156
          // Predicated region
          $region25: #{res_unet_att_forward.64} parent=23 // pred_check
            _
          $region26: #{res_unet_att_forward.64} parent=23 // pred_check_branch
            %159 = sbr.rel (0) target = $region28
          $region27: #{res_unet_att_forward.64} parent=23 // pred_region
            // Predicated region
            $region29: #{res_unet_att_forward.64} parent=27 // pred_check
              _
            $region30: #{res_unet_att_forward.64} parent=27 // pred_check_branch
              %161 = sbr.rel (0) target = $region32
            $region31: #{res_unet_att_forward.64} parent=27 // pred_region
              // Predicated region
              $region44: #{res_unet_att_forward.64} parent=31 // pred_check
                _
              $region45: #{res_unet_att_forward.64} parent=31 // pred_check_branch
                %210 = sbr.rel (0) target = $region47
              $region46: #{res_unet_att_forward.64} parent=31 // pred_region
                loop: start=0, step=1, limit=1
                $region48: #{res_unet_att_forward.64} parent=46 // loop_pre_header
                  _
                $region49: #{res_unet_att_forward.64} parent=46 // loop_header
                  %s212 = sphi 0, %s216
                  %p213 = scmp.ge.s32.totalorder %s212, 1
                  %s217 = sphi %s157, %s157
                  %s218 = sphi %s154, %s154
                $region50: #{res_unet_att_forward.64} parent=46 // loop_header_branch
                  %215 = sbr.rel (%p213) target = $region54
                $region51: #{res_unet_att_forward.64} parent=46 // loop_body
                  %v219 = vld [vmem:[%s217] sm:$0xff]
                  %220 = vst [vmem:[%s218] sm:$0xff] %v219
                  %v221 = vld [vmem:[%s217 + $0x10] sm:$0xff]
                  %222 = vst [vmem:[%s218 + $0x8] sm:$0xff] %v221
                  %v223 = vld [vmem:[%s217 + $0x20] sm:$0xff]
                  %224 = vst [vmem:[%s218 + $0x10] sm:$0xff] %v223
                  %v225 = vld [vmem:[%s217 + $0x30] sm:$0xff]
                  %226 = vst [vmem:[%s218 + $0x18] sm:$0xff] %v225
                  %v227 = vld [vmem:[%s217 + $0x40] sm:$0xff]
                  %228 = vst [vmem:[%s218 + $0x20] sm:$0xff] %v227
                  %v229 = vld [vmem:[%s217 + $0x50] sm:$0xff]
                  %230 = vst [vmem:[%s218 + $0x28] sm:$0xff] %v229
                  %v231 = vld [vmem:[%s217 + $0x60] sm:$0xff]
                  %232 = vst [vmem:[%s218 + $0x30] sm:$0xff] %v231
                  %v233 = vld [vmem:[%s217 + $0x70] sm:$0xff]
                  %234 = vst [vmem:[%s218 + $0x38] sm:$0xff] %v233
                  %v235 = vld [vmem:[%s217 + $0x80] sm:$0xff]
                  %236 = vst [vmem:[%s218 + $0x40] sm:$0xff] %v235
                  %v237 = vld [vmem:[%s217 + $0x90] sm:$0xff]
                  %238 = vst [vmem:[%s218 + $0x48] sm:$0xff] %v237
                  %v239 = vld [vmem:[%s217 + $0xa0] sm:$0xff]
                  %240 = vst [vmem:[%s218 + $0x50] sm:$0xff] %v239
                  %v241 = vld [vmem:[%s217 + $0xb0] sm:$0xff]
                  %242 = vst [vmem:[%s218 + $0x58] sm:$0xff] %v241
                  %v243 = vld [vmem:[%s217 + $0xc0] sm:$0xff]
                  %244 = vst [vmem:[%s218 + $0x60] sm:$0xff] %v243
                  %v245 = vld [vmem:[%s217 + $0xd0] sm:$0xff]
                  %246 = vst [vmem:[%s218 + $0x68] sm:$0xff] %v245
                  %v247 = vld [vmem:[%s217 + $0xe0] sm:$0xff]
                  %248 = vst [vmem:[%s218 + $0x70] sm:$0xff] %v247
                  %v249 = vld [vmem:[%s217 + $0xf0] sm:$0xff]
                  %250 = vst [vmem:[%s218 + $0x78] sm:$0xff] %v249
                  %v251 = vld [vmem:[%s217 + $0x100] sm:$0xff]
                  %252 = vst [vmem:[%s218 + $0x80] sm:$0xff] %v251
                  %v253 = vld [vmem:[%s217 + $0x110] sm:$0xff]
                  %254 = vst [vmem:[%s218 + $0x88] sm:$0xff] %v253
                $region52: #{res_unet_att_forward.64} parent=46 // loop_footer
                  %s216 = sadd.s32 1, %s212
                $region53: #{res_unet_att_forward.64} parent=46 // loop_footer_branch
                  %211 = sbr.rel target = $region49
                $region54: #{res_unet_att_forward.64} parent=46 // loop_exit
                  _
              $region47: #{res_unet_att_forward.64} parent=31 // pred_fallthru
                _
              // Predicated region
              $region55: #{res_unet_att_forward.64} parent=31 // pred_check
                _
              $region56: #{res_unet_att_forward.64} parent=31 // pred_check_branch
                %256 = sbr.rel target = $region58
              $region57: #{res_unet_att_forward.64} parent=31 // pred_region
                _
              $region58: #{res_unet_att_forward.64} parent=31 // pred_fallthru
                _
            $region32: #{res_unet_att_forward.64} parent=27 // pred_fallthru
              _
            // Predicated region
            $region33: #{res_unet_att_forward.64} parent=27 // pred_check
              _
            $region34: #{res_unet_att_forward.64} parent=27 // pred_check_branch
              %163 = sbr.rel target = $region36
            $region35: #{res_unet_att_forward.64} parent=27 // pred_region
              loop: start=0, step=1, limit=1
              $region37: #{res_unet_att_forward.64} parent=35 // loop_pre_header
                _
              $region38: #{res_unet_att_forward.64} parent=35 // loop_header
                %s166 = sphi 0, %s170
                %p167 = scmp.ge.s32.totalorder %s166, 1
                %s171 = sphi %s157, %s157
                %s172 = sphi %s154, %s154
              $region39: #{res_unet_att_forward.64} parent=35 // loop_header_branch
                %169 = sbr.rel (%p167) target = $region43
              $region40: #{res_unet_att_forward.64} parent=35 // loop_body
                %v173 = vld [vmem:[%s171] sm:$0xff]
                %174 = vst [vmem:[%s172] sm:$0xff] %v173
                %v175 = vld [vmem:[%s171 + $0x10] sm:$0xff]
                %176 = vst [vmem:[%s172 + $0x8] sm:$0xff] %v175
                %v177 = vld [vmem:[%s171 + $0x20] sm:$0xff]
                %178 = vst [vmem:[%s172 + $0x10] sm:$0xff] %v177
                %v179 = vld [vmem:[%s171 + $0x30] sm:$0xff]
                %180 = vst [vmem:[%s172 + $0x18] sm:$0xff] %v179
                %v181 = vld [vmem:[%s171 + $0x40] sm:$0xff]
                %182 = vst [vmem:[%s172 + $0x20] sm:$0xff] %v181
                %v183 = vld [vmem:[%s171 + $0x50] sm:$0xff]
                %184 = vst [vmem:[%s172 + $0x28] sm:$0xff] %v183
                %v185 = vld [vmem:[%s171 + $0x60] sm:$0xff]
                %186 = vst [vmem:[%s172 + $0x30] sm:$0xff] %v185
                %v187 = vld [vmem:[%s171 + $0x70] sm:$0xff]
                %188 = vst [vmem:[%s172 + $0x38] sm:$0xff] %v187
                %v189 = vld [vmem:[%s171 + $0x80] sm:$0xff]
                %190 = vst [vmem:[%s172 + $0x40] sm:$0xff] %v189
                %v191 = vld [vmem:[%s171 + $0x90] sm:$0xff]
                %192 = vst [vmem:[%s172 + $0x48] sm:$0xff] %v191
                %v193 = vld [vmem:[%s171 + $0xa0] sm:$0xff]
                %194 = vst [vmem:[%s172 + $0x50] sm:$0xff] %v193
                %v195 = vld [vmem:[%s171 + $0xb0] sm:$0xff]
                %196 = vst [vmem:[%s172 + $0x58] sm:$0xff] %v195
                %v197 = vld [vmem:[%s171 + $0xc0] sm:$0xff]
                %198 = vst [vmem:[%s172 + $0x60] sm:$0xff] %v197
                %v199 = vld [vmem:[%s171 + $0xd0] sm:$0xff]
                %200 = vst [vmem:[%s172 + $0x68] sm:$0xff] %v199
                %v201 = vld [vmem:[%s171 + $0xe0] sm:$0xff]
                %202 = vst [vmem:[%s172 + $0x70] sm:$0xff] %v201
                %v203 = vld [vmem:[%s171 + $0xf0] sm:$0xff]
                %204 = vst [vmem:[%s172 + $0x78] sm:$0xff] %v203
                %v205 = vld [vmem:[%s171 + $0x100] sm:$0xff]
                %206 = vst [vmem:[%s172 + $0x80] sm:$0xff] %v205
                %v207 = vld [vmem:[%s171 + $0x110] sm:$0xff]
                %208 = vst [vmem:[%s172 + $0x88] sm:$0xff] %v207
              $region41: #{res_unet_att_forward.64} parent=35 // loop_footer
                %s170 = sadd.s32 1, %s166
              $region42: #{res_unet_att_forward.64} parent=35 // loop_footer_branch
                %165 = sbr.rel target = $region38
              $region43: #{res_unet_att_forward.64} parent=35 // loop_exit
                _
            $region36: #{res_unet_att_forward.64} parent=27 // pred_fallthru
              _
          $region28: #{res_unet_att_forward.64} parent=23 // pred_fallthru
            _
          %257 = vnop
        $region24: #{res_unet_att_forward.64} parent=19 // pred_fallthru
          _
      $region20: #{res_unet_att_forward.64} parent=5 // pred_fallthru
        _
      %p258 = scmp.le.s32.totalorder 1, %s11
      %p259 = scmp.lt.s32.totalorder %s11, 3
      %p260 = pnand %p258, %p259
      %p261 = pneg %p260
      // Predicated region
      $region59: #{res_unet_att_forward.64} parent=5 // pred_check
        _
      $region60: #{res_unet_att_forward.64} parent=5 // pred_check_branch
        %263 = sbr.rel (%p260) target = $region62
      $region61: #{res_unet_att_forward.64} parent=5 // pred_region
        %s264 = ssub.s32 %s11, 1
        %s265 = sand.u32 %s45, 1
        %s266 = sand.u32 %s45, 1
        %s267 = smul.addr %s266, 144
        %s268 = scalar_lea.vmem [#allocation2], %s267
        // Predicated region
        $region63: #{res_unet_att_forward.64} parent=61 // pred_check
          %p269 = pneg %p58
        $region64: #{res_unet_att_forward.64} parent=61 // pred_check_branch
          %271 = sbr.rel (%p269) target = $region66
        $region65: #{res_unet_att_forward.64} parent=61 // pred_region
          _
        $region66: #{res_unet_att_forward.64} parent=61 // pred_fallthru
          _
        %p272 = pneg %p32
        %p273 = pneg %p29
        %s274 = sand.u32 %s45, 1
        %s275 = sand.u32 %s45, 1
        %s276 = smul.addr %s275, 144
        %s277 = scalar_lea.vmem [#allocation2], %s276
        %p278 = pneg %p58
        %p279 = pneg %p55
        %p280 = pneg %p84
        %p281 = pneg %p81
        %s282 = smul.u32 2, %s16
        %p283 = scmp.lt.s32.totalorder %s282, 3
        %s284 = scalar_select %p283, %s282, 3
        %s285 = smul.addr %s284, 8
        %s286 = scalar_lea.vmem %s2, %s285
        %p287 = pneg %p105
        %p288 = pneg %p102
        %p289 = pneg %p126
        %p290 = pneg %p123
        %s291 = smul.u32 2, %s16
        %s292 = smul.u32 2, %s16
        %p293 = scmp.lt.s32.totalorder %s292, 3
        %s294 = scalar_select %p293, %s292, 3
        %s295 = smul.addr %s294, 8
        %s296 = scalar_lea.vmem %s2, %s295
        %s297 = smul.u32 2, %s16
        %v299 = vld [vmem:[%s0] sm:$0xff]
        %v300 = vld [vmem:[%s268] sm:$0xff]
        %v301 = vld [vmem:[%s268 + $0x8] sm:$0xff]
        %v302 = vld [vmem:[%s268 + $0x10] sm:$0xff]
        %v303 = vld [vmem:[%s268 + $0x18] sm:$0xff]
        %v304 = vld [vmem:[%s268 + $0x20] sm:$0xff]
        %v305 = vld [vmem:[%s268 + $0x28] sm:$0xff]
        %v306 = vld [vmem:[%s268 + $0x30] sm:$0xff]
        %v307 = vld [vmem:[%s268 + $0x38] sm:$0xff]
        %v308 = vld [vmem:[%s268 + $0x40] sm:$0xff]
        %v309 = vld [vmem:[%s268 + $0x48] sm:$0xff]
        %v310 = vld [vmem:[%s268 + $0x50] sm:$0xff]
        %v311 = vld [vmem:[%s268 + $0x58] sm:$0xff]
        %v312 = vld [vmem:[%s268 + $0x60] sm:$0xff]
        %v313 = vld [vmem:[%s268 + $0x68] sm:$0xff]
        %v314 = vld [vmem:[%s268 + $0x70] sm:$0xff]
        %v315 = vld [vmem:[%s268 + $0x78] sm:$0xff]
        %v316 = vld [vmem:[%s268 + $0x80] sm:$0xff]
        %v317 = vld [vmem:[%s268 + $0x88] sm:$0xff]
        %v319 = vunpack.c.l.b16 %v299
        %v320 = vunpack.c.h.b16 %v299
        %v321 = vpack.c.b16 %v319, %v319
        %v322 = vpack.c.b16 %v320, %v320
        %v342 = vunpack.c.l.b16 %v300
        %v343 = vunpack.c.h.b16 %v300
        %v344 = vunpack.c.l.b16 %v301
        %v345 = vunpack.c.h.b16 %v301
        %v346 = vunpack.c.l.b16 %v302
        %v347 = vunpack.c.h.b16 %v302
        %v348 = vunpack.c.l.b16 %v303
        %v349 = vunpack.c.h.b16 %v303
        %v350 = vunpack.c.l.b16 %v304
        %v351 = vunpack.c.h.b16 %v304
        %v352 = vunpack.c.l.b16 %v305
        %v353 = vunpack.c.h.b16 %v305
        %v354 = vunpack.c.l.b16 %v306
        %v355 = vunpack.c.h.b16 %v306
        %v356 = vunpack.c.l.b16 %v307
        %v357 = vunpack.c.h.b16 %v307
        %v358 = vunpack.c.l.b16 %v308
        %v359 = vunpack.c.h.b16 %v308
        %v360 = vunpack.c.l.b16 %v309
        %v361 = vunpack.c.h.b16 %v309
        %v362 = vunpack.c.l.b16 %v310
        %v363 = vunpack.c.h.b16 %v310
        %v364 = vunpack.c.l.b16 %v311
        %v365 = vunpack.c.h.b16 %v311
        %v366 = vunpack.c.l.b16 %v312
        %v367 = vunpack.c.h.b16 %v312
        %v368 = vunpack.c.l.b16 %v313
        %v369 = vunpack.c.h.b16 %v313
        %v370 = vunpack.c.l.b16 %v314
        %v371 = vunpack.c.h.b16 %v314
        %v372 = vunpack.c.l.b16 %v315
        %v373 = vunpack.c.h.b16 %v315
        %v374 = vunpack.c.l.b16 %v316
        %v375 = vunpack.c.h.b16 %v316
        %v376 = vunpack.c.l.b16 %v317
        %v377 = vunpack.c.h.b16 %v317
        %v378 = vpack.c.b16 %v344, %v342
        %v379 = vpack.c.b16 %v345, %v343
        %v380 = vpack.c.b16 %v348, %v346
        %v381 = vpack.c.b16 %v349, %v347
        %v382 = vpack.c.b16 %v352, %v350
        %v383 = vpack.c.b16 %v353, %v351
        %v384 = vpack.c.b16 %v356, %v354
        %v385 = vpack.c.b16 %v357, %v355
        %v386 = vpack.c.b16 %v360, %v358
        %v387 = vpack.c.b16 %v361, %v359
        %v388 = vpack.c.b16 %v364, %v362
        %v389 = vpack.c.b16 %v365, %v363
        %v390 = vpack.c.b16 %v368, %v366
        %v391 = vpack.c.b16 %v369, %v367
        %v392 = vpack.c.b16 %v372, %v370
        %v393 = vpack.c.b16 %v373, %v371
        %v394 = vpack.c.b16 %v376, %v374
        %v395 = vpack.c.b16 %v377, %v375
        %vm414 = vcmask 130048
        %v416 = vsel %vm414, %v322, 0
        %418 = vmatprep.subr.bf16.mxu0 %v379
        %419 = vmatpush1.bf16.msra.mxu0 %v378
        %420 = vmatprep.subr.bf16.mxu0 %v381
        %421 = vmatpush1.bf16.msra.mxu0 %v380
        %422 = vmatprep.subr.bf16.mxu0 %v383
        %423 = vmatpush1.bf16.msra.mxu0 %v382
        %424 = vmatprep.subr.bf16.mxu0 %v385
        %425 = vmatpush1.bf16.msra.mxu0 %v384
        %426 = vmatprep.subr.bf16.mxu0 %v387
        %427 = vmatpush1.bf16.msra.mxu0 %v386
        %428 = vmatprep.subr.bf16.mxu0 %v389
        %429 = vmatpush1.bf16.msra.mxu0 %v388
        %430 = vmatprep.subr.bf16.mxu0 %v391
        %431 = vmatpush1.bf16.msra.mxu0 %v390
        %432 = vmatprep.subr.bf16.mxu0 %v393
        %433 = vmatpush1.bf16.msra.mxu0 %v392
        %434 = vmatprep.subr.bf16.mxu0 %v395
        %435 = vmatpush1.bf16.msra.mxu0 %v394
        %436 = vmatprep.subr.bf16.mxu0 0
        %437 = vmatpush1.bf16.msra.mxu0 0
        %438 = vmatprep.subr.bf16.mxu0 0
        %439 = vmatpush1.bf16.msra.mxu0 0
        %440 = vmatprep.subr.bf16.mxu0 0
        %441 = vmatpush1.bf16.msra.mxu0 0
        %442 = vmatprep.subr.bf16.mxu0 0
        %443 = vmatpush1.bf16.msra.mxu0 0
        %444 = vmatprep.subr.bf16.mxu0 0
        %445 = vmatpush1.bf16.msra.mxu0 0
        %446 = vmatprep.subr.bf16.mxu0 0
        %447 = vmatpush1.bf16.msra.mxu0 0
        %448 = vmatprep.subr.bf16.mxu0 0
        %449 = vmatpush1.bf16.msra.mxu0 0
        %450 = vmatprep.mubr.bf16.mxu0 %v416
        %451 = vmatmul.mubr.bf16.gmra.mrb[0].mxu0 %v321
        %v452 = vpop.f32.mrb[0].mxu0
        %v453 = vadd.f32 0.0, %v452
        %v454 = vpop.f32.mrb[0].mxu0
        %v455 = vadd.f32 0.0, %v454
        %v456 = vpop.f32.mrb[0].mxu0
        %v457 = vpop.f32.mrb[0].mxu0
        %458 = vdwg.mxu0
        %459 = vst [vmem:[%s296] sm:$0xff] %v453
        %460 = vst [vmem:[%s296 + $0x8] sm:$0xff] %v455
        %p461 = scmp.eq.s32.totalorder %s16, 0
        // Predicated region
        $region67: #{res_unet_att_forward.64} parent=61 // pred_check
          %p462 = pneg %p461
        $region68: #{res_unet_att_forward.64} parent=61 // pred_check_branch
          %464 = sbr.rel (%p462) target = $region70
        $region69: #{res_unet_att_forward.64} parent=61 // pred_region
          %vm465 = vcmask 7168
          %466 = vst.msk [vmem:[%s3] sm:$0xff] %vm465, 0.0
          %467 = vst.msk [vmem:[%s4] sm:$0xff] %vm465, 0.0
        $region70: #{res_unet_att_forward.64} parent=61 // pred_fallthru
          _
        %v468 = vld [vmem:[%s3] sm:$0xff]
        %v469 = vadd.f32 %v453, %v455
        %470 = vadd.xlane.f32.xlu0 %v469
        %v471 = vpop.xlane.xlu0 %470
        %v472 = vadd.f32 %v468, %v471
        %vm473 = vcmask 7168
        %474 = vst.msk [vmem:[%s3] sm:$0xff] %vm473, %v472
        %v475 = vld [vmem:[%s4] sm:$0xff]
        %v476 = vmul.f32 %v453, %v453
        %v477 = vmul.f32 %v455, %v455
        %v478 = vadd.f32 %v476, %v477
        %479 = vadd.xlane.f32.xlu0 %v478
        %v480 = vpop.xlane.xlu0 %479
        %v481 = vadd.f32 %v475, %v480
        %482 = vst.msk [vmem:[%s4] sm:$0xff] %vm473, %v481
        %s483 = smul.u32 2, %s16
        %p484 = scmp.lt.s32.totalorder %s483, 3
        %s485 = scalar_select %p484, %s483, 3
        %s486 = smul.addr %s485, 8
        %s487 = scalar_lea.vmem %s2, %s486
        // Predicated region
        $region71: #{res_unet_att_forward.64} parent=61 // pred_check
          %p488 = pneg %p81
        $region72: #{res_unet_att_forward.64} parent=61 // pred_check_branch
          %490 = sbr.rel (%p488) target = $region74
        $region73: #{res_unet_att_forward.64} parent=61 // pred_region
          %s491 = smul.u32 2, %s16
        $region74: #{res_unet_att_forward.64} parent=61 // pred_fallthru
          _
        // Predicated region
        $region75: #{res_unet_att_forward.64} parent=61 // pred_check
          %p492 = pneg %p102
        $region76: #{res_unet_att_forward.64} parent=61 // pred_check_branch
          %494 = sbr.rel (%p492) target = $region78
        $region77: #{res_unet_att_forward.64} parent=61 // pred_region
          _
        $region78: #{res_unet_att_forward.64} parent=61 // pred_fallthru
          _
        // Predicated region
        $region79: #{res_unet_att_forward.64} parent=61 // pred_check
          %p495 = pneg %p123
        $region80: #{res_unet_att_forward.64} parent=61 // pred_check_branch
          %497 = sbr.rel (%p495) target = $region82
        $region81: #{res_unet_att_forward.64} parent=61 // pred_region
          _
        $region82: #{res_unet_att_forward.64} parent=61 // pred_fallthru
          _
        // Predicated region
        $region83: #{res_unet_att_forward.64} parent=61 // pred_check
          %p498 = pneg %p102
        $region84: #{res_unet_att_forward.64} parent=61 // pred_check_branch
          %500 = sbr.rel (%p498) target = $region86
        $region85: #{res_unet_att_forward.64} parent=61 // pred_region
          _
        $region86: #{res_unet_att_forward.64} parent=61 // pred_fallthru
          _
        // Predicated region
        $region87: #{res_unet_att_forward.64} parent=61 // pred_check
          %p501 = pneg %p123
        $region88: #{res_unet_att_forward.64} parent=61 // pred_check_branch
          %503 = sbr.rel (%p501) target = $region90
        $region89: #{res_unet_att_forward.64} parent=61 // pred_region
          _
        $region90: #{res_unet_att_forward.64} parent=61 // pred_fallthru
          _
      $region62: #{res_unet_att_forward.64} parent=5 // pred_fallthru
        _
      %p504 = scmp.le.s32.totalorder 2, %s11
      // Predicated region
      $region91: #{res_unet_att_forward.64} parent=5 // pred_check
        %p505 = pneg %p504
      $region92: #{res_unet_att_forward.64} parent=5 // pred_check_branch
        %507 = sbr.rel (%p505) target = $region94
      $region93: #{res_unet_att_forward.64} parent=5 // pred_region
        %s508 = ssub.s32 %s11, 2
        // Predicated region
        $region95: #{res_unet_att_forward.64} parent=93 // pred_check
          %p509 = pneg %p87
        $region96: #{res_unet_att_forward.64} parent=93 // pred_check_branch
          %511 = sbr.rel (%p509) target = $region98
        $region97: #{res_unet_att_forward.64} parent=93 // pred_region
          %s512 = smul.u32 2, %s17
          %p513 = scmp.lt.s32.totalorder %s512, 3
          %s514 = scalar_select %p513, %s512, 3
          %s515 = smul.addr %s514, 8
          %s516 = scalar_lea.vmem %s2, %s515
        $region98: #{res_unet_att_forward.64} parent=93 // pred_fallthru
          _
      $region94: #{res_unet_att_forward.64} parent=5 // pred_fallthru
        _
    $region6: #{res_unet_att_forward.64} parent=1 // loop_footer
      %s15 = sadd.s32 1, %s11
    $region7: #{res_unet_att_forward.64} parent=1 // loop_footer_branch
      %10 = sbr.rel target = $region3
    $region8: #{res_unet_att_forward.64} parent=1 // loop_exit
      _

// kernel: res_unet_att_forward.65
$region0: #{res_unet_att_forward.65}
  #allocation0 [shape = 'u32[]', space=smem, size = 0x4, offset = 0x4, fixed_abs, tag = 'smem constant byte address 0x4 - core index']
  #allocation1 [shape = 'u32[144,128]{1,0:T(1,128)}', space=vmem, size = 0x12000, scoped, tag = 'internal scratch']
  %s0 = inlined_call_operand.vmem [shape: f32[8,512], index: 0, kind: input, shape index: {}]
  %s1 = inlined_call_operand.vmem [shape: f32[8,1], index: 1, kind: input, shape index: {}]
  %s2 = inlined_call_operand.vmem [shape: f32[8,1], index: 2, kind: input, shape index: {}]
  %s3 = inlined_call_operand.vmem [shape: f32[8,512], index: 3, kind: input, shape index: {}]
  %s4 = inlined_call_operand.vmem [shape: f32[8,512], index: 4, kind: output, shape index: {}]
  %s5 = sld [smem:[#allocation0]]
  $region49: #{res_unet_att_forward.65} parent=0
    _
  %s7 = ssub.s32 1, %s5
  %s8 = scalar_select 0, %s7, %s5
  loop: start=0, step=1, limit=4
  $region2: #{res_unet_att_forward.65} parent=0 // loop_pre_header
    _
  $region3: #{res_unet_att_forward.65} parent=0 // loop_header
    %s10 = sphi 0, %s14
    %p11 = scmp.ge.s32.totalorder %s10, 4
    %s20 = sphi 0, %s22
    %s23 = sphi 0, %s20
    %s24 = sphi 0, %s23
    %s40 = sphi 0, %s24
    %s44 = sphi 0, %s44
    %s46 = sphi 0, %s44
    %s47 = sphi 0, %s46
    %s61 = sphi 0, %s47
    %s65 = sphi 0, %s65
    %s67 = sphi 0, %s65
    %s68 = sphi 0, %s67
    %s82 = sphi 0, %s68
    %s88 = sphi 0, %s90
    %s91 = sphi 0, %s88
    %s92 = sphi 0, %s91
    %s108 = sphi 0, %s92
    %s114 = sphi 0, %s116
    %s117 = sphi 0, %s114
    %s118 = sphi 0, %s117
    %s134 = sphi 0, %s118
  $region4: #{res_unet_att_forward.65} parent=0 // loop_header_branch
    %13 = sbr.rel (%p11) target = $region8
  $region5: #{res_unet_att_forward.65} parent=0 // loop_body
    %s15 = ssub.s32 %s10, 1
    %s16 = ssub.s32 %s10, 2
    %s17 = sadd.s32 %s10, 1
    %s18 = ssub.s32 %s10, %s17
    %p19 = scmp.eq.s32.totalorder %s18, 0
    %s21 = sadd.s32 %s20, 1
    %s22 = scalar_select %p19, %s20, %s21
    %p25 = pneg %p19
    %p26 = scmp.eq.s32.totalorder %s10, 1
    %p27 = por %p25, %p26
    %p28 = scmp.ne.s32.totalorder %s20, %s23
    %p29 = scmp.eq.s32.totalorder %s10, 0
    %p30 = por %p28, %p29
    %p31 = scmp.ne.s32.totalorder %s20, %s23
    %p32 = scmp.eq.s32.totalorder %s15, 1
    %p33 = por %p31, %p32
    %p34 = scmp.ne.s32.totalorder %s23, %s24
    %p35 = scmp.eq.s32.totalorder %s15, 0
    %p36 = por %p34, %p35
    %p37 = scmp.ne.s32.totalorder %s23, %s24
    %p38 = scmp.eq.s32.totalorder %s16, 1
    %p39 = por %p37, %p38
    %p41 = scmp.ne.s32.totalorder %s24, %s40
    %p42 = scmp.eq.s32.totalorder %s16, 0
    %p43 = por %p41, %p42
    %s45 = sadd.s32 %s44, 1
    %p48 = scmp.eq.s32.totalorder %s10, 1
    %p49 = scmp.ne.s32.totalorder %s44, %s46
    %p50 = scmp.eq.s32.totalorder %s10, 0
    %p51 = por %p49, %p50
    %p52 = scmp.ne.s32.totalorder %s44, %s46
    %p53 = scmp.eq.s32.totalorder %s15, 1
    %p54 = por %p52, %p53
    %p55 = scmp.ne.s32.totalorder %s46, %s47
    %p56 = scmp.eq.s32.totalorder %s15, 0
    %p57 = por %p55, %p56
    %p58 = scmp.ne.s32.totalorder %s46, %s47
    %p59 = scmp.eq.s32.totalorder %s16, 1
    %p60 = por %p58, %p59
    %p62 = scmp.ne.s32.totalorder %s47, %s61
    %p63 = scmp.eq.s32.totalorder %s16, 0
    %p64 = por %p62, %p63
    %s66 = sadd.s32 %s65, 1
    %p69 = scmp.eq.s32.totalorder %s10, 1
    %p70 = scmp.ne.s32.totalorder %s65, %s67
    %p71 = scmp.eq.s32.totalorder %s10, 0
    %p72 = por %p70, %p71
    %p73 = scmp.ne.s32.totalorder %s65, %s67
    %p74 = scmp.eq.s32.totalorder %s15, 1
    %p75 = por %p73, %p74
    %p76 = scmp.ne.s32.totalorder %s67, %s68
    %p77 = scmp.eq.s32.totalorder %s15, 0
    %p78 = por %p76, %p77
    %p79 = scmp.ne.s32.totalorder %s67, %s68
    %p80 = scmp.eq.s32.totalorder %s16, 1
    %p81 = por %p79, %p80
    %p83 = scmp.ne.s32.totalorder %s68, %s82
    %p84 = scmp.eq.s32.totalorder %s16, 0
    %p85 = por %p83, %p84
    %s86 = ssub.s32 %s10, %s17
    %p87 = scmp.eq.s32.totalorder %s86, 0
    %s89 = sadd.s32 %s88, 1
    %s90 = scalar_select %p87, %s88, %s89
    %p93 = pneg %p87
    %p94 = scmp.eq.s32.totalorder %s10, 1
    %p95 = por %p93, %p94
    %p96 = scmp.ne.s32.totalorder %s88, %s91
    %p97 = scmp.eq.s32.totalorder %s10, 0
    %p98 = por %p96, %p97
    %p99 = scmp.ne.s32.totalorder %s88, %s91
    %p100 = scmp.eq.s32.totalorder %s15, 1
    %p101 = por %p99, %p100
    %p102 = scmp.ne.s32.totalorder %s91, %s92
    %p103 = scmp.eq.s32.totalorder %s15, 0
    %p104 = por %p102, %p103
    %p105 = scmp.ne.s32.totalorder %s91, %s92
    %p106 = scmp.eq.s32.totalorder %s16, 1
    %p107 = por %p105, %p106
    %p109 = scmp.ne.s32.totalorder %s92, %s108
    %p110 = scmp.eq.s32.totalorder %s16, 0
    %p111 = por %p109, %p110
    %s112 = ssub.s32 %s10, %s17
    %p113 = scmp.eq.s32.totalorder %s112, 0
    %s115 = sadd.s32 %s114, 1
    %s116 = scalar_select %p113, %s114, %s115
    %p119 = pneg %p113
    %p120 = scmp.eq.s32.totalorder %s10, 1
    %p121 = por %p119, %p120
    %p122 = scmp.ne.s32.totalorder %s114, %s117
    %p123 = scmp.eq.s32.totalorder %s10, 0
    %p124 = por %p122, %p123
    %p125 = scmp.ne.s32.totalorder %s114, %s117
    %p126 = scmp.eq.s32.totalorder %s15, 1
    %p127 = por %p125, %p126
    %p128 = scmp.ne.s32.totalorder %s117, %s118
    %p129 = scmp.eq.s32.totalorder %s15, 0
    %p130 = por %p128, %p129
    %p131 = scmp.ne.s32.totalorder %s117, %s118
    %p132 = scmp.eq.s32.totalorder %s16, 1
    %p133 = por %p131, %p132
    %p135 = scmp.ne.s32.totalorder %s118, %s134
    %p136 = scmp.eq.s32.totalorder %s16, 0
    %p137 = por %p135, %p136
    %p138 = scmp.le.s32.totalorder 1, %s10
    %p139 = scmp.lt.s32.totalorder %s10, 3
    %p140 = pnand %p138, %p139
    %p141 = pneg %p140
    // Predicated region
    $region9: #{res_unet_att_forward.65} parent=5 // pred_check
      _
    $region10: #{res_unet_att_forward.65} parent=5 // pred_check_branch
      %143 = sbr.rel (%p140) target = $region12
    $region11: #{res_unet_att_forward.65} parent=5 // pred_region
      %s144 = ssub.s32 %s10, 1
      // Predicated region
      $region13: #{res_unet_att_forward.65} parent=11 // pred_check
        %p145 = pneg %p57
      $region14: #{res_unet_att_forward.65} parent=11 // pred_check_branch
        %147 = sbr.rel (%p145) target = $region16
      $region15: #{res_unet_att_forward.65} parent=11 // pred_region
        _
      $region16: #{res_unet_att_forward.65} parent=11 // pred_fallthru
        _
      // Predicated region
      $region17: #{res_unet_att_forward.65} parent=11 // pred_check
        %p148 = pneg %p78
      $region18: #{res_unet_att_forward.65} parent=11 // pred_check_branch
        %150 = sbr.rel (%p148) target = $region20
      $region19: #{res_unet_att_forward.65} parent=11 // pred_region
        _
      $region20: #{res_unet_att_forward.65} parent=11 // pred_fallthru
        _
    $region12: #{res_unet_att_forward.65} parent=5 // pred_fallthru
      _
    %p151 = scmp.lt.s32.totalorder %s10, 2
    // Predicated region
    $region21: #{res_unet_att_forward.65} parent=5 // pred_check
      %p152 = pneg %p151
    $region22: #{res_unet_att_forward.65} parent=5 // pred_check_branch
      %154 = sbr.rel (%p152) target = $region24
    $region23: #{res_unet_att_forward.65} parent=5 // pred_region
      // Predicated region
      $region25: #{res_unet_att_forward.65} parent=23 // pred_check
        %p155 = pneg %p30
      $region26: #{res_unet_att_forward.65} parent=23 // pred_check_branch
        %157 = sbr.rel (%p155) target = $region28
      $region27: #{res_unet_att_forward.65} parent=23 // pred_region
        %s158 = smul.u32 2, %s10
        %p159 = scmp.lt.s32.totalorder %s158, 3
        %s160 = scalar_select %p159, %s158, 3
        %s161 = smul.addr %s160, 8
        %s162 = scalar_lea.vmem %s0, %s161
        %s163 = smul.u32 2, %s10
      $region28: #{res_unet_att_forward.65} parent=23 // pred_fallthru
        _
      // Predicated region
      $region29: #{res_unet_att_forward.65} parent=23 // pred_check
        %p164 = pneg %p98
      $region30: #{res_unet_att_forward.65} parent=23 // pred_check_branch
        %166 = sbr.rel (%p164) target = $region32
      $region31: #{res_unet_att_forward.65} parent=23 // pred_region
        %s167 = smul.u32 2, %s10
        %p168 = scmp.lt.s32.totalorder %s167, 3
        %s169 = scalar_select %p168, %s167, 3
        %s170 = smul.addr %s169, 8
        %s171 = scalar_lea.vmem %s3, %s170
        %s172 = smul.u32 2, %s10
      $region32: #{res_unet_att_forward.65} parent=23 // pred_fallthru
        _
    $region24: #{res_unet_att_forward.65} parent=5 // pred_fallthru
      _
    %p173 = scmp.le.s32.totalorder 1, %s10
    %p174 = scmp.lt.s32.totalorder %s10, 3
    %p175 = pnand %p173, %p174
    %p176 = pneg %p175
    // Predicated region
    $region33: #{res_unet_att_forward.65} parent=5 // pred_check
      _
    $region34: #{res_unet_att_forward.65} parent=5 // pred_check_branch
      %178 = sbr.rel (%p175) target = $region36
    $region35: #{res_unet_att_forward.65} parent=5 // pred_region
      %s179 = ssub.s32 %s10, 1
      %s180 = smul.u32 2, %s15
      %p181 = scmp.lt.s32.totalorder %s180, 3
      %s182 = scalar_select %p181, %s180, 3
      %s183 = smul.addr %s182, 8
      %s184 = scalar_lea.vmem %s0, %s183
      %p185 = pneg %p36
      %p186 = pneg %p33
      %p187 = pneg %p57
      %p188 = pneg %p54
      %p189 = pneg %p78
      %p190 = pneg %p75
      %s191 = smul.u32 2, %s15
      %p192 = scmp.lt.s32.totalorder %s191, 3
      %s193 = scalar_select %p192, %s191, 3
      %s194 = smul.addr %s193, 8
      %s195 = scalar_lea.vmem %s3, %s194
      %p196 = pneg %p104
      %p197 = pneg %p101
      %p198 = pneg %p130
      %p199 = pneg %p127
      %s200 = smul.u32 2, %s15
      %p201 = scmp.lt.s32.totalorder %s200, 3
      %s202 = scalar_select %p201, %s200, 3
      %s203 = smul.addr %s202, 8
      %s204 = scalar_lea.vmem %s4, %s203
      %s205 = smul.u32 2, %s15
      %p206 = scmp.lt.s32.totalorder %s205, 3
      %s207 = scalar_select %p206, %s205, 3
      %s208 = smul.addr %s207, 8
      %s209 = scalar_lea.vmem %s0, %s208
      %s210 = smul.u32 2, %s15
      %s211 = smul.u32 2, %s15
      %p212 = scmp.lt.s32.totalorder %s211, 3
      %s213 = scalar_select %p212, %s211, 3
      %s214 = smul.addr %s213, 8
      %s215 = scalar_lea.vmem %s3, %s214
      %s216 = smul.u32 2, %s15
      %s217 = smul.u32 2, %s15
      %p218 = scmp.lt.s32.totalorder %s217, 3
      %s219 = scalar_select %p218, %s217, 3
      %s220 = smul.addr %s219, 8
      %s221 = scalar_lea.vmem %s4, %s220
      %s222 = smul.u32 2, %s15
      %v223 = vld [vmem:[%s209] sm:$0xff]
      %v224 = vld [vmem:[%s209 + $0x8] sm:$0xff]
      %v225 = vld [vmem:[%s1] sm:$0xff]
      %227 = vset.pattern.permute.xlu0 0
      %228 = vperm.xlu0 %227, %v225
      %v229 = vpop.permute.xlu0 %228
      %v231 = vmul.f32 %v223, %v229
      %v232 = vmul.f32 %v224, %v229
      %v233 = vld [vmem:[%s2] sm:$0xff]
      %235 = vset.pattern.permute.xlu0 0
      %236 = vperm.xlu0 %235, %v233
      %v237 = vpop.permute.xlu0 %236
      %v239 = vadd.f32 %v231, %v237
      %v240 = vadd.f32 %v232, %v237
      %v241 = vmax.f32 %v239, 0.0
      %v242 = vmax.f32 %v240, 0.0
      %v243 = vld [vmem:[%s215] sm:$0xff]
      %v244 = vld [vmem:[%s215 + $0x8] sm:$0xff]
      %v245 = vadd.f32 %v241, %v243
      %v246 = vadd.f32 %v242, %v244
      %247 = vst [vmem:[%s221] sm:$0xff] %v245
      %248 = vst [vmem:[%s221 + $0x8] sm:$0xff] %v246
      %s249 = smul.u32 2, %s15
      %p250 = scmp.lt.s32.totalorder %s249, 3
      %s251 = scalar_select %p250, %s249, 3
      %s252 = smul.addr %s251, 8
      %s253 = scalar_lea.vmem %s4, %s252
      // Predicated region
      $region37: #{res_unet_att_forward.65} parent=35 // pred_check
        %p254 = pneg %p127
      $region38: #{res_unet_att_forward.65} parent=35 // pred_check_branch
        %256 = sbr.rel (%p254) target = $region40
      $region39: #{res_unet_att_forward.65} parent=35 // pred_region
        %s257 = smul.u32 2, %s15
      $region40: #{res_unet_att_forward.65} parent=35 // pred_fallthru
        _
    $region36: #{res_unet_att_forward.65} parent=5 // pred_fallthru
      _
    %p258 = scmp.le.s32.totalorder 2, %s10
    // Predicated region
    $region41: #{res_unet_att_forward.65} parent=5 // pred_check
      %p259 = pneg %p258
    $region42: #{res_unet_att_forward.65} parent=5 // pred_check_branch
      %261 = sbr.rel (%p259) target = $region44
    $region43: #{res_unet_att_forward.65} parent=5 // pred_region
      %s262 = ssub.s32 %s10, 2
      // Predicated region
      $region45: #{res_unet_att_forward.65} parent=43 // pred_check
        %p263 = pneg %p133
      $region46: #{res_unet_att_forward.65} parent=43 // pred_check_branch
        %265 = sbr.rel (%p263) target = $region48
      $region47: #{res_unet_att_forward.65} parent=43 // pred_region
        %s266 = smul.u32 2, %s16
        %p267 = scmp.lt.s32.totalorder %s266, 3
        %s268 = scalar_select %p267, %s266, 3
        %s269 = smul.addr %s268, 8
        %s270 = scalar_lea.vmem %s4, %s269
      $region48: #{res_unet_att_forward.65} parent=43 // pred_fallthru
        _
    $region44: #{res_unet_att_forward.65} parent=5 // pred_fallthru
      _
  $region6: #{res_unet_att_forward.65} parent=0 // loop_footer
    %s14 = sadd.s32 1, %s10
  $region7: #{res_unet_att_forward.65} parent=0 // loop_footer_branch
    %9 = sbr.rel target = $region3
  $region8: #{res_unet_att_forward.65} parent=0 // loop_exit
    _

// kernel: res_unet_att_forward.66
$region0: #{res_unet_att_forward.66}
  #allocation0 [shape = 'u32[]', space=smem, size = 0x4, offset = 0x4, fixed_abs, tag = 'smem constant byte address 0x4 - core index']
  #allocation1 [shape = 'u32[144,128]{1,0:T(1,128)}', space=vmem, size = 0x12000, scoped, tag = 'internal scratch']
  %s0 = inlined_call_operand.vmem [shape: bf16[3,392], index: 0, kind: input, shape index: {}]
  %s1 = inlined_call_operand.vmem [shape: bf16[392,512], index: 1, kind: input, shape index: {}]
  %s2 = inlined_call_operand.vmem [shape: f32[3,512], index: 2, kind: output, shape index: {0}]
  %s3 = inlined_call_operand.hbm [shape: f32[3,1], index: 3, kind: output, shape index: {1}]
  %s4 = inlined_call_operand.hbm [shape: f32[3,1], index: 4, kind: output, shape index: {2}]
  %5 = xla_tuple %s2, %s3, %s4
  %s6 = sld [smem:[#allocation0]]
  $region99: #{res_unet_att_forward.66} parent=0
    _
  %s8 = ssub.s32 1, %s6
  %s9 = scalar_select 0, %s8, %s6
  $region1: #{res_unet_att_forward.66} parent=0
    #allocation2 [shape = 'u8[401408]{0}', space=vmem, size = 0x62000, scoped, tag = 'input window, operand 1']
    #allocation3 [shape = 'u8[2048]{0}', space=vmem, size = 0x800, scoped, tag = 'output window, operand 1, single buffered']
    #allocation4 [shape = 's32[2]{0}', space=sflag, size = 0x8, scoped, tag = 'scoped memory for res_unet_att_forward.66']
    #allocation5 [shape = 'u8[2048]{0}', space=vmem, size = 0x800, scoped, tag = 'output window, operand 2, single buffered']
    #allocation6 [shape = 's32[1]{0}', space=sflag, size = 0x4, scoped, tag = 'scoped memory for res_unet_att_forward.66']
    %10 = vsyncpa [#allocation4], 0
    %11 = vsyncpa [#allocation6], 0
    loop: start=0, step=1, limit=4
    $region2: #{res_unet_att_forward.66} parent=1 // loop_pre_header
      _
    $region3: #{res_unet_att_forward.66} parent=1 // loop_header
      %s13 = sphi 0, %s17
      %p14 = scmp.ge.s32.totalorder %s13, 4
      %s21 = sphi 0, %s21
      %s23 = sphi 0, %s21
      %s24 = sphi 0, %s23
      %s38 = sphi 0, %s24
      %s44 = sphi 0, %s46
      %s47 = sphi 0, %s44
      %s48 = sphi 0, %s47
      %s64 = sphi 0, %s48
      %s70 = sphi 0, %s72
      %s73 = sphi 0, %s70
      %s74 = sphi 0, %s73
      %s90 = sphi 0, %s74
      %s94 = sphi 0, %s94
      %s96 = sphi 0, %s94
      %s97 = sphi 0, %s96
      %s111 = sphi 0, %s97
      %s115 = sphi 0, %s115
      %s117 = sphi 0, %s115
      %s118 = sphi 0, %s117
      %s132 = sphi 0, %s118
    $region4: #{res_unet_att_forward.66} parent=1 // loop_header_branch
      %16 = sbr.rel (%p14) target = $region8
    $region5: #{res_unet_att_forward.66} parent=1 // loop_body
      %s18 = ssub.s32 %s13, 1
      %s19 = ssub.s32 %s13, 2
      %s20 = sadd.s32 %s13, 1
      %s22 = sadd.s32 %s21, 1
      %p25 = scmp.eq.s32.totalorder %s13, 1
      %p26 = scmp.ne.s32.totalorder %s21, %s23
      %p27 = scmp.eq.s32.totalorder %s13, 0
      %p28 = por %p26, %p27
      %p29 = scmp.ne.s32.totalorder %s21, %s23
      %p30 = scmp.eq.s32.totalorder %s18, 1
      %p31 = por %p29, %p30
      %p32 = scmp.ne.s32.totalorder %s23, %s24
      %p33 = scmp.eq.s32.totalorder %s18, 0
      %p34 = por %p32, %p33
      %p35 = scmp.ne.s32.totalorder %s23, %s24
      %p36 = scmp.eq.s32.totalorder %s19, 1
      %p37 = por %p35, %p36
      %p39 = scmp.ne.s32.totalorder %s24, %s38
      %p40 = scmp.eq.s32.totalorder %s19, 0
      %p41 = por %p39, %p40
      %s42 = ssub.s32 %s13, %s20
      %p43 = scmp.eq.s32.totalorder %s42, 0
      %s45 = sadd.s32 %s44, 1
      %s46 = scalar_select %p43, %s44, %s45
      %p49 = pneg %p43
      %p50 = scmp.eq.s32.totalorder %s13, 1
      %p51 = por %p49, %p50
      %p52 = scmp.ne.s32.totalorder %s44, %s47
      %p53 = scmp.eq.s32.totalorder %s13, 0
      %p54 = por %p52, %p53
      %p55 = scmp.ne.s32.totalorder %s44, %s47
      %p56 = scmp.eq.s32.totalorder %s18, 1
      %p57 = por %p55, %p56
      %p58 = scmp.ne.s32.totalorder %s47, %s48
      %p59 = scmp.eq.s32.totalorder %s18, 0
      %p60 = por %p58, %p59
      %p61 = scmp.ne.s32.totalorder %s47, %s48
      %p62 = scmp.eq.s32.totalorder %s19, 1
      %p63 = por %p61, %p62
      %p65 = scmp.ne.s32.totalorder %s48, %s64
      %p66 = scmp.eq.s32.totalorder %s19, 0
      %p67 = por %p65, %p66
      %s68 = ssub.s32 %s13, %s20
      %p69 = scmp.eq.s32.totalorder %s68, 0
      %s71 = sadd.s32 %s70, 1
      %s72 = scalar_select %p69, %s70, %s71
      %p75 = pneg %p69
      %p76 = scmp.eq.s32.totalorder %s13, 1
      %p77 = por %p75, %p76
      %p78 = scmp.ne.s32.totalorder %s70, %s73
      %p79 = scmp.eq.s32.totalorder %s13, 0
      %p80 = por %p78, %p79
      %p81 = scmp.ne.s32.totalorder %s70, %s73
      %p82 = scmp.eq.s32.totalorder %s18, 1
      %p83 = por %p81, %p82
      %p84 = scmp.ne.s32.totalorder %s73, %s74
      %p85 = scmp.eq.s32.totalorder %s18, 0
      %p86 = por %p84, %p85
      %p87 = scmp.ne.s32.totalorder %s73, %s74
      %p88 = scmp.eq.s32.totalorder %s19, 1
      %p89 = por %p87, %p88
      %p91 = scmp.ne.s32.totalorder %s74, %s90
      %p92 = scmp.eq.s32.totalorder %s19, 0
      %p93 = por %p91, %p92
      %s95 = sadd.s32 %s94, 1
      %p98 = scmp.eq.s32.totalorder %s13, 1
      %p99 = scmp.ne.s32.totalorder %s94, %s96
      %p100 = scmp.eq.s32.totalorder %s13, 0
      %p101 = por %p99, %p100
      %p102 = scmp.ne.s32.totalorder %s94, %s96
      %p103 = scmp.eq.s32.totalorder %s18, 1
      %p104 = por %p102, %p103
      %p105 = scmp.ne.s32.totalorder %s96, %s97
      %p106 = scmp.eq.s32.totalorder %s18, 0
      %p107 = por %p105, %p106
      %p108 = scmp.ne.s32.totalorder %s96, %s97
      %p109 = scmp.eq.s32.totalorder %s19, 1
      %p110 = por %p108, %p109
      %p112 = scmp.ne.s32.totalorder %s97, %s111
      %p113 = scmp.eq.s32.totalorder %s19, 0
      %p114 = por %p112, %p113
      %s116 = sadd.s32 %s115, 1
      %p119 = scmp.eq.s32.totalorder %s13, 1
      %p120 = scmp.ne.s32.totalorder %s115, %s117
      %p121 = scmp.eq.s32.totalorder %s13, 0
      %p122 = por %p120, %p121
      %p123 = scmp.ne.s32.totalorder %s115, %s117
      %p124 = scmp.eq.s32.totalorder %s18, 1
      %p125 = por %p123, %p124
      %p126 = scmp.ne.s32.totalorder %s117, %s118
      %p127 = scmp.eq.s32.totalorder %s18, 0
      %p128 = por %p126, %p127
      %p129 = scmp.ne.s32.totalorder %s117, %s118
      %p130 = scmp.eq.s32.totalorder %s19, 1
      %p131 = por %p129, %p130
      %p133 = scmp.ne.s32.totalorder %s118, %s132
      %p134 = scmp.eq.s32.totalorder %s19, 0
      %p135 = por %p133, %p134
      %p136 = scmp.le.s32.totalorder 1, %s13
      %p137 = scmp.lt.s32.totalorder %s13, 3
      %p138 = pnand %p136, %p137
      %p139 = pneg %p138
      // Predicated region
      $region9: #{res_unet_att_forward.66} parent=5 // pred_check
        _
      $region10: #{res_unet_att_forward.66} parent=5 // pred_check_branch
        %141 = sbr.rel (%p138) target = $region12
      $region11: #{res_unet_att_forward.66} parent=5 // pred_region
        %s142 = ssub.s32 %s13, 1
        // Predicated region
        $region13: #{res_unet_att_forward.66} parent=11 // pred_check
          %p143 = pneg %p34
        $region14: #{res_unet_att_forward.66} parent=11 // pred_check_branch
          %145 = sbr.rel (%p143) target = $region16
        $region15: #{res_unet_att_forward.66} parent=11 // pred_region
          _
        $region16: #{res_unet_att_forward.66} parent=11 // pred_fallthru
          _
      $region12: #{res_unet_att_forward.66} parent=5 // pred_fallthru
        _
      %p146 = scmp.lt.s32.totalorder %s13, 2
      // Predicated region
      $region17: #{res_unet_att_forward.66} parent=5 // pred_check
        %p147 = pneg %p146
      $region18: #{res_unet_att_forward.66} parent=5 // pred_check_branch
        %149 = sbr.rel (%p147) target = $region20
      $region19: #{res_unet_att_forward.66} parent=5 // pred_region
        // Predicated region
        $region21: #{res_unet_att_forward.66} parent=19 // pred_check
          %p150 = pneg %p54
        $region22: #{res_unet_att_forward.66} parent=19 // pred_check_branch
          %152 = sbr.rel (%p150) target = $region24
        $region23: #{res_unet_att_forward.66} parent=19 // pred_region
          %s153 = sand.u32 %s44, 1
          %s154 = sand.u32 %s44, 1
          %s155 = smul.addr %s154, 392
          %s156 = scalar_lea.vmem [#allocation2], %s155
          %s157 = smul.u32 2, %s13
          %s158 = smul.addr %s157, 4
          %s159 = scalar_lea.vmem %s1, %s158
          // Predicated region
          $region25: #{res_unet_att_forward.66} parent=23 // pred_check
            _
          $region26: #{res_unet_att_forward.66} parent=23 // pred_check_branch
            %161 = sbr.rel (0) target = $region28
          $region27: #{res_unet_att_forward.66} parent=23 // pred_region
            // Predicated region
            $region29: #{res_unet_att_forward.66} parent=27 // pred_check
              _
            $region30: #{res_unet_att_forward.66} parent=27 // pred_check_branch
              %163 = sbr.rel (0) target = $region32
            $region31: #{res_unet_att_forward.66} parent=27 // pred_region
              // Predicated region
              $region44: #{res_unet_att_forward.66} parent=31 // pred_check
                _
              $region45: #{res_unet_att_forward.66} parent=31 // pred_check_branch
                %274 = sbr.rel (0) target = $region47
              $region46: #{res_unet_att_forward.66} parent=31 // pred_region
                loop: start=0, step=1, limit=1
                $region48: #{res_unet_att_forward.66} parent=46 // loop_pre_header
                  _
                $region49: #{res_unet_att_forward.66} parent=46 // loop_header
                  %s276 = sphi 0, %s280
                  %p277 = scmp.ge.s32.totalorder %s276, 1
                  %s281 = sphi %s159, %s159
                  %s282 = sphi %s156, %s156
                $region50: #{res_unet_att_forward.66} parent=46 // loop_header_branch
                  %279 = sbr.rel (%p277) target = $region54
                $region51: #{res_unet_att_forward.66} parent=46 // loop_body
                  %v283 = vld [vmem:[%s281] sm:$0xff]
                  %284 = vst [vmem:[%s282] sm:$0xff] %v283
                  %v285 = vld [vmem:[%s281 + $0x10] sm:$0xff]
                  %286 = vst [vmem:[%s282 + $0x8] sm:$0xff] %v285
                  %v287 = vld [vmem:[%s281 + $0x20] sm:$0xff]
                  %288 = vst [vmem:[%s282 + $0x10] sm:$0xff] %v287
                  %v289 = vld [vmem:[%s281 + $0x30] sm:$0xff]
                  %290 = vst [vmem:[%s282 + $0x18] sm:$0xff] %v289
                  %v291 = vld [vmem:[%s281 + $0x40] sm:$0xff]
                  %292 = vst [vmem:[%s282 + $0x20] sm:$0xff] %v291
                  %v293 = vld [vmem:[%s281 + $0x50] sm:$0xff]
                  %294 = vst [vmem:[%s282 + $0x28] sm:$0xff] %v293
                  %v295 = vld [vmem:[%s281 + $0x60] sm:$0xff]
                  %296 = vst [vmem:[%s282 + $0x30] sm:$0xff] %v295
                  %v297 = vld [vmem:[%s281 + $0x70] sm:$0xff]
                  %298 = vst [vmem:[%s282 + $0x38] sm:$0xff] %v297
                  %v299 = vld [vmem:[%s281 + $0x80] sm:$0xff]
                  %300 = vst [vmem:[%s282 + $0x40] sm:$0xff] %v299
                  %v301 = vld [vmem:[%s281 + $0x90] sm:$0xff]
                  %302 = vst [vmem:[%s282 + $0x48] sm:$0xff] %v301
                  %v303 = vld [vmem:[%s281 + $0xa0] sm:$0xff]
                  %304 = vst [vmem:[%s282 + $0x50] sm:$0xff] %v303
                  %v305 = vld [vmem:[%s281 + $0xb0] sm:$0xff]
                  %306 = vst [vmem:[%s282 + $0x58] sm:$0xff] %v305
                  %v307 = vld [vmem:[%s281 + $0xc0] sm:$0xff]
                  %308 = vst [vmem:[%s282 + $0x60] sm:$0xff] %v307
                  %v309 = vld [vmem:[%s281 + $0xd0] sm:$0xff]
                  %310 = vst [vmem:[%s282 + $0x68] sm:$0xff] %v309
                  %v311 = vld [vmem:[%s281 + $0xe0] sm:$0xff]
                  %312 = vst [vmem:[%s282 + $0x70] sm:$0xff] %v311
                  %v313 = vld [vmem:[%s281 + $0xf0] sm:$0xff]
                  %314 = vst [vmem:[%s282 + $0x78] sm:$0xff] %v313
                  %v315 = vld [vmem:[%s281 + $0x100] sm:$0xff]
                  %316 = vst [vmem:[%s282 + $0x80] sm:$0xff] %v315
                  %v317 = vld [vmem:[%s281 + $0x110] sm:$0xff]
                  %318 = vst [vmem:[%s282 + $0x88] sm:$0xff] %v317
                  %v319 = vld [vmem:[%s281 + $0x120] sm:$0xff]
                  %320 = vst [vmem:[%s282 + $0x90] sm:$0xff] %v319
                  %v321 = vld [vmem:[%s281 + $0x130] sm:$0xff]
                  %322 = vst [vmem:[%s282 + $0x98] sm:$0xff] %v321
                  %v323 = vld [vmem:[%s281 + $0x140] sm:$0xff]
                  %324 = vst [vmem:[%s282 + $0xa0] sm:$0xff] %v323
                  %v325 = vld [vmem:[%s281 + $0x150] sm:$0xff]
                  %326 = vst [vmem:[%s282 + $0xa8] sm:$0xff] %v325
                  %v327 = vld [vmem:[%s281 + $0x160] sm:$0xff]
                  %328 = vst [vmem:[%s282 + $0xb0] sm:$0xff] %v327
                  %v329 = vld [vmem:[%s281 + $0x170] sm:$0xff]
                  %330 = vst [vmem:[%s282 + $0xb8] sm:$0xff] %v329
                  %v331 = vld [vmem:[%s281 + $0x180] sm:$0xff]
                  %332 = vst [vmem:[%s282 + $0xc0] sm:$0xff] %v331
                  %v333 = vld [vmem:[%s281 + $0x190] sm:$0xff]
                  %334 = vst [vmem:[%s282 + $0xc8] sm:$0xff] %v333
                  %v335 = vld [vmem:[%s281 + $0x1a0] sm:$0xff]
                  %336 = vst [vmem:[%s282 + $0xd0] sm:$0xff] %v335
                  %v337 = vld [vmem:[%s281 + $0x1b0] sm:$0xff]
                  %338 = vst [vmem:[%s282 + $0xd8] sm:$0xff] %v337
                  %v339 = vld [vmem:[%s281 + $0x1c0] sm:$0xff]
                  %340 = vst [vmem:[%s282 + $0xe0] sm:$0xff] %v339
                  %v341 = vld [vmem:[%s281 + $0x1d0] sm:$0xff]
                  %342 = vst [vmem:[%s282 + $0xe8] sm:$0xff] %v341
                  %v343 = vld [vmem:[%s281 + $0x1e0] sm:$0xff]
                  %344 = vst [vmem:[%s282 + $0xf0] sm:$0xff] %v343
                  %v345 = vld [vmem:[%s281 + $0x1f0] sm:$0xff]
                  %346 = vst [vmem:[%s282 + $0xf8] sm:$0xff] %v345
                  %v347 = vld [vmem:[%s281 + $0x200] sm:$0xff]
                  %348 = vst [vmem:[%s282 + $0x100] sm:$0xff] %v347
                  %v349 = vld [vmem:[%s281 + $0x210] sm:$0xff]
                  %350 = vst [vmem:[%s282 + $0x108] sm:$0xff] %v349
                  %v351 = vld [vmem:[%s281 + $0x220] sm:$0xff]
                  %352 = vst [vmem:[%s282 + $0x110] sm:$0xff] %v351
                  %v353 = vld [vmem:[%s281 + $0x230] sm:$0xff]
                  %354 = vst [vmem:[%s282 + $0x118] sm:$0xff] %v353
                  %v355 = vld [vmem:[%s281 + $0x240] sm:$0xff]
                  %356 = vst [vmem:[%s282 + $0x120] sm:$0xff] %v355
                  %v357 = vld [vmem:[%s281 + $0x250] sm:$0xff]
                  %358 = vst [vmem:[%s282 + $0x128] sm:$0xff] %v357
                  %v359 = vld [vmem:[%s281 + $0x260] sm:$0xff]
                  %360 = vst [vmem:[%s282 + $0x130] sm:$0xff] %v359
                  %v361 = vld [vmem:[%s281 + $0x270] sm:$0xff]
                  %362 = vst [vmem:[%s282 + $0x138] sm:$0xff] %v361
                  %v363 = vld [vmem:[%s281 + $0x280] sm:$0xff]
                  %364 = vst [vmem:[%s282 + $0x140] sm:$0xff] %v363
                  %v365 = vld [vmem:[%s281 + $0x290] sm:$0xff]
                  %366 = vst [vmem:[%s282 + $0x148] sm:$0xff] %v365
                  %v367 = vld [vmem:[%s281 + $0x2a0] sm:$0xff]
                  %368 = vst [vmem:[%s282 + $0x150] sm:$0xff] %v367
                  %v369 = vld [vmem:[%s281 + $0x2b0] sm:$0xff]
                  %370 = vst [vmem:[%s282 + $0x158] sm:$0xff] %v369
                  %v371 = vld [vmem:[%s281 + $0x2c0] sm:$0xff]
                  %372 = vst [vmem:[%s282 + $0x160] sm:$0xff] %v371
                  %v373 = vld [vmem:[%s281 + $0x2d0] sm:$0xff]
                  %374 = vst [vmem:[%s282 + $0x168] sm:$0xff] %v373
                  %v375 = vld [vmem:[%s281 + $0x2e0] sm:$0xff]
                  %376 = vst [vmem:[%s282 + $0x170] sm:$0xff] %v375
                  %v377 = vld [vmem:[%s281 + $0x2f0] sm:$0xff]
                  %378 = vst [vmem:[%s282 + $0x178] sm:$0xff] %v377
                  %v379 = vld [vmem:[%s281 + $0x300] sm:$0xff]
                  %380 = vst [vmem:[%s282 + $0x180] sm:$0xff] %v379
                $region52: #{res_unet_att_forward.66} parent=46 // loop_footer
                  %s280 = sadd.s32 1, %s276
                $region53: #{res_unet_att_forward.66} parent=46 // loop_footer_branch
                  %275 = sbr.rel target = $region49
                $region54: #{res_unet_att_forward.66} parent=46 // loop_exit
                  _
              $region47: #{res_unet_att_forward.66} parent=31 // pred_fallthru
                _
              // Predicated region
              $region55: #{res_unet_att_forward.66} parent=31 // pred_check
                _
              $region56: #{res_unet_att_forward.66} parent=31 // pred_check_branch
                %382 = sbr.rel target = $region58
              $region57: #{res_unet_att_forward.66} parent=31 // pred_region
                _
              $region58: #{res_unet_att_forward.66} parent=31 // pred_fallthru
                _
            $region32: #{res_unet_att_forward.66} parent=27 // pred_fallthru
              _
            // Predicated region
            $region33: #{res_unet_att_forward.66} parent=27 // pred_check
              _
            $region34: #{res_unet_att_forward.66} parent=27 // pred_check_branch
              %165 = sbr.rel target = $region36
            $region35: #{res_unet_att_forward.66} parent=27 // pred_region
              loop: start=0, step=1, limit=1
              $region37: #{res_unet_att_forward.66} parent=35 // loop_pre_header
                _
              $region38: #{res_unet_att_forward.66} parent=35 // loop_header
                %s168 = sphi 0, %s172
                %p169 = scmp.ge.s32.totalorder %s168, 1
                %s173 = sphi %s159, %s159
                %s174 = sphi %s156, %s156
              $region39: #{res_unet_att_forward.66} parent=35 // loop_header_branch
                %171 = sbr.rel (%p169) target = $region43
              $region40: #{res_unet_att_forward.66} parent=35 // loop_body
                %v175 = vld [vmem:[%s173] sm:$0xff]
                %176 = vst [vmem:[%s174] sm:$0xff] %v175
                %v177 = vld [vmem:[%s173 + $0x10] sm:$0xff]
                %178 = vst [vmem:[%s174 + $0x8] sm:$0xff] %v177
                %v179 = vld [vmem:[%s173 + $0x20] sm:$0xff]
                %180 = vst [vmem:[%s174 + $0x10] sm:$0xff] %v179
                %v181 = vld [vmem:[%s173 + $0x30] sm:$0xff]
                %182 = vst [vmem:[%s174 + $0x18] sm:$0xff] %v181
                %v183 = vld [vmem:[%s173 + $0x40] sm:$0xff]
                %184 = vst [vmem:[%s174 + $0x20] sm:$0xff] %v183
                %v185 = vld [vmem:[%s173 + $0x50] sm:$0xff]
                %186 = vst [vmem:[%s174 + $0x28] sm:$0xff] %v185
                %v187 = vld [vmem:[%s173 + $0x60] sm:$0xff]
                %188 = vst [vmem:[%s174 + $0x30] sm:$0xff] %v187
                %v189 = vld [vmem:[%s173 + $0x70] sm:$0xff]
                %190 = vst [vmem:[%s174 + $0x38] sm:$0xff] %v189
                %v191 = vld [vmem:[%s173 + $0x80] sm:$0xff]
                %192 = vst [vmem:[%s174 + $0x40] sm:$0xff] %v191
                %v193 = vld [vmem:[%s173 + $0x90] sm:$0xff]
                %194 = vst [vmem:[%s174 + $0x48] sm:$0xff] %v193
                %v195 = vld [vmem:[%s173 + $0xa0] sm:$0xff]
                %196 = vst [vmem:[%s174 + $0x50] sm:$0xff] %v195
                %v197 = vld [vmem:[%s173 + $0xb0] sm:$0xff]
                %198 = vst [vmem:[%s174 + $0x58] sm:$0xff] %v197
                %v199 = vld [vmem:[%s173 + $0xc0] sm:$0xff]
                %200 = vst [vmem:[%s174 + $0x60] sm:$0xff] %v199
                %v201 = vld [vmem:[%s173 + $0xd0] sm:$0xff]
                %202 = vst [vmem:[%s174 + $0x68] sm:$0xff] %v201
                %v203 = vld [vmem:[%s173 + $0xe0] sm:$0xff]
                %204 = vst [vmem:[%s174 + $0x70] sm:$0xff] %v203
                %v205 = vld [vmem:[%s173 + $0xf0] sm:$0xff]
                %206 = vst [vmem:[%s174 + $0x78] sm:$0xff] %v205
                %v207 = vld [vmem:[%s173 + $0x100] sm:$0xff]
                %208 = vst [vmem:[%s174 + $0x80] sm:$0xff] %v207
                %v209 = vld [vmem:[%s173 + $0x110] sm:$0xff]
                %210 = vst [vmem:[%s174 + $0x88] sm:$0xff] %v209
                %v211 = vld [vmem:[%s173 + $0x120] sm:$0xff]
                %212 = vst [vmem:[%s174 + $0x90] sm:$0xff] %v211
                %v213 = vld [vmem:[%s173 + $0x130] sm:$0xff]
                %214 = vst [vmem:[%s174 + $0x98] sm:$0xff] %v213
                %v215 = vld [vmem:[%s173 + $0x140] sm:$0xff]
                %216 = vst [vmem:[%s174 + $0xa0] sm:$0xff] %v215
                %v217 = vld [vmem:[%s173 + $0x150] sm:$0xff]
                %218 = vst [vmem:[%s174 + $0xa8] sm:$0xff] %v217
                %v219 = vld [vmem:[%s173 + $0x160] sm:$0xff]
                %220 = vst [vmem:[%s174 + $0xb0] sm:$0xff] %v219
                %v221 = vld [vmem:[%s173 + $0x170] sm:$0xff]
                %222 = vst [vmem:[%s174 + $0xb8] sm:$0xff] %v221
                %v223 = vld [vmem:[%s173 + $0x180] sm:$0xff]
                %224 = vst [vmem:[%s174 + $0xc0] sm:$0xff] %v223
                %v225 = vld [vmem:[%s173 + $0x190] sm:$0xff]
                %226 = vst [vmem:[%s174 + $0xc8] sm:$0xff] %v225
                %v227 = vld [vmem:[%s173 + $0x1a0] sm:$0xff]
                %228 = vst [vmem:[%s174 + $0xd0] sm:$0xff] %v227
                %v229 = vld [vmem:[%s173 + $0x1b0] sm:$0xff]
                %230 = vst [vmem:[%s174 + $0xd8] sm:$0xff] %v229
                %v231 = vld [vmem:[%s173 + $0x1c0] sm:$0xff]
                %232 = vst [vmem:[%s174 + $0xe0] sm:$0xff] %v231
                %v233 = vld [vmem:[%s173 + $0x1d0] sm:$0xff]
                %234 = vst [vmem:[%s174 + $0xe8] sm:$0xff] %v233
                %v235 = vld [vmem:[%s173 + $0x1e0] sm:$0xff]
                %236 = vst [vmem:[%s174 + $0xf0] sm:$0xff] %v235
                %v237 = vld [vmem:[%s173 + $0x1f0] sm:$0xff]
                %238 = vst [vmem:[%s174 + $0xf8] sm:$0xff] %v237
                %v239 = vld [vmem:[%s173 + $0x200] sm:$0xff]
                %240 = vst [vmem:[%s174 + $0x100] sm:$0xff] %v239
                %v241 = vld [vmem:[%s173 + $0x210] sm:$0xff]
                %242 = vst [vmem:[%s174 + $0x108] sm:$0xff] %v241
                %v243 = vld [vmem:[%s173 + $0x220] sm:$0xff]
                %244 = vst [vmem:[%s174 + $0x110] sm:$0xff] %v243
                %v245 = vld [vmem:[%s173 + $0x230] sm:$0xff]
                %246 = vst [vmem:[%s174 + $0x118] sm:$0xff] %v245
                %v247 = vld [vmem:[%s173 + $0x240] sm:$0xff]
                %248 = vst [vmem:[%s174 + $0x120] sm:$0xff] %v247
                %v249 = vld [vmem:[%s173 + $0x250] sm:$0xff]
                %250 = vst [vmem:[%s174 + $0x128] sm:$0xff] %v249
                %v251 = vld [vmem:[%s173 + $0x260] sm:$0xff]
                %252 = vst [vmem:[%s174 + $0x130] sm:$0xff] %v251
                %v253 = vld [vmem:[%s173 + $0x270] sm:$0xff]
                %254 = vst [vmem:[%s174 + $0x138] sm:$0xff] %v253
                %v255 = vld [vmem:[%s173 + $0x280] sm:$0xff]
                %256 = vst [vmem:[%s174 + $0x140] sm:$0xff] %v255
                %v257 = vld [vmem:[%s173 + $0x290] sm:$0xff]
                %258 = vst [vmem:[%s174 + $0x148] sm:$0xff] %v257
                %v259 = vld [vmem:[%s173 + $0x2a0] sm:$0xff]
                %260 = vst [vmem:[%s174 + $0x150] sm:$0xff] %v259
                %v261 = vld [vmem:[%s173 + $0x2b0] sm:$0xff]
                %262 = vst [vmem:[%s174 + $0x158] sm:$0xff] %v261
                %v263 = vld [vmem:[%s173 + $0x2c0] sm:$0xff]
                %264 = vst [vmem:[%s174 + $0x160] sm:$0xff] %v263
                %v265 = vld [vmem:[%s173 + $0x2d0] sm:$0xff]
                %266 = vst [vmem:[%s174 + $0x168] sm:$0xff] %v265
                %v267 = vld [vmem:[%s173 + $0x2e0] sm:$0xff]
                %268 = vst [vmem:[%s174 + $0x170] sm:$0xff] %v267
                %v269 = vld [vmem:[%s173 + $0x2f0] sm:$0xff]
                %270 = vst [vmem:[%s174 + $0x178] sm:$0xff] %v269
                %v271 = vld [vmem:[%s173 + $0x300] sm:$0xff]
                %272 = vst [vmem:[%s174 + $0x180] sm:$0xff] %v271
              $region41: #{res_unet_att_forward.66} parent=35 // loop_footer
                %s172 = sadd.s32 1, %s168
              $region42: #{res_unet_att_forward.66} parent=35 // loop_footer_branch
                %167 = sbr.rel target = $region38
              $region43: #{res_unet_att_forward.66} parent=35 // loop_exit
                _
            $region36: #{res_unet_att_forward.66} parent=27 // pred_fallthru
              _
          $region28: #{res_unet_att_forward.66} parent=23 // pred_fallthru
            _
          %383 = vnop
        $region24: #{res_unet_att_forward.66} parent=19 // pred_fallthru
          _
      $region20: #{res_unet_att_forward.66} parent=5 // pred_fallthru
        _
      %p384 = scmp.le.s32.totalorder 1, %s13
      %p385 = scmp.lt.s32.totalorder %s13, 3
      %p386 = pnand %p384, %p385
      %p387 = pneg %p386
      // Predicated region
      $region59: #{res_unet_att_forward.66} parent=5 // pred_check
        _
      $region60: #{res_unet_att_forward.66} parent=5 // pred_check_branch
        %389 = sbr.rel (%p386) target = $region62
      $region61: #{res_unet_att_forward.66} parent=5 // pred_region
        %s390 = ssub.s32 %s13, 1
        %s391 = sand.u32 %s47, 1
        %s392 = sand.u32 %s47, 1
        %s393 = smul.addr %s392, 392
        %s394 = scalar_lea.vmem [#allocation2], %s393
        // Predicated region
        $region63: #{res_unet_att_forward.66} parent=61 // pred_check
          %p395 = pneg %p60
        $region64: #{res_unet_att_forward.66} parent=61 // pred_check_branch
          %397 = sbr.rel (%p395) target = $region66
        $region65: #{res_unet_att_forward.66} parent=61 // pred_region
          _
        $region66: #{res_unet_att_forward.66} parent=61 // pred_fallthru
          _
        %p398 = pneg %p34
        %p399 = pneg %p31
        %s400 = sand.u32 %s47, 1
        %s401 = sand.u32 %s47, 1
        %s402 = smul.addr %s401, 392
        %s403 = scalar_lea.vmem [#allocation2], %s402
        %p404 = pneg %p60
        %p405 = pneg %p57
        %p406 = pneg %p86
        %p407 = pneg %p83
        %s408 = smul.u32 2, %s18
        %p409 = scmp.lt.s32.totalorder %s408, 3
        %s410 = scalar_select %p409, %s408, 3
        %s411 = smul.addr %s410, 4
        %s412 = scalar_lea.vmem %s2, %s411
        %p413 = pneg %p107
        %p414 = pneg %p104
        %p415 = pneg %p128
        %p416 = pneg %p125
        %s417 = smul.u32 2, %s18
        %s418 = smul.u32 2, %s18
        %p419 = scmp.lt.s32.totalorder %s418, 3
        %s420 = scalar_select %p419, %s418, 3
        %s421 = smul.addr %s420, 4
        %s422 = scalar_lea.vmem %s2, %s421
        %s423 = smul.u32 2, %s18
        %v425 = vld [vmem:[%s0] sm:$0xff]
        %v426 = vld [vmem:[%s394] sm:$0xff]
        %v427 = vld [vmem:[%s394 + $0x8] sm:$0xff]
        %v428 = vld [vmem:[%s394 + $0x10] sm:$0xff]
        %v429 = vld [vmem:[%s394 + $0x18] sm:$0xff]
        %v430 = vld [vmem:[%s394 + $0x20] sm:$0xff]
        %v431 = vld [vmem:[%s394 + $0x28] sm:$0xff]
        %v432 = vld [vmem:[%s394 + $0x30] sm:$0xff]
        %v433 = vld [vmem:[%s394 + $0x38] sm:$0xff]
        %v434 = vld [vmem:[%s394 + $0x40] sm:$0xff]
        %v435 = vld [vmem:[%s394 + $0x48] sm:$0xff]
        %v436 = vld [vmem:[%s394 + $0x50] sm:$0xff]
        %v437 = vld [vmem:[%s394 + $0x58] sm:$0xff]
        %v438 = vld [vmem:[%s394 + $0x60] sm:$0xff]
        %v439 = vld [vmem:[%s394 + $0x68] sm:$0xff]
        %v440 = vld [vmem:[%s394 + $0x70] sm:$0xff]
        %v441 = vld [vmem:[%s394 + $0x78] sm:$0xff]
        %v442 = vld [vmem:[%s394 + $0x80] sm:$0xff]
        %v443 = vld [vmem:[%s394 + $0x88] sm:$0xff]
        %v444 = vld [vmem:[%s394 + $0x90] sm:$0xff]
        %v445 = vld [vmem:[%s394 + $0x98] sm:$0xff]
        %v446 = vld [vmem:[%s394 + $0xa0] sm:$0xff]
        %v447 = vld [vmem:[%s394 + $0xa8] sm:$0xff]
        %v448 = vld [vmem:[%s394 + $0xb0] sm:$0xff]
        %v449 = vld [vmem:[%s394 + $0xb8] sm:$0xff]
        %v450 = vld [vmem:[%s394 + $0xc0] sm:$0xff]
        %v451 = vld [vmem:[%s394 + $0xc8] sm:$0xff]
        %v452 = vld [vmem:[%s394 + $0xd0] sm:$0xff]
        %v453 = vld [vmem:[%s394 + $0xd8] sm:$0xff]
        %v454 = vld [vmem:[%s394 + $0xe0] sm:$0xff]
        %v455 = vld [vmem:[%s394 + $0xe8] sm:$0xff]
        %v456 = vld [vmem:[%s394 + $0xf0] sm:$0xff]
        %v457 = vld [vmem:[%s394 + $0xf8] sm:$0xff]
        %v458 = vld [vmem:[%s394 + $0x100] sm:$0xff]
        %v459 = vld [vmem:[%s394 + $0x108] sm:$0xff]
        %v460 = vld [vmem:[%s394 + $0x110] sm:$0xff]
        %v461 = vld [vmem:[%s394 + $0x118] sm:$0xff]
        %v462 = vld [vmem:[%s394 + $0x120] sm:$0xff]
        %v463 = vld [vmem:[%s394 + $0x128] sm:$0xff]
        %v464 = vld [vmem:[%s394 + $0x130] sm:$0xff]
        %v465 = vld [vmem:[%s394 + $0x138] sm:$0xff]
        %v466 = vld [vmem:[%s394 + $0x140] sm:$0xff]
        %v467 = vld [vmem:[%s394 + $0x148] sm:$0xff]
        %v468 = vld [vmem:[%s394 + $0x150] sm:$0xff]
        %v469 = vld [vmem:[%s394 + $0x158] sm:$0xff]
        %v470 = vld [vmem:[%s394 + $0x160] sm:$0xff]
        %v471 = vld [vmem:[%s394 + $0x168] sm:$0xff]
        %v472 = vld [vmem:[%s394 + $0x170] sm:$0xff]
        %v473 = vld [vmem:[%s394 + $0x178] sm:$0xff]
        %v474 = vld [vmem:[%s394 + $0x180] sm:$0xff]
        %v476 = vcombine.high %v425, %v425
        %v478 = vunpack.c.l.s4 1983009808
        %v479 = vunpack.c.0.s8 %v478
        %v480 = vlaneseq
        %v481 = vshrl.u32 %v480, 7
        %v482 = vsub.s32 %v479, %v481
        %v483 = vrot.slane %v425, %v482
        %v485 = vunpack.c.l.s4 1983009808
        %v486 = vunpack.c.0.s8 %v485
        %v487 = vlaneseq
        %v488 = vshrl.u32 %v487, 7
        %v489 = vsub.s32 %v486, %v488
        %v490 = vrot.slane %v476, %v489
        %v491 = vcombine.high %v483, %v483
        %v492 = vcombine.high %v490, %v490
        %v545 = vunpack.c.l.b16 %v426
        %v546 = vunpack.c.h.b16 %v426
        %v547 = vunpack.c.l.b16 %v427
        %v548 = vunpack.c.h.b16 %v427
        %v549 = vunpack.c.l.b16 %v428
        %v550 = vunpack.c.h.b16 %v428
        %v551 = vunpack.c.l.b16 %v429
        %v552 = vunpack.c.h.b16 %v429
        %v553 = vunpack.c.l.b16 %v430
        %v554 = vunpack.c.h.b16 %v430
        %v555 = vunpack.c.l.b16 %v431
        %v556 = vunpack.c.h.b16 %v431
        %v557 = vunpack.c.l.b16 %v432
        %v558 = vunpack.c.h.b16 %v432
        %v559 = vunpack.c.l.b16 %v433
        %v560 = vunpack.c.h.b16 %v433
        %v561 = vunpack.c.l.b16 %v434
        %v562 = vunpack.c.h.b16 %v434
        %v563 = vunpack.c.l.b16 %v435
        %v564 = vunpack.c.h.b16 %v435
        %v565 = vunpack.c.l.b16 %v436
        %v566 = vunpack.c.h.b16 %v436
        %v567 = vunpack.c.l.b16 %v437
        %v568 = vunpack.c.h.b16 %v437
        %v569 = vunpack.c.l.b16 %v438
        %v570 = vunpack.c.h.b16 %v438
        %v571 = vunpack.c.l.b16 %v439
        %v572 = vunpack.c.h.b16 %v439
        %v573 = vunpack.c.l.b16 %v440
        %v574 = vunpack.c.h.b16 %v440
        %v575 = vunpack.c.l.b16 %v441
        %v576 = vunpack.c.h.b16 %v441
        %v577 = vunpack.c.l.b16 %v442
        %v578 = vunpack.c.h.b16 %v442
        %v579 = vunpack.c.l.b16 %v443
        %v580 = vunpack.c.h.b16 %v443
        %v581 = vunpack.c.l.b16 %v444
        %v582 = vunpack.c.h.b16 %v444
        %v583 = vunpack.c.l.b16 %v445
        %v584 = vunpack.c.h.b16 %v445
        %v585 = vunpack.c.l.b16 %v446
        %v586 = vunpack.c.h.b16 %v446
        %v587 = vunpack.c.l.b16 %v447
        %v588 = vunpack.c.h.b16 %v447
        %v589 = vunpack.c.l.b16 %v448
        %v590 = vunpack.c.h.b16 %v448
        %v591 = vunpack.c.l.b16 %v449
        %v592 = vunpack.c.h.b16 %v449
        %v593 = vunpack.c.l.b16 %v450
        %v594 = vunpack.c.h.b16 %v450
        %v595 = vunpack.c.l.b16 %v451
        %v596 = vunpack.c.h.b16 %v451
        %v597 = vunpack.c.l.b16 %v452
        %v598 = vunpack.c.h.b16 %v452
        %v599 = vunpack.c.l.b16 %v453
        %v600 = vunpack.c.h.b16 %v453
        %v601 = vunpack.c.l.b16 %v454
        %v602 = vunpack.c.h.b16 %v454
        %v603 = vunpack.c.l.b16 %v455
        %v604 = vunpack.c.h.b16 %v455
        %v605 = vunpack.c.l.b16 %v456
        %v606 = vunpack.c.h.b16 %v456
        %v607 = vunpack.c.l.b16 %v457
        %v608 = vunpack.c.h.b16 %v457
        %v609 = vunpack.c.l.b16 %v458
        %v610 = vunpack.c.h.b16 %v458
        %v611 = vunpack.c.l.b16 %v459
        %v612 = vunpack.c.h.b16 %v459
        %v613 = vunpack.c.l.b16 %v460
        %v614 = vunpack.c.h.b16 %v460
        %v615 = vunpack.c.l.b16 %v461
        %v616 = vunpack.c.h.b16 %v461
        %v617 = vunpack.c.l.b16 %v462
        %v618 = vunpack.c.h.b16 %v462
        %v619 = vunpack.c.l.b16 %v463
        %v620 = vunpack.c.h.b16 %v463
        %v621 = vunpack.c.l.b16 %v464
        %v622 = vunpack.c.h.b16 %v464
        %v623 = vunpack.c.l.b16 %v465
        %v624 = vunpack.c.h.b16 %v465
        %v625 = vunpack.c.l.b16 %v466
        %v626 = vunpack.c.h.b16 %v466
        %v627 = vunpack.c.l.b16 %v467
        %v628 = vunpack.c.h.b16 %v467
        %v629 = vunpack.c.l.b16 %v468
        %v630 = vunpack.c.h.b16 %v468
        %v631 = vunpack.c.l.b16 %v469
        %v632 = vunpack.c.h.b16 %v469
        %v633 = vunpack.c.l.b16 %v470
        %v634 = vunpack.c.h.b16 %v470
        %v635 = vunpack.c.l.b16 %v471
        %v636 = vunpack.c.h.b16 %v471
        %v637 = vunpack.c.l.b16 %v472
        %v638 = vunpack.c.h.b16 %v472
        %v639 = vunpack.c.l.b16 %v473
        %v640 = vunpack.c.h.b16 %v473
        %v641 = vunpack.c.l.b16 %v474
        %v642 = vunpack.c.h.b16 %v474
        %v643 = vpack.c.b16 %v547, %v545
        %v644 = vpack.c.b16 %v548, %v546
        %v645 = vpack.c.b16 %v551, %v549
        %v646 = vpack.c.b16 %v552, %v550
        %v647 = vpack.c.b16 %v555, %v553
        %v648 = vpack.c.b16 %v556, %v554
        %v649 = vpack.c.b16 %v559, %v557
        %v650 = vpack.c.b16 %v560, %v558
        %v651 = vpack.c.b16 %v563, %v561
        %v652 = vpack.c.b16 %v564, %v562
        %v653 = vpack.c.b16 %v567, %v565
        %v654 = vpack.c.b16 %v568, %v566
        %v655 = vpack.c.b16 %v571, %v569
        %v656 = vpack.c.b16 %v572, %v570
        %v657 = vpack.c.b16 %v575, %v573
        %v658 = vpack.c.b16 %v576, %v574
        %v659 = vpack.c.b16 %v579, %v577
        %v660 = vpack.c.b16 %v580, %v578
        %v661 = vpack.c.b16 %v583, %v581
        %v662 = vpack.c.b16 %v584, %v582
        %v663 = vpack.c.b16 %v587, %v585
        %v664 = vpack.c.b16 %v588, %v586
        %v665 = vpack.c.b16 %v591, %v589
        %v666 = vpack.c.b16 %v592, %v590
        %v667 = vpack.c.b16 %v595, %v593
        %v668 = vpack.c.b16 %v596, %v594
        %v669 = vpack.c.b16 %v599, %v597
        %v670 = vpack.c.b16 %v600, %v598
        %v671 = vpack.c.b16 %v603, %v601
        %v672 = vpack.c.b16 %v604, %v602
        %v673 = vpack.c.b16 %v607, %v605
        %v674 = vpack.c.b16 %v608, %v606
        %v675 = vpack.c.b16 %v611, %v609
        %v676 = vpack.c.b16 %v612, %v610
        %v677 = vpack.c.b16 %v615, %v613
        %v678 = vpack.c.b16 %v616, %v614
        %v679 = vpack.c.b16 %v619, %v617
        %v680 = vpack.c.b16 %v620, %v618
        %v681 = vpack.c.b16 %v623, %v621
        %v682 = vpack.c.b16 %v624, %v622
        %v683 = vpack.c.b16 %v627, %v625
        %v684 = vpack.c.b16 %v628, %v626
        %v685 = vpack.c.b16 %v631, %v629
        %v686 = vpack.c.b16 %v632, %v630
        %v687 = vpack.c.b16 %v635, %v633
        %v688 = vpack.c.b16 %v636, %v634
        %v689 = vpack.c.b16 %v639, %v637
        %v690 = vpack.c.b16 %v640, %v638
        %v691 = vpack.c.b16 %v641, %v641
        %v692 = vpack.c.b16 %v642, %v642
        %vm741 = vcmask 64512
        %v743 = vsel %vm741, %v492, 0
        %vm745 = vcmask 1043456
        %v747 = vsel %vm745, %v691, 0
        %v750 = vsel %vm745, %v692, 0
        %752 = vmatprep.subr.bf16.mxu0 %v644
        %753 = vmatpush1.bf16.msra.mxu0 %v643
        %754 = vmatprep.subr.bf16.mxu0 %v646
        %755 = vmatpush1.bf16.msra.mxu0 %v645
        %756 = vmatprep.subr.bf16.mxu0 %v648
        %757 = vmatpush1.bf16.msra.mxu0 %v647
        %758 = vmatprep.subr.bf16.mxu0 %v650
        %759 = vmatpush1.bf16.msra.mxu0 %v649
        %760 = vmatprep.subr.bf16.mxu0 %v652
        %761 = vmatpush1.bf16.msra.mxu0 %v651
        %762 = vmatprep.subr.bf16.mxu0 %v654
        %763 = vmatpush1.bf16.msra.mxu0 %v653
        %764 = vmatprep.subr.bf16.mxu0 %v656
        %765 = vmatpush1.bf16.msra.mxu0 %v655
        %766 = vmatprep.subr.bf16.mxu0 %v658
        %767 = vmatpush1.bf16.msra.mxu0 %v657
        %768 = vmatprep.subr.bf16.mxu0 %v660
        %769 = vmatpush1.bf16.msra.mxu0 %v659
        %770 = vmatprep.subr.bf16.mxu0 %v662
        %771 = vmatpush1.bf16.msra.mxu0 %v661
        %772 = vmatprep.subr.bf16.mxu0 %v664
        %773 = vmatpush1.bf16.msra.mxu0 %v663
        %774 = vmatprep.subr.bf16.mxu0 %v666
        %775 = vmatpush1.bf16.msra.mxu0 %v665
        %776 = vmatprep.subr.bf16.mxu0 %v668
        %777 = vmatpush1.bf16.msra.mxu0 %v667
        %778 = vmatprep.subr.bf16.mxu0 %v670
        %779 = vmatpush1.bf16.msra.mxu0 %v669
        %780 = vmatprep.subr.bf16.mxu0 %v672
        %781 = vmatpush1.bf16.msra.mxu0 %v671
        %782 = vmatprep.subr.bf16.mxu0 %v674
        %783 = vmatpush1.bf16.msra.mxu0 %v673
        %784 = vmatprep.mubr.bf16.mxu0 %v491
        %785 = vmatmul.mubr.bf16.gmra.mrb[0].mxu0 %v483
        %v786 = vpop.f32.mrb[0].mxu0
        %v787 = vadd.f32 0.0, %v786
        %v788 = vpop.f32.mrb[0].mxu0
        %v789 = vadd.f32 0.0, %v788
        %v790 = vpop.f32.mrb[0].mxu0
        %v791 = vpop.f32.mrb[0].mxu0
        %792 = vdwg.mxu0
        %793 = vmatprep.subr.bf16.mxu0 %v676
        %794 = vmatpush1.bf16.msra.mxu0 %v675
        %795 = vmatprep.subr.bf16.mxu0 %v678
        %796 = vmatpush1.bf16.msra.mxu0 %v677
        %797 = vmatprep.subr.bf16.mxu0 %v680
        %798 = vmatpush1.bf16.msra.mxu0 %v679
        %799 = vmatprep.subr.bf16.mxu0 %v682
        %800 = vmatpush1.bf16.msra.mxu0 %v681
        %801 = vmatprep.subr.bf16.mxu0 %v684
        %802 = vmatpush1.bf16.msra.mxu0 %v683
        %803 = vmatprep.subr.bf16.mxu0 %v686
        %804 = vmatpush1.bf16.msra.mxu0 %v685
        %805 = vmatprep.subr.bf16.mxu0 %v688
        %806 = vmatpush1.bf16.msra.mxu0 %v687
        %807 = vmatprep.subr.bf16.mxu0 %v690
        %808 = vmatpush1.bf16.msra.mxu0 %v689
        %809 = vmatprep.subr.bf16.mxu0 %v750
        %810 = vmatpush1.bf16.msra.mxu0 %v747
        %811 = vmatprep.subr.bf16.mxu0 0
        %812 = vmatpush1.bf16.msra.mxu0 0
        %813 = vmatprep.subr.bf16.mxu0 0
        %814 = vmatpush1.bf16.msra.mxu0 0
        %815 = vmatprep.subr.bf16.mxu0 0
        %816 = vmatpush1.bf16.msra.mxu0 0
        %817 = vmatprep.subr.bf16.mxu0 0
        %818 = vmatpush1.bf16.msra.mxu0 0
        %819 = vmatprep.subr.bf16.mxu0 0
        %820 = vmatpush1.bf16.msra.mxu0 0
        %821 = vmatprep.subr.bf16.mxu0 0
        %822 = vmatpush1.bf16.msra.mxu0 0
        %823 = vmatprep.subr.bf16.mxu0 0
        %824 = vmatpush1.bf16.msra.mxu0 0
        %825 = vmatprep.mubr.bf16.mxu0 %v743
        %826 = vmatmul.mubr.bf16.gmra.mrb[0].mxu0 %v490
        %v827 = vpop.f32.mrb[0].mxu0
        %v828 = vadd.f32 %v787, %v827
        %v829 = vpop.f32.mrb[0].mxu0
        %v830 = vadd.f32 %v789, %v829
        %v831 = vpop.f32.mrb[0].mxu0
        %v832 = vpop.f32.mrb[0].mxu0
        %833 = vdwg.mxu0
        %v836 = vcombine.low %v828, %v830
        %838 = vst [vmem:[%s422] sm:$0x77] %v836
        %p839 = scmp.eq.s32.totalorder %s18, 0
        // Predicated region
        $region67: #{res_unet_att_forward.66} parent=61 // pred_check
          %p840 = pneg %p839
        $region68: #{res_unet_att_forward.66} parent=61 // pred_check_branch
          %842 = sbr.rel (%p840) target = $region70
        $region69: #{res_unet_att_forward.66} parent=61 // pred_region
          %vm843 = vcmask 2048
          %844 = vst.msk [vmem:[#allocation3] sm:$0x7] %vm843, 0.0
          %845 = vst.msk [vmem:[#allocation5] sm:$0x7] %vm843, 0.0
        $region70: #{res_unet_att_forward.66} parent=61 // pred_fallthru
          _
        %v846 = vld [vmem:[#allocation3] sm:$0x7]
        %vm847 = vcmask 1042432
        %v848 = vsel %vm847, %v828, 0.0
        %v849 = vsel %vm847, %v830, 0.0
        %v850 = vadd.f32 %v848, %v849
        %851 = vadd.xlane.f32.xlu0 %v850
        %v852 = vpop.xlane.xlu0 %851
        %v853 = vadd.f32 %v846, %v852
        %vm854 = vcmask 2048
        %855 = vst.msk [vmem:[#allocation3] sm:$0x7] %vm854, %v853
        %v856 = vld [vmem:[#allocation5] sm:$0x7]
        %v857 = vmul.f32 %v828, %v828
        %v858 = vmul.f32 %v830, %v830
        %v859 = vsel %vm847, %v857, 0.0
        %v860 = vsel %vm847, %v858, 0.0
        %v861 = vadd.f32 %v859, %v860
        %862 = vadd.xlane.f32.xlu0 %v861
        %v863 = vpop.xlane.xlu0 %862
        %v864 = vadd.f32 %v856, %v863
        %865 = vst.msk [vmem:[#allocation5] sm:$0x7] %vm854, %v864
        %s866 = smul.u32 2, %s18
        %p867 = scmp.lt.s32.totalorder %s866, 3
        %s868 = scalar_select %p867, %s866, 3
        %s869 = smul.addr %s868, 4
        %s870 = scalar_lea.vmem %s2, %s869
        // Predicated region
        $region71: #{res_unet_att_forward.66} parent=61 // pred_check
          %p871 = pneg %p83
        $region72: #{res_unet_att_forward.66} parent=61 // pred_check_branch
          %873 = sbr.rel (%p871) target = $region74
        $region73: #{res_unet_att_forward.66} parent=61 // pred_region
          %s874 = smul.u32 2, %s18
        $region74: #{res_unet_att_forward.66} parent=61 // pred_fallthru
          _
        // Predicated region
        $region75: #{res_unet_att_forward.66} parent=61 // pred_check
          %p875 = pneg %p104
        $region76: #{res_unet_att_forward.66} parent=61 // pred_check_branch
          %877 = sbr.rel (%p875) target = $region78
        $region77: #{res_unet_att_forward.66} parent=61 // pred_region
          %s879 = ssub.s32 64, 64
          %880 = vsyncadd [#allocation4], %s879
          %s882 = sshll.u32 [#allocation3], 4
          %s883 = int_to_ptr.vmem [resolvable:$true] %s882
          %885 = dma.vmem_to_hbm [thread:$0]  %s883, 64, %s3, [#allocation4]
        $region78: #{res_unet_att_forward.66} parent=61 // pred_fallthru
          _
        // Predicated region
        $region79: #{res_unet_att_forward.66} parent=61 // pred_check
          %p886 = pneg %p125
        $region80: #{res_unet_att_forward.66} parent=61 // pred_check_branch
          %888 = sbr.rel (%p886) target = $region82
        $region81: #{res_unet_att_forward.66} parent=61 // pred_region
          %s890 = ssub.s32 64, 64
          %891 = vsyncadd [#allocation6], %s890
          %s893 = sshll.u32 [#allocation5], 4
          %s894 = int_to_ptr.vmem [resolvable:$true] %s893
          %896 = dma.vmem_to_hbm [thread:$0]  %s894, 64, %s4, [#allocation6]
        $region82: #{res_unet_att_forward.66} parent=61 // pred_fallthru
          _
        // Predicated region
        $region83: #{res_unet_att_forward.66} parent=61 // pred_check
          %p897 = pneg %p104
        $region84: #{res_unet_att_forward.66} parent=61 // pred_check_branch
          %899 = sbr.rel (%p897) target = $region86
        $region85: #{res_unet_att_forward.66} parent=61 // pred_region
          %900 = dma.done [#allocation4], 64
        $region86: #{res_unet_att_forward.66} parent=61 // pred_fallthru
          _
        // Predicated region
        $region87: #{res_unet_att_forward.66} parent=61 // pred_check
          %p901 = pneg %p125
        $region88: #{res_unet_att_forward.66} parent=61 // pred_check_branch
          %903 = sbr.rel (%p901) target = $region90
        $region89: #{res_unet_att_forward.66} parent=61 // pred_region
          %904 = dma.done [#allocation6], 64
        $region90: #{res_unet_att_forward.66} parent=61 // pred_fallthru
          _
      $region62: #{res_unet_att_forward.66} parent=5 // pred_fallthru
        _
      %p905 = scmp.le.s32.totalorder 2, %s13
      // Predicated region
      $region91: #{res_unet_att_forward.66} parent=5 // pred_check
        %p906 = pneg %p905
      $region92: #{res_unet_att_forward.66} parent=5 // pred_check_branch
        %908 = sbr.rel (%p906) target = $region94
      $region93: #{res_unet_att_forward.66} parent=5 // pred_region
        %s909 = ssub.s32 %s13, 2
        // Predicated region
        $region95: #{res_unet_att_forward.66} parent=93 // pred_check
          %p910 = pneg %p89
        $region96: #{res_unet_att_forward.66} parent=93 // pred_check_branch
          %912 = sbr.rel (%p910) target = $region98
        $region97: #{res_unet_att_forward.66} parent=93 // pred_region
          %s913 = smul.u32 2, %s19
          %p914 = scmp.lt.s32.totalorder %s913, 3
          %s915 = scalar_select %p914, %s913, 3
          %s916 = smul.addr %s915, 4
          %s917 = scalar_lea.vmem %s2, %s916
        $region98: #{res_unet_att_forward.66} parent=93 // pred_fallthru
          _
      $region94: #{res_unet_att_forward.66} parent=5 // pred_fallthru
        _
    $region6: #{res_unet_att_forward.66} parent=1 // loop_footer
      %s17 = sadd.s32 1, %s13
    $region7: #{res_unet_att_forward.66} parent=1 // loop_footer_branch
      %12 = sbr.rel target = $region3
    $region8: #{res_unet_att_forward.66} parent=1 // loop_exit
      _
    %918 = vsyncpa [#allocation4], 1
    %s919 = scalar_lea.sflag [#allocation4], 1
    %920 = vsyncpa %s919, 1
    %921 = vsyncpa [#allocation6], 1

// kernel: res_unet_att_forward.67
$region0: #{res_unet_att_forward.67}
  #allocation0 [shape = 'u32[]', space=smem, size = 0x4, offset = 0x4, fixed_abs, tag = 'smem constant byte address 0x4 - core index']
  #allocation1 [shape = 'u32[144,128]{1,0:T(1,128)}', space=vmem, size = 0x12000, scoped, tag = 'internal scratch']
  %s0 = inlined_call_operand.vmem [shape: f32[3,512], index: 0, kind: input, shape index: {}]
  %s1 = inlined_call_operand.vmem [shape: f32[3,1], index: 1, kind: input, shape index: {}]
  %s2 = inlined_call_operand.vmem [shape: f32[3,1], index: 2, kind: input, shape index: {}]
  %s3 = inlined_call_operand.vmem [shape: f32[3,512], index: 3, kind: output, shape index: {}]
  %s4 = sld [smem:[#allocation0]]
  $region45: #{res_unet_att_forward.67} parent=0
    _
  %s6 = ssub.s32 1, %s4
  %s7 = scalar_select 0, %s6, %s4
  loop: start=0, step=1, limit=4
  $region2: #{res_unet_att_forward.67} parent=0 // loop_pre_header
    _
  $region3: #{res_unet_att_forward.67} parent=0 // loop_header
    %s9 = sphi 0, %s13
    %p10 = scmp.ge.s32.totalorder %s9, 4
    %s19 = sphi 0, %s21
    %s22 = sphi 0, %s19
    %s23 = sphi 0, %s22
    %s39 = sphi 0, %s23
    %s43 = sphi 0, %s43
    %s45 = sphi 0, %s43
    %s46 = sphi 0, %s45
    %s60 = sphi 0, %s46
    %s64 = sphi 0, %s64
    %s66 = sphi 0, %s64
    %s67 = sphi 0, %s66
    %s81 = sphi 0, %s67
    %s87 = sphi 0, %s89
    %s90 = sphi 0, %s87
    %s91 = sphi 0, %s90
    %s107 = sphi 0, %s91
  $region4: #{res_unet_att_forward.67} parent=0 // loop_header_branch
    %12 = sbr.rel (%p10) target = $region8
  $region5: #{res_unet_att_forward.67} parent=0 // loop_body
    %s14 = ssub.s32 %s9, 1
    %s15 = ssub.s32 %s9, 2
    %s16 = sadd.s32 %s9, 1
    %s17 = ssub.s32 %s9, %s16
    %p18 = scmp.eq.s32.totalorder %s17, 0
    %s20 = sadd.s32 %s19, 1
    %s21 = scalar_select %p18, %s19, %s20
    %p24 = pneg %p18
    %p25 = scmp.eq.s32.totalorder %s9, 1
    %p26 = por %p24, %p25
    %p27 = scmp.ne.s32.totalorder %s19, %s22
    %p28 = scmp.eq.s32.totalorder %s9, 0
    %p29 = por %p27, %p28
    %p30 = scmp.ne.s32.totalorder %s19, %s22
    %p31 = scmp.eq.s32.totalorder %s14, 1
    %p32 = por %p30, %p31
    %p33 = scmp.ne.s32.totalorder %s22, %s23
    %p34 = scmp.eq.s32.totalorder %s14, 0
    %p35 = por %p33, %p34
    %p36 = scmp.ne.s32.totalorder %s22, %s23
    %p37 = scmp.eq.s32.totalorder %s15, 1
    %p38 = por %p36, %p37
    %p40 = scmp.ne.s32.totalorder %s23, %s39
    %p41 = scmp.eq.s32.totalorder %s15, 0
    %p42 = por %p40, %p41
    %s44 = sadd.s32 %s43, 1
    %p47 = scmp.eq.s32.totalorder %s9, 1
    %p48 = scmp.ne.s32.totalorder %s43, %s45
    %p49 = scmp.eq.s32.totalorder %s9, 0
    %p50 = por %p48, %p49
    %p51 = scmp.ne.s32.totalorder %s43, %s45
    %p52 = scmp.eq.s32.totalorder %s14, 1
    %p53 = por %p51, %p52
    %p54 = scmp.ne.s32.totalorder %s45, %s46
    %p55 = scmp.eq.s32.totalorder %s14, 0
    %p56 = por %p54, %p55
    %p57 = scmp.ne.s32.totalorder %s45, %s46
    %p58 = scmp.eq.s32.totalorder %s15, 1
    %p59 = por %p57, %p58
    %p61 = scmp.ne.s32.totalorder %s46, %s60
    %p62 = scmp.eq.s32.totalorder %s15, 0
    %p63 = por %p61, %p62
    %s65 = sadd.s32 %s64, 1
    %p68 = scmp.eq.s32.totalorder %s9, 1
    %p69 = scmp.ne.s32.totalorder %s64, %s66
    %p70 = scmp.eq.s32.totalorder %s9, 0
    %p71 = por %p69, %p70
    %p72 = scmp.ne.s32.totalorder %s64, %s66
    %p73 = scmp.eq.s32.totalorder %s14, 1
    %p74 = por %p72, %p73
    %p75 = scmp.ne.s32.totalorder %s66, %s67
    %p76 = scmp.eq.s32.totalorder %s14, 0
    %p77 = por %p75, %p76
    %p78 = scmp.ne.s32.totalorder %s66, %s67
    %p79 = scmp.eq.s32.totalorder %s15, 1
    %p80 = por %p78, %p79
    %p82 = scmp.ne.s32.totalorder %s67, %s81
    %p83 = scmp.eq.s32.totalorder %s15, 0
    %p84 = por %p82, %p83
    %s85 = ssub.s32 %s9, %s16
    %p86 = scmp.eq.s32.totalorder %s85, 0
    %s88 = sadd.s32 %s87, 1
    %s89 = scalar_select %p86, %s87, %s88
    %p92 = pneg %p86
    %p93 = scmp.eq.s32.totalorder %s9, 1
    %p94 = por %p92, %p93
    %p95 = scmp.ne.s32.totalorder %s87, %s90
    %p96 = scmp.eq.s32.totalorder %s9, 0
    %p97 = por %p95, %p96
    %p98 = scmp.ne.s32.totalorder %s87, %s90
    %p99 = scmp.eq.s32.totalorder %s14, 1
    %p100 = por %p98, %p99
    %p101 = scmp.ne.s32.totalorder %s90, %s91
    %p102 = scmp.eq.s32.totalorder %s14, 0
    %p103 = por %p101, %p102
    %p104 = scmp.ne.s32.totalorder %s90, %s91
    %p105 = scmp.eq.s32.totalorder %s15, 1
    %p106 = por %p104, %p105
    %p108 = scmp.ne.s32.totalorder %s91, %s107
    %p109 = scmp.eq.s32.totalorder %s15, 0
    %p110 = por %p108, %p109
    %p111 = scmp.le.s32.totalorder 1, %s9
    %p112 = scmp.lt.s32.totalorder %s9, 3
    %p113 = pnand %p111, %p112
    %p114 = pneg %p113
    // Predicated region
    $region9: #{res_unet_att_forward.67} parent=5 // pred_check
      _
    $region10: #{res_unet_att_forward.67} parent=5 // pred_check_branch
      %116 = sbr.rel (%p113) target = $region12
    $region11: #{res_unet_att_forward.67} parent=5 // pred_region
      %s117 = ssub.s32 %s9, 1
      // Predicated region
      $region13: #{res_unet_att_forward.67} parent=11 // pred_check
        %p118 = pneg %p56
      $region14: #{res_unet_att_forward.67} parent=11 // pred_check_branch
        %120 = sbr.rel (%p118) target = $region16
      $region15: #{res_unet_att_forward.67} parent=11 // pred_region
        _
      $region16: #{res_unet_att_forward.67} parent=11 // pred_fallthru
        _
      // Predicated region
      $region17: #{res_unet_att_forward.67} parent=11 // pred_check
        %p121 = pneg %p77
      $region18: #{res_unet_att_forward.67} parent=11 // pred_check_branch
        %123 = sbr.rel (%p121) target = $region20
      $region19: #{res_unet_att_forward.67} parent=11 // pred_region
        _
      $region20: #{res_unet_att_forward.67} parent=11 // pred_fallthru
        _
    $region12: #{res_unet_att_forward.67} parent=5 // pred_fallthru
      _
    %p124 = scmp.lt.s32.totalorder %s9, 2
    // Predicated region
    $region21: #{res_unet_att_forward.67} parent=5 // pred_check
      %p125 = pneg %p124
    $region22: #{res_unet_att_forward.67} parent=5 // pred_check_branch
      %127 = sbr.rel (%p125) target = $region24
    $region23: #{res_unet_att_forward.67} parent=5 // pred_region
      // Predicated region
      $region25: #{res_unet_att_forward.67} parent=23 // pred_check
        %p128 = pneg %p29
      $region26: #{res_unet_att_forward.67} parent=23 // pred_check_branch
        %130 = sbr.rel (%p128) target = $region28
      $region27: #{res_unet_att_forward.67} parent=23 // pred_region
        %s131 = smul.u32 2, %s9
        %p132 = scmp.lt.s32.totalorder %s131, 3
        %s133 = scalar_select %p132, %s131, 3
        %s134 = smul.addr %s133, 4
        %s135 = scalar_lea.vmem %s0, %s134
        %s136 = smul.u32 2, %s9
      $region28: #{res_unet_att_forward.67} parent=23 // pred_fallthru
        _
    $region24: #{res_unet_att_forward.67} parent=5 // pred_fallthru
      _
    %p137 = scmp.le.s32.totalorder 1, %s9
    %p138 = scmp.lt.s32.totalorder %s9, 3
    %p139 = pnand %p137, %p138
    %p140 = pneg %p139
    // Predicated region
    $region29: #{res_unet_att_forward.67} parent=5 // pred_check
      _
    $region30: #{res_unet_att_forward.67} parent=5 // pred_check_branch
      %142 = sbr.rel (%p139) target = $region32
    $region31: #{res_unet_att_forward.67} parent=5 // pred_region
      %s143 = ssub.s32 %s9, 1
      %s144 = smul.u32 2, %s14
      %p145 = scmp.lt.s32.totalorder %s144, 3
      %s146 = scalar_select %p145, %s144, 3
      %s147 = smul.addr %s146, 4
      %s148 = scalar_lea.vmem %s0, %s147
      %p149 = pneg %p35
      %p150 = pneg %p32
      %p151 = pneg %p56
      %p152 = pneg %p53
      %p153 = pneg %p77
      %p154 = pneg %p74
      %p155 = pneg %p103
      %p156 = pneg %p100
      %s157 = smul.u32 2, %s14
      %p158 = scmp.lt.s32.totalorder %s157, 3
      %s159 = scalar_select %p158, %s157, 3
      %s160 = smul.addr %s159, 4
      %s161 = scalar_lea.vmem %s3, %s160
      %s162 = smul.u32 2, %s14
      %p163 = scmp.lt.s32.totalorder %s162, 3
      %s164 = scalar_select %p163, %s162, 3
      %s165 = smul.addr %s164, 4
      %s166 = scalar_lea.vmem %s0, %s165
      %s167 = smul.u32 2, %s14
      %s168 = smul.u32 2, %s14
      %p169 = scmp.lt.s32.totalorder %s168, 3
      %s170 = scalar_select %p169, %s168, 3
      %s171 = smul.addr %s170, 4
      %s172 = scalar_lea.vmem %s3, %s171
      %s173 = smul.u32 2, %s14
      %v174 = vld [vmem:[%s166] sm:$0x77]
      %v175 = vld [vmem:[%s1] sm:$0x7]
      %177 = vset.pattern.permute.xlu0 0
      %178 = vperm.xlu0 %177, %v175
      %v179 = vpop.permute.xlu0 %178
      %v181 = vunpack.c.l.s4 839922192
      %v182 = vunpack.c.0.s8 %v181
      %v183 = vlaneseq
      %v184 = vshrl.u32 %v183, 7
      %v185 = vsub.s32 %v182, %v184
      %v186 = vrot.slane %v179, %v185
      %v188 = vmul.f32 %v174, %v186
      %v189 = vld [vmem:[%s2] sm:$0x7]
      %191 = vset.pattern.permute.xlu0 0
      %192 = vperm.xlu0 %191, %v189
      %v193 = vpop.permute.xlu0 %192
      %v195 = vunpack.c.l.s4 839922192
      %v196 = vunpack.c.0.s8 %v195
      %v197 = vlaneseq
      %v198 = vshrl.u32 %v197, 7
      %v199 = vsub.s32 %v196, %v198
      %v200 = vrot.slane %v193, %v199
      %v202 = vadd.f32 %v188, %v200
      %v203 = vtanh.pop %v202
      %204 = vst [vmem:[%s172] sm:$0x77] %v203
      %s205 = smul.u32 2, %s14
      %p206 = scmp.lt.s32.totalorder %s205, 3
      %s207 = scalar_select %p206, %s205, 3
      %s208 = smul.addr %s207, 4
      %s209 = scalar_lea.vmem %s3, %s208
      // Predicated region
      $region33: #{res_unet_att_forward.67} parent=31 // pred_check
        %p210 = pneg %p100
      $region34: #{res_unet_att_forward.67} parent=31 // pred_check_branch
        %212 = sbr.rel (%p210) target = $region36
      $region35: #{res_unet_att_forward.67} parent=31 // pred_region
        %s213 = smul.u32 2, %s14
      $region36: #{res_unet_att_forward.67} parent=31 // pred_fallthru
        _
    $region32: #{res_unet_att_forward.67} parent=5 // pred_fallthru
      _
    %p214 = scmp.le.s32.totalorder 2, %s9
    // Predicated region
    $region37: #{res_unet_att_forward.67} parent=5 // pred_check
      %p215 = pneg %p214
    $region38: #{res_unet_att_forward.67} parent=5 // pred_check_branch
      %217 = sbr.rel (%p215) target = $region40
    $region39: #{res_unet_att_forward.67} parent=5 // pred_region
      %s218 = ssub.s32 %s9, 2
      // Predicated region
      $region41: #{res_unet_att_forward.67} parent=39 // pred_check
        %p219 = pneg %p106
      $region42: #{res_unet_att_forward.67} parent=39 // pred_check_branch
        %221 = sbr.rel (%p219) target = $region44
      $region43: #{res_unet_att_forward.67} parent=39 // pred_region
        %s222 = smul.u32 2, %s15
        %p223 = scmp.lt.s32.totalorder %s222, 3
        %s224 = scalar_select %p223, %s222, 3
        %s225 = smul.addr %s224, 4
        %s226 = scalar_lea.vmem %s3, %s225
      $region44: #{res_unet_att_forward.67} parent=39 // pred_fallthru
        _
    $region40: #{res_unet_att_forward.67} parent=5 // pred_fallthru
      _
  $region6: #{res_unet_att_forward.67} parent=0 // loop_footer
    %s13 = sadd.s32 1, %s9
  $region7: #{res_unet_att_forward.67} parent=0 // loop_footer_branch
    %8 = sbr.rel target = $region3
  $region8: #{res_unet_att_forward.67} parent=0 // loop_exit
    _

</llo_original>
